<compile_context>
chip_gen: v6e
topology: v6e:2x2x1
jax: 0.10.0
libtpu: 0.0.40
codegen_flags: <defaults>
</compile_context>

<pallas_src>
import functools
import math

import jax
import jax.numpy as jnp
from jax.experimental import pallas as pl
from jax.experimental.pallas import tpu as pltpu


# ----------------------------------------------------------------------------
# Boundary masks (computed once in the wrapper, passed in as a [11, H*W] array):
#   rows 0..8 : validity masks for the 9 conv taps (dh, dw) in {-1,0,1}^2
#   row 9     : col >= 1   (used by dx / grad_T)
#   row 10    : row >= 1   (used by dy / grad_T)
# ----------------------------------------------------------------------------
def _make_masks(H, W):
    idx = jnp.arange(H * W, dtype=jnp.int32)
    row = idx // W
    col = idx % W
    rows = []
    for dh in (-1, 0, 1):
        for dw in (-1, 0, 1):
            ok = ((row + dh >= 0) & (row + dh <= H - 1) &
                  (col + dw >= 0) & (col + dw <= W - 1))
            rows.append(ok)
    rows.append(col >= 1)
    rows.append(row >= 1)
    return jnp.stack(rows, axis=0).astype(jnp.float32)            # [11, H*W]


# ----------------------------------------------------------------------------
# Fully fused network kernel: grid = (batch, stage).  State (x, a) carried in
# VMEM scratch across the stage axis; per-stage prediction written each step.
# ----------------------------------------------------------------------------
def _net_kernel(scal_ref, alphas_ref, masks_ref, x0_ref, gy_ref, a0_ref,
                wx0_ref, bx0_ref, wx1_ref, bx1_ref,
                we0_ref, be0_ref, weh_ref, beh_ref, we5_ref, be5_ref,
                out_ref, xc_ref, ac_ref, *, H, W, S, n_iter):
    b = pl.program_id(0)
    s = pl.program_id(1)
    N = H * W

    # raw CAM outputs; apply the 0.2 / 1.0 / 0.1 scalings here.
    lba = scal_ref[b, s] * 0.2            # FISTA step size
    wgt = scal_ref[b, S + s]              # blend weight
    ts = scal_ref[b, 2 * S + s] * 0.1     # soft threshold

    # Initialize the per-batch carry at the first stage.
    @pl.when(s == 0)
    def _():
        xc_ref[...] = x0_ref[0]
        ac_ref[...] = a0_ref[0]

    masks = masks_ref[...]                                         # hoisted once
    tap_masks = [None if k == 4 else masks[k:k + 1, :] for k in range(9)]
    cmask = masks[9:10, :]                                         # col >= 1
    rmask = masks[10:11, :]                                        # row >= 1

    def dx(u):                    # forward difference along W (flattened layout)
        return (u - pltpu.roll(u, shift=1, axis=1)) * cmask

    def dy(u):                    # forward difference along H
        return (u - pltpu.roll(u, shift=W, axis=1)) * rmask

    def grad_T(gx, gy_):          # adjoint of grad_op (matches grad_T_op)
        gxp = gx * cmask
        gyp = gy_ * rmask
        return (gxp - pltpu.roll(gxp, shift=N - 1, axis=1)
                + gyp - pltpu.roll(gyp, shift=N - W, axis=1))

    def conv3x3(act, w, bias):
        # act: [Cin, N] f32;  w: [Cout, 9*Cin] bf16;  bias: [Cout, 1] f32
        taps = []
        k = 0
        for dh in (-1, 0, 1):
            for dw in (-1, 0, 1):
                delta = dh * W + dw
                t = act if delta == 0 else pltpu.roll(act, shift=(-delta) % N, axis=1)
                if tap_masks[k] is not None:
                    t = t * tap_masks[k]
                taps.append(t.astype(w.dtype))
                k += 1
        patch = jnp.concatenate(taps, axis=0)                      # [9*Cin, N]
        # single K = 9*Cin MXU matmul, N = H*W lanes, f32 accumulation
        return jnp.dot(w, patch, preferred_element_type=jnp.float32) + bias

    def prelu(u, alpha):
        return jnp.where(u > 0, u, alpha * u)

    x = xc_ref[...]               # [1, N]
    a = ac_ref[...]               # [2, N]
    gy = gy_ref[0]                # [2, N]  (0 = W-diff comp, 1 = H-diff comp)
    rx = gy[0:1] - a[0:1]
    ry = gy[1:2] - a[1:2]

    # ---------------- FISTA inner loop (unrolled) ----------------
    vk = x
    phik = x
    t = 1.0
    for _ in range(n_iter):
        dgrad = grad_T(dx(vk) - rx, dy(vk) - ry)
        phinext = vk - lba * dgrad
        tnext = 0.5 * (1.0 + math.sqrt(1.0 + 4.0 * t * t))
        vk = phinext + ((t - 1.0) / tnext) * (phinext - phik)
        phik = phinext
        t = tnext

    dg = grad_T(dx(phik) - rx, dy(phik) - ry)
    x_cat = jnp.concatenate([phik, dg], axis=0)                    # [2, N]

    # ---------------- SubNN_X ----------------
    # TODO(synk): SubNN_X is not defined in the PyTorch source; implemented as
    # conv(2->6) -> PReLU -> conv(6->1) to match the SubNN_X(2, 1, 6, 1) interface.
    h = prelu(conv3x3(x_cat, wx0_ref[0], bx0_ref[0]), alphas_ref[s, 0])
    xb = conv3x3(h, wx1_ref[0], bx1_ref[0])                        # [1, N]

    x_new = phik * wgt + (1.0 - wgt) * xb                          # [1, N]

    # ---------------- b = grad_y - grad_op(x_new) ----------------
    bcat = jnp.concatenate([gy[0:1] - dx(x_new), gy[1:2] - dy(x_new)], axis=0)

    # ---------------- SubNN_E: conv(2->32), [PReLU, conv(32->32)]x4,
    #                  PReLU, conv(32->2), soft threshold -----------------------
    h = conv3x3(bcat, we0_ref[0], be0_ref[0])
    for j in range(4):
        h = prelu(h, alphas_ref[s, 1 + j])
        h = conv3x3(h, weh_ref[0, j], beh_ref[0, j])
    h = prelu(h, alphas_ref[s, 5])
    h = conv3x3(h, we5_ref[0], be5_ref[0])                         # [2, N]

    a_new = jnp.where(h > ts, h - ts, jnp.where(h < -ts, h + ts, 0.0))

    # carry to next stage + per-stage prediction output
    xc_ref[...] = x_new
    ac_ref[...] = a_new
    out_ref[0, 0] = x_new


def _unrolled_stages(ps, scal, masks, x, gy, a, *, H, W, S, n_iter=10):
    B = x.shape[0]
    N = H * W

    def full(arr):
        nd = arr.ndim
        return pl.BlockSpec(arr.shape, lambda b, s, _nd=nd: (0,) * _nd)

    def per_stage(arr):
        nd = arr.ndim
        return pl.BlockSpec((1,) + arr.shape[1:],
                            lambda b, s, _nd=nd: (s,) + (0,) * (_nd - 1))

    smem = pl.BlockSpec(memory_space=pltpu.MemorySpace.SMEM)

    in_specs = [
        smem,                                                 # scal   [B, 3*S]
        smem,                                                 # alphas [S, 6]
        full(masks),                                          # masks  [11, N]
        pl.BlockSpec((1, 1, N), lambda b, s: (b, 0, 0)),      # x0     [B, 1, N]
        pl.BlockSpec((1, 2, N), lambda b, s: (b, 0, 0)),      # gy     [B, 2, N]
        pl.BlockSpec((1, 2, N), lambda b, s: (b, 0, 0)),      # a0     [B, 2, N]
        per_stage(ps["wx0"]), per_stage(ps["bx0"]),
        per_stage(ps["wx1"]), per_stage(ps["bx1"]),
        per_stage(ps["we0"]), per_stage(ps["be0"]),
        per_stage(ps["weh"]), per_stage(ps["beh"]),
        per_stage(ps["we5"]), per_stage(ps["be5"]),
    ]
    out_specs = pl.BlockSpec((1, 1, 1, N), lambda b, s: (b, s, 0, 0))

    return pl.pallas_call(
        functools.partial(_net_kernel, H=H, W=W, S=S, n_iter=n_iter),
        out_shape=jax.ShapeDtypeStruct((B, S, 1, N), jnp.float32),
        grid=(B, S),
        in_specs=in_specs,
        out_specs=out_specs,
        scratch_shapes=[pltpu.VMEM((1, N), jnp.float32),      # x carry
                        pltpu.VMEM((2, N), jnp.float32)],     # a carry
        compiler_params=pltpu.CompilerParams(
            dimension_semantics=("parallel", "arbitrary")),   # batch across TCs
    )(scal, ps["alphas"], masks, x, gy, a,
      ps["wx0"], ps["bx0"], ps["wx1"], ps["bx1"],
      ps["we0"], ps["be0"], ps["weh"], ps["beh"], ps["we5"], ps["be5"])


# ----------------------------------------------------------------------------
# CAM conditioning MLP kernel.
# ----------------------------------------------------------------------------
def _cam_kernel(acts_ref, cond_ref, w1_ref, b1_ref, w2_ref, b2_ref,
                w3_ref, b3_ref, o_ref):
    a1 = acts_ref[0]
    a2 = acts_ref[1]
    h = cond_ref[...] * w1_ref[...] + b1_ref[...]         # fc1 (in_features == 1)
    h = jnp.where(h > 0, h, a1 * h)                       # PReLU
    h = jnp.dot(h, w2_ref[...], preferred_element_type=jnp.float32) + b2_ref[...]
    h = jnp.where(h > 0, h, a2 * h)                       # PReLU
    y = jnp.dot(h, w3_ref[...], preferred_element_type=jnp.float32) + b3_ref[...]
    o_ref[...] = pl.reciprocal(1.0 + jnp.exp(-y), approx=True)   # sigmoid via EUP


def cam_forward(p, cond):
    B = cond.shape[0]
    S3 = p["w3"].shape[1]

    def full(arr):
        nd = arr.ndim
        return pl.BlockSpec(arr.shape, lambda i, _nd=nd: (0,) * _nd)

    arrays = (cond, p["w1"], p["b1"], p["w2"], p["b2"], p["w3"], p["b3"])
    return pl.pallas_call(
        _cam_kernel,
        out_shape=jax.ShapeDtypeStruct((B, S3), jnp.float32),
        grid=(1,),
        in_specs=[pl.BlockSpec(memory_space=pltpu.MemorySpace.SMEM)]
                 + [full(arr) for arr in arrays],
        out_specs=pl.BlockSpec((B, S3), lambda i: (0, 0)),
        compiler_params=pltpu.CompilerParams(dimension_semantics=("arbitrary",)),
    )(p["acts"], *arrays)


# ----------------------------------------------------------------------------
# Full network forward.
# ----------------------------------------------------------------------------
def network_forward(params, grad_y, cond, x0, a0, *, stage_num, H, W):
    B = grad_y.shape[0]
    N = H * W
    S = stage_num

    # CAM outputs: [lba_0..lba_{S-1}, w_0.., d_0..]; 0.2 / 0.1 scalings are
    # applied inside the fused stage kernel.
    scal = cam_forward(params["cam"], cond)                          # [B, 3*S]

    gy = jnp.stack([grad_y[:, 0, :, :, 0].reshape(B, N),
                    grad_y[:, 0, :, :, 1].reshape(B, N)], axis=1)    # [B, 2, N]
    a = jnp.stack([a0[:, 0, :, :, 0].reshape(B, N),
                   a0[:, 0, :, :, 1].reshape(B, N)], axis=1)         # [B, 2, N]
    x = x0.reshape(B, 1, N)                                          # [B, 1, N]
    masks = _make_masks(H, W)                                        # [11, N]

    preds = _unrolled_stages(params["stages"], scal, masks, x, gy, a,
                             H=H, W=W, S=S)                          # [B, S, 1, N]
    preds_list = [preds[:, i].reshape(B, 1, H, W) for i in range(S)]
    return preds_list[-1], preds_list


# ----------------------------------------------------------------------------
# Deterministic parameter init (weights created directly in kernel layouts,
# stacked over stages: conv weights [S, Cout, 9*Cin] bf16, biases [S, Cout, 1]).
# ----------------------------------------------------------------------------
def init_params(key, stage_num, hidden_cam=128, e_hidden=32, x_hidden=6):
    keys = iter(jax.random.split(key, 64))

    def nrm(shape, scale=0.1, dtype=jnp.float32):
        return (scale * jax.random.normal(next(keys), shape)).astype(dtype)

    S = stage_num
    S3 = S * 3
    cam = dict(w1=nrm((1, hidden_cam)), b1=nrm((1, hidden_cam), 0.01),
               w2=nrm((hidden_cam, hidden_cam), 0.05), b2=nrm((1, hidden_cam), 0.01),
               w3=nrm((hidden_cam, S3), 0.05), b3=nrm((1, S3), 0.01),
               acts=jnp.full((2,), 0.25, jnp.float32))       # PReLU alphas
    wdt = jnp.bfloat16
    stages = dict(
        wx0=nrm((S, x_hidden, 9 * 2), dtype=wdt), bx0=nrm((S, x_hidden, 1), 0.01),
        wx1=nrm((S, 1, 9 * x_hidden), dtype=wdt), bx1=nrm((S, 1, 1), 0.01),
        we0=nrm((S, e_hidden, 9 * 2), dtype=wdt), be0=nrm((S, e_hidden, 1), 0.01),
        weh=nrm((S, 4, e_hidden, 9 * e_hidden), dtype=wdt),
        beh=nrm((S, 4, e_hidden, 1), 0.01),
        we5=nrm((S, 2, 9 * e_hidden), dtype=wdt), be5=nrm((S, 2, 1), 0.01),
        alphas=jnp.full((S, 6), 0.25, jnp.float32),          # [x-block, e-block x5]
    )
    return dict(cam=cam, stages=stages)


if __name__ == "__main__":
    B, H, W, S = 2, 16, 16, 2
    key = jax.random.PRNGKey(0)
    k1, k2, k3, k4, kp = jax.random.split(key, 5)
    grad_y = jax.random.normal(k1, (B, 1, H, W, 2), jnp.float32)
    cond = jax.random.uniform(k2, (B, 1), jnp.float32)
    x0 = jax.random.normal(k3, (B, 1, H, W), jnp.float32)
    a0 = 0.1 * jax.random.normal(k4, (B, 1, H, W, 2), jnp.float32)
    params = init_params(kp, S)

    fwd = jax.jit(functools.partial(network_forward, stage_num=S, H=H, W=W))
    x_out, preds = fwd(params, grad_y, cond, x0, a0)
    jax.block_until_ready((x_out, preds))
    assert x_out.shape == (B, 1, H, W) and len(preds) == S
    print("KERNEL_OK")
</pallas_src>

<mosaic_0001>
module attributes {stable_mosaic.version = 11 : i64} {
  func.func @_cam_kernel(%arg0: i32, %arg1: memref<2xf32, #tpu.memory_space<smem>>, %arg2: memref<2x1xf32, #tpu.memory_space<vmem>>, %arg3: memref<1x128xf32, #tpu.memory_space<vmem>>, %arg4: memref<1x128xf32, #tpu.memory_space<vmem>>, %arg5: memref<128x128xf32, #tpu.memory_space<vmem>>, %arg6: memref<1x128xf32, #tpu.memory_space<vmem>>, %arg7: memref<128x6xf32, #tpu.memory_space<vmem>>, %arg8: memref<1x6xf32, #tpu.memory_space<vmem>>, %arg9: memref<2x6xf32, #tpu.memory_space<vmem>>) attributes {dimension_semantics = [#tpu.dimension_semantics<arbitrary>], iteration_bounds = array<i64: 1>, scalar_prefetch = 0 : i64, scratch_operands = 0 : i64, tpu.core_type = #tpu.core_type<tc>, window_params = [{transform_indices = @transform_0, window_bounds = array<i64: 2>}, {pipeline_mode = #tpu.pipeline_mode<synchronous>, transform_indices = @transform_1, window_bounds = array<i64: 2, 1>}, {pipeline_mode = #tpu.pipeline_mode<synchronous>, transform_indices = @transform_2, window_bounds = array<i64: 1, 128>}, {pipeline_mode = #tpu.pipeline_mode<synchronous>, transform_indices = @transform_3, window_bounds = array<i64: 1, 128>}, {pipeline_mode = #tpu.pipeline_mode<synchronous>, transform_indices = @transform_4, window_bounds = array<i64: 128, 128>}, {pipeline_mode = #tpu.pipeline_mode<synchronous>, transform_indices = @transform_5, window_bounds = array<i64: 1, 128>}, {pipeline_mode = #tpu.pipeline_mode<synchronous>, transform_indices = @transform_6, window_bounds = array<i64: 128, 6>}, {pipeline_mode = #tpu.pipeline_mode<synchronous>, transform_indices = @transform_7, window_bounds = array<i64: 1, 6>}, {pipeline_mode = #tpu.pipeline_mode<synchronous>, transform_indices = @transform_8, window_bounds = array<i64: 2, 6>}]} {
    %c0 = arith.constant 0 : index
    %0 = memref.load %arg1[%c0] : memref<2xf32, #tpu.memory_space<smem>>
    %c1 = arith.constant 1 : index
    %1 = memref.load %arg1[%c1] : memref<2xf32, #tpu.memory_space<smem>>
    %c0_0 = arith.constant 0 : index
    %c0_1 = arith.constant 0 : index
    %2 = vector.load %arg2[%c0_0, %c0_1] : memref<2x1xf32, #tpu.memory_space<vmem>>, vector<2x1xf32>
    %c0_2 = arith.constant 0 : index
    %c0_3 = arith.constant 0 : index
    %3 = vector.load %arg3[%c0_2, %c0_3] : memref<1x128xf32, #tpu.memory_space<vmem>>, vector<1x128xf32>
    %4 = vector.broadcast %2 : vector<2x1xf32> to vector<2x128xf32>
    %5 = vector.broadcast %3 : vector<1x128xf32> to vector<2x128xf32>
    %6 = arith.mulf %4, %5 : vector<2x128xf32>
    %c0_4 = arith.constant 0 : index
    %c0_5 = arith.constant 0 : index
    %7 = vector.load %arg4[%c0_4, %c0_5] : memref<1x128xf32, #tpu.memory_space<vmem>>, vector<1x128xf32>
    %8 = vector.broadcast %7 : vector<1x128xf32> to vector<2x128xf32>
    %9 = arith.addf %6, %8 : vector<2x128xf32>
    %cst = arith.constant 0.000000e+00 : f32
    %10 = vector.broadcast %cst : f32 to vector<2x128xf32>
    %11 = arith.cmpf ogt, %9, %10 : vector<2x128xf32>
    %12 = vector.broadcast %0 : f32 to vector<2x128xf32>
    %13 = arith.mulf %12, %9 : vector<2x128xf32>
    %14 = arith.select %11, %9, %13 : vector<2x128xi1>, vector<2x128xf32>
    %c0_6 = arith.constant 0 : index
    %c0_7 = arith.constant 0 : index
    %15 = vector.load %arg5[%c0_6, %c0_7] : memref<128x128xf32, #tpu.memory_space<vmem>>, vector<128x128xf32>
    %cst_8 = arith.constant dense<0.000000e+00> : vector<2x128xf32>
    %16 = tpu.matmul %14, %15, %cst_8 {dimension_numbers = #tpu.dot_dimension_numbers<[1], [0], [0], [1], [0, 0, 1, 1], [], []>} : vector<2x128xf32>, vector<128x128xf32>, vector<2x128xf32> -> vector<2x128xf32>
    %c0_9 = arith.constant 0 : index
    %c0_10 = arith.constant 0 : index
    %17 = vector.load %arg6[%c0_9, %c0_10] : memref<1x128xf32, #tpu.memory_space<vmem>>, vector<1x128xf32>
    %18 = vector.broadcast %17 : vector<1x128xf32> to vector<2x128xf32>
    %19 = arith.addf %16, %18 : vector<2x128xf32>
    %cst_11 = arith.constant 0.000000e+00 : f32
    %20 = vector.broadcast %cst_11 : f32 to vector<2x128xf32>
    %21 = arith.cmpf ogt, %19, %20 : vector<2x128xf32>
    %22 = vector.broadcast %1 : f32 to vector<2x128xf32>
    %23 = arith.mulf %22, %19 : vector<2x128xf32>
    %24 = arith.select %21, %19, %23 : vector<2x128xi1>, vector<2x128xf32>
    %c0_12 = arith.constant 0 : index
    %c0_13 = arith.constant 0 : index
    %25 = vector.load %arg7[%c0_12, %c0_13] : memref<128x6xf32, #tpu.memory_space<vmem>>, vector<128x6xf32>
    %cst_14 = arith.constant dense<0.000000e+00> : vector<2x6xf32>
    %26 = tpu.matmul %24, %25, %cst_14 {dimension_numbers = #tpu.dot_dimension_numbers<[1], [0], [0], [1], [0, 0, 1, 1], [], []>} : vector<2x128xf32>, vector<128x6xf32>, vector<2x6xf32> -> vector<2x6xf32>
    %c0_15 = arith.constant 0 : index
    %c0_16 = arith.constant 0 : index
    %27 = vector.load %arg8[%c0_15, %c0_16] : memref<1x6xf32, #tpu.memory_space<vmem>>, vector<1x6xf32>
    %28 = vector.broadcast %27 : vector<1x6xf32> to vector<2x6xf32>
    %29 = arith.addf %26, %28 : vector<2x6xf32>
    %cst_17 = arith.constant 0.000000e+00 : f32
    %30 = vector.broadcast %cst_17 : f32 to vector<2x6xf32>
    %31 = arith.subf %30, %29 : vector<2x6xf32>
    %32 = math.exp %31 : vector<2x6xf32>
    %cst_18 = arith.constant 1.000000e+00 : f32
    %33 = vector.broadcast %cst_18 : f32 to vector<2x6xf32>
    %34 = arith.addf %33, %32 : vector<2x6xf32>
    %35 = tpu.reciprocal %34 {approx = true} : vector<2x6xf32> -> vector<2x6xf32>
    %c0_19 = arith.constant 0 : index
    %c0_20 = arith.constant 0 : index
    %36 = vector.load %arg9[%c0_19, %c0_20] : memref<2x6xf32, #tpu.memory_space<vmem>>, vector<2x6xf32>
    tpu.vector_store %arg9[%c0_19, %c0_20], %35 {strides = array<i32>} : memref<2x6xf32, #tpu.memory_space<vmem>>, vector<2x6xf32>,
    return
  }
  func.func @transform_0(%arg0: i32) -> i32 {
    %c0_i32 = arith.constant 0 : i32
    %c0_i32_0 = arith.constant 0 : i32
    return %c0_i32 : i32
  }
  func.func @transform_1(%arg0: i32) -> (i32, i32) {
    %c0_i32 = arith.constant 0 : i32
    %c0_i32_0 = arith.constant 0 : i32
    %c0_i32_1 = arith.constant 0 : i32
    return %c0_i32, %c0_i32_0 : i32, i32
  }
  func.func @transform_2(%arg0: i32) -> (i32, i32) {
    %c0_i32 = arith.constant 0 : i32
    %c0_i32_0 = arith.constant 0 : i32
    %c0_i32_1 = arith.constant 0 : i32
    return %c0_i32, %c0_i32_0 : i32, i32
  }
  func.func @transform_3(%arg0: i32) -> (i32, i32) {
    %c0_i32 = arith.constant 0 : i32
    %c0_i32_0 = arith.constant 0 : i32
    %c0_i32_1 = arith.constant 0 : i32
    return %c0_i32, %c0_i32_0 : i32, i32
  }
  func.func @transform_4(%arg0: i32) -> (i32, i32) {
    %c0_i32 = arith.constant 0 : i32
    %c0_i32_0 = arith.constant 0 : i32
    %c0_i32_1 = arith.constant 0 : i32
    return %c0_i32, %c0_i32_0 : i32, i32
  }
  func.func @transform_5(%arg0: i32) -> (i32, i32) {
    %c0_i32 = arith.constant 0 : i32
    %c0_i32_0 = arith.constant 0 : i32
    %c0_i32_1 = arith.constant 0 : i32
    return %c0_i32, %c0_i32_0 : i32, i32
  }
  func.func @transform_6(%arg0: i32) -> (i32, i32) {
    %c0_i32 = arith.constant 0 : i32
    %c0_i32_0 = arith.constant 0 : i32
    %c0_i32_1 = arith.constant 0 : i32
    return %c0_i32, %c0_i32_0 : i32, i32
  }
  func.func @transform_7(%arg0: i32) -> (i32, i32) {
    %c0_i32 = arith.constant 0 : i32
    %c0_i32_0 = arith.constant 0 : i32
    %c0_i32_1 = arith.constant 0 : i32
    return %c0_i32, %c0_i32_0 : i32, i32
  }
  func.func @transform_8(%arg0: i32) -> (i32, i32) {
    %c0_i32 = arith.constant 0 : i32
    %c0_i32_0 = arith.constant 0 : i32
    %c0_i32_1 = arith.constant 0 : i32
    return %c0_i32, %c0_i32_0 : i32, i32
  }
}

module attributes {stable_mosaic.version = 11 : i64} {
  func.func @_net_kernel(%arg0: i32, %arg1: i32, %arg2: memref<2x6xf32, #tpu.memory_space<smem>>, %arg3: memref<2x6xf32, #tpu.memory_space<smem>>, %arg4: memref<11x256xf32, #tpu.memory_space<vmem>>, %arg5: memref<1x1x256xf32, #tpu.memory_space<vmem>>, %arg6: memref<1x2x256xf32, #tpu.memory_space<vmem>>, %arg7: memref<1x2x256xf32, #tpu.memory_space<vmem>>, %arg8: memref<1x6x18xbf16, #tpu.memory_space<vmem>>, %arg9: memref<1x6x1xf32, #tpu.memory_space<vmem>>, %arg10: memref<1x1x54xbf16, #tpu.memory_space<vmem>>, %arg11: memref<1x1x1xf32, #tpu.memory_space<vmem>>, %arg12: memref<1x32x18xbf16, #tpu.memory_space<vmem>>, %arg13: memref<1x32x1xf32, #tpu.memory_space<vmem>>, %arg14: memref<1x4x32x288xbf16, #tpu.memory_space<vmem>>, %arg15: memref<1x4x32x1xf32, #tpu.memory_space<vmem>>, %arg16: memref<1x2x288xbf16, #tpu.memory_space<vmem>>, %arg17: memref<1x2x1xf32, #tpu.memory_space<vmem>>, %arg18: memref<1x1x1x256xf32, #tpu.memory_space<vmem>>, %arg19: memref<1x256xf32, #tpu.memory_space<vmem>>, %arg20: memref<2x256xf32, #tpu.memory_space<vmem>>) attributes {dimension_semantics = [#tpu.dimension_semantics<parallel>, #tpu.dimension_semantics<arbitrary>], iteration_bounds = array<i64: 2, 2>, scalar_prefetch = 0 : i64, scratch_operands = 2 : i64, tpu.core_type = #tpu.core_type<tc>, window_params = [{transform_indices = @transform_0, window_bounds = array<i64: 2, 6>}, {transform_indices = @transform_1, window_bounds = array<i64: 2, 6>}, {pipeline_mode = #tpu.pipeline_mode<synchronous>, transform_indices = @transform_2, window_bounds = array<i64: 11, 256>}, {transform_indices = @transform_3, window_bounds = array<i64: 1, 1, 256>}, {transform_indices = @transform_4, window_bounds = array<i64: 1, 2, 256>}, {transform_indices = @transform_5, window_bounds = array<i64: 1, 2, 256>}, {transform_indices = @transform_6, window_bounds = array<i64: 1, 6, 18>}, {transform_indices = @transform_7, window_bounds = array<i64: 1, 6, 1>}, {transform_indices = @transform_8, window_bounds = array<i64: 1, 1, 54>}, {transform_indices = @transform_9, window_bounds = array<i64: 1, 1, 1>}, {transform_indices = @transform_10, window_bounds = array<i64: 1, 32, 18>}, {transform_indices = @transform_11, window_bounds = array<i64: 1, 32, 1>}, {transform_indices = @transform_12, window_bounds = array<i64: 1, 4, 32, 288>}, {transform_indices = @transform_13, window_bounds = array<i64: 1, 4, 32, 1>}, {transform_indices = @transform_14, window_bounds = array<i64: 1, 2, 288>}, {transform_indices = @transform_15, window_bounds = array<i64: 1, 2, 1>}, {transform_indices = @transform_16, window_bounds = array<i64: 1, 1, 1, 256>}]} {
    %0 = arith.index_cast %arg0 : i32 to index
    %1 = arith.index_cast %arg1 : i32 to index
    %2 = memref.load %arg2[%0, %1] : memref<2x6xf32, #tpu.memory_space<smem>>
    %cst = arith.constant 2.000000e-01 : f32
    %3 = arith.mulf %2, %cst : f32
    %c2_i32 = arith.constant 2 : i32
    %4 = arith.addi %c2_i32, %arg1 : i32
    %5 = arith.index_cast %arg0 : i32 to index
    %6 = arith.index_cast %4 : i32 to index
    %7 = memref.load %arg2[%5, %6] : memref<2x6xf32, #tpu.memory_space<smem>>
    %c4_i32 = arith.constant 4 : i32
    %8 = arith.addi %c4_i32, %arg1 : i32
    %9 = arith.index_cast %arg0 : i32 to index
    %10 = arith.index_cast %8 : i32 to index
    %11 = memref.load %arg2[%9, %10] : memref<2x6xf32, #tpu.memory_space<smem>>
    %cst_0 = arith.constant 1.000000e-01 : f32
    %12 = arith.mulf %11, %cst_0 : f32
    %c0_i32 = arith.constant 0 : i32
    %13 = arith.cmpi eq, %arg1, %c0_i32 : i32
    %14 = arith.extui %13 : i1 to i32
    %c0_i32_1 = arith.constant 0 : i32
    %15 = arith.cmpi ne, %14, %c0_i32_1 : i32
    scf.if %15 {
      %c0_203 = arith.constant 0 : index
      %c0_204 = arith.constant 0 : index
      %c0_205 = arith.constant 0 : index
      %673 = vector.load %arg5[%c0_203, %c0_204, %c0_205] : memref<1x1x256xf32, #tpu.memory_space<vmem>>, vector<1x1x256xf32>
      %674 = vector.shape_cast %673 : vector<1x1x256xf32> to vector<1x256xf32>
      %c0_206 = arith.constant 0 : index
      %c0_207 = arith.constant 0 : index
      %675 = vector.load %arg19[%c0_206, %c0_207] : memref<1x256xf32, #tpu.memory_space<vmem>>, vector<1x256xf32>
      tpu.vector_store %arg19[%c0_206, %c0_207], %674 {strides = array<i32>} : memref<1x256xf32, #tpu.memory_space<vmem>>, vector<1x256xf32>,
      %c0_208 = arith.constant 0 : index
      %c0_209 = arith.constant 0 : index
      %c0_210 = arith.constant 0 : index
      %676 = vector.load %arg7[%c0_208, %c0_209, %c0_210] : memref<1x2x256xf32, #tpu.memory_space<vmem>>, vector<1x2x256xf32>
      %677 = vector.shape_cast %676 : vector<1x2x256xf32> to vector<2x256xf32>
      %c0_211 = arith.constant 0 : index
      %c0_212 = arith.constant 0 : index
      %678 = vector.load %arg20[%c0_211, %c0_212] : memref<2x256xf32, #tpu.memory_space<vmem>>, vector<2x256xf32>
      tpu.vector_store %arg20[%c0_211, %c0_212], %677 {strides = array<i32>} : memref<2x256xf32, #tpu.memory_space<vmem>>, vector<2x256xf32>,
    } else {
    }
    %c0 = arith.constant 0 : index
    %c0_2 = arith.constant 0 : index
    %16 = vector.load %arg4[%c0, %c0_2] : memref<11x256xf32, #tpu.memory_space<vmem>>, vector<11x256xf32>
    %17 = vector.extract_strided_slice %16 {offsets = [0, 0], sizes = [1, 256], strides = [1, 1]} : vector<11x256xf32> to vector<1x256xf32>
    %18 = vector.extract_strided_slice %16 {offsets = [1, 0], sizes = [1, 256], strides = [1, 1]} : vector<11x256xf32> to vector<1x256xf32>
    %19 = vector.extract_strided_slice %16 {offsets = [2, 0], sizes = [1, 256], strides = [1, 1]} : vector<11x256xf32> to vector<1x256xf32>
    %20 = vector.extract_strided_slice %16 {offsets = [3, 0], sizes = [1, 256], strides = [1, 1]} : vector<11x256xf32> to vector<1x256xf32>
    %21 = vector.extract_strided_slice %16 {offsets = [5, 0], sizes = [1, 256], strides = [1, 1]} : vector<11x256xf32> to vector<1x256xf32>
    %22 = vector.extract_strided_slice %16 {offsets = [6, 0], sizes = [1, 256], strides = [1, 1]} : vector<11x256xf32> to vector<1x256xf32>
    %23 = vector.extract_strided_slice %16 {offsets = [7, 0], sizes = [1, 256], strides = [1, 1]} : vector<11x256xf32> to vector<1x256xf32>
    %24 = vector.extract_strided_slice %16 {offsets = [8, 0], sizes = [1, 256], strides = [1, 1]} : vector<11x256xf32> to vector<1x256xf32>
    %25 = vector.extract_strided_slice %16 {offsets = [9, 0], sizes = [1, 256], strides = [1, 1]} : vector<11x256xf32> to vector<1x256xf32>
    %26 = vector.extract_strided_slice %16 {offsets = [10, 0], sizes = [1, 256], strides = [1, 1]} : vector<11x256xf32> to vector<1x256xf32>
    %c0_3 = arith.constant 0 : index
    %c0_4 = arith.constant 0 : index
    %27 = vector.load %arg19[%c0_3, %c0_4] : memref<1x256xf32, #tpu.memory_space<vmem>>, vector<1x256xf32>
    %c0_5 = arith.constant 0 : index
    %c0_6 = arith.constant 0 : index
    %28 = vector.load %arg20[%c0_5, %c0_6] : memref<2x256xf32, #tpu.memory_space<vmem>>, vector<2x256xf32>
    %c0_7 = arith.constant 0 : index
    %c0_8 = arith.constant 0 : index
    %c0_9 = arith.constant 0 : index
    %29 = vector.load %arg6[%c0_7, %c0_8, %c0_9] : memref<1x2x256xf32, #tpu.memory_space<vmem>>, vector<1x2x256xf32>
    %30 = vector.shape_cast %29 : vector<1x2x256xf32> to vector<2x256xf32>
    %31 = vector.extract_strided_slice %30 {offsets = [0, 0], sizes = [1, 256], strides = [1, 1]} : vector<2x256xf32> to vector<1x256xf32>
    %32 = vector.extract_strided_slice %28 {offsets = [0, 0], sizes = [1, 256], strides = [1, 1]} : vector<2x256xf32> to vector<1x256xf32>
    %33 = arith.subf %31, %32 : vector<1x256xf32>
    %34 = vector.extract_strided_slice %30 {offsets = [1, 0], sizes = [1, 256], strides = [1, 1]} : vector<2x256xf32> to vector<1x256xf32>
    %35 = vector.extract_strided_slice %28 {offsets = [1, 0], sizes = [1, 256], strides = [1, 1]} : vector<2x256xf32> to vector<1x256xf32>
    %36 = arith.subf %34, %35 : vector<1x256xf32>
    %c1_i32 = arith.constant 1 : i32
    %37 = tpu.dynamic_rotate %27 by %c1_i32 dim 1 : vector<1x256xf32>, i32 -> vector<1x256xf32>
    %38 = arith.subf %27, %37 : vector<1x256xf32>
    %39 = arith.mulf %38, %25 : vector<1x256xf32>
    %40 = arith.subf %39, %33 : vector<1x256xf32>
    %c16_i32 = arith.constant 16 : i32
    %41 = tpu.dynamic_rotate %27 by %c16_i32 dim 1 : vector<1x256xf32>, i32 -> vector<1x256xf32>
    %42 = arith.subf %27, %41 : vector<1x256xf32>
    %43 = arith.mulf %42, %26 : vector<1x256xf32>
    %44 = arith.subf %43, %36 : vector<1x256xf32>
    %45 = arith.mulf %40, %25 : vector<1x256xf32>
    %46 = arith.mulf %44, %26 : vector<1x256xf32>
    %c255_i32 = arith.constant 255 : i32
    %47 = tpu.dynamic_rotate %45 by %c255_i32 dim 1 : vector<1x256xf32>, i32 -> vector<1x256xf32>
    %48 = arith.subf %45, %47 : vector<1x256xf32>
    %49 = arith.addf %48, %46 : vector<1x256xf32>
    %c240_i32 = arith.constant 240 : i32
    %50 = tpu.dynamic_rotate %46 by %c240_i32 dim 1 : vector<1x256xf32>, i32 -> vector<1x256xf32>
    %51 = arith.subf %49, %50 : vector<1x256xf32>
    %52 = vector.broadcast %3 : f32 to vector<1x256xf32>
    %53 = arith.mulf %52, %51 : vector<1x256xf32>
    %54 = arith.subf %27, %53 : vector<1x256xf32>
    %55 = arith.subf %54, %27 : vector<1x256xf32>
    %cst_10 = arith.constant 0.000000e+00 : f32
    %56 = vector.broadcast %cst_10 : f32 to vector<1x256xf32>
    %57 = arith.mulf %56, %55 : vector<1x256xf32>
    %58 = arith.addf %54, %57 : vector<1x256xf32>
    %c1_i32_11 = arith.constant 1 : i32
    %59 = tpu.dynamic_rotate %58 by %c1_i32_11 dim 1 : vector<1x256xf32>, i32 -> vector<1x256xf32>
    %60 = arith.subf %58, %59 : vector<1x256xf32>
    %61 = arith.mulf %60, %25 : vector<1x256xf32>
    %62 = arith.subf %61, %33 : vector<1x256xf32>
    %c16_i32_12 = arith.constant 16 : i32
    %63 = tpu.dynamic_rotate %58 by %c16_i32_12 dim 1 : vector<1x256xf32>, i32 -> vector<1x256xf32>
    %64 = arith.subf %58, %63 : vector<1x256xf32>
    %65 = arith.mulf %64, %26 : vector<1x256xf32>
    %66 = arith.subf %65, %36 : vector<1x256xf32>
    %67 = arith.mulf %62, %25 : vector<1x256xf32>
    %68 = arith.mulf %66, %26 : vector<1x256xf32>
    %c255_i32_13 = arith.constant 255 : i32
    %69 = tpu.dynamic_rotate %67 by %c255_i32_13 dim 1 : vector<1x256xf32>, i32 -> vector<1x256xf32>
    %70 = arith.subf %67, %69 : vector<1x256xf32>
    %71 = arith.addf %70, %68 : vector<1x256xf32>
    %c240_i32_14 = arith.constant 240 : i32
    %72 = tpu.dynamic_rotate %68 by %c240_i32_14 dim 1 : vector<1x256xf32>, i32 -> vector<1x256xf32>
    %73 = arith.subf %71, %72 : vector<1x256xf32>
    %74 = vector.broadcast %3 : f32 to vector<1x256xf32>
    %75 = arith.mulf %74, %73 : vector<1x256xf32>
    %76 = arith.subf %58, %75 : vector<1x256xf32>
    %77 = arith.subf %76, %54 : vector<1x256xf32>
    %cst_15 = arith.constant 0.28175351 : f32
    %78 = vector.broadcast %cst_15 : f32 to vector<1x256xf32>
    %79 = arith.mulf %78, %77 : vector<1x256xf32>
    %80 = arith.addf %76, %79 : vector<1x256xf32>
    %c1_i32_16 = arith.constant 1 : i32
    %81 = tpu.dynamic_rotate %80 by %c1_i32_16 dim 1 : vector<1x256xf32>, i32 -> vector<1x256xf32>
    %82 = arith.subf %80, %81 : vector<1x256xf32>
    %83 = arith.mulf %82, %25 : vector<1x256xf32>
    %84 = arith.subf %83, %33 : vector<1x256xf32>
    %c16_i32_17 = arith.constant 16 : i32
    %85 = tpu.dynamic_rotate %80 by %c16_i32_17 dim 1 : vector<1x256xf32>, i32 -> vector<1x256xf32>
    %86 = arith.subf %80, %85 : vector<1x256xf32>
    %87 = arith.mulf %86, %26 : vector<1x256xf32>
    %88 = arith.subf %87, %36 : vector<1x256xf32>
    %89 = arith.mulf %84, %25 : vector<1x256xf32>
    %90 = arith.mulf %88, %26 : vector<1x256xf32>
    %c255_i32_18 = arith.constant 255 : i32
    %91 = tpu.dynamic_rotate %89 by %c255_i32_18 dim 1 : vector<1x256xf32>, i32 -> vector<1x256xf32>
    %92 = arith.subf %89, %91 : vector<1x256xf32>
    %93 = arith.addf %92, %90 : vector<1x256xf32>
    %c240_i32_19 = arith.constant 240 : i32
    %94 = tpu.dynamic_rotate %90 by %c240_i32_19 dim 1 : vector<1x256xf32>, i32 -> vector<1x256xf32>
    %95 = arith.subf %93, %94 : vector<1x256xf32>
    %96 = vector.broadcast %3 : f32 to vector<1x256xf32>
    %97 = arith.mulf %96, %95 : vector<1x256xf32>
    %98 = arith.subf %80, %97 : vector<1x256xf32>
    %99 = arith.subf %98, %76 : vector<1x256xf32>
    %cst_20 = arith.constant 0.434042782 : f32
    %100 = vector.broadcast %cst_20 : f32 to vector<1x256xf32>
    %101 = arith.mulf %100, %99 : vector<1x256xf32>
    %102 = arith.addf %98, %101 : vector<1x256xf32>
    %c1_i32_21 = arith.constant 1 : i32
    %103 = tpu.dynamic_rotate %102 by %c1_i32_21 dim 1 : vector<1x256xf32>, i32 -> vector<1x256xf32>
    %104 = arith.subf %102, %103 : vector<1x256xf32>
    %105 = arith.mulf %104, %25 : vector<1x256xf32>
    %106 = arith.subf %105, %33 : vector<1x256xf32>
    %c16_i32_22 = arith.constant 16 : i32
    %107 = tpu.dynamic_rotate %102 by %c16_i32_22 dim 1 : vector<1x256xf32>, i32 -> vector<1x256xf32>
    %108 = arith.subf %102, %107 : vector<1x256xf32>
    %109 = arith.mulf %108, %26 : vector<1x256xf32>
    %110 = arith.subf %109, %36 : vector<1x256xf32>
    %111 = arith.mulf %106, %25 : vector<1x256xf32>
    %112 = arith.mulf %110, %26 : vector<1x256xf32>
    %c255_i32_23 = arith.constant 255 : i32
    %113 = tpu.dynamic_rotate %111 by %c255_i32_23 dim 1 : vector<1x256xf32>, i32 -> vector<1x256xf32>
    %114 = arith.subf %111, %113 : vector<1x256xf32>
    %115 = arith.addf %114, %112 : vector<1x256xf32>
    %c240_i32_24 = arith.constant 240 : i32
    %116 = tpu.dynamic_rotate %112 by %c240_i32_24 dim 1 : vector<1x256xf32>, i32 -> vector<1x256xf32>
    %117 = arith.subf %115, %116 : vector<1x256xf32>
    %118 = vector.broadcast %3 : f32 to vector<1x256xf32>
    %119 = arith.mulf %118, %117 : vector<1x256xf32>
    %120 = arith.subf %102, %119 : vector<1x256xf32>
    %121 = arith.subf %120, %98 : vector<1x256xf32>
    %cst_25 = arith.constant 0.531063795 : f32
    %122 = vector.broadcast %cst_25 : f32 to vector<1x256xf32>
    %123 = arith.mulf %122, %121 : vector<1x256xf32>
    %124 = arith.addf %120, %123 : vector<1x256xf32>
    %c1_i32_26 = arith.constant 1 : i32
    %125 = tpu.dynamic_rotate %124 by %c1_i32_26 dim 1 : vector<1x256xf32>, i32 -> vector<1x256xf32>
    %126 = arith.subf %124, %125 : vector<1x256xf32>
    %127 = arith.mulf %126, %25 : vector<1x256xf32>
    %128 = arith.subf %127, %33 : vector<1x256xf32>
    %c16_i32_27 = arith.constant 16 : i32
    %129 = tpu.dynamic_rotate %124 by %c16_i32_27 dim 1 : vector<1x256xf32>, i32 -> vector<1x256xf32>
    %130 = arith.subf %124, %129 : vector<1x256xf32>
    %131 = arith.mulf %130, %26 : vector<1x256xf32>
    %132 = arith.subf %131, %36 : vector<1x256xf32>
    %133 = arith.mulf %128, %25 : vector<1x256xf32>
    %134 = arith.mulf %132, %26 : vector<1x256xf32>
    %c255_i32_28 = arith.constant 255 : i32
    %135 = tpu.dynamic_rotate %133 by %c255_i32_28 dim 1 : vector<1x256xf32>, i32 -> vector<1x256xf32>
    %136 = arith.subf %133, %135 : vector<1x256xf32>
    %137 = arith.addf %136, %134 : vector<1x256xf32>
    %c240_i32_29 = arith.constant 240 : i32
    %138 = tpu.dynamic_rotate %134 by %c240_i32_29 dim 1 : vector<1x256xf32>, i32 -> vector<1x256xf32>
    %139 = arith.subf %137, %138 : vector<1x256xf32>
    %140 = vector.broadcast %3 : f32 to vector<1x256xf32>
    %141 = arith.mulf %140, %139 : vector<1x256xf32>
    %142 = arith.subf %124, %141 : vector<1x256xf32>
    %143 = arith.subf %142, %120 : vector<1x256xf32>
    %cst_30 = arith.constant 0.598778605 : f32
    %144 = vector.broadcast %cst_30 : f32 to vector<1x256xf32>
    %145 = arith.mulf %144, %143 : vector<1x256xf32>
    %146 = arith.addf %142, %145 : vector<1x256xf32>
    %c1_i32_31 = arith.constant 1 : i32
    %147 = tpu.dynamic_rotate %146 by %c1_i32_31 dim 1 : vector<1x256xf32>, i32 -> vector<1x256xf32>
    %148 = arith.subf %146, %147 : vector<1x256xf32>
    %149 = arith.mulf %148, %25 : vector<1x256xf32>
    %150 = arith.subf %149, %33 : vector<1x256xf32>
    %c16_i32_32 = arith.constant 16 : i32
    %151 = tpu.dynamic_rotate %146 by %c16_i32_32 dim 1 : vector<1x256xf32>, i32 -> vector<1x256xf32>
    %152 = arith.subf %146, %151 : vector<1x256xf32>
    %153 = arith.mulf %152, %26 : vector<1x256xf32>
    %154 = arith.subf %153, %36 : vector<1x256xf32>
    %155 = arith.mulf %150, %25 : vector<1x256xf32>
    %156 = arith.mulf %154, %26 : vector<1x256xf32>
    %c255_i32_33 = arith.constant 255 : i32
    %157 = tpu.dynamic_rotate %155 by %c255_i32_33 dim 1 : vector<1x256xf32>, i32 -> vector<1x256xf32>
    %158 = arith.subf %155, %157 : vector<1x256xf32>
    %159 = arith.addf %158, %156 : vector<1x256xf32>
    %c240_i32_34 = arith.constant 240 : i32
    %160 = tpu.dynamic_rotate %156 by %c240_i32_34 dim 1 : vector<1x256xf32>, i32 -> vector<1x256xf32>
    %161 = arith.subf %159, %160 : vector<1x256xf32>
    %162 = vector.broadcast %3 : f32 to vector<1x256xf32>
    %163 = arith.mulf %162, %161 : vector<1x256xf32>
    %164 = arith.subf %146, %163 : vector<1x256xf32>
    %165 = arith.subf %164, %142 : vector<1x256xf32>
    %cst_35 = arith.constant 0.648923337 : f32
    %166 = vector.broadcast %cst_35 : f32 to vector<1x256xf32>
    %167 = arith.mulf %166, %165 : vector<1x256xf32>
    %168 = arith.addf %164, %167 : vector<1x256xf32>
    %c1_i32_36 = arith.constant 1 : i32
    %169 = tpu.dynamic_rotate %168 by %c1_i32_36 dim 1 : vector<1x256xf32>, i32 -> vector<1x256xf32>
    %170 = arith.subf %168, %169 : vector<1x256xf32>
    %171 = arith.mulf %170, %25 : vector<1x256xf32>
    %172 = arith.subf %171, %33 : vector<1x256xf32>
    %c16_i32_37 = arith.constant 16 : i32
    %173 = tpu.dynamic_rotate %168 by %c16_i32_37 dim 1 : vector<1x256xf32>, i32 -> vector<1x256xf32>
    %174 = arith.subf %168, %173 : vector<1x256xf32>
    %175 = arith.mulf %174, %26 : vector<1x256xf32>
    %176 = arith.subf %175, %36 : vector<1x256xf32>
    %177 = arith.mulf %172, %25 : vector<1x256xf32>
    %178 = arith.mulf %176, %26 : vector<1x256xf32>
    %c255_i32_38 = arith.constant 255 : i32
    %179 = tpu.dynamic_rotate %177 by %c255_i32_38 dim 1 : vector<1x256xf32>, i32 -> vector<1x256xf32>
    %180 = arith.subf %177, %179 : vector<1x256xf32>
    %181 = arith.addf %180, %178 : vector<1x256xf32>
    %c240_i32_39 = arith.constant 240 : i32
    %182 = tpu.dynamic_rotate %178 by %c240_i32_39 dim 1 : vector<1x256xf32>, i32 -> vector<1x256xf32>
    %183 = arith.subf %181, %182 : vector<1x256xf32>
    %184 = vector.broadcast %3 : f32 to vector<1x256xf32>
    %185 = arith.mulf %184, %183 : vector<1x256xf32>
    %186 = arith.subf %168, %185 : vector<1x256xf32>
    %187 = arith.subf %186, %164 : vector<1x256xf32>
    %cst_40 = arith.constant 0.687645852 : f32
    %188 = vector.broadcast %cst_40 : f32 to vector<1x256xf32>
    %189 = arith.mulf %188, %187 : vector<1x256xf32>
    %190 = arith.addf %186, %189 : vector<1x256xf32>
    %c1_i32_41 = arith.constant 1 : i32
    %191 = tpu.dynamic_rotate %190 by %c1_i32_41 dim 1 : vector<1x256xf32>, i32 -> vector<1x256xf32>
    %192 = arith.subf %190, %191 : vector<1x256xf32>
    %193 = arith.mulf %192, %25 : vector<1x256xf32>
    %194 = arith.subf %193, %33 : vector<1x256xf32>
    %c16_i32_42 = arith.constant 16 : i32
    %195 = tpu.dynamic_rotate %190 by %c16_i32_42 dim 1 : vector<1x256xf32>, i32 -> vector<1x256xf32>
    %196 = arith.subf %190, %195 : vector<1x256xf32>
    %197 = arith.mulf %196, %26 : vector<1x256xf32>
    %198 = arith.subf %197, %36 : vector<1x256xf32>
    %199 = arith.mulf %194, %25 : vector<1x256xf32>
    %200 = arith.mulf %198, %26 : vector<1x256xf32>
    %c255_i32_43 = arith.constant 255 : i32
    %201 = tpu.dynamic_rotate %199 by %c255_i32_43 dim 1 : vector<1x256xf32>, i32 -> vector<1x256xf32>
    %202 = arith.subf %199, %201 : vector<1x256xf32>
    %203 = arith.addf %202, %200 : vector<1x256xf32>
    %c240_i32_44 = arith.constant 240 : i32
    %204 = tpu.dynamic_rotate %200 by %c240_i32_44 dim 1 : vector<1x256xf32>, i32 -> vector<1x256xf32>
    %205 = arith.subf %203, %204 : vector<1x256xf32>
    %206 = vector.broadcast %3 : f32 to vector<1x256xf32>
    %207 = arith.mulf %206, %205 : vector<1x256xf32>
    %208 = arith.subf %190, %207 : vector<1x256xf32>
    %209 = arith.subf %208, %186 : vector<1x256xf32>
    %cst_45 = arith.constant 0.718499839 : f32
    %210 = vector.broadcast %cst_45 : f32 to vector<1x256xf32>
    %211 = arith.mulf %210, %209 : vector<1x256xf32>
    %212 = arith.addf %208, %211 : vector<1x256xf32>
    %c1_i32_46 = arith.constant 1 : i32
    %213 = tpu.dynamic_rotate %212 by %c1_i32_46 dim 1 : vector<1x256xf32>, i32 -> vector<1x256xf32>
    %214 = arith.subf %212, %213 : vector<1x256xf32>
    %215 = arith.mulf %214, %25 : vector<1x256xf32>
    %216 = arith.subf %215, %33 : vector<1x256xf32>
    %c16_i32_47 = arith.constant 16 : i32
    %217 = tpu.dynamic_rotate %212 by %c16_i32_47 dim 1 : vector<1x256xf32>, i32 -> vector<1x256xf32>
    %218 = arith.subf %212, %217 : vector<1x256xf32>
    %219 = arith.mulf %218, %26 : vector<1x256xf32>
    %220 = arith.subf %219, %36 : vector<1x256xf32>
    %221 = arith.mulf %216, %25 : vector<1x256xf32>
    %222 = arith.mulf %220, %26 : vector<1x256xf32>
    %c255_i32_48 = arith.constant 255 : i32
    %223 = tpu.dynamic_rotate %221 by %c255_i32_48 dim 1 : vector<1x256xf32>, i32 -> vector<1x256xf32>
    %224 = arith.subf %221, %223 : vector<1x256xf32>
    %225 = arith.addf %224, %222 : vector<1x256xf32>
    %c240_i32_49 = arith.constant 240 : i32
    %226 = tpu.dynamic_rotate %222 by %c240_i32_49 dim 1 : vector<1x256xf32>, i32 -> vector<1x256xf32>
    %227 = arith.subf %225, %226 : vector<1x256xf32>
    %228 = vector.broadcast %3 : f32 to vector<1x256xf32>
    %229 = arith.mulf %228, %227 : vector<1x256xf32>
    %230 = arith.subf %212, %229 : vector<1x256xf32>
    %231 = arith.subf %230, %208 : vector<1x256xf32>
    %cst_50 = arith.constant 7.436910e-01 : f32
    %232 = vector.broadcast %cst_50 : f32 to vector<1x256xf32>
    %233 = arith.mulf %232, %231 : vector<1x256xf32>
    %234 = arith.addf %230, %233 : vector<1x256xf32>
    %c1_i32_51 = arith.constant 1 : i32
    %235 = tpu.dynamic_rotate %234 by %c1_i32_51 dim 1 : vector<1x256xf32>, i32 -> vector<1x256xf32>
    %236 = arith.subf %234, %235 : vector<1x256xf32>
    %237 = arith.mulf %236, %25 : vector<1x256xf32>
    %238 = arith.subf %237, %33 : vector<1x256xf32>
    %c16_i32_52 = arith.constant 16 : i32
    %239 = tpu.dynamic_rotate %234 by %c16_i32_52 dim 1 : vector<1x256xf32>, i32 -> vector<1x256xf32>
    %240 = arith.subf %234, %239 : vector<1x256xf32>
    %241 = arith.mulf %240, %26 : vector<1x256xf32>
    %242 = arith.subf %241, %36 : vector<1x256xf32>
    %243 = arith.mulf %238, %25 : vector<1x256xf32>
    %244 = arith.mulf %242, %26 : vector<1x256xf32>
    %c255_i32_53 = arith.constant 255 : i32
    %245 = tpu.dynamic_rotate %243 by %c255_i32_53 dim 1 : vector<1x256xf32>, i32 -> vector<1x256xf32>
    %246 = arith.subf %243, %245 : vector<1x256xf32>
    %247 = arith.addf %246, %244 : vector<1x256xf32>
    %c240_i32_54 = arith.constant 240 : i32
    %248 = tpu.dynamic_rotate %244 by %c240_i32_54 dim 1 : vector<1x256xf32>, i32 -> vector<1x256xf32>
    %249 = arith.subf %247, %248 : vector<1x256xf32>
    %250 = vector.broadcast %3 : f32 to vector<1x256xf32>
    %251 = arith.mulf %250, %249 : vector<1x256xf32>
    %252 = arith.subf %234, %251 : vector<1x256xf32>
    %c1_i32_55 = arith.constant 1 : i32
    %253 = tpu.dynamic_rotate %252 by %c1_i32_55 dim 1 : vector<1x256xf32>, i32 -> vector<1x256xf32>
    %254 = arith.subf %252, %253 : vector<1x256xf32>
    %255 = arith.mulf %254, %25 : vector<1x256xf32>
    %256 = arith.subf %255, %33 : vector<1x256xf32>
    %c16_i32_56 = arith.constant 16 : i32
    %257 = tpu.dynamic_rotate %252 by %c16_i32_56 dim 1 : vector<1x256xf32>, i32 -> vector<1x256xf32>
    %258 = arith.subf %252, %257 : vector<1x256xf32>
    %259 = arith.mulf %258, %26 : vector<1x256xf32>
    %260 = arith.subf %259, %36 : vector<1x256xf32>
    %261 = arith.mulf %256, %25 : vector<1x256xf32>
    %262 = arith.mulf %260, %26 : vector<1x256xf32>
    %c255_i32_57 = arith.constant 255 : i32
    %263 = tpu.dynamic_rotate %261 by %c255_i32_57 dim 1 : vector<1x256xf32>, i32 -> vector<1x256xf32>
    %264 = arith.subf %261, %263 : vector<1x256xf32>
    %265 = arith.addf %264, %262 : vector<1x256xf32>
    %c240_i32_58 = arith.constant 240 : i32
    %266 = tpu.dynamic_rotate %262 by %c240_i32_58 dim 1 : vector<1x256xf32>, i32 -> vector<1x256xf32>
    %267 = arith.subf %265, %266 : vector<1x256xf32>
    %268 = tpu.concatenate %252, %267 in 0 : vector<1x256xf32>, vector<1x256xf32> -> vector<2x256xf32>
    %c0_59 = arith.constant 0 : index
    %c0_60 = arith.constant 0 : index
    %c0_61 = arith.constant 0 : index
    %269 = vector.load %arg8[%c0_59, %c0_60, %c0_61] : memref<1x6x18xbf16, #tpu.memory_space<vmem>>, vector<1x6x18xbf16>
    %270 = vector.shape_cast %269 : vector<1x6x18xbf16> to vector<6x18xbf16>
    %c0_62 = arith.constant 0 : index
    %c0_63 = arith.constant 0 : index
    %c0_64 = arith.constant 0 : index
    %271 = vector.load %arg9[%c0_62, %c0_63, %c0_64] : memref<1x6x1xf32, #tpu.memory_space<vmem>>, vector<1x6x1xf32>
    %272 = vector.shape_cast %271 : vector<1x6x1xf32> to vector<6x1xf32>
    %c17_i32 = arith.constant 17 : i32
    %273 = tpu.dynamic_rotate %268 by %c17_i32 dim 1 : vector<2x256xf32>, i32 -> vector<2x256xf32>
    %274 = vector.broadcast %17 : vector<1x256xf32> to vector<2x256xf32>
    %275 = arith.mulf %273, %274 : vector<2x256xf32>
    %276 = arith.truncf %275 : vector<2x256xf32> to vector<2x256xbf16>
    %c16_i32_65 = arith.constant 16 : i32
    %277 = tpu.dynamic_rotate %268 by %c16_i32_65 dim 1 : vector<2x256xf32>, i32 -> vector<2x256xf32>
    %278 = vector.broadcast %18 : vector<1x256xf32> to vector<2x256xf32>
    %279 = arith.mulf %277, %278 : vector<2x256xf32>
    %280 = arith.truncf %279 : vector<2x256xf32> to vector<2x256xbf16>
    %c15_i32 = arith.constant 15 : i32
    %281 = tpu.dynamic_rotate %268 by %c15_i32 dim 1 : vector<2x256xf32>, i32 -> vector<2x256xf32>
    %282 = vector.broadcast %19 : vector<1x256xf32> to vector<2x256xf32>
    %283 = arith.mulf %281, %282 : vector<2x256xf32>
    %284 = arith.truncf %283 : vector<2x256xf32> to vector<2x256xbf16>
    %c1_i32_66 = arith.constant 1 : i32
    %285 = tpu.dynamic_rotate %268 by %c1_i32_66 dim 1 : vector<2x256xf32>, i32 -> vector<2x256xf32>
    %286 = vector.broadcast %20 : vector<1x256xf32> to vector<2x256xf32>
    %287 = arith.mulf %285, %286 : vector<2x256xf32>
    %288 = arith.truncf %287 : vector<2x256xf32> to vector<2x256xbf16>
    %289 = arith.truncf %268 : vector<2x256xf32> to vector<2x256xbf16>
    %c255_i32_67 = arith.constant 255 : i32
    %290 = tpu.dynamic_rotate %268 by %c255_i32_67 dim 1 : vector<2x256xf32>, i32 -> vector<2x256xf32>
    %291 = vector.broadcast %21 : vector<1x256xf32> to vector<2x256xf32>
    %292 = arith.mulf %290, %291 : vector<2x256xf32>
    %293 = arith.truncf %292 : vector<2x256xf32> to vector<2x256xbf16>
    %c241_i32 = arith.constant 241 : i32
    %294 = tpu.dynamic_rotate %268 by %c241_i32 dim 1 : vector<2x256xf32>, i32 -> vector<2x256xf32>
    %295 = vector.broadcast %22 : vector<1x256xf32> to vector<2x256xf32>
    %296 = arith.mulf %294, %295 : vector<2x256xf32>
    %297 = arith.truncf %296 : vector<2x256xf32> to vector<2x256xbf16>
    %c240_i32_68 = arith.constant 240 : i32
    %298 = tpu.dynamic_rotate %268 by %c240_i32_68 dim 1 : vector<2x256xf32>, i32 -> vector<2x256xf32>
    %299 = vector.broadcast %23 : vector<1x256xf32> to vector<2x256xf32>
    %300 = arith.mulf %298, %299 : vector<2x256xf32>
    %301 = arith.truncf %300 : vector<2x256xf32> to vector<2x256xbf16>
    %c239_i32 = arith.constant 239 : i32
    %302 = tpu.dynamic_rotate %268 by %c239_i32 dim 1 : vector<2x256xf32>, i32 -> vector<2x256xf32>
    %303 = vector.broadcast %24 : vector<1x256xf32> to vector<2x256xf32>
    %304 = arith.mulf %302, %303 : vector<2x256xf32>
    %305 = arith.truncf %304 : vector<2x256xf32> to vector<2x256xbf16>
    %306 = tpu.concatenate %276, %280, %284, %288, %289, %293, %297, %301, %305 in 0 : vector<2x256xbf16>, vector<2x256xbf16>, vector<2x256xbf16>, vector<2x256xbf16>, vector<2x256xbf16>, vector<2x256xbf16>, vector<2x256xbf16>, vector<2x256xbf16>, vector<2x256xbf16> -> vector<18x256xbf16>
    %cst_69 = arith.constant dense<0.000000e+00> : vector<6x256xf32>
    %307 = tpu.matmul %270, %306, %cst_69 {dimension_numbers = #tpu.dot_dimension_numbers<[1], [0], [0], [1], [0, 0, 1, 1], [], []>} : vector<6x18xbf16>, vector<18x256xbf16>, vector<6x256xf32> -> vector<6x256xf32>
    %308 = vector.broadcast %272 : vector<6x1xf32> to vector<6x256xf32>
    %309 = arith.addf %307, %308 : vector<6x256xf32>
    %310 = arith.index_cast %arg1 : i32 to index
    %c0_70 = arith.constant 0 : index
    %311 = memref.load %arg3[%310, %c0_70] : memref<2x6xf32, #tpu.memory_space<smem>>
    %cst_71 = arith.constant 0.000000e+00 : f32
    %312 = vector.broadcast %cst_71 : f32 to vector<6x256xf32>
    %313 = arith.cmpf ogt, %309, %312 : vector<6x256xf32>
    %314 = vector.broadcast %311 : f32 to vector<6x256xf32>
    %315 = arith.mulf %314, %309 : vector<6x256xf32>
    %316 = arith.select %313, %309, %315 : vector<6x256xi1>, vector<6x256xf32>
    %c0_72 = arith.constant 0 : index
    %c0_73 = arith.constant 0 : index
    %c0_74 = arith.constant 0 : index
    %317 = vector.load %arg10[%c0_72, %c0_73, %c0_74] : memref<1x1x54xbf16, #tpu.memory_space<vmem>>, vector<1x1x54xbf16>
    %318 = vector.shape_cast %317 : vector<1x1x54xbf16> to vector<1x54xbf16>
    %c0_75 = arith.constant 0 : index
    %c0_76 = arith.constant 0 : index
    %c0_77 = arith.constant 0 : index
    %319 = vector.load %arg11[%c0_75, %c0_76, %c0_77] : memref<1x1x1xf32, #tpu.memory_space<vmem>>, vector<1x1x1xf32>
    %320 = vector.shape_cast %319 : vector<1x1x1xf32> to vector<1x1xf32>
    %c17_i32_78 = arith.constant 17 : i32
    %321 = tpu.dynamic_rotate %316 by %c17_i32_78 dim 1 : vector<6x256xf32>, i32 -> vector<6x256xf32>
    %322 = vector.broadcast %17 : vector<1x256xf32> to vector<6x256xf32>
    %323 = arith.mulf %321, %322 : vector<6x256xf32>
    %324 = arith.truncf %323 : vector<6x256xf32> to vector<6x256xbf16>
    %c16_i32_79 = arith.constant 16 : i32
    %325 = tpu.dynamic_rotate %316 by %c16_i32_79 dim 1 : vector<6x256xf32>, i32 -> vector<6x256xf32>
    %326 = vector.broadcast %18 : vector<1x256xf32> to vector<6x256xf32>
    %327 = arith.mulf %325, %326 : vector<6x256xf32>
    %328 = arith.truncf %327 : vector<6x256xf32> to vector<6x256xbf16>
    %c15_i32_80 = arith.constant 15 : i32
    %329 = tpu.dynamic_rotate %316 by %c15_i32_80 dim 1 : vector<6x256xf32>, i32 -> vector<6x256xf32>
    %330 = vector.broadcast %19 : vector<1x256xf32> to vector<6x256xf32>
    %331 = arith.mulf %329, %330 : vector<6x256xf32>
    %332 = arith.truncf %331 : vector<6x256xf32> to vector<6x256xbf16>
    %c1_i32_81 = arith.constant 1 : i32
    %333 = tpu.dynamic_rotate %316 by %c1_i32_81 dim 1 : vector<6x256xf32>, i32 -> vector<6x256xf32>
    %334 = vector.broadcast %20 : vector<1x256xf32> to vector<6x256xf32>
    %335 = arith.mulf %333, %334 : vector<6x256xf32>
    %336 = arith.truncf %335 : vector<6x256xf32> to vector<6x256xbf16>
    %337 = arith.truncf %316 : vector<6x256xf32> to vector<6x256xbf16>
    %c255_i32_82 = arith.constant 255 : i32
    %338 = tpu.dynamic_rotate %316 by %c255_i32_82 dim 1 : vector<6x256xf32>, i32 -> vector<6x256xf32>
    %339 = vector.broadcast %21 : vector<1x256xf32> to vector<6x256xf32>
    %340 = arith.mulf %338, %339 : vector<6x256xf32>
    %341 = arith.truncf %340 : vector<6x256xf32> to vector<6x256xbf16>
    %c241_i32_83 = arith.constant 241 : i32
    %342 = tpu.dynamic_rotate %316 by %c241_i32_83 dim 1 : vector<6x256xf32>, i32 -> vector<6x256xf32>
    %343 = vector.broadcast %22 : vector<1x256xf32> to vector<6x256xf32>
    %344 = arith.mulf %342, %343 : vector<6x256xf32>
    %345 = arith.truncf %344 : vector<6x256xf32> to vector<6x256xbf16>
    %c240_i32_84 = arith.constant 240 : i32
    %346 = tpu.dynamic_rotate %316 by %c240_i32_84 dim 1 : vector<6x256xf32>, i32 -> vector<6x256xf32>
    %347 = vector.broadcast %23 : vector<1x256xf32> to vector<6x256xf32>
    %348 = arith.mulf %346, %347 : vector<6x256xf32>
    %349 = arith.truncf %348 : vector<6x256xf32> to vector<6x256xbf16>
    %c239_i32_85 = arith.constant 239 : i32
    %350 = tpu.dynamic_rotate %316 by %c239_i32_85 dim 1 : vector<6x256xf32>, i32 -> vector<6x256xf32>
    %351 = vector.broadcast %24 : vector<1x256xf32> to vector<6x256xf32>
    %352 = arith.mulf %350, %351 : vector<6x256xf32>
    %353 = arith.truncf %352 : vector<6x256xf32> to vector<6x256xbf16>
    %354 = tpu.concatenate %324, %328, %332, %336, %337, %341, %345, %349, %353 in 0 : vector<6x256xbf16>, vector<6x256xbf16>, vector<6x256xbf16>, vector<6x256xbf16>, vector<6x256xbf16>, vector<6x256xbf16>, vector<6x256xbf16>, vector<6x256xbf16>, vector<6x256xbf16> -> vector<54x256xbf16>
    %cst_86 = arith.constant dense<0.000000e+00> : vector<1x256xf32>
    %355 = tpu.matmul %318, %354, %cst_86 {dimension_numbers = #tpu.dot_dimension_numbers<[1], [0], [0], [1], [0, 0, 1, 1], [], []>} : vector<1x54xbf16>, vector<54x256xbf16>, vector<1x256xf32> -> vector<1x256xf32>
    %356 = vector.broadcast %320 : vector<1x1xf32> to vector<1x256xf32>
    %357 = arith.addf %355, %356 : vector<1x256xf32>
    %358 = vector.broadcast %7 : f32 to vector<1x256xf32>
    %359 = arith.mulf %252, %358 : vector<1x256xf32>
    %cst_87 = arith.constant 1.000000e+00 : f32
    %360 = arith.subf %cst_87, %7 : f32
    %361 = vector.broadcast %360 : f32 to vector<1x256xf32>
    %362 = arith.mulf %361, %357 : vector<1x256xf32>
    %363 = arith.addf %359, %362 : vector<1x256xf32>
    %364 = vector.extract_strided_slice %30 {offsets = [0, 0], sizes = [1, 256], strides = [1, 1]} : vector<2x256xf32> to vector<1x256xf32>
    %c1_i32_88 = arith.constant 1 : i32
    %365 = tpu.dynamic_rotate %363 by %c1_i32_88 dim 1 : vector<1x256xf32>, i32 -> vector<1x256xf32>
    %366 = arith.subf %363, %365 : vector<1x256xf32>
    %367 = arith.mulf %366, %25 : vector<1x256xf32>
    %368 = arith.subf %364, %367 : vector<1x256xf32>
    %369 = vector.extract_strided_slice %30 {offsets = [1, 0], sizes = [1, 256], strides = [1, 1]} : vector<2x256xf32> to vector<1x256xf32>
    %c16_i32_89 = arith.constant 16 : i32
    %370 = tpu.dynamic_rotate %363 by %c16_i32_89 dim 1 : vector<1x256xf32>, i32 -> vector<1x256xf32>
    %371 = arith.subf %363, %370 : vector<1x256xf32>
    %372 = arith.mulf %371, %26 : vector<1x256xf32>
    %373 = arith.subf %369, %372 : vector<1x256xf32>
    %374 = tpu.concatenate %368, %373 in 0 : vector<1x256xf32>, vector<1x256xf32> -> vector<2x256xf32>
    %c0_90 = arith.constant 0 : index
    %c0_91 = arith.constant 0 : index
    %c0_92 = arith.constant 0 : index
    %375 = vector.load %arg12[%c0_90, %c0_91, %c0_92] : memref<1x32x18xbf16, #tpu.memory_space<vmem>>, vector<1x32x18xbf16>
    %376 = vector.shape_cast %375 : vector<1x32x18xbf16> to vector<32x18xbf16>
    %c0_93 = arith.constant 0 : index
    %c0_94 = arith.constant 0 : index
    %c0_95 = arith.constant 0 : index
    %377 = vector.load %arg13[%c0_93, %c0_94, %c0_95] : memref<1x32x1xf32, #tpu.memory_space<vmem>>, vector<1x32x1xf32>
    %378 = vector.shape_cast %377 : vector<1x32x1xf32> to vector<32x1xf32>
    %c17_i32_96 = arith.constant 17 : i32
    %379 = tpu.dynamic_rotate %374 by %c17_i32_96 dim 1 : vector<2x256xf32>, i32 -> vector<2x256xf32>
    %380 = vector.broadcast %17 : vector<1x256xf32> to vector<2x256xf32>
    %381 = arith.mulf %379, %380 : vector<2x256xf32>
    %382 = arith.truncf %381 : vector<2x256xf32> to vector<2x256xbf16>
    %c16_i32_97 = arith.constant 16 : i32
    %383 = tpu.dynamic_rotate %374 by %c16_i32_97 dim 1 : vector<2x256xf32>, i32 -> vector<2x256xf32>
    %384 = vector.broadcast %18 : vector<1x256xf32> to vector<2x256xf32>
    %385 = arith.mulf %383, %384 : vector<2x256xf32>
    %386 = arith.truncf %385 : vector<2x256xf32> to vector<2x256xbf16>
    %c15_i32_98 = arith.constant 15 : i32
    %387 = tpu.dynamic_rotate %374 by %c15_i32_98 dim 1 : vector<2x256xf32>, i32 -> vector<2x256xf32>
    %388 = vector.broadcast %19 : vector<1x256xf32> to vector<2x256xf32>
    %389 = arith.mulf %387, %388 : vector<2x256xf32>
    %390 = arith.truncf %389 : vector<2x256xf32> to vector<2x256xbf16>
    %c1_i32_99 = arith.constant 1 : i32
    %391 = tpu.dynamic_rotate %374 by %c1_i32_99 dim 1 : vector<2x256xf32>, i32 -> vector<2x256xf32>
    %392 = vector.broadcast %20 : vector<1x256xf32> to vector<2x256xf32>
    %393 = arith.mulf %391, %392 : vector<2x256xf32>
    %394 = arith.truncf %393 : vector<2x256xf32> to vector<2x256xbf16>
    %395 = arith.truncf %374 : vector<2x256xf32> to vector<2x256xbf16>
    %c255_i32_100 = arith.constant 255 : i32
    %396 = tpu.dynamic_rotate %374 by %c255_i32_100 dim 1 : vector<2x256xf32>, i32 -> vector<2x256xf32>
    %397 = vector.broadcast %21 : vector<1x256xf32> to vector<2x256xf32>
    %398 = arith.mulf %396, %397 : vector<2x256xf32>
    %399 = arith.truncf %398 : vector<2x256xf32> to vector<2x256xbf16>
    %c241_i32_101 = arith.constant 241 : i32
    %400 = tpu.dynamic_rotate %374 by %c241_i32_101 dim 1 : vector<2x256xf32>, i32 -> vector<2x256xf32>
    %401 = vector.broadcast %22 : vector<1x256xf32> to vector<2x256xf32>
    %402 = arith.mulf %400, %401 : vector<2x256xf32>
    %403 = arith.truncf %402 : vector<2x256xf32> to vector<2x256xbf16>
    %c240_i32_102 = arith.constant 240 : i32
    %404 = tpu.dynamic_rotate %374 by %c240_i32_102 dim 1 : vector<2x256xf32>, i32 -> vector<2x256xf32>
    %405 = vector.broadcast %23 : vector<1x256xf32> to vector<2x256xf32>
    %406 = arith.mulf %404, %405 : vector<2x256xf32>
    %407 = arith.truncf %406 : vector<2x256xf32> to vector<2x256xbf16>
    %c239_i32_103 = arith.constant 239 : i32
    %408 = tpu.dynamic_rotate %374 by %c239_i32_103 dim 1 : vector<2x256xf32>, i32 -> vector<2x256xf32>
    %409 = vector.broadcast %24 : vector<1x256xf32> to vector<2x256xf32>
    %410 = arith.mulf %408, %409 : vector<2x256xf32>
    %411 = arith.truncf %410 : vector<2x256xf32> to vector<2x256xbf16>
    %412 = tpu.concatenate %382, %386, %390, %394, %395, %399, %403, %407, %411 in 0 : vector<2x256xbf16>, vector<2x256xbf16>, vector<2x256xbf16>, vector<2x256xbf16>, vector<2x256xbf16>, vector<2x256xbf16>, vector<2x256xbf16>, vector<2x256xbf16>, vector<2x256xbf16> -> vector<18x256xbf16>
    %cst_104 = arith.constant dense<0.000000e+00> : vector<32x256xf32>
    %413 = tpu.matmul %376, %412, %cst_104 {dimension_numbers = #tpu.dot_dimension_numbers<[1], [0], [0], [1], [0, 0, 1, 1], [], []>} : vector<32x18xbf16>, vector<18x256xbf16>, vector<32x256xf32> -> vector<32x256xf32>
    %414 = vector.broadcast %378 : vector<32x1xf32> to vector<32x256xf32>
    %415 = arith.addf %413, %414 : vector<32x256xf32>
    %416 = arith.index_cast %arg1 : i32 to index
    %c1 = arith.constant 1 : index
    %417 = memref.load %arg3[%416, %c1] : memref<2x6xf32, #tpu.memory_space<smem>>
    %cst_105 = arith.constant 0.000000e+00 : f32
    %418 = vector.broadcast %cst_105 : f32 to vector<32x256xf32>
    %419 = arith.cmpf ogt, %415, %418 : vector<32x256xf32>
    %420 = vector.broadcast %417 : f32 to vector<32x256xf32>
    %421 = arith.mulf %420, %415 : vector<32x256xf32>
    %422 = arith.select %419, %415, %421 : vector<32x256xi1>, vector<32x256xf32>
    %c0_106 = arith.constant 0 : index
    %c0_107 = arith.constant 0 : index
    %c0_108 = arith.constant 0 : index
    %c0_109 = arith.constant 0 : index
    %423 = vector.load %arg14[%c0_106, %c0_107, %c0_108, %c0_109] : memref<1x4x32x288xbf16, #tpu.memory_space<vmem>>, vector<1x1x32x288xbf16>
    %424 = vector.shape_cast %423 : vector<1x1x32x288xbf16> to vector<32x288xbf16>
    %c0_110 = arith.constant 0 : index
    %c0_111 = arith.constant 0 : index
    %c0_112 = arith.constant 0 : index
    %c0_113 = arith.constant 0 : index
    %425 = vector.load %arg15[%c0_110, %c0_111, %c0_112, %c0_113] : memref<1x4x32x1xf32, #tpu.memory_space<vmem>>, vector<1x1x32x1xf32>
    %426 = vector.shape_cast %425 : vector<1x1x32x1xf32> to vector<32x1xf32>
    %c17_i32_114 = arith.constant 17 : i32
    %427 = tpu.dynamic_rotate %422 by %c17_i32_114 dim 1 : vector<32x256xf32>, i32 -> vector<32x256xf32>
    %428 = vector.broadcast %17 : vector<1x256xf32> to vector<32x256xf32>
    %429 = arith.mulf %427, %428 : vector<32x256xf32>
    %430 = arith.truncf %429 : vector<32x256xf32> to vector<32x256xbf16>
    %c16_i32_115 = arith.constant 16 : i32
    %431 = tpu.dynamic_rotate %422 by %c16_i32_115 dim 1 : vector<32x256xf32>, i32 -> vector<32x256xf32>
    %432 = vector.broadcast %18 : vector<1x256xf32> to vector<32x256xf32>
    %433 = arith.mulf %431, %432 : vector<32x256xf32>
    %434 = arith.truncf %433 : vector<32x256xf32> to vector<32x256xbf16>
    %c15_i32_116 = arith.constant 15 : i32
    %435 = tpu.dynamic_rotate %422 by %c15_i32_116 dim 1 : vector<32x256xf32>, i32 -> vector<32x256xf32>
    %436 = vector.broadcast %19 : vector<1x256xf32> to vector<32x256xf32>
    %437 = arith.mulf %435, %436 : vector<32x256xf32>
    %438 = arith.truncf %437 : vector<32x256xf32> to vector<32x256xbf16>
    %c1_i32_117 = arith.constant 1 : i32
    %439 = tpu.dynamic_rotate %422 by %c1_i32_117 dim 1 : vector<32x256xf32>, i32 -> vector<32x256xf32>
    %440 = vector.broadcast %20 : vector<1x256xf32> to vector<32x256xf32>
    %441 = arith.mulf %439, %440 : vector<32x256xf32>
    %442 = arith.truncf %441 : vector<32x256xf32> to vector<32x256xbf16>
    %443 = arith.truncf %422 : vector<32x256xf32> to vector<32x256xbf16>
    %c255_i32_118 = arith.constant 255 : i32
    %444 = tpu.dynamic_rotate %422 by %c255_i32_118 dim 1 : vector<32x256xf32>, i32 -> vector<32x256xf32>
    %445 = vector.broadcast %21 : vector<1x256xf32> to vector<32x256xf32>
    %446 = arith.mulf %444, %445 : vector<32x256xf32>
    %447 = arith.truncf %446 : vector<32x256xf32> to vector<32x256xbf16>
    %c241_i32_119 = arith.constant 241 : i32
    %448 = tpu.dynamic_rotate %422 by %c241_i32_119 dim 1 : vector<32x256xf32>, i32 -> vector<32x256xf32>
    %449 = vector.broadcast %22 : vector<1x256xf32> to vector<32x256xf32>
    %450 = arith.mulf %448, %449 : vector<32x256xf32>
    %451 = arith.truncf %450 : vector<32x256xf32> to vector<32x256xbf16>
    %c240_i32_120 = arith.constant 240 : i32
    %452 = tpu.dynamic_rotate %422 by %c240_i32_120 dim 1 : vector<32x256xf32>, i32 -> vector<32x256xf32>
    %453 = vector.broadcast %23 : vector<1x256xf32> to vector<32x256xf32>
    %454 = arith.mulf %452, %453 : vector<32x256xf32>
    %455 = arith.truncf %454 : vector<32x256xf32> to vector<32x256xbf16>
    %c239_i32_121 = arith.constant 239 : i32
    %456 = tpu.dynamic_rotate %422 by %c239_i32_121 dim 1 : vector<32x256xf32>, i32 -> vector<32x256xf32>
    %457 = vector.broadcast %24 : vector<1x256xf32> to vector<32x256xf32>
    %458 = arith.mulf %456, %457 : vector<32x256xf32>
    %459 = arith.truncf %458 : vector<32x256xf32> to vector<32x256xbf16>
    %460 = tpu.concatenate %430, %434, %438, %442, %443, %447, %451, %455, %459 in 0 : vector<32x256xbf16>, vector<32x256xbf16>, vector<32x256xbf16>, vector<32x256xbf16>, vector<32x256xbf16>, vector<32x256xbf16>, vector<32x256xbf16>, vector<32x256xbf16>, vector<32x256xbf16> -> vector<288x256xbf16>
    %cst_122 = arith.constant dense<0.000000e+00> : vector<32x256xf32>
    %461 = tpu.matmul %424, %460, %cst_122 {dimension_numbers = #tpu.dot_dimension_numbers<[1], [0], [0], [1], [0, 0, 1, 1], [], []>} : vector<32x288xbf16>, vector<288x256xbf16>, vector<32x256xf32> -> vector<32x256xf32>
    %462 = vector.broadcast %426 : vector<32x1xf32> to vector<32x256xf32>
    %463 = arith.addf %461, %462 : vector<32x256xf32>
    %464 = arith.index_cast %arg1 : i32 to index
    %c2 = arith.constant 2 : index
    %465 = memref.load %arg3[%464, %c2] : memref<2x6xf32, #tpu.memory_space<smem>>
    %cst_123 = arith.constant 0.000000e+00 : f32
    %466 = vector.broadcast %cst_123 : f32 to vector<32x256xf32>
    %467 = arith.cmpf ogt, %463, %466 : vector<32x256xf32>
    %468 = vector.broadcast %465 : f32 to vector<32x256xf32>
    %469 = arith.mulf %468, %463 : vector<32x256xf32>
    %470 = arith.select %467, %463, %469 : vector<32x256xi1>, vector<32x256xf32>
    %c0_124 = arith.constant 0 : index
    %c1_125 = arith.constant 1 : index
    %c0_126 = arith.constant 0 : index
    %c0_127 = arith.constant 0 : index
    %471 = vector.load %arg14[%c0_124, %c1_125, %c0_126, %c0_127] : memref<1x4x32x288xbf16, #tpu.memory_space<vmem>>, vector<1x1x32x288xbf16>
    %472 = vector.shape_cast %471 : vector<1x1x32x288xbf16> to vector<32x288xbf16>
    %c0_128 = arith.constant 0 : index
    %c1_129 = arith.constant 1 : index
    %c0_130 = arith.constant 0 : index
    %c0_131 = arith.constant 0 : index
    %473 = vector.load %arg15[%c0_128, %c1_129, %c0_130, %c0_131] : memref<1x4x32x1xf32, #tpu.memory_space<vmem>>, vector<1x1x32x1xf32>
    %474 = vector.shape_cast %473 : vector<1x1x32x1xf32> to vector<32x1xf32>
    %c17_i32_132 = arith.constant 17 : i32
    %475 = tpu.dynamic_rotate %470 by %c17_i32_132 dim 1 : vector<32x256xf32>, i32 -> vector<32x256xf32>
    %476 = vector.broadcast %17 : vector<1x256xf32> to vector<32x256xf32>
    %477 = arith.mulf %475, %476 : vector<32x256xf32>
    %478 = arith.truncf %477 : vector<32x256xf32> to vector<32x256xbf16>
    %c16_i32_133 = arith.constant 16 : i32
    %479 = tpu.dynamic_rotate %470 by %c16_i32_133 dim 1 : vector<32x256xf32>, i32 -> vector<32x256xf32>
    %480 = vector.broadcast %18 : vector<1x256xf32> to vector<32x256xf32>
    %481 = arith.mulf %479, %480 : vector<32x256xf32>
    %482 = arith.truncf %481 : vector<32x256xf32> to vector<32x256xbf16>
    %c15_i32_134 = arith.constant 15 : i32
    %483 = tpu.dynamic_rotate %470 by %c15_i32_134 dim 1 : vector<32x256xf32>, i32 -> vector<32x256xf32>
    %484 = vector.broadcast %19 : vector<1x256xf32> to vector<32x256xf32>
    %485 = arith.mulf %483, %484 : vector<32x256xf32>
    %486 = arith.truncf %485 : vector<32x256xf32> to vector<32x256xbf16>
    %c1_i32_135 = arith.constant 1 : i32
    %487 = tpu.dynamic_rotate %470 by %c1_i32_135 dim 1 : vector<32x256xf32>, i32 -> vector<32x256xf32>
    %488 = vector.broadcast %20 : vector<1x256xf32> to vector<32x256xf32>
    %489 = arith.mulf %487, %488 : vector<32x256xf32>
    %490 = arith.truncf %489 : vector<32x256xf32> to vector<32x256xbf16>
    %491 = arith.truncf %470 : vector<32x256xf32> to vector<32x256xbf16>
    %c255_i32_136 = arith.constant 255 : i32
    %492 = tpu.dynamic_rotate %470 by %c255_i32_136 dim 1 : vector<32x256xf32>, i32 -> vector<32x256xf32>
    %493 = vector.broadcast %21 : vector<1x256xf32> to vector<32x256xf32>
    %494 = arith.mulf %492, %493 : vector<32x256xf32>
    %495 = arith.truncf %494 : vector<32x256xf32> to vector<32x256xbf16>
    %c241_i32_137 = arith.constant 241 : i32
    %496 = tpu.dynamic_rotate %470 by %c241_i32_137 dim 1 : vector<32x256xf32>, i32 -> vector<32x256xf32>
    %497 = vector.broadcast %22 : vector<1x256xf32> to vector<32x256xf32>
    %498 = arith.mulf %496, %497 : vector<32x256xf32>
    %499 = arith.truncf %498 : vector<32x256xf32> to vector<32x256xbf16>
    %c240_i32_138 = arith.constant 240 : i32
    %500 = tpu.dynamic_rotate %470 by %c240_i32_138 dim 1 : vector<32x256xf32>, i32 -> vector<32x256xf32>
    %501 = vector.broadcast %23 : vector<1x256xf32> to vector<32x256xf32>
    %502 = arith.mulf %500, %501 : vector<32x256xf32>
    %503 = arith.truncf %502 : vector<32x256xf32> to vector<32x256xbf16>
    %c239_i32_139 = arith.constant 239 : i32
    %504 = tpu.dynamic_rotate %470 by %c239_i32_139 dim 1 : vector<32x256xf32>, i32 -> vector<32x256xf32>
    %505 = vector.broadcast %24 : vector<1x256xf32> to vector<32x256xf32>
    %506 = arith.mulf %504, %505 : vector<32x256xf32>
    %507 = arith.truncf %506 : vector<32x256xf32> to vector<32x256xbf16>
    %508 = tpu.concatenate %478, %482, %486, %490, %491, %495, %499, %503, %507 in 0 : vector<32x256xbf16>, vector<32x256xbf16>, vector<32x256xbf16>, vector<32x256xbf16>, vector<32x256xbf16>, vector<32x256xbf16>, vector<32x256xbf16>, vector<32x256xbf16>, vector<32x256xbf16> -> vector<288x256xbf16>
    %cst_140 = arith.constant dense<0.000000e+00> : vector<32x256xf32>
    %509 = tpu.matmul %472, %508, %cst_140 {dimension_numbers = #tpu.dot_dimension_numbers<[1], [0], [0], [1], [0, 0, 1, 1], [], []>} : vector<32x288xbf16>, vector<288x256xbf16>, vector<32x256xf32> -> vector<32x256xf32>
    %510 = vector.broadcast %474 : vector<32x1xf32> to vector<32x256xf32>
    %511 = arith.addf %509, %510 : vector<32x256xf32>
    %512 = arith.index_cast %arg1 : i32 to index
    %c3 = arith.constant 3 : index
    %513 = memref.load %arg3[%512, %c3] : memref<2x6xf32, #tpu.memory_space<smem>>
    %cst_141 = arith.constant 0.000000e+00 : f32
    %514 = vector.broadcast %cst_141 : f32 to vector<32x256xf32>
    %515 = arith.cmpf ogt, %511, %514 : vector<32x256xf32>
    %516 = vector.broadcast %513 : f32 to vector<32x256xf32>
    %517 = arith.mulf %516, %511 : vector<32x256xf32>
    %518 = arith.select %515, %511, %517 : vector<32x256xi1>, vector<32x256xf32>
    %c0_142 = arith.constant 0 : index
    %c2_143 = arith.constant 2 : index
    %c0_144 = arith.constant 0 : index
    %c0_145 = arith.constant 0 : index
    %519 = vector.load %arg14[%c0_142, %c2_143, %c0_144, %c0_145] : memref<1x4x32x288xbf16, #tpu.memory_space<vmem>>, vector<1x1x32x288xbf16>
    %520 = vector.shape_cast %519 : vector<1x1x32x288xbf16> to vector<32x288xbf16>
    %c0_146 = arith.constant 0 : index
    %c2_147 = arith.constant 2 : index
    %c0_148 = arith.constant 0 : index
    %c0_149 = arith.constant 0 : index
    %521 = vector.load %arg15[%c0_146, %c2_147, %c0_148, %c0_149] : memref<1x4x32x1xf32, #tpu.memory_space<vmem>>, vector<1x1x32x1xf32>
    %522 = vector.shape_cast %521 : vector<1x1x32x1xf32> to vector<32x1xf32>
    %c17_i32_150 = arith.constant 17 : i32
    %523 = tpu.dynamic_rotate %518 by %c17_i32_150 dim 1 : vector<32x256xf32>, i32 -> vector<32x256xf32>
    %524 = vector.broadcast %17 : vector<1x256xf32> to vector<32x256xf32>
    %525 = arith.mulf %523, %524 : vector<32x256xf32>
    %526 = arith.truncf %525 : vector<32x256xf32> to vector<32x256xbf16>
    %c16_i32_151 = arith.constant 16 : i32
    %527 = tpu.dynamic_rotate %518 by %c16_i32_151 dim 1 : vector<32x256xf32>, i32 -> vector<32x256xf32>
    %528 = vector.broadcast %18 : vector<1x256xf32> to vector<32x256xf32>
    %529 = arith.mulf %527, %528 : vector<32x256xf32>
    %530 = arith.truncf %529 : vector<32x256xf32> to vector<32x256xbf16>
    %c15_i32_152 = arith.constant 15 : i32
    %531 = tpu.dynamic_rotate %518 by %c15_i32_152 dim 1 : vector<32x256xf32>, i32 -> vector<32x256xf32>
    %532 = vector.broadcast %19 : vector<1x256xf32> to vector<32x256xf32>
    %533 = arith.mulf %531, %532 : vector<32x256xf32>
    %534 = arith.truncf %533 : vector<32x256xf32> to vector<32x256xbf16>
    %c1_i32_153 = arith.constant 1 : i32
    %535 = tpu.dynamic_rotate %518 by %c1_i32_153 dim 1 : vector<32x256xf32>, i32 -> vector<32x256xf32>
    %536 = vector.broadcast %20 : vector<1x256xf32> to vector<32x256xf32>
    %537 = arith.mulf %535, %536 : vector<32x256xf32>
    %538 = arith.truncf %537 : vector<32x256xf32> to vector<32x256xbf16>
    %539 = arith.truncf %518 : vector<32x256xf32> to vector<32x256xbf16>
    %c255_i32_154 = arith.constant 255 : i32
    %540 = tpu.dynamic_rotate %518 by %c255_i32_154 dim 1 : vector<32x256xf32>, i32 -> vector<32x256xf32>
    %541 = vector.broadcast %21 : vector<1x256xf32> to vector<32x256xf32>
    %542 = arith.mulf %540, %541 : vector<32x256xf32>
    %543 = arith.truncf %542 : vector<32x256xf32> to vector<32x256xbf16>
    %c241_i32_155 = arith.constant 241 : i32
    %544 = tpu.dynamic_rotate %518 by %c241_i32_155 dim 1 : vector<32x256xf32>, i32 -> vector<32x256xf32>
    %545 = vector.broadcast %22 : vector<1x256xf32> to vector<32x256xf32>
    %546 = arith.mulf %544, %545 : vector<32x256xf32>
    %547 = arith.truncf %546 : vector<32x256xf32> to vector<32x256xbf16>
    %c240_i32_156 = arith.constant 240 : i32
    %548 = tpu.dynamic_rotate %518 by %c240_i32_156 dim 1 : vector<32x256xf32>, i32 -> vector<32x256xf32>
    %549 = vector.broadcast %23 : vector<1x256xf32> to vector<32x256xf32>
    %550 = arith.mulf %548, %549 : vector<32x256xf32>
    %551 = arith.truncf %550 : vector<32x256xf32> to vector<32x256xbf16>
    %c239_i32_157 = arith.constant 239 : i32
    %552 = tpu.dynamic_rotate %518 by %c239_i32_157 dim 1 : vector<32x256xf32>, i32 -> vector<32x256xf32>
    %553 = vector.broadcast %24 : vector<1x256xf32> to vector<32x256xf32>
    %554 = arith.mulf %552, %553 : vector<32x256xf32>
    %555 = arith.truncf %554 : vector<32x256xf32> to vector<32x256xbf16>
    %556 = tpu.concatenate %526, %530, %534, %538, %539, %543, %547, %551, %555 in 0 : vector<32x256xbf16>, vector<32x256xbf16>, vector<32x256xbf16>, vector<32x256xbf16>, vector<32x256xbf16>, vector<32x256xbf16>, vector<32x256xbf16>, vector<32x256xbf16>, vector<32x256xbf16> -> vector<288x256xbf16>
    %cst_158 = arith.constant dense<0.000000e+00> : vector<32x256xf32>
    %557 = tpu.matmul %520, %556, %cst_158 {dimension_numbers = #tpu.dot_dimension_numbers<[1], [0], [0], [1], [0, 0, 1, 1], [], []>} : vector<32x288xbf16>, vector<288x256xbf16>, vector<32x256xf32> -> vector<32x256xf32>
    %558 = vector.broadcast %522 : vector<32x1xf32> to vector<32x256xf32>
    %559 = arith.addf %557, %558 : vector<32x256xf32>
    %560 = arith.index_cast %arg1 : i32 to index
    %c4 = arith.constant 4 : index
    %561 = memref.load %arg3[%560, %c4] : memref<2x6xf32, #tpu.memory_space<smem>>
    %cst_159 = arith.constant 0.000000e+00 : f32
    %562 = vector.broadcast %cst_159 : f32 to vector<32x256xf32>
    %563 = arith.cmpf ogt, %559, %562 : vector<32x256xf32>
    %564 = vector.broadcast %561 : f32 to vector<32x256xf32>
    %565 = arith.mulf %564, %559 : vector<32x256xf32>
    %566 = arith.select %563, %559, %565 : vector<32x256xi1>, vector<32x256xf32>
    %c0_160 = arith.constant 0 : index
    %c3_161 = arith.constant 3 : index
    %c0_162 = arith.constant 0 : index
    %c0_163 = arith.constant 0 : index
    %567 = vector.load %arg14[%c0_160, %c3_161, %c0_162, %c0_163] : memref<1x4x32x288xbf16, #tpu.memory_space<vmem>>, vector<1x1x32x288xbf16>
    %568 = vector.shape_cast %567 : vector<1x1x32x288xbf16> to vector<32x288xbf16>
    %c0_164 = arith.constant 0 : index
    %c3_165 = arith.constant 3 : index
    %c0_166 = arith.constant 0 : index
    %c0_167 = arith.constant 0 : index
    %569 = vector.load %arg15[%c0_164, %c3_165, %c0_166, %c0_167] : memref<1x4x32x1xf32, #tpu.memory_space<vmem>>, vector<1x1x32x1xf32>
    %570 = vector.shape_cast %569 : vector<1x1x32x1xf32> to vector<32x1xf32>
    %c17_i32_168 = arith.constant 17 : i32
    %571 = tpu.dynamic_rotate %566 by %c17_i32_168 dim 1 : vector<32x256xf32>, i32 -> vector<32x256xf32>
    %572 = vector.broadcast %17 : vector<1x256xf32> to vector<32x256xf32>
    %573 = arith.mulf %571, %572 : vector<32x256xf32>
    %574 = arith.truncf %573 : vector<32x256xf32> to vector<32x256xbf16>
    %c16_i32_169 = arith.constant 16 : i32
    %575 = tpu.dynamic_rotate %566 by %c16_i32_169 dim 1 : vector<32x256xf32>, i32 -> vector<32x256xf32>
    %576 = vector.broadcast %18 : vector<1x256xf32> to vector<32x256xf32>
    %577 = arith.mulf %575, %576 : vector<32x256xf32>
    %578 = arith.truncf %577 : vector<32x256xf32> to vector<32x256xbf16>
    %c15_i32_170 = arith.constant 15 : i32
    %579 = tpu.dynamic_rotate %566 by %c15_i32_170 dim 1 : vector<32x256xf32>, i32 -> vector<32x256xf32>
    %580 = vector.broadcast %19 : vector<1x256xf32> to vector<32x256xf32>
    %581 = arith.mulf %579, %580 : vector<32x256xf32>
    %582 = arith.truncf %581 : vector<32x256xf32> to vector<32x256xbf16>
    %c1_i32_171 = arith.constant 1 : i32
    %583 = tpu.dynamic_rotate %566 by %c1_i32_171 dim 1 : vector<32x256xf32>, i32 -> vector<32x256xf32>
    %584 = vector.broadcast %20 : vector<1x256xf32> to vector<32x256xf32>
    %585 = arith.mulf %583, %584 : vector<32x256xf32>
    %586 = arith.truncf %585 : vector<32x256xf32> to vector<32x256xbf16>
    %587 = arith.truncf %566 : vector<32x256xf32> to vector<32x256xbf16>
    %c255_i32_172 = arith.constant 255 : i32
    %588 = tpu.dynamic_rotate %566 by %c255_i32_172 dim 1 : vector<32x256xf32>, i32 -> vector<32x256xf32>
    %589 = vector.broadcast %21 : vector<1x256xf32> to vector<32x256xf32>
    %590 = arith.mulf %588, %589 : vector<32x256xf32>
    %591 = arith.truncf %590 : vector<32x256xf32> to vector<32x256xbf16>
    %c241_i32_173 = arith.constant 241 : i32
    %592 = tpu.dynamic_rotate %566 by %c241_i32_173 dim 1 : vector<32x256xf32>, i32 -> vector<32x256xf32>
    %593 = vector.broadcast %22 : vector<1x256xf32> to vector<32x256xf32>
    %594 = arith.mulf %592, %593 : vector<32x256xf32>
    %595 = arith.truncf %594 : vector<32x256xf32> to vector<32x256xbf16>
    %c240_i32_174 = arith.constant 240 : i32
    %596 = tpu.dynamic_rotate %566 by %c240_i32_174 dim 1 : vector<32x256xf32>, i32 -> vector<32x256xf32>
    %597 = vector.broadcast %23 : vector<1x256xf32> to vector<32x256xf32>
    %598 = arith.mulf %596, %597 : vector<32x256xf32>
    %599 = arith.truncf %598 : vector<32x256xf32> to vector<32x256xbf16>
    %c239_i32_175 = arith.constant 239 : i32
    %600 = tpu.dynamic_rotate %566 by %c239_i32_175 dim 1 : vector<32x256xf32>, i32 -> vector<32x256xf32>
    %601 = vector.broadcast %24 : vector<1x256xf32> to vector<32x256xf32>
    %602 = arith.mulf %600, %601 : vector<32x256xf32>
    %603 = arith.truncf %602 : vector<32x256xf32> to vector<32x256xbf16>
    %604 = tpu.concatenate %574, %578, %582, %586, %587, %591, %595, %599, %603 in 0 : vector<32x256xbf16>, vector<32x256xbf16>, vector<32x256xbf16>, vector<32x256xbf16>, vector<32x256xbf16>, vector<32x256xbf16>, vector<32x256xbf16>, vector<32x256xbf16>, vector<32x256xbf16> -> vector<288x256xbf16>
    %cst_176 = arith.constant dense<0.000000e+00> : vector<32x256xf32>
    %605 = tpu.matmul %568, %604, %cst_176 {dimension_numbers = #tpu.dot_dimension_numbers<[1], [0], [0], [1], [0, 0, 1, 1], [], []>} : vector<32x288xbf16>, vector<288x256xbf16>, vector<32x256xf32> -> vector<32x256xf32>
    %606 = vector.broadcast %570 : vector<32x1xf32> to vector<32x256xf32>
    %607 = arith.addf %605, %606 : vector<32x256xf32>
    %608 = arith.index_cast %arg1 : i32 to index
    %c5 = arith.constant 5 : index
    %609 = memref.load %arg3[%608, %c5] : memref<2x6xf32, #tpu.memory_space<smem>>
    %cst_177 = arith.constant 0.000000e+00 : f32
    %610 = vector.broadcast %cst_177 : f32 to vector<32x256xf32>
    %611 = arith.cmpf ogt, %607, %610 : vector<32x256xf32>
    %612 = vector.broadcast %609 : f32 to vector<32x256xf32>
    %613 = arith.mulf %612, %607 : vector<32x256xf32>
    %614 = arith.select %611, %607, %613 : vector<32x256xi1>, vector<32x256xf32>
    %c0_178 = arith.constant 0 : index
    %c0_179 = arith.constant 0 : index
    %c0_180 = arith.constant 0 : index
    %615 = vector.load %arg16[%c0_178, %c0_179, %c0_180] : memref<1x2x288xbf16, #tpu.memory_space<vmem>>, vector<1x2x288xbf16>
    %616 = vector.shape_cast %615 : vector<1x2x288xbf16> to vector<2x288xbf16>
    %c0_181 = arith.constant 0 : index
    %c0_182 = arith.constant 0 : index
    %c0_183 = arith.constant 0 : index
    %617 = vector.load %arg17[%c0_181, %c0_182, %c0_183] : memref<1x2x1xf32, #tpu.memory_space<vmem>>, vector<1x2x1xf32>
    %618 = vector.shape_cast %617 : vector<1x2x1xf32> to vector<2x1xf32>
    %c17_i32_184 = arith.constant 17 : i32
    %619 = tpu.dynamic_rotate %614 by %c17_i32_184 dim 1 : vector<32x256xf32>, i32 -> vector<32x256xf32>
    %620 = vector.broadcast %17 : vector<1x256xf32> to vector<32x256xf32>
    %621 = arith.mulf %619, %620 : vector<32x256xf32>
    %622 = arith.truncf %621 : vector<32x256xf32> to vector<32x256xbf16>
    %c16_i32_185 = arith.constant 16 : i32
    %623 = tpu.dynamic_rotate %614 by %c16_i32_185 dim 1 : vector<32x256xf32>, i32 -> vector<32x256xf32>
    %624 = vector.broadcast %18 : vector<1x256xf32> to vector<32x256xf32>
    %625 = arith.mulf %623, %624 : vector<32x256xf32>
    %626 = arith.truncf %625 : vector<32x256xf32> to vector<32x256xbf16>
    %c15_i32_186 = arith.constant 15 : i32
    %627 = tpu.dynamic_rotate %614 by %c15_i32_186 dim 1 : vector<32x256xf32>, i32 -> vector<32x256xf32>
    %628 = vector.broadcast %19 : vector<1x256xf32> to vector<32x256xf32>
    %629 = arith.mulf %627, %628 : vector<32x256xf32>
    %630 = arith.truncf %629 : vector<32x256xf32> to vector<32x256xbf16>
    %c1_i32_187 = arith.constant 1 : i32
    %631 = tpu.dynamic_rotate %614 by %c1_i32_187 dim 1 : vector<32x256xf32>, i32 -> vector<32x256xf32>
    %632 = vector.broadcast %20 : vector<1x256xf32> to vector<32x256xf32>
    %633 = arith.mulf %631, %632 : vector<32x256xf32>
    %634 = arith.truncf %633 : vector<32x256xf32> to vector<32x256xbf16>
    %635 = arith.truncf %614 : vector<32x256xf32> to vector<32x256xbf16>
    %c255_i32_188 = arith.constant 255 : i32
    %636 = tpu.dynamic_rotate %614 by %c255_i32_188 dim 1 : vector<32x256xf32>, i32 -> vector<32x256xf32>
    %637 = vector.broadcast %21 : vector<1x256xf32> to vector<32x256xf32>
    %638 = arith.mulf %636, %637 : vector<32x256xf32>
    %639 = arith.truncf %638 : vector<32x256xf32> to vector<32x256xbf16>
    %c241_i32_189 = arith.constant 241 : i32
    %640 = tpu.dynamic_rotate %614 by %c241_i32_189 dim 1 : vector<32x256xf32>, i32 -> vector<32x256xf32>
    %641 = vector.broadcast %22 : vector<1x256xf32> to vector<32x256xf32>
    %642 = arith.mulf %640, %641 : vector<32x256xf32>
    %643 = arith.truncf %642 : vector<32x256xf32> to vector<32x256xbf16>
    %c240_i32_190 = arith.constant 240 : i32
    %644 = tpu.dynamic_rotate %614 by %c240_i32_190 dim 1 : vector<32x256xf32>, i32 -> vector<32x256xf32>
    %645 = vector.broadcast %23 : vector<1x256xf32> to vector<32x256xf32>
    %646 = arith.mulf %644, %645 : vector<32x256xf32>
    %647 = arith.truncf %646 : vector<32x256xf32> to vector<32x256xbf16>
    %c239_i32_191 = arith.constant 239 : i32
    %648 = tpu.dynamic_rotate %614 by %c239_i32_191 dim 1 : vector<32x256xf32>, i32 -> vector<32x256xf32>
    %649 = vector.broadcast %24 : vector<1x256xf32> to vector<32x256xf32>
    %650 = arith.mulf %648, %649 : vector<32x256xf32>
    %651 = arith.truncf %650 : vector<32x256xf32> to vector<32x256xbf16>
    %652 = tpu.concatenate %622, %626, %630, %634, %635, %639, %643, %647, %651 in 0 : vector<32x256xbf16>, vector<32x256xbf16>, vector<32x256xbf16>, vector<32x256xbf16>, vector<32x256xbf16>, vector<32x256xbf16>, vector<32x256xbf16>, vector<32x256xbf16>, vector<32x256xbf16> -> vector<288x256xbf16>
    %cst_192 = arith.constant dense<0.000000e+00> : vector<2x256xf32>
    %653 = tpu.matmul %616, %652, %cst_192 {dimension_numbers = #tpu.dot_dimension_numbers<[1], [0], [0], [1], [0, 0, 1, 1], [], []>} : vector<2x288xbf16>, vector<288x256xbf16>, vector<2x256xf32> -> vector<2x256xf32>
    %654 = vector.broadcast %618 : vector<2x1xf32> to vector<2x256xf32>
    %655 = arith.addf %653, %654 : vector<2x256xf32>
    %656 = vector.broadcast %12 : f32 to vector<2x256xf32>
    %657 = arith.cmpf ogt, %655, %656 : vector<2x256xf32>
    %658 = vector.broadcast %12 : f32 to vector<2x256xf32>
    %659 = arith.subf %655, %658 : vector<2x256xf32>
    %cst_193 = arith.constant 0.000000e+00 : f32
    %660 = arith.subf %cst_193, %12 : f32
    %661 = vector.broadcast %660 : f32 to vector<2x256xf32>
    %662 = arith.cmpf olt, %655, %661 : vector<2x256xf32>
    %663 = vector.broadcast %12 : f32 to vector<2x256xf32>
    %664 = arith.addf %655, %663 : vector<2x256xf32>
    %cst_194 = arith.constant 0.000000e+00 : f32
    %665 = vector.broadcast %cst_194 : f32 to vector<2x256xf32>
    %666 = arith.select %662, %664, %665 : vector<2x256xi1>, vector<2x256xf32>
    %667 = arith.select %657, %659, %666 : vector<2x256xi1>, vector<2x256xf32>
    %c0_195 = arith.constant 0 : index
    %c0_196 = arith.constant 0 : index
    %668 = vector.load %arg19[%c0_195, %c0_196] : memref<1x256xf32, #tpu.memory_space<vmem>>, vector<1x256xf32>
    tpu.vector_store %arg19[%c0_195, %c0_196], %363 {strides = array<i32>} : memref<1x256xf32, #tpu.memory_space<vmem>>, vector<1x256xf32>,
    %c0_197 = arith.constant 0 : index
    %c0_198 = arith.constant 0 : index
    %669 = vector.load %arg20[%c0_197, %c0_198] : memref<2x256xf32, #tpu.memory_space<vmem>>, vector<2x256xf32>
    tpu.vector_store %arg20[%c0_197, %c0_198], %667 {strides = array<i32>} : memref<2x256xf32, #tpu.memory_space<vmem>>, vector<2x256xf32>,
    %c0_199 = arith.constant 0 : index
    %c0_200 = arith.constant 0 : index
    %c0_201 = arith.constant 0 : index
    %c0_202 = arith.constant 0 : index
    %670 = vector.load %arg18[%c0_199, %c0_200, %c0_201, %c0_202] : memref<1x1x1x256xf32, #tpu.memory_space<vmem>>, vector<1x1x1x256xf32>
    %671 = vector.shape_cast %670 : vector<1x1x1x256xf32> to vector<1x256xf32>
    %672 = vector.shape_cast %363 : vector<1x256xf32> to vector<1x1x1x256xf32>
    tpu.vector_store %arg18[%c0_199, %c0_200, %c0_201, %c0_202], %672 {strides = array<i32>} : memref<1x1x1x256xf32, #tpu.memory_space<vmem>>, vector<1x1x1x256xf32>,
    return
  }
  func.func @transform_0(%arg0: i32, %arg1: i32) -> (i32, i32) {
    %c0_i32 = arith.constant 0 : i32
    %c0_i32_0 = arith.constant 0 : i32
    %c0_i32_1 = arith.constant 0 : i32
    return %c0_i32, %c0_i32_0 : i32, i32
  }
  func.func @transform_1(%arg0: i32, %arg1: i32) -> (i32, i32) {
    %c0_i32 = arith.constant 0 : i32
    %c0_i32_0 = arith.constant 0 : i32
    %c0_i32_1 = arith.constant 0 : i32
    return %c0_i32, %c0_i32_0 : i32, i32
  }
  func.func @transform_2(%arg0: i32, %arg1: i32) -> (i32, i32) {
    %c0_i32 = arith.constant 0 : i32
    %c0_i32_0 = arith.constant 0 : i32
    %c0_i32_1 = arith.constant 0 : i32
    return %c0_i32, %c0_i32_0 : i32, i32
  }
  func.func @transform_3(%arg0: i32, %arg1: i32) -> (i32, i32, i32) {
    %c0_i32 = arith.constant 0 : i32
    %c0_i32_0 = arith.constant 0 : i32
    %c0_i32_1 = arith.constant 0 : i32
    return %arg0, %c0_i32, %c0_i32_0 : i32, i32, i32
  }
  func.func @transform_4(%arg0: i32, %arg1: i32) -> (i32, i32, i32) {
    %c0_i32 = arith.constant 0 : i32
    %c0_i32_0 = arith.constant 0 : i32
    %c0_i32_1 = arith.constant 0 : i32
    return %arg0, %c0_i32, %c0_i32_0 : i32, i32, i32
  }
  func.func @transform_5(%arg0: i32, %arg1: i32) -> (i32, i32, i32) {
    %c0_i32 = arith.constant 0 : i32
    %c0_i32_0 = arith.constant 0 : i32
    %c0_i32_1 = arith.constant 0 : i32
    return %arg0, %c0_i32, %c0_i32_0 : i32, i32, i32
  }
  func.func @transform_6(%arg0: i32, %arg1: i32) -> (i32, i32, i32) {
    %c0_i32 = arith.constant 0 : i32
    %c0_i32_0 = arith.constant 0 : i32
    %c0_i32_1 = arith.constant 0 : i32
    return %arg1, %c0_i32, %c0_i32_0 : i32, i32, i32
  }
  func.func @transform_7(%arg0: i32, %arg1: i32) -> (i32, i32, i32) {
    %c0_i32 = arith.constant 0 : i32
    %c0_i32_0 = arith.constant 0 : i32
    %c0_i32_1 = arith.constant 0 : i32
    return %arg1, %c0_i32, %c0_i32_0 : i32, i32, i32
  }
  func.func @transform_8(%arg0: i32, %arg1: i32) -> (i32, i32, i32) {
    %c0_i32 = arith.constant 0 : i32
    %c0_i32_0 = arith.constant 0 : i32
    %c0_i32_1 = arith.constant 0 : i32
    return %arg1, %c0_i32, %c0_i32_0 : i32, i32, i32
  }
  func.func @transform_9(%arg0: i32, %arg1: i32) -> (i32, i32, i32) {
    %c0_i32 = arith.constant 0 : i32
    %c0_i32_0 = arith.constant 0 : i32
    %c0_i32_1 = arith.constant 0 : i32
    return %arg1, %c0_i32, %c0_i32_0 : i32, i32, i32
  }
  func.func @transform_10(%arg0: i32, %arg1: i32) -> (i32, i32, i32) {
    %c0_i32 = arith.constant 0 : i32
    %c0_i32_0 = arith.constant 0 : i32
    %c0_i32_1 = arith.constant 0 : i32
    return %arg1, %c0_i32, %c0_i32_0 : i32, i32, i32
  }
  func.func @transform_11(%arg0: i32, %arg1: i32) -> (i32, i32, i32) {
    %c0_i32 = arith.constant 0 : i32
    %c0_i32_0 = arith.constant 0 : i32
    %c0_i32_1 = arith.constant 0 : i32
    return %arg1, %c0_i32, %c0_i32_0 : i32, i32, i32
  }
  func.func @transform_12(%arg0: i32, %arg1: i32) -> (i32, i32, i32, i32) {
    %c0_i32 = arith.constant 0 : i32
    %c0_i32_0 = arith.constant 0 : i32
    %c0_i32_1 = arith.constant 0 : i32
    %c0_i32_2 = arith.constant 0 : i32
    return %arg1, %c0_i32, %c0_i32_0, %c0_i32_1 : i32, i32, i32, i32
  }
  func.func @transform_13(%arg0: i32, %arg1: i32) -> (i32, i32, i32, i32) {
    %c0_i32 = arith.constant 0 : i32
    %c0_i32_0 = arith.constant 0 : i32
    %c0_i32_1 = arith.constant 0 : i32
    %c0_i32_2 = arith.constant 0 : i32
    return %arg1, %c0_i32, %c0_i32_0, %c0_i32_1 : i32, i32, i32, i32
  }
  func.func @transform_14(%arg0: i32, %arg1: i32) -> (i32, i32, i32) {
    %c0_i32 = arith.constant 0 : i32
    %c0_i32_0 = arith.constant 0 : i32
    %c0_i32_1 = arith.constant 0 : i32
    return %arg1, %c0_i32, %c0_i32_0 : i32, i32, i32
  }
  func.func @transform_15(%arg0: i32, %arg1: i32) -> (i32, i32, i32) {
    %c0_i32 = arith.constant 0 : i32
    %c0_i32_0 = arith.constant 0 : i32
    %c0_i32_1 = arith.constant 0 : i32
    return %arg1, %c0_i32, %c0_i32_0 : i32, i32, i32
  }
  func.func @transform_16(%arg0: i32, %arg1: i32) -> (i32, i32, i32, i32) {
    %c0_i32 = arith.constant 0 : i32
    %c0_i32_0 = arith.constant 0 : i32
    %c0_i32_1 = arith.constant 0 : i32
    return %arg0, %arg1, %c0_i32, %c0_i32_0 : i32, i32, i32, i32
  }
}

</mosaic_0001>

<llo_original>
// kernel: squeeze.2
$region0: #{squeeze.2}
  %s0 = inlined_call_operand.vmem [shape: f32[2,16,16], index: 0, kind: input, shape index: {}]
  %s1 = inlined_call_operand.vmem [shape: f32[2,1,256], index: 1, kind: output, shape index: {}]
  $region1: #{squeeze.2} parent=0
    #allocation0 [shape = 'u8[16384]{0}', space=vmem, size = 0x4000, scoped, tag = 'scoped mem for output reshape']
    %v2 = vld [vmem:[%s0] ss:$8 sm:$0xf]
    %vm3 = vcmask 130048
    %4 = vst.msk [vmem:[#allocation0] ss:$8 sm:$0xf] %vm3, %v2
    %s5 = scalar_lea.vmem %s0, 7
    %v6 = vld [vmem:[%s5] ss:$8 sm:$0xf]
    %7 = vrot.lane.b32.xlu0 %v6, 112
    %v8 = vpop.permute.xlu0 %7
    %vm9 = vcmask 1048448
    %10 = vst.msk [vmem:[#allocation0] ss:$8 sm:$0xf] %vm9, %v8
    %s11 = scalar_lea.vmem %s0, 6
    %v12 = vld [vmem:[%s11] ss:$8 sm:$0xf]
    %13 = vrot.lane.b32.xlu0 %v12, 96
    %v14 = vpop.permute.xlu0 %13
    %vm15 = vcmask 917248
    %16 = vst.msk [vmem:[#allocation0] ss:$8 sm:$0xf] %vm15, %v14
    %s17 = scalar_lea.vmem %s0, 5
    %v18 = vld [vmem:[%s17] ss:$8 sm:$0xf]
    %19 = vrot.lane.b32.xlu0 %v18, 80
    %v20 = vpop.permute.xlu0 %19
    %vm21 = vcmask 786048
    %22 = vst.msk [vmem:[#allocation0] ss:$8 sm:$0xf] %vm21, %v20
    %s23 = scalar_lea.vmem %s0, 4
    %v24 = vld [vmem:[%s23] ss:$8 sm:$0xf]
    %25 = vrot.lane.b32.xlu0 %v24, 64
    %v26 = vpop.permute.xlu0 %25
    %vm27 = vcmask 654848
    %28 = vst.msk [vmem:[#allocation0] ss:$8 sm:$0xf] %vm27, %v26
    %s29 = scalar_lea.vmem %s0, 3
    %v30 = vld [vmem:[%s29] ss:$8 sm:$0xf]
    %31 = vrot.lane.b32.xlu0 %v30, 48
    %v32 = vpop.permute.xlu0 %31
    %vm33 = vcmask 523648
    %34 = vst.msk [vmem:[#allocation0] ss:$8 sm:$0xf] %vm33, %v32
    %s35 = scalar_lea.vmem %s0, 2
    %v36 = vld [vmem:[%s35] ss:$8 sm:$0xf]
    %37 = vrot.lane.b32.xlu0 %v36, 32
    %v38 = vpop.permute.xlu0 %37
    %vm39 = vcmask 392448
    %40 = vst.msk [vmem:[#allocation0] ss:$8 sm:$0xf] %vm39, %v38
    %s41 = scalar_lea.vmem %s0, 1
    %v42 = vld [vmem:[%s41] ss:$8 sm:$0xf]
    %43 = vrot.lane.b32.xlu0 %v42, 16
    %v44 = vpop.permute.xlu0 %43
    %vm45 = vcmask 261248
    %46 = vst.msk [vmem:[#allocation0] ss:$8 sm:$0xf] %vm45, %v44
    %s48 = sshll.u32 1, 1
    %s49 = ssub.s32 %s48, 1
    %v51 = vld [vmem:[#allocation0] sm:%s49]
    %s52 = sshll.u32 1, 1
    %s53 = ssub.s32 %s52, 1
    %54 = vst [vmem:[%s1] sm:%s53] %v51
    %s55 = scalar_lea.vmem [#allocation0], 8
    %v56 = vld [vmem:[%s55] sm:%s49]
    %s57 = sshll.u32 1, 1
    %s58 = ssub.s32 %s57, 1
    %s59 = scalar_lea.vmem %s1, 1
    %60 = vst [vmem:[%s59] sm:%s58] %v56
    %s61 = scalar_lea.vmem [#allocation0], 16
    %v62 = vld [vmem:[%s61] sm:%s49]
    %s63 = sshll.u32 1, 1
    %s64 = ssub.s32 %s63, 1
    %s65 = smul.addr 1, 2
    %s66 = scalar_lea.vmem %s1, %s65
    %67 = vst [vmem:[%s66] sm:%s64] %v62
    %s68 = scalar_lea.vmem [#allocation0], 24
    %v69 = vld [vmem:[%s68] sm:%s49]
    %s70 = sshll.u32 1, 1
    %s71 = ssub.s32 %s70, 1
    %s72 = smul.addr 1, 3
    %s73 = scalar_lea.vmem %s1, %s72
    %74 = vst [vmem:[%s73] sm:%s71] %v69

// kernel: squeeze.10
$region0: #{squeeze.10}
  %s0 = inlined_call_operand.vmem [shape: f32[2,256], index: 0, kind: input, shape index: {}]
  %s1 = inlined_call_operand.hbm [shape: f32[2,1,16,16], index: 1, kind: output, shape index: {}]
  $region1: #{squeeze.10} parent=0
    #allocation0 [shape = 'u8[16384]{0}', space=vmem, size = 0x4000, scoped, tag = 'operand span for operand 1']
    #allocation1 [shape = 's32[1]{0}', space=sflag, size = 0x4, scoped, tag = 'scoped memory for squeeze.10']
    #allocation2 [shape = 'u8[8192]{0}', space=vmem, size = 0x2000, scoped, tag = 'scoped mem for input reshape']
    %2 = vsyncpa [#allocation1], 0
    %s4 = sshll.u32 1, 2
    %s5 = ssub.s32 %s4, 1
    %s6 = scalar_lea.vmem %s0, 2
    %v7 = vld [vmem:[%s6] sm:%s5]
    %s8 = scalar_lea.vmem [#allocation2], 8
    %9 = vst [vmem:[%s8] sm:%s5] %v7
    %v10 = vld [vmem:[%s0] sm:%s5]
    %11 = vst [vmem:[#allocation2] sm:%s5] %v10
    %v12 = vld [vmem:[#allocation2] sm:$0x3]
    %vm13 = vcmask 130048
    %14 = vst.msk [vmem:[#allocation0] ss:$16 sm:$0x3] %vm13, %v12
    %s15 = scalar_lea.vmem [#allocation2], 8
    %v16 = vld [vmem:[%s15] sm:$0x3]
    %vm17 = vcmask 130048
    %s18 = scalar_lea.vmem [#allocation0], 8
    %19 = vst.msk [vmem:[%s18] ss:$16 sm:$0x3] %vm17, %v16
    %v20 = vld.sshfl [vmem:[#allocation2] sm:$0xff pattern:$0x99999180]
    %21 = vrot.lane.b32.xlu0 %v20, 112
    %v22 = vpop.permute.xlu0 %21
    %vm23 = vcmask 130048
    %s24 = scalar_lea.vmem [#allocation0], 1
    %25 = vst.msk [vmem:[%s24] ss:$8 sm:$0xf] %vm23, %v22
    %v26 = vld.sshfl [vmem:[#allocation2] sm:$0xff pattern:$0x99999180]
    %27 = vrot.lane.b32.xlu0 %v26, 96
    %v28 = vpop.permute.xlu0 %27
    %vm29 = vcmask 130048
    %s30 = scalar_lea.vmem [#allocation0], 2
    %31 = vst.msk [vmem:[%s30] ss:$8 sm:$0xf] %vm29, %v28
    %v32 = vld.sshfl [vmem:[#allocation2] sm:$0xff pattern:$0x99999180]
    %33 = vrot.lane.b32.xlu0 %v32, 80
    %v34 = vpop.permute.xlu0 %33
    %vm35 = vcmask 130048
    %s36 = scalar_lea.vmem [#allocation0], 3
    %37 = vst.msk [vmem:[%s36] ss:$8 sm:$0xf] %vm35, %v34
    %v38 = vld.sshfl [vmem:[#allocation2] sm:$0xff pattern:$0x99999180]
    %39 = vrot.lane.b32.xlu0 %v38, 64
    %v40 = vpop.permute.xlu0 %39
    %vm41 = vcmask 130048
    %s42 = scalar_lea.vmem [#allocation0], 4
    %43 = vst.msk [vmem:[%s42] ss:$8 sm:$0xf] %vm41, %v40
    %v44 = vld.sshfl [vmem:[#allocation2] sm:$0xff pattern:$0x99999180]
    %45 = vrot.lane.b32.xlu0 %v44, 48
    %v46 = vpop.permute.xlu0 %45
    %vm47 = vcmask 130048
    %s48 = scalar_lea.vmem [#allocation0], 5
    %49 = vst.msk [vmem:[%s48] ss:$8 sm:$0xf] %vm47, %v46
    %v50 = vld.sshfl [vmem:[#allocation2] sm:$0xff pattern:$0x99999180]
    %51 = vrot.lane.b32.xlu0 %v50, 32
    %v52 = vpop.permute.xlu0 %51
    %vm53 = vcmask 130048
    %s54 = scalar_lea.vmem [#allocation0], 6
    %55 = vst.msk [vmem:[%s54] ss:$8 sm:$0xf] %vm53, %v52
    %v56 = vld.sshfl [vmem:[#allocation2] sm:$0xff pattern:$0x99999180]
    %57 = vrot.lane.b32.xlu0 %v56, 16
    %v58 = vpop.permute.xlu0 %57
    %vm59 = vcmask 130048
    %s60 = scalar_lea.vmem [#allocation0], 7
    %61 = vst.msk [vmem:[%s60] ss:$8 sm:$0xf] %vm59, %v58
    %s63 = ssub.s32 512, 512
    %64 = vsyncadd [#allocation1], %s63
    %s66 = sshll.u32 [#allocation0], 4
    %s67 = int_to_ptr.vmem [resolvable:$true] %s66
    %69 = dma.vmem_to_hbm [thread:$0]  %s67, 512, %s1, [#allocation1]
    %70 = dma.done [#allocation1], 512
    %71 = vsyncpa [#allocation1], 1

// kernel: squeeze.11
$region0: #{squeeze.11}
  %s0 = inlined_call_operand.vmem [shape: f32[2,256], index: 0, kind: input, shape index: {}]
  %s1 = inlined_call_operand.vmem [shape: f32[2,1,16,16], index: 1, kind: output, shape index: {}]
  $region1: #{squeeze.11} parent=0
    #allocation0 [shape = 'u8[8192]{0}', space=vmem, size = 0x2000, scoped, tag = 'scoped mem for input reshape']
    %s3 = sshll.u32 1, 2
    %s4 = ssub.s32 %s3, 1
    %s5 = scalar_lea.vmem %s0, 2
    %v6 = vld [vmem:[%s5] sm:%s4]
    %s7 = scalar_lea.vmem [#allocation0], 8
    %8 = vst [vmem:[%s7] sm:%s4] %v6
    %v9 = vld [vmem:[%s0] sm:%s4]
    %10 = vst [vmem:[#allocation0] sm:%s4] %v9
    %v11 = vld [vmem:[#allocation0] sm:$0x3]
    %vm12 = vcmask 130048
    %13 = vst.msk [vmem:[%s1] ss:$16 sm:$0x3] %vm12, %v11
    %s14 = scalar_lea.vmem [#allocation0], 8
    %v15 = vld [vmem:[%s14] sm:$0x3]
    %vm16 = vcmask 130048
    %s17 = scalar_lea.vmem %s1, 8
    %18 = vst.msk [vmem:[%s17] ss:$16 sm:$0x3] %vm16, %v15
    %v19 = vld.sshfl [vmem:[#allocation0] sm:$0xff pattern:$0x99999180]
    %20 = vrot.lane.b32.xlu0 %v19, 112
    %v21 = vpop.permute.xlu0 %20
    %vm22 = vcmask 130048
    %s23 = scalar_lea.vmem %s1, 1
    %24 = vst.msk [vmem:[%s23] ss:$8 sm:$0xf] %vm22, %v21
    %v25 = vld.sshfl [vmem:[#allocation0] sm:$0xff pattern:$0x99999180]
    %26 = vrot.lane.b32.xlu0 %v25, 96
    %v27 = vpop.permute.xlu0 %26
    %vm28 = vcmask 130048
    %s29 = scalar_lea.vmem %s1, 2
    %30 = vst.msk [vmem:[%s29] ss:$8 sm:$0xf] %vm28, %v27
    %v31 = vld.sshfl [vmem:[#allocation0] sm:$0xff pattern:$0x99999180]
    %32 = vrot.lane.b32.xlu0 %v31, 80
    %v33 = vpop.permute.xlu0 %32
    %vm34 = vcmask 130048
    %s35 = scalar_lea.vmem %s1, 3
    %36 = vst.msk [vmem:[%s35] ss:$8 sm:$0xf] %vm34, %v33
    %v37 = vld.sshfl [vmem:[#allocation0] sm:$0xff pattern:$0x99999180]
    %38 = vrot.lane.b32.xlu0 %v37, 64
    %v39 = vpop.permute.xlu0 %38
    %vm40 = vcmask 130048
    %s41 = scalar_lea.vmem %s1, 4
    %42 = vst.msk [vmem:[%s41] ss:$8 sm:$0xf] %vm40, %v39
    %v43 = vld.sshfl [vmem:[#allocation0] sm:$0xff pattern:$0x99999180]
    %44 = vrot.lane.b32.xlu0 %v43, 48
    %v45 = vpop.permute.xlu0 %44
    %vm46 = vcmask 130048
    %s47 = scalar_lea.vmem %s1, 5
    %48 = vst.msk [vmem:[%s47] ss:$8 sm:$0xf] %vm46, %v45
    %v49 = vld.sshfl [vmem:[#allocation0] sm:$0xff pattern:$0x99999180]
    %50 = vrot.lane.b32.xlu0 %v49, 32
    %v51 = vpop.permute.xlu0 %50
    %vm52 = vcmask 130048
    %s53 = scalar_lea.vmem %s1, 6
    %54 = vst.msk [vmem:[%s53] ss:$8 sm:$0xf] %vm52, %v51
    %v55 = vld.sshfl [vmem:[#allocation0] sm:$0xff pattern:$0x99999180]
    %56 = vrot.lane.b32.xlu0 %v55, 16
    %v57 = vpop.permute.xlu0 %56
    %vm58 = vcmask 130048
    %s59 = scalar_lea.vmem %s1, 7
    %60 = vst.msk [vmem:[%s59] ss:$8 sm:$0xf] %vm58, %v57

// kernel: network_forward.2
$region0: #{network_forward.2}
  #allocation0 [shape = 'u32[]', space=smem, size = 0x4, offset = 0x4, fixed_abs, tag = 'smem constant byte address 0x4 - core index']
  #allocation1 [shape = 'u32[144,128]{1,0:T(1,128)}', space=vmem, size = 0x12000, scoped, tag = 'internal scratch']
  %s0 = inlined_call_operand.vmem [shape: f32[2], index: 0, kind: input, shape index: {}]
  %s1 = inlined_call_operand.vmem [shape: f32[2,1], index: 1, kind: input, shape index: {}]
  %s2 = inlined_call_operand.vmem [shape: f32[1,128], index: 2, kind: input, shape index: {}]
  %s3 = inlined_call_operand.vmem [shape: f32[1,128], index: 3, kind: input, shape index: {}]
  %s4 = inlined_call_operand.vmem [shape: f32[128,128], index: 4, kind: input, shape index: {}]
  %s5 = inlined_call_operand.vmem [shape: f32[1,128], index: 5, kind: input, shape index: {}]
  %s6 = inlined_call_operand.vmem [shape: f32[128,6], index: 6, kind: input, shape index: {}]
  %s7 = inlined_call_operand.vmem [shape: f32[1,6], index: 7, kind: input, shape index: {}]
  %s8 = inlined_call_operand.vmem [shape: f32[2,6], index: 8, kind: output, shape index: {}]
  %s9 = sld [smem:[#allocation0]]
  $region46: #{network_forward.2} parent=0
    _
  %s11 = ssub.s32 1, %s9
  %s12 = scalar_select 0, %s11, %s9
  $region1: #{network_forward.2} parent=0
    #allocation2 [shape = 'u8[512]{0}', space=smem, size = 0x200, scoped, tag = 'input window, operand 0, single buffered']
    #allocation3 [shape = 's32[1]{0}', space=sflag, size = 0x4, scoped, tag = 'scoped memory for network_forward.2']
    %13 = vsyncpa [#allocation3], 0
    // Predicated region
    $region2: #{network_forward.2} parent=1 // pred_check
      _
    $region3: #{network_forward.2} parent=1 // pred_check_branch
      %15 = sbr.rel (0) target = $region5
    $region4: #{network_forward.2} parent=1 // pred_region
      %s17 = ssub.s32 16, 16
      %18 = vsyncadd [#allocation3], %s17
      %s20 = sshll.u32 %s0, 4
      %s21 = int_to_ptr.vmem [resolvable:$true] %s20
      %23 = dma.vmem_to_smem %s21, 16, [#allocation2], [#allocation3]
    $region5: #{network_forward.2} parent=1 // pred_fallthru
      _
    // Predicated region
    $region6: #{network_forward.2} parent=1 // pred_check
      _
    $region7: #{network_forward.2} parent=1 // pred_check_branch
      %25 = sbr.rel (0) target = $region9
    $region8: #{network_forward.2} parent=1 // pred_region
      _
    $region9: #{network_forward.2} parent=1 // pred_fallthru
      _
    // Predicated region
    $region10: #{network_forward.2} parent=1 // pred_check
      _
    $region11: #{network_forward.2} parent=1 // pred_check_branch
      %27 = sbr.rel (0) target = $region13
    $region12: #{network_forward.2} parent=1 // pred_region
      _
    $region13: #{network_forward.2} parent=1 // pred_fallthru
      _
    // Predicated region
    $region14: #{network_forward.2} parent=1 // pred_check
      _
    $region15: #{network_forward.2} parent=1 // pred_check_branch
      %29 = sbr.rel (0) target = $region17
    $region16: #{network_forward.2} parent=1 // pred_region
      _
    $region17: #{network_forward.2} parent=1 // pred_fallthru
      _
    // Predicated region
    $region18: #{network_forward.2} parent=1 // pred_check
      _
    $region19: #{network_forward.2} parent=1 // pred_check_branch
      %31 = sbr.rel (0) target = $region21
    $region20: #{network_forward.2} parent=1 // pred_region
      _
    $region21: #{network_forward.2} parent=1 // pred_fallthru
      _
    // Predicated region
    $region22: #{network_forward.2} parent=1 // pred_check
      _
    $region23: #{network_forward.2} parent=1 // pred_check_branch
      %33 = sbr.rel (0) target = $region25
    $region24: #{network_forward.2} parent=1 // pred_region
      _
    $region25: #{network_forward.2} parent=1 // pred_fallthru
      _
    // Predicated region
    $region26: #{network_forward.2} parent=1 // pred_check
      _
    $region27: #{network_forward.2} parent=1 // pred_check_branch
      %35 = sbr.rel (0) target = $region29
    $region28: #{network_forward.2} parent=1 // pred_region
      _
    $region29: #{network_forward.2} parent=1 // pred_fallthru
      _
    // Predicated region
    $region30: #{network_forward.2} parent=1 // pred_check
      _
    $region31: #{network_forward.2} parent=1 // pred_check_branch
      %37 = sbr.rel (0) target = $region33
    $region32: #{network_forward.2} parent=1 // pred_region
      _
    $region33: #{network_forward.2} parent=1 // pred_fallthru
      _
    // Predicated region
    $region34: #{network_forward.2} parent=1 // pred_check
      _
    $region35: #{network_forward.2} parent=1 // pred_check_branch
      %39 = sbr.rel (0) target = $region37
    $region36: #{network_forward.2} parent=1 // pred_region
      %40 = dma.done [#allocation3], 16
    $region37: #{network_forward.2} parent=1 // pred_fallthru
      _
    %41 = sfence
    %s42 = sld [smem:[#allocation2]]
    %s43 = sld [smem:[#allocation2 + $0x1]]
    %v44 = vld [vmem:[%s1] sm:$0x3]
    %v45 = vld [vmem:[%s2] sm:$0x1]
    %47 = vset.pattern.permute.xlu0 0
    %48 = vperm.xlu0 %47, %v44
    %v49 = vpop.permute.xlu0 %48
    %v52 = vlaneseq
    %v53 = vshrl.u32 %v52, 7
    %v54 = vsub.s32 0, %v53
    %v55 = vrot.slane %v45, %v54
    %v57 = vmul.f32 %v49, %v55
    %v58 = vld [vmem:[%s3] sm:$0x1]
    %v60 = vlaneseq
    %v61 = vshrl.u32 %v60, 7
    %v62 = vsub.s32 0, %v61
    %v63 = vrot.slane %v58, %v62
    %v65 = vadd.f32 %v57, %v63
    %vm66 = vcmp.gt.f32.partialorder %v65, 0.0
    %v67 = vstv %s42
    %v68 = vmul.f32 %v67, %v65
    %v69 = vsel %vm66, %v65, %v68
    %v70 = vld [vmem:[%s4] sm:$0xff]
    %v71 = vld [vmem:[%s4 + $0x8] sm:$0xff]
    %v72 = vld [vmem:[%s4 + $0x10] sm:$0xff]
    %v73 = vld [vmem:[%s4 + $0x18] sm:$0xff]
    %v74 = vld [vmem:[%s4 + $0x20] sm:$0xff]
    %v75 = vld [vmem:[%s4 + $0x28] sm:$0xff]
    %v76 = vld [vmem:[%s4 + $0x30] sm:$0xff]
    %v77 = vld [vmem:[%s4 + $0x38] sm:$0xff]
    %v78 = vld [vmem:[%s4 + $0x40] sm:$0xff]
    %v79 = vld [vmem:[%s4 + $0x48] sm:$0xff]
    %v80 = vld [vmem:[%s4 + $0x50] sm:$0xff]
    %v81 = vld [vmem:[%s4 + $0x58] sm:$0xff]
    %v82 = vld [vmem:[%s4 + $0x60] sm:$0xff]
    %v83 = vld [vmem:[%s4 + $0x68] sm:$0xff]
    %v84 = vld [vmem:[%s4 + $0x70] sm:$0xff]
    %v85 = vld [vmem:[%s4 + $0x78] sm:$0xff]
    %v86 = vld [vmem:[%s5] sm:$0x1]
    %v88 = vlaneseq
    %v89 = vshrl.u32 %v88, 7
    %v90 = vsub.s32 0, %v89
    %v91 = vrot.slane %v86, %v90
    %93 = vmatprep.subr.mxu0 0.0
    %94 = vmatpush1.msra.mxu0 %v85
    %95 = vmatprep.subr.mxu0 0.0
    %96 = vmatpush1.msra.mxu0 %v84
    %97 = vmatprep.subr.mxu0 0.0
    %98 = vmatpush1.msra.mxu0 %v83
    %99 = vmatprep.subr.mxu0 0.0
    %100 = vmatpush1.msra.mxu0 %v82
    %101 = vmatprep.subr.mxu0 0.0
    %102 = vmatpush1.msra.mxu0 %v81
    %103 = vmatprep.subr.mxu0 0.0
    %104 = vmatpush1.msra.mxu0 %v80
    %105 = vmatprep.subr.mxu0 0.0
    %106 = vmatpush1.msra.mxu0 %v79
    %107 = vmatprep.subr.mxu0 0.0
    %108 = vmatpush1.msra.mxu0 %v78
    %109 = vmatprep.subr.mxu0 0.0
    %110 = vmatpush1.msra.mxu0 %v77
    %111 = vmatprep.subr.mxu0 0.0
    %112 = vmatpush1.msra.mxu0 %v76
    %113 = vmatprep.subr.mxu0 0.0
    %114 = vmatpush1.msra.mxu0 %v75
    %115 = vmatprep.subr.mxu0 0.0
    %116 = vmatpush1.msra.mxu0 %v74
    %117 = vmatprep.subr.mxu0 0.0
    %118 = vmatpush1.msra.mxu0 %v73
    %119 = vmatprep.subr.mxu0 0.0
    %120 = vmatpush1.msra.mxu0 %v72
    %121 = vmatprep.subr.mxu0 0.0
    %122 = vmatpush1.msra.mxu0 %v71
    %123 = vmatprep.subr.mxu0 0.0
    %124 = vmatpush1.msra.mxu0 %v70
    %125 = vmatprep.subr.mxu0 0.0
    %126 = vmatpush2.msra.mxu0 0.0
    %127 = vmatprep.subr.mxu0 0.0
    %128 = vmatpush2.msra.mxu0 0.0
    %129 = vmatprep.subr.mxu0 0.0
    %130 = vmatpush2.msra.mxu0 0.0
    %131 = vmatprep.subr.mxu0 0.0
    %132 = vmatpush2.msra.mxu0 0.0
    %133 = vmatprep.subr.mxu0 0.0
    %134 = vmatpush2.msra.mxu0 0.0
    %135 = vmatprep.subr.mxu0 0.0
    %136 = vmatpush2.msra.mxu0 0.0
    %137 = vmatprep.subr.mxu0 0.0
    %138 = vmatpush2.msra.mxu0 0.0
    %139 = vmatprep.subr.mxu0 0.0
    %140 = vmatpush2.msra.mxu0 0.0
    %141 = vmatprep.subr.mxu0 0.0
    %142 = vmatpush2.msra.mxu0 0.0
    %143 = vmatprep.subr.mxu0 0.0
    %144 = vmatpush2.msra.mxu0 0.0
    %145 = vmatprep.subr.mxu0 0.0
    %146 = vmatpush2.msra.mxu0 0.0
    %147 = vmatprep.subr.mxu0 0.0
    %148 = vmatpush2.msra.mxu0 0.0
    %149 = vmatprep.subr.mxu0 0.0
    %150 = vmatpush2.msra.mxu0 0.0
    %151 = vmatprep.subr.mxu0 0.0
    %152 = vmatpush2.msra.mxu0 0.0
    %153 = vmatprep.subr.mxu0 0.0
    %154 = vmatpush2.msra.mxu0 0.0
    %155 = vmatprep.subr.mxu0 0.0
    %156 = vmatpush2.msra.mxu0 0.0
    %157 = vmatprep.mubr.f32.mxu0 0.0
    %158 = vmatmul.mubr.f32.gmra.mxu0 %v69
    %v159 = vpop.f32.mrf.mxu0
    %v160 = vadd.f32 %v91, %v159
    %v161 = vpop.f32.mrf.mxu0
    %162 = vdwg.mxu0
    %vm163 = vcmp.gt.f32.partialorder %v160, 0.0
    %v164 = vstv %s43
    %v165 = vmul.f32 %v164, %v160
    %v166 = vsel %vm163, %v160, %v165
    %v167 = vld [vmem:[%s6] sm:$0xff]
    %v168 = vld [vmem:[%s6 + $0x8] sm:$0xff]
    %v169 = vld [vmem:[%s6 + $0x10] sm:$0xff]
    %v170 = vld [vmem:[%s6 + $0x18] sm:$0xff]
    %v171 = vld [vmem:[%s6 + $0x20] sm:$0xff]
    %v172 = vld [vmem:[%s6 + $0x28] sm:$0xff]
    %v173 = vld [vmem:[%s6 + $0x30] sm:$0xff]
    %v174 = vld [vmem:[%s6 + $0x38] sm:$0xff]
    %v175 = vld [vmem:[%s6 + $0x40] sm:$0xff]
    %v176 = vld [vmem:[%s6 + $0x48] sm:$0xff]
    %v177 = vld [vmem:[%s6 + $0x50] sm:$0xff]
    %v178 = vld [vmem:[%s6 + $0x58] sm:$0xff]
    %v179 = vld [vmem:[%s6 + $0x60] sm:$0xff]
    %v180 = vld [vmem:[%s6 + $0x68] sm:$0xff]
    %v181 = vld [vmem:[%s6 + $0x70] sm:$0xff]
    %v182 = vld [vmem:[%s6 + $0x78] sm:$0xff]
    %v183 = vld [vmem:[%s7] sm:$0x1]
    %v185 = vlaneseq
    %v186 = vshrl.u32 %v185, 7
    %v187 = vsub.s32 0, %v186
    %v188 = vrot.slane %v183, %v187
    %190 = vmatprep.subr.mxu0 0.0
    %191 = vmatpush1.msra.mxu0 %v182
    %192 = vmatprep.subr.mxu0 0.0
    %193 = vmatpush1.msra.mxu0 %v181
    %194 = vmatprep.subr.mxu0 0.0
    %195 = vmatpush1.msra.mxu0 %v180
    %196 = vmatprep.subr.mxu0 0.0
    %197 = vmatpush1.msra.mxu0 %v179
    %198 = vmatprep.subr.mxu0 0.0
    %199 = vmatpush1.msra.mxu0 %v178
    %200 = vmatprep.subr.mxu0 0.0
    %201 = vmatpush1.msra.mxu0 %v177
    %202 = vmatprep.subr.mxu0 0.0
    %203 = vmatpush1.msra.mxu0 %v176
    %204 = vmatprep.subr.mxu0 0.0
    %205 = vmatpush1.msra.mxu0 %v175
    %206 = vmatprep.subr.mxu0 0.0
    %207 = vmatpush1.msra.mxu0 %v174
    %208 = vmatprep.subr.mxu0 0.0
    %209 = vmatpush1.msra.mxu0 %v173
    %210 = vmatprep.subr.mxu0 0.0
    %211 = vmatpush1.msra.mxu0 %v172
    %212 = vmatprep.subr.mxu0 0.0
    %213 = vmatpush1.msra.mxu0 %v171
    %214 = vmatprep.subr.mxu0 0.0
    %215 = vmatpush1.msra.mxu0 %v170
    %216 = vmatprep.subr.mxu0 0.0
    %217 = vmatpush1.msra.mxu0 %v169
    %218 = vmatprep.subr.mxu0 0.0
    %219 = vmatpush1.msra.mxu0 %v168
    %220 = vmatprep.subr.mxu0 0.0
    %221 = vmatpush1.msra.mxu0 %v167
    %222 = vmatprep.subr.mxu0 0.0
    %223 = vmatpush2.msra.mxu0 0.0
    %224 = vmatprep.subr.mxu0 0.0
    %225 = vmatpush2.msra.mxu0 0.0
    %226 = vmatprep.subr.mxu0 0.0
    %227 = vmatpush2.msra.mxu0 0.0
    %228 = vmatprep.subr.mxu0 0.0
    %229 = vmatpush2.msra.mxu0 0.0
    %230 = vmatprep.subr.mxu0 0.0
    %231 = vmatpush2.msra.mxu0 0.0
    %232 = vmatprep.subr.mxu0 0.0
    %233 = vmatpush2.msra.mxu0 0.0
    %234 = vmatprep.subr.mxu0 0.0
    %235 = vmatpush2.msra.mxu0 0.0
    %236 = vmatprep.subr.mxu0 0.0
    %237 = vmatpush2.msra.mxu0 0.0
    %238 = vmatprep.subr.mxu0 0.0
    %239 = vmatpush2.msra.mxu0 0.0
    %240 = vmatprep.subr.mxu0 0.0
    %241 = vmatpush2.msra.mxu0 0.0
    %242 = vmatprep.subr.mxu0 0.0
    %243 = vmatpush2.msra.mxu0 0.0
    %244 = vmatprep.subr.mxu0 0.0
    %245 = vmatpush2.msra.mxu0 0.0
    %246 = vmatprep.subr.mxu0 0.0
    %247 = vmatpush2.msra.mxu0 0.0
    %248 = vmatprep.subr.mxu0 0.0
    %249 = vmatpush2.msra.mxu0 0.0
    %250 = vmatprep.subr.mxu0 0.0
    %251 = vmatpush2.msra.mxu0 0.0
    %252 = vmatprep.subr.mxu0 0.0
    %253 = vmatpush2.msra.mxu0 0.0
    %254 = vmatprep.mubr.f32.mxu0 0.0
    %255 = vmatmul.mubr.f32.gmra.mxu0 %v166
    %v256 = vpop.f32.mrf.mxu0
    %v257 = vadd.f32 %v188, %v256
    %v258 = vpop.f32.mrf.mxu0
    %259 = vdwg.mxu0
    %v260 = vsub.f32 0.0, %v257
    %v261 = vmul.f32 %v260, 1.442695
    %v262 = vpow.pop %v261
    %v263 = vadd.f32 %v262, 1.0
    %v264 = vrcp.pop %v263
    %vm265 = vcmask 41984
    %266 = vst.msk [vmem:[%s8] sm:$0x3] %vm265, %v264
    // Predicated region
    $region38: #{network_forward.2} parent=1 // pred_check
      _
    $region39: #{network_forward.2} parent=1 // pred_check_branch
      %268 = sbr.rel (0) target = $region41
    $region40: #{network_forward.2} parent=1 // pred_region
      _
    $region41: #{network_forward.2} parent=1 // pred_fallthru
      _
    // Predicated region
    $region42: #{network_forward.2} parent=1 // pred_check
      _
    $region43: #{network_forward.2} parent=1 // pred_check_branch
      %270 = sbr.rel (0) target = $region45
    $region44: #{network_forward.2} parent=1 // pred_region
      _
    $region45: #{network_forward.2} parent=1 // pred_fallthru
      _
    %271 = vsyncpa [#allocation3], 1

// kernel: network_forward.3
$region0: #{network_forward.3}
  #allocation0 [shape = 'u32[]', space=smem, size = 0x4, offset = 0x4, fixed_abs, tag = 'smem constant byte address 0x4 - core index']
  #allocation1 [shape = 'u32[144,128]{1,0:T(1,128)}', space=vmem, size = 0x12000, scoped, tag = 'internal scratch']
  #allocation2 [shape = 'f32[1,256]{1,0:T(1,128)}', space=vmem, size = 0x400, scoped, tag = 'scratch operand']
  #allocation3 [shape = 'f32[2,256]{1,0:T(2,128)}', space=vmem, size = 0x800, scoped, tag = 'scratch operand']
  %s0 = inlined_call_operand.vmem [shape: f32[2,6], index: 0, kind: input, shape index: {}]
  %s1 = inlined_call_operand.vmem [shape: f32[2,6], index: 1, kind: input, shape index: {}]
  %s2 = inlined_call_operand.vmem [shape: f32[11,256], index: 2, kind: input, shape index: {}]
  %s3 = inlined_call_operand.vmem [shape: f32[2,1,256], index: 3, kind: input, shape index: {}]
  %s4 = inlined_call_operand.vmem [shape: f32[2,2,256], index: 4, kind: input, shape index: {}]
  %s5 = inlined_call_operand.vmem [shape: f32[2,2,256], index: 5, kind: input, shape index: {}]
  %s6 = inlined_call_operand.vmem [shape: bf16[2,6,18], index: 6, kind: input, shape index: {}]
  %s7 = inlined_call_operand.vmem [shape: f32[2,6,1], index: 7, kind: input, shape index: {}]
  %s8 = inlined_call_operand.vmem [shape: bf16[2,1,54], index: 8, kind: input, shape index: {}]
  %s9 = inlined_call_operand.vmem [shape: f32[2,1,1], index: 9, kind: input, shape index: {}]
  %s10 = inlined_call_operand.vmem [shape: bf16[2,32,18], index: 10, kind: input, shape index: {}]
  %s11 = inlined_call_operand.vmem [shape: f32[2,32,1], index: 11, kind: input, shape index: {}]
  %s12 = inlined_call_operand.vmem [shape: bf16[2,4,32,288], index: 12, kind: input, shape index: {}]
  %s13 = inlined_call_operand.vmem [shape: f32[2,4,32,1], index: 13, kind: input, shape index: {}]
  %s14 = inlined_call_operand.vmem [shape: bf16[2,2,288], index: 14, kind: input, shape index: {}]
  %s15 = inlined_call_operand.vmem [shape: f32[2,2,1], index: 15, kind: input, shape index: {}]
  %s16 = inlined_call_operand.vmem [shape: f32[2,2,1,256], index: 16, kind: output, shape index: {}]
  %s17 = sld [smem:[#allocation0]]
  $region109: #{network_forward.3} parent=0
    _
  %s19 = ssub.s32 1, %s17
  %s20 = scalar_select 0, %s19, %s17
  $region1: #{network_forward.3} parent=0
    #allocation4 [shape = 'u8[1024]{0}', space=smem, size = 0x400, scoped, tag = 'input window, operand 0, single buffered']
    #allocation5 [shape = 's32[2]{0}', space=sflag, size = 0x8, scoped, tag = 'scoped memory for network_forward.3']
    #allocation6 [shape = 'u8[1024]{0}', space=smem, size = 0x400, scoped, tag = 'input window, operand 1, single buffered']
    #allocation7 [shape = 's32[1]{0}', space=sflag, size = 0x4, scoped, tag = 'scoped memory for network_forward.3']
    %21 = vsyncpa [#allocation5], 0
    %22 = vsyncpa [#allocation7], 0
    loop: start=0, step=1, limit=6
    $region2: #{network_forward.3} parent=1 // loop_pre_header
      _
    $region3: #{network_forward.3} parent=1 // loop_header
      %s24 = sphi 0, %s28
      %p25 = scmp.ge.s32.totalorder %s24, 6
      %s31 = sphi 0, %s43
      %s32 = sphi 0, %s39
      %s33 = sphi 0, %s31
      %s34 = sphi 0, %s32
      %s35 = sphi 0, %s33
      %s36 = sphi 0, %s34
      %s44 = sphi 0, %s44
      %s46 = sphi 0, %s44
      %s47 = sphi 0, %s46
      %s61 = sphi 0, %s47
      %s65 = sphi 0, %s65
      %s67 = sphi 0, %s65
      %s68 = sphi 0, %s67
      %s82 = sphi 0, %s68
      %s86 = sphi 0, %s86
      %s88 = sphi 0, %s86
      %s89 = sphi 0, %s88
      %s103 = sphi 0, %s89
      %s109 = sphi 0, %s111
      %s112 = sphi 0, %s109
      %s113 = sphi 0, %s112
      %s129 = sphi 0, %s113
      %s135 = sphi 0, %s137
      %s138 = sphi 0, %s135
      %s139 = sphi 0, %s138
      %s155 = sphi 0, %s139
      %s161 = sphi 0, %s163
      %s164 = sphi 0, %s161
      %s165 = sphi 0, %s164
      %s181 = sphi 0, %s165
      %s187 = sphi 0, %s189
      %s190 = sphi 0, %s187
      %s191 = sphi 0, %s190
      %s207 = sphi 0, %s191
      %s213 = sphi 0, %s215
      %s216 = sphi 0, %s213
      %s217 = sphi 0, %s216
      %s233 = sphi 0, %s217
      %s239 = sphi 0, %s241
      %s242 = sphi 0, %s239
      %s243 = sphi 0, %s242
      %s259 = sphi 0, %s243
      %s265 = sphi 0, %s267
      %s268 = sphi 0, %s265
      %s269 = sphi 0, %s268
      %s285 = sphi 0, %s269
      %s291 = sphi 0, %s293
      %s294 = sphi 0, %s291
      %s295 = sphi 0, %s294
      %s311 = sphi 0, %s295
      %s317 = sphi 0, %s319
      %s320 = sphi 0, %s317
      %s321 = sphi 0, %s320
      %s337 = sphi 0, %s321
      %s343 = sphi 0, %s345
      %s346 = sphi 0, %s343
      %s347 = sphi 0, %s346
      %s363 = sphi 0, %s347
      %s369 = sphi 0, %s371
      %s372 = sphi 0, %s369
      %s373 = sphi 0, %s372
      %s389 = sphi 0, %s373
      %s395 = sphi 0, %s397
      %s398 = sphi 0, %s395
      %s399 = sphi 0, %s398
      %s415 = sphi 0, %s399
      %s421 = sphi 0, %s423
      %s424 = sphi 0, %s421
      %s425 = sphi 0, %s424
      %s441 = sphi 0, %s425
      %s449 = sphi 0, %s451
      %s452 = sphi 0, %s449
      %s453 = sphi 0, %s452
      %s469 = sphi 0, %s453
    $region4: #{network_forward.3} parent=1 // loop_header_branch
      %27 = sbr.rel (%p25) target = $region8
    $region5: #{network_forward.3} parent=1 // loop_body
      %s29 = ssub.s32 %s24, 1
      %s30 = ssub.s32 %s24, 2
      %s37 = sadd.s32 1, %s32
      %p38 = scmp.ge.s32.totalorder %s37, 2
      %s39 = scalar_select %p38, 0, %s37
      %s40 = sadd.s32 1, %s31
      %s41 = scalar_select %p38, %s40, %s31
      %p42 = scmp.ge.s32.totalorder %s41, 2
      %s43 = scalar_select %p42, 0, %s41
      %s45 = sadd.s32 %s44, 1
      %p48 = scmp.eq.s32.totalorder %s24, 3
      %p49 = scmp.ne.s32.totalorder %s44, %s46
      %p50 = scmp.eq.s32.totalorder %s24, 0
      %p51 = por %p49, %p50
      %p52 = scmp.ne.s32.totalorder %s44, %s46
      %p53 = scmp.eq.s32.totalorder %s29, 3
      %p54 = por %p52, %p53
      %p55 = scmp.ne.s32.totalorder %s46, %s47
      %p56 = scmp.eq.s32.totalorder %s29, 0
      %p57 = por %p55, %p56
      %p58 = scmp.ne.s32.totalorder %s46, %s47
      %p59 = scmp.eq.s32.totalorder %s30, 3
      %p60 = por %p58, %p59
      %p62 = scmp.ne.s32.totalorder %s47, %s61
      %p63 = scmp.eq.s32.totalorder %s30, 0
      %p64 = por %p62, %p63
      %s66 = sadd.s32 %s65, 1
      %p69 = scmp.eq.s32.totalorder %s24, 3
      %p70 = scmp.ne.s32.totalorder %s65, %s67
      %p71 = scmp.eq.s32.totalorder %s24, 0
      %p72 = por %p70, %p71
      %p73 = scmp.ne.s32.totalorder %s65, %s67
      %p74 = scmp.eq.s32.totalorder %s29, 3
      %p75 = por %p73, %p74
      %p76 = scmp.ne.s32.totalorder %s67, %s68
      %p77 = scmp.eq.s32.totalorder %s29, 0
      %p78 = por %p76, %p77
      %p79 = scmp.ne.s32.totalorder %s67, %s68
      %p80 = scmp.eq.s32.totalorder %s30, 3
      %p81 = por %p79, %p80
      %p83 = scmp.ne.s32.totalorder %s68, %s82
      %p84 = scmp.eq.s32.totalorder %s30, 0
      %p85 = por %p83, %p84
      %s87 = sadd.s32 %s86, 1
      %p90 = scmp.eq.s32.totalorder %s24, 3
      %p91 = scmp.ne.s32.totalorder %s86, %s88
      %p92 = scmp.eq.s32.totalorder %s24, 0
      %p93 = por %p91, %p92
      %p94 = scmp.ne.s32.totalorder %s86, %s88
      %p95 = scmp.eq.s32.totalorder %s29, 3
      %p96 = por %p94, %p95
      %p97 = scmp.ne.s32.totalorder %s88, %s89
      %p98 = scmp.eq.s32.totalorder %s29, 0
      %p99 = por %p97, %p98
      %p100 = scmp.ne.s32.totalorder %s88, %s89
      %p101 = scmp.eq.s32.totalorder %s30, 3
      %p102 = por %p100, %p101
      %p104 = scmp.ne.s32.totalorder %s89, %s103
      %p105 = scmp.eq.s32.totalorder %s30, 0
      %p106 = por %p104, %p105
      %s107 = ssub.s32 %s31, %s43
      %p108 = scmp.eq.s32.totalorder %s107, 0
      %s110 = sadd.s32 %s109, 1
      %s111 = scalar_select %p108, %s109, %s110
      %p114 = pneg %p108
      %p115 = scmp.eq.s32.totalorder %s24, 3
      %p116 = por %p114, %p115
      %p117 = scmp.ne.s32.totalorder %s109, %s112
      %p118 = scmp.eq.s32.totalorder %s24, 0
      %p119 = por %p117, %p118
      %p120 = scmp.ne.s32.totalorder %s109, %s112
      %p121 = scmp.eq.s32.totalorder %s29, 3
      %p122 = por %p120, %p121
      %p123 = scmp.ne.s32.totalorder %s112, %s113
      %p124 = scmp.eq.s32.totalorder %s29, 0
      %p125 = por %p123, %p124
      %p126 = scmp.ne.s32.totalorder %s112, %s113
      %p127 = scmp.eq.s32.totalorder %s30, 3
      %p128 = por %p126, %p127
      %p130 = scmp.ne.s32.totalorder %s113, %s129
      %p131 = scmp.eq.s32.totalorder %s30, 0
      %p132 = por %p130, %p131
      %s133 = ssub.s32 %s31, %s43
      %p134 = scmp.eq.s32.totalorder %s133, 0
      %s136 = sadd.s32 %s135, 1
      %s137 = scalar_select %p134, %s135, %s136
      %p140 = pneg %p134
      %p141 = scmp.eq.s32.totalorder %s24, 3
      %p142 = por %p140, %p141
      %p143 = scmp.ne.s32.totalorder %s135, %s138
      %p144 = scmp.eq.s32.totalorder %s24, 0
      %p145 = por %p143, %p144
      %p146 = scmp.ne.s32.totalorder %s135, %s138
      %p147 = scmp.eq.s32.totalorder %s29, 3
      %p148 = por %p146, %p147
      %p149 = scmp.ne.s32.totalorder %s138, %s139
      %p150 = scmp.eq.s32.totalorder %s29, 0
      %p151 = por %p149, %p150
      %p152 = scmp.ne.s32.totalorder %s138, %s139
      %p153 = scmp.eq.s32.totalorder %s30, 3
      %p154 = por %p152, %p153
      %p156 = scmp.ne.s32.totalorder %s139, %s155
      %p157 = scmp.eq.s32.totalorder %s30, 0
      %p158 = por %p156, %p157
      %s159 = ssub.s32 %s31, %s43
      %p160 = scmp.eq.s32.totalorder %s159, 0
      %s162 = sadd.s32 %s161, 1
      %s163 = scalar_select %p160, %s161, %s162
      %p166 = pneg %p160
      %p167 = scmp.eq.s32.totalorder %s24, 3
      %p168 = por %p166, %p167
      %p169 = scmp.ne.s32.totalorder %s161, %s164
      %p170 = scmp.eq.s32.totalorder %s24, 0
      %p171 = por %p169, %p170
      %p172 = scmp.ne.s32.totalorder %s161, %s164
      %p173 = scmp.eq.s32.totalorder %s29, 3
      %p174 = por %p172, %p173
      %p175 = scmp.ne.s32.totalorder %s164, %s165
      %p176 = scmp.eq.s32.totalorder %s29, 0
      %p177 = por %p175, %p176
      %p178 = scmp.ne.s32.totalorder %s164, %s165
      %p179 = scmp.eq.s32.totalorder %s30, 3
      %p180 = por %p178, %p179
      %p182 = scmp.ne.s32.totalorder %s165, %s181
      %p183 = scmp.eq.s32.totalorder %s30, 0
      %p184 = por %p182, %p183
      %s185 = ssub.s32 %s32, %s39
      %p186 = scmp.eq.s32.totalorder %s185, 0
      %s188 = sadd.s32 %s187, 1
      %s189 = scalar_select %p186, %s187, %s188
      %p192 = pneg %p186
      %p193 = scmp.eq.s32.totalorder %s24, 3
      %p194 = por %p192, %p193
      %p195 = scmp.ne.s32.totalorder %s187, %s190
      %p196 = scmp.eq.s32.totalorder %s24, 0
      %p197 = por %p195, %p196
      %p198 = scmp.ne.s32.totalorder %s187, %s190
      %p199 = scmp.eq.s32.totalorder %s29, 3
      %p200 = por %p198, %p199
      %p201 = scmp.ne.s32.totalorder %s190, %s191
      %p202 = scmp.eq.s32.totalorder %s29, 0
      %p203 = por %p201, %p202
      %p204 = scmp.ne.s32.totalorder %s190, %s191
      %p205 = scmp.eq.s32.totalorder %s30, 3
      %p206 = por %p204, %p205
      %p208 = scmp.ne.s32.totalorder %s191, %s207
      %p209 = scmp.eq.s32.totalorder %s30, 0
      %p210 = por %p208, %p209
      %s211 = ssub.s32 %s32, %s39
      %p212 = scmp.eq.s32.totalorder %s211, 0
      %s214 = sadd.s32 %s213, 1
      %s215 = scalar_select %p212, %s213, %s214
      %p218 = pneg %p212
      %p219 = scmp.eq.s32.totalorder %s24, 3
      %p220 = por %p218, %p219
      %p221 = scmp.ne.s32.totalorder %s213, %s216
      %p222 = scmp.eq.s32.totalorder %s24, 0
      %p223 = por %p221, %p222
      %p224 = scmp.ne.s32.totalorder %s213, %s216
      %p225 = scmp.eq.s32.totalorder %s29, 3
      %p226 = por %p224, %p225
      %p227 = scmp.ne.s32.totalorder %s216, %s217
      %p228 = scmp.eq.s32.totalorder %s29, 0
      %p229 = por %p227, %p228
      %p230 = scmp.ne.s32.totalorder %s216, %s217
      %p231 = scmp.eq.s32.totalorder %s30, 3
      %p232 = por %p230, %p231
      %p234 = scmp.ne.s32.totalorder %s217, %s233
      %p235 = scmp.eq.s32.totalorder %s30, 0
      %p236 = por %p234, %p235
      %s237 = ssub.s32 %s32, %s39
      %p238 = scmp.eq.s32.totalorder %s237, 0
      %s240 = sadd.s32 %s239, 1
      %s241 = scalar_select %p238, %s239, %s240
      %p244 = pneg %p238
      %p245 = scmp.eq.s32.totalorder %s24, 3
      %p246 = por %p244, %p245
      %p247 = scmp.ne.s32.totalorder %s239, %s242
      %p248 = scmp.eq.s32.totalorder %s24, 0
      %p249 = por %p247, %p248
      %p250 = scmp.ne.s32.totalorder %s239, %s242
      %p251 = scmp.eq.s32.totalorder %s29, 3
      %p252 = por %p250, %p251
      %p253 = scmp.ne.s32.totalorder %s242, %s243
      %p254 = scmp.eq.s32.totalorder %s29, 0
      %p255 = por %p253, %p254
      %p256 = scmp.ne.s32.totalorder %s242, %s243
      %p257 = scmp.eq.s32.totalorder %s30, 3
      %p258 = por %p256, %p257
      %p260 = scmp.ne.s32.totalorder %s243, %s259
      %p261 = scmp.eq.s32.totalorder %s30, 0
      %p262 = por %p260, %p261
      %s263 = ssub.s32 %s32, %s39
      %p264 = scmp.eq.s32.totalorder %s263, 0
      %s266 = sadd.s32 %s265, 1
      %s267 = scalar_select %p264, %s265, %s266
      %p270 = pneg %p264
      %p271 = scmp.eq.s32.totalorder %s24, 3
      %p272 = por %p270, %p271
      %p273 = scmp.ne.s32.totalorder %s265, %s268
      %p274 = scmp.eq.s32.totalorder %s24, 0
      %p275 = por %p273, %p274
      %p276 = scmp.ne.s32.totalorder %s265, %s268
      %p277 = scmp.eq.s32.totalorder %s29, 3
      %p278 = por %p276, %p277
      %p279 = scmp.ne.s32.totalorder %s268, %s269
      %p280 = scmp.eq.s32.totalorder %s29, 0
      %p281 = por %p279, %p280
      %p282 = scmp.ne.s32.totalorder %s268, %s269
      %p283 = scmp.eq.s32.totalorder %s30, 3
      %p284 = por %p282, %p283
      %p286 = scmp.ne.s32.totalorder %s269, %s285
      %p287 = scmp.eq.s32.totalorder %s30, 0
      %p288 = por %p286, %p287
      %s289 = ssub.s32 %s32, %s39
      %p290 = scmp.eq.s32.totalorder %s289, 0
      %s292 = sadd.s32 %s291, 1
      %s293 = scalar_select %p290, %s291, %s292
      %p296 = pneg %p290
      %p297 = scmp.eq.s32.totalorder %s24, 3
      %p298 = por %p296, %p297
      %p299 = scmp.ne.s32.totalorder %s291, %s294
      %p300 = scmp.eq.s32.totalorder %s24, 0
      %p301 = por %p299, %p300
      %p302 = scmp.ne.s32.totalorder %s291, %s294
      %p303 = scmp.eq.s32.totalorder %s29, 3
      %p304 = por %p302, %p303
      %p305 = scmp.ne.s32.totalorder %s294, %s295
      %p306 = scmp.eq.s32.totalorder %s29, 0
      %p307 = por %p305, %p306
      %p308 = scmp.ne.s32.totalorder %s294, %s295
      %p309 = scmp.eq.s32.totalorder %s30, 3
      %p310 = por %p308, %p309
      %p312 = scmp.ne.s32.totalorder %s295, %s311
      %p313 = scmp.eq.s32.totalorder %s30, 0
      %p314 = por %p312, %p313
      %s315 = ssub.s32 %s32, %s39
      %p316 = scmp.eq.s32.totalorder %s315, 0
      %s318 = sadd.s32 %s317, 1
      %s319 = scalar_select %p316, %s317, %s318
      %p322 = pneg %p316
      %p323 = scmp.eq.s32.totalorder %s24, 3
      %p324 = por %p322, %p323
      %p325 = scmp.ne.s32.totalorder %s317, %s320
      %p326 = scmp.eq.s32.totalorder %s24, 0
      %p327 = por %p325, %p326
      %p328 = scmp.ne.s32.totalorder %s317, %s320
      %p329 = scmp.eq.s32.totalorder %s29, 3
      %p330 = por %p328, %p329
      %p331 = scmp.ne.s32.totalorder %s320, %s321
      %p332 = scmp.eq.s32.totalorder %s29, 0
      %p333 = por %p331, %p332
      %p334 = scmp.ne.s32.totalorder %s320, %s321
      %p335 = scmp.eq.s32.totalorder %s30, 3
      %p336 = por %p334, %p335
      %p338 = scmp.ne.s32.totalorder %s321, %s337
      %p339 = scmp.eq.s32.totalorder %s30, 0
      %p340 = por %p338, %p339
      %s341 = ssub.s32 %s32, %s39
      %p342 = scmp.eq.s32.totalorder %s341, 0
      %s344 = sadd.s32 %s343, 1
      %s345 = scalar_select %p342, %s343, %s344
      %p348 = pneg %p342
      %p349 = scmp.eq.s32.totalorder %s24, 3
      %p350 = por %p348, %p349
      %p351 = scmp.ne.s32.totalorder %s343, %s346
      %p352 = scmp.eq.s32.totalorder %s24, 0
      %p353 = por %p351, %p352
      %p354 = scmp.ne.s32.totalorder %s343, %s346
      %p355 = scmp.eq.s32.totalorder %s29, 3
      %p356 = por %p354, %p355
      %p357 = scmp.ne.s32.totalorder %s346, %s347
      %p358 = scmp.eq.s32.totalorder %s29, 0
      %p359 = por %p357, %p358
      %p360 = scmp.ne.s32.totalorder %s346, %s347
      %p361 = scmp.eq.s32.totalorder %s30, 3
      %p362 = por %p360, %p361
      %p364 = scmp.ne.s32.totalorder %s347, %s363
      %p365 = scmp.eq.s32.totalorder %s30, 0
      %p366 = por %p364, %p365
      %s367 = ssub.s32 %s32, %s39
      %p368 = scmp.eq.s32.totalorder %s367, 0
      %s370 = sadd.s32 %s369, 1
      %s371 = scalar_select %p368, %s369, %s370
      %p374 = pneg %p368
      %p375 = scmp.eq.s32.totalorder %s24, 3
      %p376 = por %p374, %p375
      %p377 = scmp.ne.s32.totalorder %s369, %s372
      %p378 = scmp.eq.s32.totalorder %s24, 0
      %p379 = por %p377, %p378
      %p380 = scmp.ne.s32.totalorder %s369, %s372
      %p381 = scmp.eq.s32.totalorder %s29, 3
      %p382 = por %p380, %p381
      %p383 = scmp.ne.s32.totalorder %s372, %s373
      %p384 = scmp.eq.s32.totalorder %s29, 0
      %p385 = por %p383, %p384
      %p386 = scmp.ne.s32.totalorder %s372, %s373
      %p387 = scmp.eq.s32.totalorder %s30, 3
      %p388 = por %p386, %p387
      %p390 = scmp.ne.s32.totalorder %s373, %s389
      %p391 = scmp.eq.s32.totalorder %s30, 0
      %p392 = por %p390, %p391
      %s393 = ssub.s32 %s32, %s39
      %p394 = scmp.eq.s32.totalorder %s393, 0
      %s396 = sadd.s32 %s395, 1
      %s397 = scalar_select %p394, %s395, %s396
      %p400 = pneg %p394
      %p401 = scmp.eq.s32.totalorder %s24, 3
      %p402 = por %p400, %p401
      %p403 = scmp.ne.s32.totalorder %s395, %s398
      %p404 = scmp.eq.s32.totalorder %s24, 0
      %p405 = por %p403, %p404
      %p406 = scmp.ne.s32.totalorder %s395, %s398
      %p407 = scmp.eq.s32.totalorder %s29, 3
      %p408 = por %p406, %p407
      %p409 = scmp.ne.s32.totalorder %s398, %s399
      %p410 = scmp.eq.s32.totalorder %s29, 0
      %p411 = por %p409, %p410
      %p412 = scmp.ne.s32.totalorder %s398, %s399
      %p413 = scmp.eq.s32.totalorder %s30, 3
      %p414 = por %p412, %p413
      %p416 = scmp.ne.s32.totalorder %s399, %s415
      %p417 = scmp.eq.s32.totalorder %s30, 0
      %p418 = por %p416, %p417
      %s419 = ssub.s32 %s32, %s39
      %p420 = scmp.eq.s32.totalorder %s419, 0
      %s422 = sadd.s32 %s421, 1
      %s423 = scalar_select %p420, %s421, %s422
      %p426 = pneg %p420
      %p427 = scmp.eq.s32.totalorder %s24, 3
      %p428 = por %p426, %p427
      %p429 = scmp.ne.s32.totalorder %s421, %s424
      %p430 = scmp.eq.s32.totalorder %s24, 0
      %p431 = por %p429, %p430
      %p432 = scmp.ne.s32.totalorder %s421, %s424
      %p433 = scmp.eq.s32.totalorder %s29, 3
      %p434 = por %p432, %p433
      %p435 = scmp.ne.s32.totalorder %s424, %s425
      %p436 = scmp.eq.s32.totalorder %s29, 0
      %p437 = por %p435, %p436
      %p438 = scmp.ne.s32.totalorder %s424, %s425
      %p439 = scmp.eq.s32.totalorder %s30, 3
      %p440 = por %p438, %p439
      %p442 = scmp.ne.s32.totalorder %s425, %s441
      %p443 = scmp.eq.s32.totalorder %s30, 0
      %p444 = por %p442, %p443
      %s445 = ssub.s32 %s31, %s43
      %s446 = ssub.s32 %s32, %s39
      %s447 = sor.u32 %s445, %s446
      %p448 = scmp.eq.s32.totalorder %s447, 0
      %s450 = sadd.s32 %s449, 1
      %s451 = scalar_select %p448, %s449, %s450
      %p454 = pneg %p448
      %p455 = scmp.eq.s32.totalorder %s24, 3
      %p456 = por %p454, %p455
      %p457 = scmp.ne.s32.totalorder %s449, %s452
      %p458 = scmp.eq.s32.totalorder %s24, 0
      %p459 = por %p457, %p458
      %p460 = scmp.ne.s32.totalorder %s449, %s452
      %p461 = scmp.eq.s32.totalorder %s29, 3
      %p462 = por %p460, %p461
      %p463 = scmp.ne.s32.totalorder %s452, %s453
      %p464 = scmp.eq.s32.totalorder %s29, 0
      %p465 = por %p463, %p464
      %p466 = scmp.ne.s32.totalorder %s452, %s453
      %p467 = scmp.eq.s32.totalorder %s30, 3
      %p468 = por %p466, %p467
      %p470 = scmp.ne.s32.totalorder %s453, %s469
      %p471 = scmp.eq.s32.totalorder %s30, 0
      %p472 = por %p470, %p471
      %p473 = scmp.le.s32.totalorder 1, %s24
      %p474 = scmp.lt.s32.totalorder %s24, 5
      %p475 = pnand %p473, %p474
      %p476 = pneg %p475
      // Predicated region
      $region9: #{network_forward.3} parent=5 // pred_check
        _
      $region10: #{network_forward.3} parent=5 // pred_check_branch
        %478 = sbr.rel (%p475) target = $region12
      $region11: #{network_forward.3} parent=5 // pred_region
        %s479 = ssub.s32 %s24, 1
        // Predicated region
        $region13: #{network_forward.3} parent=11 // pred_check
          %p480 = pneg %p57
        $region14: #{network_forward.3} parent=11 // pred_check_branch
          %482 = sbr.rel (%p480) target = $region16
        $region15: #{network_forward.3} parent=11 // pred_region
          %s484 = ssub.s32 32, 32
          %485 = vsyncadd [#allocation5], %s484
          %s487 = sshll.u32 %s0, 4
          %s488 = int_to_ptr.vmem [resolvable:$true] %s487
          %490 = dma.vmem_to_smem %s488, 32, [#allocation4], [#allocation5]
        $region16: #{network_forward.3} parent=11 // pred_fallthru
          _
        // Predicated region
        $region17: #{network_forward.3} parent=11 // pred_check
          %p491 = pneg %p78
        $region18: #{network_forward.3} parent=11 // pred_check_branch
          %493 = sbr.rel (%p491) target = $region20
        $region19: #{network_forward.3} parent=11 // pred_region
          %s495 = ssub.s32 32, 32
          %496 = vsyncadd [#allocation7], %s495
          %s498 = sshll.u32 %s1, 4
          %s499 = int_to_ptr.vmem [resolvable:$true] %s498
          %501 = dma.vmem_to_smem %s499, 32, [#allocation6], [#allocation7]
        $region20: #{network_forward.3} parent=11 // pred_fallthru
          _
        // Predicated region
        $region21: #{network_forward.3} parent=11 // pred_check
          %p502 = pneg %p99
        $region22: #{network_forward.3} parent=11 // pred_check_branch
          %504 = sbr.rel (%p502) target = $region24
        $region23: #{network_forward.3} parent=11 // pred_region
          _
        $region24: #{network_forward.3} parent=11 // pred_fallthru
          _
      $region12: #{network_forward.3} parent=5 // pred_fallthru
        _
      %p505 = scmp.lt.s32.totalorder %s24, 4
      // Predicated region
      $region25: #{network_forward.3} parent=5 // pred_check
        %p506 = pneg %p505
      $region26: #{network_forward.3} parent=5 // pred_check_branch
        %508 = sbr.rel (%p506) target = $region28
      $region27: #{network_forward.3} parent=5 // pred_region
        // Predicated region
        $region29: #{network_forward.3} parent=27 // pred_check
          %p509 = pneg %p119
        $region30: #{network_forward.3} parent=27 // pred_check_branch
          %511 = sbr.rel (%p509) target = $region32
        $region31: #{network_forward.3} parent=27 // pred_region
          %p512 = scmp.lt.s32.totalorder %s31, 1
          %s513 = scalar_select %p512, %s31, 1
          %s514 = smul.addr %s513, 2
          %s515 = scalar_lea.vmem %s3, %s514
        $region32: #{network_forward.3} parent=27 // pred_fallthru
          _
        // Predicated region
        $region33: #{network_forward.3} parent=27 // pred_check
          %p516 = pneg %p145
        $region34: #{network_forward.3} parent=27 // pred_check_branch
          %518 = sbr.rel (%p516) target = $region36
        $region35: #{network_forward.3} parent=27 // pred_region
          %p519 = scmp.lt.s32.totalorder %s31, 1
          %s520 = scalar_select %p519, %s31, 1
          %s521 = smul.addr %s520, 2
          %s522 = smul.addr %s521, 2
          %s523 = scalar_lea.vmem %s4, %s522
        $region36: #{network_forward.3} parent=27 // pred_fallthru
          _
        // Predicated region
        $region37: #{network_forward.3} parent=27 // pred_check
          %p524 = pneg %p171
        $region38: #{network_forward.3} parent=27 // pred_check_branch
          %526 = sbr.rel (%p524) target = $region40
        $region39: #{network_forward.3} parent=27 // pred_region
          %p527 = scmp.lt.s32.totalorder %s31, 1
          %s528 = scalar_select %p527, %s31, 1
          %s529 = smul.addr %s528, 2
          %s530 = smul.addr %s529, 2
          %s531 = scalar_lea.vmem %s5, %s530
        $region40: #{network_forward.3} parent=27 // pred_fallthru
          _
        // Predicated region
        $region41: #{network_forward.3} parent=27 // pred_check
          %p532 = pneg %p197
        $region42: #{network_forward.3} parent=27 // pred_check_branch
          %534 = sbr.rel (%p532) target = $region44
        $region43: #{network_forward.3} parent=27 // pred_region
          %p535 = scmp.lt.s32.totalorder %s32, 1
          %s536 = scalar_select %p535, %s32, 1
          %s537 = smul.addr %s536, 4
          %s538 = scalar_lea.vmem %s6, %s537
        $region44: #{network_forward.3} parent=27 // pred_fallthru
          _
        // Predicated region
        $region45: #{network_forward.3} parent=27 // pred_check
          %p539 = pneg %p223
        $region46: #{network_forward.3} parent=27 // pred_check_branch
          %541 = sbr.rel (%p539) target = $region48
        $region47: #{network_forward.3} parent=27 // pred_region
          %p542 = scmp.lt.s32.totalorder %s32, 1
          %s543 = scalar_select %p542, %s32, 1
          %s544 = smul.addr %s543, 8
          %s545 = scalar_lea.vmem %s7, %s544
        $region48: #{network_forward.3} parent=27 // pred_fallthru
          _
        // Predicated region
        $region49: #{network_forward.3} parent=27 // pred_check
          %p546 = pneg %p249
        $region50: #{network_forward.3} parent=27 // pred_check_branch
          %548 = sbr.rel (%p546) target = $region52
        $region51: #{network_forward.3} parent=27 // pred_region
          %p549 = scmp.lt.s32.totalorder %s32, 1
          %s550 = scalar_select %p549, %s32, 1
          %s551 = scalar_lea.vmem %s8, %s550
        $region52: #{network_forward.3} parent=27 // pred_fallthru
          _
        // Predicated region
        $region53: #{network_forward.3} parent=27 // pred_check
          %p552 = pneg %p275
        $region54: #{network_forward.3} parent=27 // pred_check_branch
          %554 = sbr.rel (%p552) target = $region56
        $region55: #{network_forward.3} parent=27 // pred_region
          %p555 = scmp.lt.s32.totalorder %s32, 1
          %s556 = scalar_select %p555, %s32, 1
          %s557 = scalar_lea.vmem %s9, %s556
        $region56: #{network_forward.3} parent=27 // pred_fallthru
          _
        // Predicated region
        $region57: #{network_forward.3} parent=27 // pred_check
          %p558 = pneg %p301
        $region58: #{network_forward.3} parent=27 // pred_check_branch
          %560 = sbr.rel (%p558) target = $region60
        $region59: #{network_forward.3} parent=27 // pred_region
          %p561 = scmp.lt.s32.totalorder %s32, 1
          %s562 = scalar_select %p561, %s32, 1
          %s563 = smul.addr %s562, 4
          %s564 = smul.addr %s563, 4
          %s565 = scalar_lea.vmem %s10, %s564
        $region60: #{network_forward.3} parent=27 // pred_fallthru
          _
        // Predicated region
        $region61: #{network_forward.3} parent=27 // pred_check
          %p566 = pneg %p327
        $region62: #{network_forward.3} parent=27 // pred_check_branch
          %568 = sbr.rel (%p566) target = $region64
        $region63: #{network_forward.3} parent=27 // pred_region
          %p569 = scmp.lt.s32.totalorder %s32, 1
          %s570 = scalar_select %p569, %s32, 1
          %s571 = smul.addr %s570, 4
          %s572 = smul.addr %s571, 8
          %s573 = scalar_lea.vmem %s11, %s572
        $region64: #{network_forward.3} parent=27 // pred_fallthru
          _
        // Predicated region
        $region65: #{network_forward.3} parent=27 // pred_check
          %p574 = pneg %p353
        $region66: #{network_forward.3} parent=27 // pred_check_branch
          %576 = sbr.rel (%p574) target = $region68
        $region67: #{network_forward.3} parent=27 // pred_region
          %p577 = scmp.lt.s32.totalorder %s32, 1
          %s578 = scalar_select %p577, %s32, 1
          %s579 = smul.addr %s578, 48
          %s580 = smul.addr %s579, 4
          %s581 = scalar_lea.vmem %s12, %s580
        $region68: #{network_forward.3} parent=27 // pred_fallthru
          _
        // Predicated region
        $region69: #{network_forward.3} parent=27 // pred_check
          %p582 = pneg %p379
        $region70: #{network_forward.3} parent=27 // pred_check_branch
          %584 = sbr.rel (%p582) target = $region72
        $region71: #{network_forward.3} parent=27 // pred_region
          %p585 = scmp.lt.s32.totalorder %s32, 1
          %s586 = scalar_select %p585, %s32, 1
          %s587 = smul.addr %s586, 16
          %s588 = smul.addr %s587, 8
          %s589 = scalar_lea.vmem %s13, %s588
        $region72: #{network_forward.3} parent=27 // pred_fallthru
          _
        // Predicated region
        $region73: #{network_forward.3} parent=27 // pred_check
          %p590 = pneg %p405
        $region74: #{network_forward.3} parent=27 // pred_check_branch
          %592 = sbr.rel (%p590) target = $region76
        $region75: #{network_forward.3} parent=27 // pred_region
          %p593 = scmp.lt.s32.totalorder %s32, 1
          %s594 = scalar_select %p593, %s32, 1
          %s595 = smul.addr %s594, 3
          %s596 = scalar_lea.vmem %s14, %s595
        $region76: #{network_forward.3} parent=27 // pred_fallthru
          _
        // Predicated region
        $region77: #{network_forward.3} parent=27 // pred_check
          %p597 = pneg %p431
        $region78: #{network_forward.3} parent=27 // pred_check_branch
          %599 = sbr.rel (%p597) target = $region80
        $region79: #{network_forward.3} parent=27 // pred_region
          %p600 = scmp.lt.s32.totalorder %s32, 1
          %s601 = scalar_select %p600, %s32, 1
          %s602 = smul.addr %s601, 2
          %s603 = scalar_lea.vmem %s15, %s602
        $region80: #{network_forward.3} parent=27 // pred_fallthru
          _
      $region28: #{network_forward.3} parent=5 // pred_fallthru
        _
      %p604 = scmp.le.s32.totalorder 1, %s24
      %p605 = scmp.lt.s32.totalorder %s24, 5
      %p606 = pnand %p604, %p605
      %p607 = pneg %p606
      // Predicated region
      $region81: #{network_forward.3} parent=5 // pred_check
        _
      $region82: #{network_forward.3} parent=5 // pred_check_branch
        %609 = sbr.rel (%p606) target = $region84
      $region83: #{network_forward.3} parent=5 // pred_region
        %s610 = ssub.s32 %s24, 1
        // Predicated region
        $region85: #{network_forward.3} parent=83 // pred_check
          %p611 = pneg %p57
        $region86: #{network_forward.3} parent=83 // pred_check_branch
          %613 = sbr.rel (%p611) target = $region88
        $region87: #{network_forward.3} parent=83 // pred_region
          %614 = dma.done [#allocation5], 32
        $region88: #{network_forward.3} parent=83 // pred_fallthru
          _
        // Predicated region
        $region89: #{network_forward.3} parent=83 // pred_check
          %p615 = pneg %p78
        $region90: #{network_forward.3} parent=83 // pred_check_branch
          %617 = sbr.rel (%p615) target = $region92
        $region91: #{network_forward.3} parent=83 // pred_region
          %618 = dma.done [#allocation7], 32
        $region92: #{network_forward.3} parent=83 // pred_fallthru
          _
        %619 = sfence
        %p620 = pneg %p57
        %p621 = pneg %p54
        %p622 = pneg %p78
        %p623 = pneg %p75
        %p624 = pneg %p99
        %p625 = pneg %p96
        %p626 = scmp.lt.s32.totalorder %s33, 1
        %s627 = scalar_select %p626, %s33, 1
        %s628 = smul.addr %s627, 2
        %s629 = scalar_lea.vmem %s3, %s628
        %p630 = pneg %p125
        %p631 = pneg %p122
        %p632 = scmp.lt.s32.totalorder %s33, 1
        %s633 = scalar_select %p632, %s33, 1
        %s634 = smul.addr %s633, 2
        %s635 = smul.addr %s634, 2
        %s636 = scalar_lea.vmem %s4, %s635
        %p637 = pneg %p151
        %p638 = pneg %p148
        %p639 = scmp.lt.s32.totalorder %s33, 1
        %s640 = scalar_select %p639, %s33, 1
        %s641 = smul.addr %s640, 2
        %s642 = smul.addr %s641, 2
        %s643 = scalar_lea.vmem %s5, %s642
        %p644 = pneg %p177
        %p645 = pneg %p174
        %p646 = scmp.lt.s32.totalorder %s34, 1
        %s647 = scalar_select %p646, %s34, 1
        %s648 = smul.addr %s647, 4
        %s649 = scalar_lea.vmem %s6, %s648
        %p650 = pneg %p203
        %p651 = pneg %p200
        %p652 = scmp.lt.s32.totalorder %s34, 1
        %s653 = scalar_select %p652, %s34, 1
        %s654 = smul.addr %s653, 8
        %s655 = scalar_lea.vmem %s7, %s654
        %p656 = pneg %p229
        %p657 = pneg %p226
        %p658 = scmp.lt.s32.totalorder %s34, 1
        %s659 = scalar_select %p658, %s34, 1
        %s660 = scalar_lea.vmem %s8, %s659
        %p661 = pneg %p255
        %p662 = pneg %p252
        %p663 = scmp.lt.s32.totalorder %s34, 1
        %s664 = scalar_select %p663, %s34, 1
        %s665 = scalar_lea.vmem %s9, %s664
        %p666 = pneg %p281
        %p667 = pneg %p278
        %p668 = scmp.lt.s32.totalorder %s34, 1
        %s669 = scalar_select %p668, %s34, 1
        %s670 = smul.addr %s669, 4
        %s671 = smul.addr %s670, 4
        %s672 = scalar_lea.vmem %s10, %s671
        %p673 = pneg %p307
        %p674 = pneg %p304
        %p675 = scmp.lt.s32.totalorder %s34, 1
        %s676 = scalar_select %p675, %s34, 1
        %s677 = smul.addr %s676, 4
        %s678 = smul.addr %s677, 8
        %s679 = scalar_lea.vmem %s11, %s678
        %p680 = pneg %p333
        %p681 = pneg %p330
        %p682 = scmp.lt.s32.totalorder %s34, 1
        %s683 = scalar_select %p682, %s34, 1
        %s684 = smul.addr %s683, 48
        %s685 = smul.addr %s684, 4
        %s686 = scalar_lea.vmem %s12, %s685
        %p687 = pneg %p359
        %p688 = pneg %p356
        %p689 = scmp.lt.s32.totalorder %s34, 1
        %s690 = scalar_select %p689, %s34, 1
        %s691 = smul.addr %s690, 16
        %s692 = smul.addr %s691, 8
        %s693 = scalar_lea.vmem %s13, %s692
        %p694 = pneg %p385
        %p695 = pneg %p382
        %p696 = scmp.lt.s32.totalorder %s34, 1
        %s697 = scalar_select %p696, %s34, 1
        %s698 = smul.addr %s697, 3
        %s699 = scalar_lea.vmem %s14, %s698
        %p700 = pneg %p411
        %p701 = pneg %p408
        %p702 = scmp.lt.s32.totalorder %s34, 1
        %s703 = scalar_select %p702, %s34, 1
        %s704 = smul.addr %s703, 2
        %s705 = scalar_lea.vmem %s15, %s704
        %p706 = pneg %p437
        %p707 = pneg %p434
        %p708 = pneg %p465
        %p709 = pneg %p462
        %p710 = scmp.lt.s32.totalorder %s33, 1
        %s711 = scalar_select %p710, %s33, 1
        %p712 = scmp.lt.s32.totalorder %s34, 1
        %s713 = scalar_select %p712, %s34, 1
        %s714 = smul.addr %s713, 2
        %s715 = smul.addr %s711, 4
        %s716 = sadd.s32 %s714, %s715
        %s717 = scalar_lea.vmem %s16, %s716
        %p718 = scmp.lt.s32.totalorder %s33, 1
        %s719 = scalar_select %p718, %s33, 1
        %s720 = smul.addr %s719, 2
        %s721 = scalar_lea.vmem %s3, %s720
        %p722 = scmp.lt.s32.totalorder %s33, 1
        %s723 = scalar_select %p722, %s33, 1
        %s724 = smul.addr %s723, 2
        %s725 = smul.addr %s724, 2
        %s726 = scalar_lea.vmem %s4, %s725
        %p727 = scmp.lt.s32.totalorder %s33, 1
        %s728 = scalar_select %p727, %s33, 1
        %s729 = smul.addr %s728, 2
        %s730 = smul.addr %s729, 2
        %s731 = scalar_lea.vmem %s5, %s730
        %p732 = scmp.lt.s32.totalorder %s34, 1
        %s733 = scalar_select %p732, %s34, 1
        %s734 = smul.addr %s733, 4
        %s735 = scalar_lea.vmem %s6, %s734
        %p736 = scmp.lt.s32.totalorder %s34, 1
        %s737 = scalar_select %p736, %s34, 1
        %s738 = smul.addr %s737, 8
        %s739 = scalar_lea.vmem %s7, %s738
        %p740 = scmp.lt.s32.totalorder %s34, 1
        %s741 = scalar_select %p740, %s34, 1
        %s742 = scalar_lea.vmem %s8, %s741
        %p743 = scmp.lt.s32.totalorder %s34, 1
        %s744 = scalar_select %p743, %s34, 1
        %s745 = scalar_lea.vmem %s9, %s744
        %p746 = scmp.lt.s32.totalorder %s34, 1
        %s747 = scalar_select %p746, %s34, 1
        %s748 = smul.addr %s747, 4
        %s749 = smul.addr %s748, 4
        %s750 = scalar_lea.vmem %s10, %s749
        %p751 = scmp.lt.s32.totalorder %s34, 1
        %s752 = scalar_select %p751, %s34, 1
        %s753 = smul.addr %s752, 4
        %s754 = smul.addr %s753, 8
        %s755 = scalar_lea.vmem %s11, %s754
        %p756 = scmp.lt.s32.totalorder %s34, 1
        %s757 = scalar_select %p756, %s34, 1
        %s758 = smul.addr %s757, 48
        %s759 = smul.addr %s758, 4
        %s760 = scalar_lea.vmem %s12, %s759
        %p761 = scmp.lt.s32.totalorder %s34, 1
        %s762 = scalar_select %p761, %s34, 1
        %s763 = smul.addr %s762, 16
        %s764 = smul.addr %s763, 8
        %s765 = scalar_lea.vmem %s13, %s764
        %p766 = scmp.lt.s32.totalorder %s34, 1
        %s767 = scalar_select %p766, %s34, 1
        %s768 = smul.addr %s767, 3
        %s769 = scalar_lea.vmem %s14, %s768
        %p770 = scmp.lt.s32.totalorder %s34, 1
        %s771 = scalar_select %p770, %s34, 1
        %s772 = smul.addr %s771, 2
        %s773 = scalar_lea.vmem %s15, %s772
        %p774 = scmp.lt.s32.totalorder %s33, 1
        %s775 = scalar_select %p774, %s33, 1
        %p776 = scmp.lt.s32.totalorder %s34, 1
        %s777 = scalar_select %p776, %s34, 1
        %s778 = smul.addr %s777, 2
        %s779 = smul.addr %s775, 4
        %s780 = sadd.s32 %s778, %s779
        %s781 = scalar_lea.vmem %s16, %s780
        %s783 = sshra.s32 %s34, 7
        %s784 = sand.u32 %s34, 127
        %s785 = sadd.s32 %s783, %s33
        %s786 = smul.u32 %s785, 128
        %s787 = sshra.s32 %s34, 7
        %s788 = sand.u32 %s34, 127
        %s789 = sadd.s32 %s786, %s788
        %s790 = sld [smem:[#allocation4 + %s789]]
        %s791 = smul.f32 %s790, 0.2
        %s792 = sadd.s32 %s34, 2
        %s793 = sshra.s32 %s792, 7
        %s794 = sand.u32 %s792, 127
        %s795 = sadd.s32 %s793, %s33
        %s796 = smul.u32 %s795, 128
        %s797 = sshra.s32 %s792, 7
        %s798 = sand.u32 %s792, 127
        %s799 = sadd.s32 %s796, %s798
        %s800 = sld [smem:[#allocation4 + %s799]]
        %s801 = sadd.s32 %s34, 4
        %s802 = sshra.s32 %s801, 7
        %s803 = sand.u32 %s801, 127
        %s804 = sadd.s32 %s802, %s33
        %s805 = smul.u32 %s804, 128
        %s806 = sshra.s32 %s801, 7
        %s807 = sand.u32 %s801, 127
        %s808 = sadd.s32 %s805, %s807
        %s809 = sld [smem:[#allocation4 + %s808]]
        %s810 = smul.f32 %s809, 0.1
        %p811 = scmp.eq.s32.totalorder %s34, 0
        // Predicated region
        $region93: #{network_forward.3} parent=83 // pred_check
          %p812 = pneg %p811
        $region94: #{network_forward.3} parent=83 // pred_check_branch
          %814 = sbr.rel (%p812) target = $region96
        $region95: #{network_forward.3} parent=83 // pred_region
          %v815 = vld [vmem:[%s721] sm:$0x3]
          %v816 = vlaneseq
          %vm817 = vcmp.ge.s32.totalorder %v816, 0
          %vm818 = vcmp.lt.s32.totalorder %v816, 256
          %vm819 = vmand %vm817, %vm818
          %820 = vst.msk [vmem:[#allocation2] sm:$0x3] %vm819, %v815
          %v821 = vld [vmem:[%s731] sm:$0xf]
          %822 = vst [vmem:[#allocation3] sm:$0xf] %v821
        $region96: #{network_forward.3} parent=83 // pred_fallthru
          _
        %v823 = vld [vmem:[%s2] sm:$0xff]
        %v824 = vld [vmem:[%s2 + $0x8] sm:$0xff]
        %v825 = vld [vmem:[%s2 + $0x10] sm:$0x7]
        %v826 = vld [vmem:[%s2 + $0x18] sm:$0x7]
        %v827 = vld [vmem:[#allocation2] sm:$0x3]
        %v828 = vld [vmem:[#allocation3] sm:$0xf]
        %v829 = vld [vmem:[%s726] sm:$0xf]
        %v830 = vsub.f32 %v829, %v828
        %v832 = vlaneseq
        %v833 = vshrl.u32 %v832, 7
        %v834 = vsub.s32 0, %v833
        %v835 = vrot.slane %v827, %v834
        %v836 = vlaneseq
        %v837 = vshrl.u32 %v836, 7
        %v838 = vsub.s32 1, %v837
        %v839 = vrot.slane %v827, %v838
        %842 = vrot.lane.b32.xlu0 %v835, 1
        %v843 = vpop.permute.xlu0 %842
        %844 = vrot.lane.b32.xlu0 %v839, 1
        %v845 = vpop.permute.xlu0 %844
        %v846 = vlaneseq
        %v847 = vand.u32 %v846, 127
        %vm848 = vcmp.lt.s32.totalorder %v847, 1
        %v849 = vsel %vm848, %v843, %v845
        %v850 = vsel %vm848, %v845, %v843
        %v853 = vcombine.low %v850, %v849
        %v855 = vunpack.c.l.s4 1966171168
        %v856 = vunpack.c.0.s8 %v855
        %v857 = vlaneseq
        %v858 = vshrl.u32 %v857, 7
        %v859 = vsub.s32 %v856, %v858
        %v860 = vrot.slane %v853, %v859
        %v862 = vunpack.c.l.s4 1966171168
        %v863 = vunpack.c.0.s8 %v862
        %v864 = vlaneseq
        %v865 = vshrl.u32 %v864, 7
        %v866 = vsub.s32 %v863, %v865
        %v867 = vrot.slane %v860, %v866
        %v869 = vsub.f32 %v827, %v867
        %v872 = vcombine.low %v825, %v826
        %v874 = vunpack.c.l.s4 1966171168
        %v875 = vunpack.c.0.s8 %v874
        %v876 = vlaneseq
        %v877 = vshrl.u32 %v876, 7
        %v878 = vsub.s32 %v875, %v877
        %v879 = vrot.slane %v872, %v878
        %v880 = vcombine.high %v879, %v879
        %v882 = vunpack.c.l.s4 1966171168
        %v883 = vunpack.c.0.s8 %v882
        %v884 = vlaneseq
        %v885 = vshrl.u32 %v884, 7
        %v886 = vsub.s32 %v883, %v885
        %v887 = vrot.slane %v880, %v886
        %v889 = vmul.f32 %v869, %v887
        %v892 = vunpack.c.l.s4 1966171168
        %v893 = vunpack.c.0.s8 %v892
        %v894 = vlaneseq
        %v895 = vshrl.u32 %v894, 7
        %v896 = vsub.s32 %v893, %v895
        %v897 = vrot.slane %v830, %v896
        %v899 = vsub.f32 %v889, %v897
        %900 = vrot.lane.b32.xlu0 %v835, 16
        %v901 = vpop.permute.xlu0 %900
        %902 = vrot.lane.b32.xlu0 %v839, 16
        %v903 = vpop.permute.xlu0 %902
        %vm904 = vcmp.lt.s32.totalorder %v847, 16
        %v905 = vsel %vm904, %v901, %v903
        %v906 = vsel %vm904, %v903, %v901
        %v909 = vcombine.low %v906, %v905
        %v911 = vunpack.c.l.s4 1966171168
        %v912 = vunpack.c.0.s8 %v911
        %v913 = vlaneseq
        %v914 = vshrl.u32 %v913, 7
        %v915 = vsub.s32 %v912, %v914
        %v916 = vrot.slane %v909, %v915
        %v918 = vunpack.c.l.s4 1966171168
        %v919 = vunpack.c.0.s8 %v918
        %v920 = vlaneseq
        %v921 = vshrl.u32 %v920, 7
        %v922 = vsub.s32 %v919, %v921
        %v923 = vrot.slane %v916, %v922
        %v925 = vsub.f32 %v827, %v923
        %v927 = vunpack.c.l.s4 1966171168
        %v928 = vunpack.c.0.s8 %v927
        %v929 = vlaneseq
        %v930 = vshrl.u32 %v929, 7
        %v931 = vsub.s32 %v928, %v930
        %v932 = vrot.slane %v879, %v931
        %v933 = vcombine.high %v932, %v932
        %v935 = vmul.f32 %v925, %v933
        %v936 = vcombine.high %v897, %v897
        %v938 = vsub.f32 %v935, %v936
        %v939 = vmul.f32 %v899, %v887
        %v940 = vmul.f32 %v938, %v933
        %v942 = vlaneseq
        %v943 = vshrl.u32 %v942, 7
        %v944 = vsub.s32 0, %v943
        %v945 = vrot.slane %v939, %v944
        %v946 = vlaneseq
        %v947 = vshrl.u32 %v946, 7
        %v948 = vsub.s32 1, %v947
        %v949 = vrot.slane %v939, %v948
        %952 = vrot.lane.b32.xlu0 %v945, 127
        %v953 = vpop.permute.xlu0 %952
        %954 = vrot.lane.b32.xlu0 %v949, 127
        %v955 = vpop.permute.xlu0 %954
        %vm956 = vcmp.lt.s32.totalorder %v847, 127
        %v957 = vsel %vm956, %v953, %v955
        %v958 = vsel %vm956, %v955, %v953
        %v961 = vcombine.low %v957, %v958
        %v963 = vunpack.c.l.s4 1966171168
        %v964 = vunpack.c.0.s8 %v963
        %v965 = vlaneseq
        %v966 = vshrl.u32 %v965, 7
        %v967 = vsub.s32 %v964, %v966
        %v968 = vrot.slane %v961, %v967
        %v970 = vunpack.c.l.s4 1966171168
        %v971 = vunpack.c.0.s8 %v970
        %v972 = vlaneseq
        %v973 = vshrl.u32 %v972, 7
        %v974 = vsub.s32 %v971, %v973
        %v975 = vrot.slane %v968, %v974
        %v977 = vsub.f32 %v939, %v975
        %v978 = vadd.f32 %v977, %v940
        %v980 = vlaneseq
        %v981 = vshrl.u32 %v980, 7
        %v982 = vsub.s32 0, %v981
        %v983 = vrot.slane %v940, %v982
        %v984 = vlaneseq
        %v985 = vshrl.u32 %v984, 7
        %v986 = vsub.s32 1, %v985
        %v987 = vrot.slane %v940, %v986
        %990 = vrot.lane.b32.xlu0 %v983, 112
        %v991 = vpop.permute.xlu0 %990
        %992 = vrot.lane.b32.xlu0 %v987, 112
        %v993 = vpop.permute.xlu0 %992
        %vm994 = vcmp.lt.s32.totalorder %v847, 112
        %v995 = vsel %vm994, %v991, %v993
        %v996 = vsel %vm994, %v993, %v991
        %v999 = vcombine.low %v995, %v996
        %v1001 = vunpack.c.l.s4 1966171168
        %v1002 = vunpack.c.0.s8 %v1001
        %v1003 = vlaneseq
        %v1004 = vshrl.u32 %v1003, 7
        %v1005 = vsub.s32 %v1002, %v1004
        %v1006 = vrot.slane %v999, %v1005
        %v1008 = vunpack.c.l.s4 1966171168
        %v1009 = vunpack.c.0.s8 %v1008
        %v1010 = vlaneseq
        %v1011 = vshrl.u32 %v1010, 7
        %v1012 = vsub.s32 %v1009, %v1011
        %v1013 = vrot.slane %v1006, %v1012
        %v1015 = vsub.f32 %v978, %v1013
        %v1016 = vstv %s791
        %v1017 = vmul.f32 %v1016, %v1015
        %v1018 = vsub.f32 %v827, %v1017
        %v1019 = vsub.f32 %v1018, %v827
        %v1020 = vmul.f32 %v1019, 0.0
        %v1021 = vadd.f32 %v1018, %v1020
        %v1023 = vlaneseq
        %v1024 = vshrl.u32 %v1023, 7
        %v1025 = vsub.s32 0, %v1024
        %v1026 = vrot.slane %v1021, %v1025
        %v1027 = vlaneseq
        %v1028 = vshrl.u32 %v1027, 7
        %v1029 = vsub.s32 1, %v1028
        %v1030 = vrot.slane %v1021, %v1029
        %1033 = vrot.lane.b32.xlu0 %v1026, 1
        %v1034 = vpop.permute.xlu0 %1033
        %1035 = vrot.lane.b32.xlu0 %v1030, 1
        %v1036 = vpop.permute.xlu0 %1035
        %v1037 = vsel %vm848, %v1034, %v1036
        %v1038 = vsel %vm848, %v1036, %v1034
        %v1041 = vcombine.low %v1038, %v1037
        %v1043 = vunpack.c.l.s4 1966171168
        %v1044 = vunpack.c.0.s8 %v1043
        %v1045 = vlaneseq
        %v1046 = vshrl.u32 %v1045, 7
        %v1047 = vsub.s32 %v1044, %v1046
        %v1048 = vrot.slane %v1041, %v1047
        %v1050 = vunpack.c.l.s4 1966171168
        %v1051 = vunpack.c.0.s8 %v1050
        %v1052 = vlaneseq
        %v1053 = vshrl.u32 %v1052, 7
        %v1054 = vsub.s32 %v1051, %v1053
        %v1055 = vrot.slane %v1048, %v1054
        %v1057 = vsub.f32 %v1021, %v1055
        %v1058 = vmul.f32 %v1057, %v887
        %v1059 = vsub.f32 %v1058, %v897
        %1060 = vrot.lane.b32.xlu0 %v1026, 16
        %v1061 = vpop.permute.xlu0 %1060
        %1062 = vrot.lane.b32.xlu0 %v1030, 16
        %v1063 = vpop.permute.xlu0 %1062
        %v1064 = vsel %vm904, %v1061, %v1063
        %v1065 = vsel %vm904, %v1063, %v1061
        %v1068 = vcombine.low %v1065, %v1064
        %v1070 = vunpack.c.l.s4 1966171168
        %v1071 = vunpack.c.0.s8 %v1070
        %v1072 = vlaneseq
        %v1073 = vshrl.u32 %v1072, 7
        %v1074 = vsub.s32 %v1071, %v1073
        %v1075 = vrot.slane %v1068, %v1074
        %v1077 = vunpack.c.l.s4 1966171168
        %v1078 = vunpack.c.0.s8 %v1077
        %v1079 = vlaneseq
        %v1080 = vshrl.u32 %v1079, 7
        %v1081 = vsub.s32 %v1078, %v1080
        %v1082 = vrot.slane %v1075, %v1081
        %v1084 = vsub.f32 %v1021, %v1082
        %v1085 = vmul.f32 %v1084, %v933
        %v1086 = vsub.f32 %v1085, %v936
        %v1087 = vmul.f32 %v1059, %v887
        %v1088 = vmul.f32 %v1086, %v933
        %v1090 = vlaneseq
        %v1091 = vshrl.u32 %v1090, 7
        %v1092 = vsub.s32 0, %v1091
        %v1093 = vrot.slane %v1087, %v1092
        %v1094 = vlaneseq
        %v1095 = vshrl.u32 %v1094, 7
        %v1096 = vsub.s32 1, %v1095
        %v1097 = vrot.slane %v1087, %v1096
        %1100 = vrot.lane.b32.xlu0 %v1093, 127
        %v1101 = vpop.permute.xlu0 %1100
        %1102 = vrot.lane.b32.xlu0 %v1097, 127
        %v1103 = vpop.permute.xlu0 %1102
        %v1104 = vsel %vm956, %v1101, %v1103
        %v1105 = vsel %vm956, %v1103, %v1101
        %v1108 = vcombine.low %v1104, %v1105
        %v1110 = vunpack.c.l.s4 1966171168
        %v1111 = vunpack.c.0.s8 %v1110
        %v1112 = vlaneseq
        %v1113 = vshrl.u32 %v1112, 7
        %v1114 = vsub.s32 %v1111, %v1113
        %v1115 = vrot.slane %v1108, %v1114
        %v1117 = vunpack.c.l.s4 1966171168
        %v1118 = vunpack.c.0.s8 %v1117
        %v1119 = vlaneseq
        %v1120 = vshrl.u32 %v1119, 7
        %v1121 = vsub.s32 %v1118, %v1120
        %v1122 = vrot.slane %v1115, %v1121
        %v1124 = vsub.f32 %v1087, %v1122
        %v1125 = vadd.f32 %v1124, %v1088
        %v1127 = vlaneseq
        %v1128 = vshrl.u32 %v1127, 7
        %v1129 = vsub.s32 0, %v1128
        %v1130 = vrot.slane %v1088, %v1129
        %v1131 = vlaneseq
        %v1132 = vshrl.u32 %v1131, 7
        %v1133 = vsub.s32 1, %v1132
        %v1134 = vrot.slane %v1088, %v1133
        %1137 = vrot.lane.b32.xlu0 %v1130, 112
        %v1138 = vpop.permute.xlu0 %1137
        %1139 = vrot.lane.b32.xlu0 %v1134, 112
        %v1140 = vpop.permute.xlu0 %1139
        %v1141 = vsel %vm994, %v1138, %v1140
        %v1142 = vsel %vm994, %v1140, %v1138
        %v1145 = vcombine.low %v1141, %v1142
        %v1147 = vunpack.c.l.s4 1966171168
        %v1148 = vunpack.c.0.s8 %v1147
        %v1149 = vlaneseq
        %v1150 = vshrl.u32 %v1149, 7
        %v1151 = vsub.s32 %v1148, %v1150
        %v1152 = vrot.slane %v1145, %v1151
        %v1154 = vunpack.c.l.s4 1966171168
        %v1155 = vunpack.c.0.s8 %v1154
        %v1156 = vlaneseq
        %v1157 = vshrl.u32 %v1156, 7
        %v1158 = vsub.s32 %v1155, %v1157
        %v1159 = vrot.slane %v1152, %v1158
        %v1161 = vsub.f32 %v1125, %v1159
        %v1162 = vmul.f32 %v1016, %v1161
        %v1163 = vsub.f32 %v1021, %v1162
        %v1164 = vsub.f32 %v1163, %v1018
        %v1165 = vmul.f32 %v1164, 0.2817535
        %v1166 = vadd.f32 %v1163, %v1165
        %v1168 = vlaneseq
        %v1169 = vshrl.u32 %v1168, 7
        %v1170 = vsub.s32 0, %v1169
        %v1171 = vrot.slane %v1166, %v1170
        %v1172 = vlaneseq
        %v1173 = vshrl.u32 %v1172, 7
        %v1174 = vsub.s32 1, %v1173
        %v1175 = vrot.slane %v1166, %v1174
        %1178 = vrot.lane.b32.xlu0 %v1171, 1
        %v1179 = vpop.permute.xlu0 %1178
        %1180 = vrot.lane.b32.xlu0 %v1175, 1
        %v1181 = vpop.permute.xlu0 %1180
        %v1182 = vsel %vm848, %v1179, %v1181
        %v1183 = vsel %vm848, %v1181, %v1179
        %v1186 = vcombine.low %v1183, %v1182
        %v1188 = vunpack.c.l.s4 1966171168
        %v1189 = vunpack.c.0.s8 %v1188
        %v1190 = vlaneseq
        %v1191 = vshrl.u32 %v1190, 7
        %v1192 = vsub.s32 %v1189, %v1191
        %v1193 = vrot.slane %v1186, %v1192
        %v1195 = vunpack.c.l.s4 1966171168
        %v1196 = vunpack.c.0.s8 %v1195
        %v1197 = vlaneseq
        %v1198 = vshrl.u32 %v1197, 7
        %v1199 = vsub.s32 %v1196, %v1198
        %v1200 = vrot.slane %v1193, %v1199
        %v1202 = vsub.f32 %v1166, %v1200
        %v1203 = vmul.f32 %v1202, %v887
        %v1204 = vsub.f32 %v1203, %v897
        %1205 = vrot.lane.b32.xlu0 %v1171, 16
        %v1206 = vpop.permute.xlu0 %1205
        %1207 = vrot.lane.b32.xlu0 %v1175, 16
        %v1208 = vpop.permute.xlu0 %1207
        %v1209 = vsel %vm904, %v1206, %v1208
        %v1210 = vsel %vm904, %v1208, %v1206
        %v1213 = vcombine.low %v1210, %v1209
        %v1215 = vunpack.c.l.s4 1966171168
        %v1216 = vunpack.c.0.s8 %v1215
        %v1217 = vlaneseq
        %v1218 = vshrl.u32 %v1217, 7
        %v1219 = vsub.s32 %v1216, %v1218
        %v1220 = vrot.slane %v1213, %v1219
        %v1222 = vunpack.c.l.s4 1966171168
        %v1223 = vunpack.c.0.s8 %v1222
        %v1224 = vlaneseq
        %v1225 = vshrl.u32 %v1224, 7
        %v1226 = vsub.s32 %v1223, %v1225
        %v1227 = vrot.slane %v1220, %v1226
        %v1229 = vsub.f32 %v1166, %v1227
        %v1230 = vmul.f32 %v1229, %v933
        %v1231 = vsub.f32 %v1230, %v936
        %v1232 = vmul.f32 %v1204, %v887
        %v1233 = vmul.f32 %v1231, %v933
        %v1235 = vlaneseq
        %v1236 = vshrl.u32 %v1235, 7
        %v1237 = vsub.s32 0, %v1236
        %v1238 = vrot.slane %v1232, %v1237
        %v1239 = vlaneseq
        %v1240 = vshrl.u32 %v1239, 7
        %v1241 = vsub.s32 1, %v1240
        %v1242 = vrot.slane %v1232, %v1241
        %1245 = vrot.lane.b32.xlu0 %v1238, 127
        %v1246 = vpop.permute.xlu0 %1245
        %1247 = vrot.lane.b32.xlu0 %v1242, 127
        %v1248 = vpop.permute.xlu0 %1247
        %v1249 = vsel %vm956, %v1246, %v1248
        %v1250 = vsel %vm956, %v1248, %v1246
        %v1253 = vcombine.low %v1249, %v1250
        %v1255 = vunpack.c.l.s4 1966171168
        %v1256 = vunpack.c.0.s8 %v1255
        %v1257 = vlaneseq
        %v1258 = vshrl.u32 %v1257, 7
        %v1259 = vsub.s32 %v1256, %v1258
        %v1260 = vrot.slane %v1253, %v1259
        %v1262 = vunpack.c.l.s4 1966171168
        %v1263 = vunpack.c.0.s8 %v1262
        %v1264 = vlaneseq
        %v1265 = vshrl.u32 %v1264, 7
        %v1266 = vsub.s32 %v1263, %v1265
        %v1267 = vrot.slane %v1260, %v1266
        %v1269 = vsub.f32 %v1232, %v1267
        %v1270 = vadd.f32 %v1269, %v1233
        %v1272 = vlaneseq
        %v1273 = vshrl.u32 %v1272, 7
        %v1274 = vsub.s32 0, %v1273
        %v1275 = vrot.slane %v1233, %v1274
        %v1276 = vlaneseq
        %v1277 = vshrl.u32 %v1276, 7
        %v1278 = vsub.s32 1, %v1277
        %v1279 = vrot.slane %v1233, %v1278
        %1282 = vrot.lane.b32.xlu0 %v1275, 112
        %v1283 = vpop.permute.xlu0 %1282
        %1284 = vrot.lane.b32.xlu0 %v1279, 112
        %v1285 = vpop.permute.xlu0 %1284
        %v1286 = vsel %vm994, %v1283, %v1285
        %v1287 = vsel %vm994, %v1285, %v1283
        %v1290 = vcombine.low %v1286, %v1287
        %v1292 = vunpack.c.l.s4 1966171168
        %v1293 = vunpack.c.0.s8 %v1292
        %v1294 = vlaneseq
        %v1295 = vshrl.u32 %v1294, 7
        %v1296 = vsub.s32 %v1293, %v1295
        %v1297 = vrot.slane %v1290, %v1296
        %v1299 = vunpack.c.l.s4 1966171168
        %v1300 = vunpack.c.0.s8 %v1299
        %v1301 = vlaneseq
        %v1302 = vshrl.u32 %v1301, 7
        %v1303 = vsub.s32 %v1300, %v1302
        %v1304 = vrot.slane %v1297, %v1303
        %v1306 = vsub.f32 %v1270, %v1304
        %v1307 = vmul.f32 %v1016, %v1306
        %v1308 = vsub.f32 %v1166, %v1307
        %v1309 = vsub.f32 %v1308, %v1163
        %v1310 = vmul.f32 %v1309, 0.43404278
        %v1311 = vadd.f32 %v1308, %v1310
        %v1313 = vlaneseq
        %v1314 = vshrl.u32 %v1313, 7
        %v1315 = vsub.s32 0, %v1314
        %v1316 = vrot.slane %v1311, %v1315
        %v1317 = vlaneseq
        %v1318 = vshrl.u32 %v1317, 7
        %v1319 = vsub.s32 1, %v1318
        %v1320 = vrot.slane %v1311, %v1319
        %1323 = vrot.lane.b32.xlu0 %v1316, 1
        %v1324 = vpop.permute.xlu0 %1323
        %1325 = vrot.lane.b32.xlu0 %v1320, 1
        %v1326 = vpop.permute.xlu0 %1325
        %v1327 = vsel %vm848, %v1324, %v1326
        %v1328 = vsel %vm848, %v1326, %v1324
        %v1331 = vcombine.low %v1328, %v1327
        %v1333 = vunpack.c.l.s4 1966171168
        %v1334 = vunpack.c.0.s8 %v1333
        %v1335 = vlaneseq
        %v1336 = vshrl.u32 %v1335, 7
        %v1337 = vsub.s32 %v1334, %v1336
        %v1338 = vrot.slane %v1331, %v1337
        %v1340 = vunpack.c.l.s4 1966171168
        %v1341 = vunpack.c.0.s8 %v1340
        %v1342 = vlaneseq
        %v1343 = vshrl.u32 %v1342, 7
        %v1344 = vsub.s32 %v1341, %v1343
        %v1345 = vrot.slane %v1338, %v1344
        %v1347 = vsub.f32 %v1311, %v1345
        %v1348 = vmul.f32 %v1347, %v887
        %v1349 = vsub.f32 %v1348, %v897
        %1350 = vrot.lane.b32.xlu0 %v1316, 16
        %v1351 = vpop.permute.xlu0 %1350
        %1352 = vrot.lane.b32.xlu0 %v1320, 16
        %v1353 = vpop.permute.xlu0 %1352
        %v1354 = vsel %vm904, %v1351, %v1353
        %v1355 = vsel %vm904, %v1353, %v1351
        %v1358 = vcombine.low %v1355, %v1354
        %v1360 = vunpack.c.l.s4 1966171168
        %v1361 = vunpack.c.0.s8 %v1360
        %v1362 = vlaneseq
        %v1363 = vshrl.u32 %v1362, 7
        %v1364 = vsub.s32 %v1361, %v1363
        %v1365 = vrot.slane %v1358, %v1364
        %v1367 = vunpack.c.l.s4 1966171168
        %v1368 = vunpack.c.0.s8 %v1367
        %v1369 = vlaneseq
        %v1370 = vshrl.u32 %v1369, 7
        %v1371 = vsub.s32 %v1368, %v1370
        %v1372 = vrot.slane %v1365, %v1371
        %v1374 = vsub.f32 %v1311, %v1372
        %v1375 = vmul.f32 %v1374, %v933
        %v1376 = vsub.f32 %v1375, %v936
        %v1377 = vmul.f32 %v1349, %v887
        %v1378 = vmul.f32 %v1376, %v933
        %v1380 = vlaneseq
        %v1381 = vshrl.u32 %v1380, 7
        %v1382 = vsub.s32 0, %v1381
        %v1383 = vrot.slane %v1377, %v1382
        %v1384 = vlaneseq
        %v1385 = vshrl.u32 %v1384, 7
        %v1386 = vsub.s32 1, %v1385
        %v1387 = vrot.slane %v1377, %v1386
        %1390 = vrot.lane.b32.xlu0 %v1383, 127
        %v1391 = vpop.permute.xlu0 %1390
        %1392 = vrot.lane.b32.xlu0 %v1387, 127
        %v1393 = vpop.permute.xlu0 %1392
        %v1394 = vsel %vm956, %v1391, %v1393
        %v1395 = vsel %vm956, %v1393, %v1391
        %v1398 = vcombine.low %v1394, %v1395
        %v1400 = vunpack.c.l.s4 1966171168
        %v1401 = vunpack.c.0.s8 %v1400
        %v1402 = vlaneseq
        %v1403 = vshrl.u32 %v1402, 7
        %v1404 = vsub.s32 %v1401, %v1403
        %v1405 = vrot.slane %v1398, %v1404
        %v1407 = vunpack.c.l.s4 1966171168
        %v1408 = vunpack.c.0.s8 %v1407
        %v1409 = vlaneseq
        %v1410 = vshrl.u32 %v1409, 7
        %v1411 = vsub.s32 %v1408, %v1410
        %v1412 = vrot.slane %v1405, %v1411
        %v1414 = vsub.f32 %v1377, %v1412
        %v1415 = vadd.f32 %v1414, %v1378
        %v1417 = vlaneseq
        %v1418 = vshrl.u32 %v1417, 7
        %v1419 = vsub.s32 0, %v1418
        %v1420 = vrot.slane %v1378, %v1419
        %v1421 = vlaneseq
        %v1422 = vshrl.u32 %v1421, 7
        %v1423 = vsub.s32 1, %v1422
        %v1424 = vrot.slane %v1378, %v1423
        %1427 = vrot.lane.b32.xlu0 %v1420, 112
        %v1428 = vpop.permute.xlu0 %1427
        %1429 = vrot.lane.b32.xlu0 %v1424, 112
        %v1430 = vpop.permute.xlu0 %1429
        %v1431 = vsel %vm994, %v1428, %v1430
        %v1432 = vsel %vm994, %v1430, %v1428
        %v1435 = vcombine.low %v1431, %v1432
        %v1437 = vunpack.c.l.s4 1966171168
        %v1438 = vunpack.c.0.s8 %v1437
        %v1439 = vlaneseq
        %v1440 = vshrl.u32 %v1439, 7
        %v1441 = vsub.s32 %v1438, %v1440
        %v1442 = vrot.slane %v1435, %v1441
        %v1444 = vunpack.c.l.s4 1966171168
        %v1445 = vunpack.c.0.s8 %v1444
        %v1446 = vlaneseq
        %v1447 = vshrl.u32 %v1446, 7
        %v1448 = vsub.s32 %v1445, %v1447
        %v1449 = vrot.slane %v1442, %v1448
        %v1451 = vsub.f32 %v1415, %v1449
        %v1452 = vmul.f32 %v1016, %v1451
        %v1453 = vsub.f32 %v1311, %v1452
        %v1454 = vsub.f32 %v1453, %v1308
        %v1455 = vmul.f32 %v1454, 0.5310638
        %v1456 = vadd.f32 %v1453, %v1455
        %v1458 = vlaneseq
        %v1459 = vshrl.u32 %v1458, 7
        %v1460 = vsub.s32 0, %v1459
        %v1461 = vrot.slane %v1456, %v1460
        %v1462 = vlaneseq
        %v1463 = vshrl.u32 %v1462, 7
        %v1464 = vsub.s32 1, %v1463
        %v1465 = vrot.slane %v1456, %v1464
        %1468 = vrot.lane.b32.xlu0 %v1461, 1
        %v1469 = vpop.permute.xlu0 %1468
        %1470 = vrot.lane.b32.xlu0 %v1465, 1
        %v1471 = vpop.permute.xlu0 %1470
        %v1472 = vsel %vm848, %v1469, %v1471
        %v1473 = vsel %vm848, %v1471, %v1469
        %v1476 = vcombine.low %v1473, %v1472
        %v1478 = vunpack.c.l.s4 1966171168
        %v1479 = vunpack.c.0.s8 %v1478
        %v1480 = vlaneseq
        %v1481 = vshrl.u32 %v1480, 7
        %v1482 = vsub.s32 %v1479, %v1481
        %v1483 = vrot.slane %v1476, %v1482
        %v1485 = vunpack.c.l.s4 1966171168
        %v1486 = vunpack.c.0.s8 %v1485
        %v1487 = vlaneseq
        %v1488 = vshrl.u32 %v1487, 7
        %v1489 = vsub.s32 %v1486, %v1488
        %v1490 = vrot.slane %v1483, %v1489
        %v1492 = vsub.f32 %v1456, %v1490
        %v1493 = vmul.f32 %v1492, %v887
        %v1494 = vsub.f32 %v1493, %v897
        %1495 = vrot.lane.b32.xlu0 %v1461, 16
        %v1496 = vpop.permute.xlu0 %1495
        %1497 = vrot.lane.b32.xlu0 %v1465, 16
        %v1498 = vpop.permute.xlu0 %1497
        %v1499 = vsel %vm904, %v1496, %v1498
        %v1500 = vsel %vm904, %v1498, %v1496
        %v1503 = vcombine.low %v1500, %v1499
        %v1505 = vunpack.c.l.s4 1966171168
        %v1506 = vunpack.c.0.s8 %v1505
        %v1507 = vlaneseq
        %v1508 = vshrl.u32 %v1507, 7
        %v1509 = vsub.s32 %v1506, %v1508
        %v1510 = vrot.slane %v1503, %v1509
        %v1512 = vunpack.c.l.s4 1966171168
        %v1513 = vunpack.c.0.s8 %v1512
        %v1514 = vlaneseq
        %v1515 = vshrl.u32 %v1514, 7
        %v1516 = vsub.s32 %v1513, %v1515
        %v1517 = vrot.slane %v1510, %v1516
        %v1519 = vsub.f32 %v1456, %v1517
        %v1520 = vmul.f32 %v1519, %v933
        %v1521 = vsub.f32 %v1520, %v936
        %v1522 = vmul.f32 %v1494, %v887
        %v1523 = vmul.f32 %v1521, %v933
        %v1525 = vlaneseq
        %v1526 = vshrl.u32 %v1525, 7
        %v1527 = vsub.s32 0, %v1526
        %v1528 = vrot.slane %v1522, %v1527
        %v1529 = vlaneseq
        %v1530 = vshrl.u32 %v1529, 7
        %v1531 = vsub.s32 1, %v1530
        %v1532 = vrot.slane %v1522, %v1531
        %1535 = vrot.lane.b32.xlu0 %v1528, 127
        %v1536 = vpop.permute.xlu0 %1535
        %1537 = vrot.lane.b32.xlu0 %v1532, 127
        %v1538 = vpop.permute.xlu0 %1537
        %v1539 = vsel %vm956, %v1536, %v1538
        %v1540 = vsel %vm956, %v1538, %v1536
        %v1543 = vcombine.low %v1539, %v1540
        %v1545 = vunpack.c.l.s4 1966171168
        %v1546 = vunpack.c.0.s8 %v1545
        %v1547 = vlaneseq
        %v1548 = vshrl.u32 %v1547, 7
        %v1549 = vsub.s32 %v1546, %v1548
        %v1550 = vrot.slane %v1543, %v1549
        %v1552 = vunpack.c.l.s4 1966171168
        %v1553 = vunpack.c.0.s8 %v1552
        %v1554 = vlaneseq
        %v1555 = vshrl.u32 %v1554, 7
        %v1556 = vsub.s32 %v1553, %v1555
        %v1557 = vrot.slane %v1550, %v1556
        %v1559 = vsub.f32 %v1522, %v1557
        %v1560 = vadd.f32 %v1559, %v1523
        %v1562 = vlaneseq
        %v1563 = vshrl.u32 %v1562, 7
        %v1564 = vsub.s32 0, %v1563
        %v1565 = vrot.slane %v1523, %v1564
        %v1566 = vlaneseq
        %v1567 = vshrl.u32 %v1566, 7
        %v1568 = vsub.s32 1, %v1567
        %v1569 = vrot.slane %v1523, %v1568
        %1572 = vrot.lane.b32.xlu0 %v1565, 112
        %v1573 = vpop.permute.xlu0 %1572
        %1574 = vrot.lane.b32.xlu0 %v1569, 112
        %v1575 = vpop.permute.xlu0 %1574
        %v1576 = vsel %vm994, %v1573, %v1575
        %v1577 = vsel %vm994, %v1575, %v1573
        %v1580 = vcombine.low %v1576, %v1577
        %v1582 = vunpack.c.l.s4 1966171168
        %v1583 = vunpack.c.0.s8 %v1582
        %v1584 = vlaneseq
        %v1585 = vshrl.u32 %v1584, 7
        %v1586 = vsub.s32 %v1583, %v1585
        %v1587 = vrot.slane %v1580, %v1586
        %v1589 = vunpack.c.l.s4 1966171168
        %v1590 = vunpack.c.0.s8 %v1589
        %v1591 = vlaneseq
        %v1592 = vshrl.u32 %v1591, 7
        %v1593 = vsub.s32 %v1590, %v1592
        %v1594 = vrot.slane %v1587, %v1593
        %v1596 = vsub.f32 %v1560, %v1594
        %v1597 = vmul.f32 %v1016, %v1596
        %v1598 = vsub.f32 %v1456, %v1597
        %v1599 = vsub.f32 %v1598, %v1453
        %v1600 = vmul.f32 %v1599, 0.5987786
        %v1601 = vadd.f32 %v1598, %v1600
        %v1603 = vlaneseq
        %v1604 = vshrl.u32 %v1603, 7
        %v1605 = vsub.s32 0, %v1604
        %v1606 = vrot.slane %v1601, %v1605
        %v1607 = vlaneseq
        %v1608 = vshrl.u32 %v1607, 7
        %v1609 = vsub.s32 1, %v1608
        %v1610 = vrot.slane %v1601, %v1609
        %1613 = vrot.lane.b32.xlu0 %v1606, 1
        %v1614 = vpop.permute.xlu0 %1613
        %1615 = vrot.lane.b32.xlu0 %v1610, 1
        %v1616 = vpop.permute.xlu0 %1615
        %v1617 = vsel %vm848, %v1614, %v1616
        %v1618 = vsel %vm848, %v1616, %v1614
        %v1621 = vcombine.low %v1618, %v1617
        %v1623 = vunpack.c.l.s4 1966171168
        %v1624 = vunpack.c.0.s8 %v1623
        %v1625 = vlaneseq
        %v1626 = vshrl.u32 %v1625, 7
        %v1627 = vsub.s32 %v1624, %v1626
        %v1628 = vrot.slane %v1621, %v1627
        %v1630 = vunpack.c.l.s4 1966171168
        %v1631 = vunpack.c.0.s8 %v1630
        %v1632 = vlaneseq
        %v1633 = vshrl.u32 %v1632, 7
        %v1634 = vsub.s32 %v1631, %v1633
        %v1635 = vrot.slane %v1628, %v1634
        %v1637 = vsub.f32 %v1601, %v1635
        %v1638 = vmul.f32 %v1637, %v887
        %v1639 = vsub.f32 %v1638, %v897
        %1640 = vrot.lane.b32.xlu0 %v1606, 16
        %v1641 = vpop.permute.xlu0 %1640
        %1642 = vrot.lane.b32.xlu0 %v1610, 16
        %v1643 = vpop.permute.xlu0 %1642
        %v1644 = vsel %vm904, %v1641, %v1643
        %v1645 = vsel %vm904, %v1643, %v1641
        %v1648 = vcombine.low %v1645, %v1644
        %v1650 = vunpack.c.l.s4 1966171168
        %v1651 = vunpack.c.0.s8 %v1650
        %v1652 = vlaneseq
        %v1653 = vshrl.u32 %v1652, 7
        %v1654 = vsub.s32 %v1651, %v1653
        %v1655 = vrot.slane %v1648, %v1654
        %v1657 = vunpack.c.l.s4 1966171168
        %v1658 = vunpack.c.0.s8 %v1657
        %v1659 = vlaneseq
        %v1660 = vshrl.u32 %v1659, 7
        %v1661 = vsub.s32 %v1658, %v1660
        %v1662 = vrot.slane %v1655, %v1661
        %v1664 = vsub.f32 %v1601, %v1662
        %v1665 = vmul.f32 %v1664, %v933
        %v1666 = vsub.f32 %v1665, %v936
        %v1667 = vmul.f32 %v1639, %v887
        %v1668 = vmul.f32 %v1666, %v933
        %v1670 = vlaneseq
        %v1671 = vshrl.u32 %v1670, 7
        %v1672 = vsub.s32 0, %v1671
        %v1673 = vrot.slane %v1667, %v1672
        %v1674 = vlaneseq
        %v1675 = vshrl.u32 %v1674, 7
        %v1676 = vsub.s32 1, %v1675
        %v1677 = vrot.slane %v1667, %v1676
        %1680 = vrot.lane.b32.xlu0 %v1673, 127
        %v1681 = vpop.permute.xlu0 %1680
        %1682 = vrot.lane.b32.xlu0 %v1677, 127
        %v1683 = vpop.permute.xlu0 %1682
        %v1684 = vsel %vm956, %v1681, %v1683
        %v1685 = vsel %vm956, %v1683, %v1681
        %v1688 = vcombine.low %v1684, %v1685
        %v1690 = vunpack.c.l.s4 1966171168
        %v1691 = vunpack.c.0.s8 %v1690
        %v1692 = vlaneseq
        %v1693 = vshrl.u32 %v1692, 7
        %v1694 = vsub.s32 %v1691, %v1693
        %v1695 = vrot.slane %v1688, %v1694
        %v1697 = vunpack.c.l.s4 1966171168
        %v1698 = vunpack.c.0.s8 %v1697
        %v1699 = vlaneseq
        %v1700 = vshrl.u32 %v1699, 7
        %v1701 = vsub.s32 %v1698, %v1700
        %v1702 = vrot.slane %v1695, %v1701
        %v1704 = vsub.f32 %v1667, %v1702
        %v1705 = vadd.f32 %v1704, %v1668
        %v1707 = vlaneseq
        %v1708 = vshrl.u32 %v1707, 7
        %v1709 = vsub.s32 0, %v1708
        %v1710 = vrot.slane %v1668, %v1709
        %v1711 = vlaneseq
        %v1712 = vshrl.u32 %v1711, 7
        %v1713 = vsub.s32 1, %v1712
        %v1714 = vrot.slane %v1668, %v1713
        %1717 = vrot.lane.b32.xlu0 %v1710, 112
        %v1718 = vpop.permute.xlu0 %1717
        %1719 = vrot.lane.b32.xlu0 %v1714, 112
        %v1720 = vpop.permute.xlu0 %1719
        %v1721 = vsel %vm994, %v1718, %v1720
        %v1722 = vsel %vm994, %v1720, %v1718
        %v1725 = vcombine.low %v1721, %v1722
        %v1727 = vunpack.c.l.s4 1966171168
        %v1728 = vunpack.c.0.s8 %v1727
        %v1729 = vlaneseq
        %v1730 = vshrl.u32 %v1729, 7
        %v1731 = vsub.s32 %v1728, %v1730
        %v1732 = vrot.slane %v1725, %v1731
        %v1734 = vunpack.c.l.s4 1966171168
        %v1735 = vunpack.c.0.s8 %v1734
        %v1736 = vlaneseq
        %v1737 = vshrl.u32 %v1736, 7
        %v1738 = vsub.s32 %v1735, %v1737
        %v1739 = vrot.slane %v1732, %v1738
        %v1741 = vsub.f32 %v1705, %v1739
        %v1742 = vmul.f32 %v1016, %v1741
        %v1743 = vsub.f32 %v1601, %v1742
        %v1744 = vsub.f32 %v1743, %v1598
        %v1745 = vmul.f32 %v1744, 0.64892334
        %v1746 = vadd.f32 %v1743, %v1745
        %v1748 = vlaneseq
        %v1749 = vshrl.u32 %v1748, 7
        %v1750 = vsub.s32 0, %v1749
        %v1751 = vrot.slane %v1746, %v1750
        %v1752 = vlaneseq
        %v1753 = vshrl.u32 %v1752, 7
        %v1754 = vsub.s32 1, %v1753
        %v1755 = vrot.slane %v1746, %v1754
        %1758 = vrot.lane.b32.xlu0 %v1751, 1
        %v1759 = vpop.permute.xlu0 %1758
        %1760 = vrot.lane.b32.xlu0 %v1755, 1
        %v1761 = vpop.permute.xlu0 %1760
        %v1762 = vsel %vm848, %v1759, %v1761
        %v1763 = vsel %vm848, %v1761, %v1759
        %v1766 = vcombine.low %v1763, %v1762
        %v1768 = vunpack.c.l.s4 1966171168
        %v1769 = vunpack.c.0.s8 %v1768
        %v1770 = vlaneseq
        %v1771 = vshrl.u32 %v1770, 7
        %v1772 = vsub.s32 %v1769, %v1771
        %v1773 = vrot.slane %v1766, %v1772
        %v1775 = vunpack.c.l.s4 1966171168
        %v1776 = vunpack.c.0.s8 %v1775
        %v1777 = vlaneseq
        %v1778 = vshrl.u32 %v1777, 7
        %v1779 = vsub.s32 %v1776, %v1778
        %v1780 = vrot.slane %v1773, %v1779
        %v1782 = vsub.f32 %v1746, %v1780
        %v1783 = vmul.f32 %v1782, %v887
        %v1784 = vsub.f32 %v1783, %v897
        %1785 = vrot.lane.b32.xlu0 %v1751, 16
        %v1786 = vpop.permute.xlu0 %1785
        %1787 = vrot.lane.b32.xlu0 %v1755, 16
        %v1788 = vpop.permute.xlu0 %1787
        %v1789 = vsel %vm904, %v1786, %v1788
        %v1790 = vsel %vm904, %v1788, %v1786
        %v1793 = vcombine.low %v1790, %v1789
        %v1795 = vunpack.c.l.s4 1966171168
        %v1796 = vunpack.c.0.s8 %v1795
        %v1797 = vlaneseq
        %v1798 = vshrl.u32 %v1797, 7
        %v1799 = vsub.s32 %v1796, %v1798
        %v1800 = vrot.slane %v1793, %v1799
        %v1802 = vunpack.c.l.s4 1966171168
        %v1803 = vunpack.c.0.s8 %v1802
        %v1804 = vlaneseq
        %v1805 = vshrl.u32 %v1804, 7
        %v1806 = vsub.s32 %v1803, %v1805
        %v1807 = vrot.slane %v1800, %v1806
        %v1809 = vsub.f32 %v1746, %v1807
        %v1810 = vmul.f32 %v1809, %v933
        %v1811 = vsub.f32 %v1810, %v936
        %v1812 = vmul.f32 %v1784, %v887
        %v1813 = vmul.f32 %v1811, %v933
        %v1815 = vlaneseq
        %v1816 = vshrl.u32 %v1815, 7
        %v1817 = vsub.s32 0, %v1816
        %v1818 = vrot.slane %v1812, %v1817
        %v1819 = vlaneseq
        %v1820 = vshrl.u32 %v1819, 7
        %v1821 = vsub.s32 1, %v1820
        %v1822 = vrot.slane %v1812, %v1821
        %1825 = vrot.lane.b32.xlu0 %v1818, 127
        %v1826 = vpop.permute.xlu0 %1825
        %1827 = vrot.lane.b32.xlu0 %v1822, 127
        %v1828 = vpop.permute.xlu0 %1827
        %v1829 = vsel %vm956, %v1826, %v1828
        %v1830 = vsel %vm956, %v1828, %v1826
        %v1833 = vcombine.low %v1829, %v1830
        %v1835 = vunpack.c.l.s4 1966171168
        %v1836 = vunpack.c.0.s8 %v1835
        %v1837 = vlaneseq
        %v1838 = vshrl.u32 %v1837, 7
        %v1839 = vsub.s32 %v1836, %v1838
        %v1840 = vrot.slane %v1833, %v1839
        %v1842 = vunpack.c.l.s4 1966171168
        %v1843 = vunpack.c.0.s8 %v1842
        %v1844 = vlaneseq
        %v1845 = vshrl.u32 %v1844, 7
        %v1846 = vsub.s32 %v1843, %v1845
        %v1847 = vrot.slane %v1840, %v1846
        %v1849 = vsub.f32 %v1812, %v1847
        %v1850 = vadd.f32 %v1849, %v1813
        %v1852 = vlaneseq
        %v1853 = vshrl.u32 %v1852, 7
        %v1854 = vsub.s32 0, %v1853
        %v1855 = vrot.slane %v1813, %v1854
        %v1856 = vlaneseq
        %v1857 = vshrl.u32 %v1856, 7
        %v1858 = vsub.s32 1, %v1857
        %v1859 = vrot.slane %v1813, %v1858
        %1862 = vrot.lane.b32.xlu0 %v1855, 112
        %v1863 = vpop.permute.xlu0 %1862
        %1864 = vrot.lane.b32.xlu0 %v1859, 112
        %v1865 = vpop.permute.xlu0 %1864
        %v1866 = vsel %vm994, %v1863, %v1865
        %v1867 = vsel %vm994, %v1865, %v1863
        %v1870 = vcombine.low %v1866, %v1867
        %v1872 = vunpack.c.l.s4 1966171168
        %v1873 = vunpack.c.0.s8 %v1872
        %v1874 = vlaneseq
        %v1875 = vshrl.u32 %v1874, 7
        %v1876 = vsub.s32 %v1873, %v1875
        %v1877 = vrot.slane %v1870, %v1876
        %v1879 = vunpack.c.l.s4 1966171168
        %v1880 = vunpack.c.0.s8 %v1879
        %v1881 = vlaneseq
        %v1882 = vshrl.u32 %v1881, 7
        %v1883 = vsub.s32 %v1880, %v1882
        %v1884 = vrot.slane %v1877, %v1883
        %v1886 = vsub.f32 %v1850, %v1884
        %v1887 = vmul.f32 %v1016, %v1886
        %v1888 = vsub.f32 %v1746, %v1887
        %v1889 = vsub.f32 %v1888, %v1743
        %v1890 = vmul.f32 %v1889, 0.68764585
        %v1891 = vadd.f32 %v1888, %v1890
        %v1893 = vlaneseq
        %v1894 = vshrl.u32 %v1893, 7
        %v1895 = vsub.s32 0, %v1894
        %v1896 = vrot.slane %v1891, %v1895
        %v1897 = vlaneseq
        %v1898 = vshrl.u32 %v1897, 7
        %v1899 = vsub.s32 1, %v1898
        %v1900 = vrot.slane %v1891, %v1899
        %1903 = vrot.lane.b32.xlu0 %v1896, 1
        %v1904 = vpop.permute.xlu0 %1903
        %1905 = vrot.lane.b32.xlu0 %v1900, 1
        %v1906 = vpop.permute.xlu0 %1905
        %v1907 = vsel %vm848, %v1904, %v1906
        %v1908 = vsel %vm848, %v1906, %v1904
        %v1911 = vcombine.low %v1908, %v1907
        %v1913 = vunpack.c.l.s4 1966171168
        %v1914 = vunpack.c.0.s8 %v1913
        %v1915 = vlaneseq
        %v1916 = vshrl.u32 %v1915, 7
        %v1917 = vsub.s32 %v1914, %v1916
        %v1918 = vrot.slane %v1911, %v1917
        %v1920 = vunpack.c.l.s4 1966171168
        %v1921 = vunpack.c.0.s8 %v1920
        %v1922 = vlaneseq
        %v1923 = vshrl.u32 %v1922, 7
        %v1924 = vsub.s32 %v1921, %v1923
        %v1925 = vrot.slane %v1918, %v1924
        %v1927 = vsub.f32 %v1891, %v1925
        %v1928 = vmul.f32 %v1927, %v887
        %v1929 = vsub.f32 %v1928, %v897
        %1930 = vrot.lane.b32.xlu0 %v1896, 16
        %v1931 = vpop.permute.xlu0 %1930
        %1932 = vrot.lane.b32.xlu0 %v1900, 16
        %v1933 = vpop.permute.xlu0 %1932
        %v1934 = vsel %vm904, %v1931, %v1933
        %v1935 = vsel %vm904, %v1933, %v1931
        %v1938 = vcombine.low %v1935, %v1934
        %v1940 = vunpack.c.l.s4 1966171168
        %v1941 = vunpack.c.0.s8 %v1940
        %v1942 = vlaneseq
        %v1943 = vshrl.u32 %v1942, 7
        %v1944 = vsub.s32 %v1941, %v1943
        %v1945 = vrot.slane %v1938, %v1944
        %v1947 = vunpack.c.l.s4 1966171168
        %v1948 = vunpack.c.0.s8 %v1947
        %v1949 = vlaneseq
        %v1950 = vshrl.u32 %v1949, 7
        %v1951 = vsub.s32 %v1948, %v1950
        %v1952 = vrot.slane %v1945, %v1951
        %v1954 = vsub.f32 %v1891, %v1952
        %v1955 = vmul.f32 %v1954, %v933
        %v1956 = vsub.f32 %v1955, %v936
        %v1957 = vmul.f32 %v1929, %v887
        %v1958 = vmul.f32 %v1956, %v933
        %v1960 = vlaneseq
        %v1961 = vshrl.u32 %v1960, 7
        %v1962 = vsub.s32 0, %v1961
        %v1963 = vrot.slane %v1957, %v1962
        %v1964 = vlaneseq
        %v1965 = vshrl.u32 %v1964, 7
        %v1966 = vsub.s32 1, %v1965
        %v1967 = vrot.slane %v1957, %v1966
        %1970 = vrot.lane.b32.xlu0 %v1963, 127
        %v1971 = vpop.permute.xlu0 %1970
        %1972 = vrot.lane.b32.xlu0 %v1967, 127
        %v1973 = vpop.permute.xlu0 %1972
        %v1974 = vsel %vm956, %v1971, %v1973
        %v1975 = vsel %vm956, %v1973, %v1971
        %v1978 = vcombine.low %v1974, %v1975
        %v1980 = vunpack.c.l.s4 1966171168
        %v1981 = vunpack.c.0.s8 %v1980
        %v1982 = vlaneseq
        %v1983 = vshrl.u32 %v1982, 7
        %v1984 = vsub.s32 %v1981, %v1983
        %v1985 = vrot.slane %v1978, %v1984
        %v1987 = vunpack.c.l.s4 1966171168
        %v1988 = vunpack.c.0.s8 %v1987
        %v1989 = vlaneseq
        %v1990 = vshrl.u32 %v1989, 7
        %v1991 = vsub.s32 %v1988, %v1990
        %v1992 = vrot.slane %v1985, %v1991
        %v1994 = vsub.f32 %v1957, %v1992
        %v1995 = vadd.f32 %v1994, %v1958
        %v1997 = vlaneseq
        %v1998 = vshrl.u32 %v1997, 7
        %v1999 = vsub.s32 0, %v1998
        %v2000 = vrot.slane %v1958, %v1999
        %v2001 = vlaneseq
        %v2002 = vshrl.u32 %v2001, 7
        %v2003 = vsub.s32 1, %v2002
        %v2004 = vrot.slane %v1958, %v2003
        %2007 = vrot.lane.b32.xlu0 %v2000, 112
        %v2008 = vpop.permute.xlu0 %2007
        %2009 = vrot.lane.b32.xlu0 %v2004, 112
        %v2010 = vpop.permute.xlu0 %2009
        %v2011 = vsel %vm994, %v2008, %v2010
        %v2012 = vsel %vm994, %v2010, %v2008
        %v2015 = vcombine.low %v2011, %v2012
        %v2017 = vunpack.c.l.s4 1966171168
        %v2018 = vunpack.c.0.s8 %v2017
        %v2019 = vlaneseq
        %v2020 = vshrl.u32 %v2019, 7
        %v2021 = vsub.s32 %v2018, %v2020
        %v2022 = vrot.slane %v2015, %v2021
        %v2024 = vunpack.c.l.s4 1966171168
        %v2025 = vunpack.c.0.s8 %v2024
        %v2026 = vlaneseq
        %v2027 = vshrl.u32 %v2026, 7
        %v2028 = vsub.s32 %v2025, %v2027
        %v2029 = vrot.slane %v2022, %v2028
        %v2031 = vsub.f32 %v1995, %v2029
        %v2032 = vmul.f32 %v1016, %v2031
        %v2033 = vsub.f32 %v1891, %v2032
        %v2034 = vsub.f32 %v2033, %v1888
        %v2035 = vmul.f32 %v2034, 0.71849984
        %v2036 = vadd.f32 %v2033, %v2035
        %v2038 = vlaneseq
        %v2039 = vshrl.u32 %v2038, 7
        %v2040 = vsub.s32 0, %v2039
        %v2041 = vrot.slane %v2036, %v2040
        %v2042 = vlaneseq
        %v2043 = vshrl.u32 %v2042, 7
        %v2044 = vsub.s32 1, %v2043
        %v2045 = vrot.slane %v2036, %v2044
        %2048 = vrot.lane.b32.xlu0 %v2041, 1
        %v2049 = vpop.permute.xlu0 %2048
        %2050 = vrot.lane.b32.xlu0 %v2045, 1
        %v2051 = vpop.permute.xlu0 %2050
        %v2052 = vsel %vm848, %v2049, %v2051
        %v2053 = vsel %vm848, %v2051, %v2049
        %v2056 = vcombine.low %v2053, %v2052
        %v2058 = vunpack.c.l.s4 1966171168
        %v2059 = vunpack.c.0.s8 %v2058
        %v2060 = vlaneseq
        %v2061 = vshrl.u32 %v2060, 7
        %v2062 = vsub.s32 %v2059, %v2061
        %v2063 = vrot.slane %v2056, %v2062
        %v2065 = vunpack.c.l.s4 1966171168
        %v2066 = vunpack.c.0.s8 %v2065
        %v2067 = vlaneseq
        %v2068 = vshrl.u32 %v2067, 7
        %v2069 = vsub.s32 %v2066, %v2068
        %v2070 = vrot.slane %v2063, %v2069
        %v2072 = vsub.f32 %v2036, %v2070
        %v2073 = vmul.f32 %v2072, %v887
        %v2074 = vsub.f32 %v2073, %v897
        %2075 = vrot.lane.b32.xlu0 %v2041, 16
        %v2076 = vpop.permute.xlu0 %2075
        %2077 = vrot.lane.b32.xlu0 %v2045, 16
        %v2078 = vpop.permute.xlu0 %2077
        %v2079 = vsel %vm904, %v2076, %v2078
        %v2080 = vsel %vm904, %v2078, %v2076
        %v2083 = vcombine.low %v2080, %v2079
        %v2085 = vunpack.c.l.s4 1966171168
        %v2086 = vunpack.c.0.s8 %v2085
        %v2087 = vlaneseq
        %v2088 = vshrl.u32 %v2087, 7
        %v2089 = vsub.s32 %v2086, %v2088
        %v2090 = vrot.slane %v2083, %v2089
        %v2092 = vunpack.c.l.s4 1966171168
        %v2093 = vunpack.c.0.s8 %v2092
        %v2094 = vlaneseq
        %v2095 = vshrl.u32 %v2094, 7
        %v2096 = vsub.s32 %v2093, %v2095
        %v2097 = vrot.slane %v2090, %v2096
        %v2099 = vsub.f32 %v2036, %v2097
        %v2100 = vmul.f32 %v2099, %v933
        %v2101 = vsub.f32 %v2100, %v936
        %v2102 = vmul.f32 %v2074, %v887
        %v2103 = vmul.f32 %v2101, %v933
        %v2105 = vlaneseq
        %v2106 = vshrl.u32 %v2105, 7
        %v2107 = vsub.s32 0, %v2106
        %v2108 = vrot.slane %v2102, %v2107
        %v2109 = vlaneseq
        %v2110 = vshrl.u32 %v2109, 7
        %v2111 = vsub.s32 1, %v2110
        %v2112 = vrot.slane %v2102, %v2111
        %2115 = vrot.lane.b32.xlu0 %v2108, 127
        %v2116 = vpop.permute.xlu0 %2115
        %2117 = vrot.lane.b32.xlu0 %v2112, 127
        %v2118 = vpop.permute.xlu0 %2117
        %v2119 = vsel %vm956, %v2116, %v2118
        %v2120 = vsel %vm956, %v2118, %v2116
        %v2123 = vcombine.low %v2119, %v2120
        %v2125 = vunpack.c.l.s4 1966171168
        %v2126 = vunpack.c.0.s8 %v2125
        %v2127 = vlaneseq
        %v2128 = vshrl.u32 %v2127, 7
        %v2129 = vsub.s32 %v2126, %v2128
        %v2130 = vrot.slane %v2123, %v2129
        %v2132 = vunpack.c.l.s4 1966171168
        %v2133 = vunpack.c.0.s8 %v2132
        %v2134 = vlaneseq
        %v2135 = vshrl.u32 %v2134, 7
        %v2136 = vsub.s32 %v2133, %v2135
        %v2137 = vrot.slane %v2130, %v2136
        %v2139 = vsub.f32 %v2102, %v2137
        %v2140 = vadd.f32 %v2139, %v2103
        %v2142 = vlaneseq
        %v2143 = vshrl.u32 %v2142, 7
        %v2144 = vsub.s32 0, %v2143
        %v2145 = vrot.slane %v2103, %v2144
        %v2146 = vlaneseq
        %v2147 = vshrl.u32 %v2146, 7
        %v2148 = vsub.s32 1, %v2147
        %v2149 = vrot.slane %v2103, %v2148
        %2152 = vrot.lane.b32.xlu0 %v2145, 112
        %v2153 = vpop.permute.xlu0 %2152
        %2154 = vrot.lane.b32.xlu0 %v2149, 112
        %v2155 = vpop.permute.xlu0 %2154
        %v2156 = vsel %vm994, %v2153, %v2155
        %v2157 = vsel %vm994, %v2155, %v2153
        %v2160 = vcombine.low %v2156, %v2157
        %v2162 = vunpack.c.l.s4 1966171168
        %v2163 = vunpack.c.0.s8 %v2162
        %v2164 = vlaneseq
        %v2165 = vshrl.u32 %v2164, 7
        %v2166 = vsub.s32 %v2163, %v2165
        %v2167 = vrot.slane %v2160, %v2166
        %v2169 = vunpack.c.l.s4 1966171168
        %v2170 = vunpack.c.0.s8 %v2169
        %v2171 = vlaneseq
        %v2172 = vshrl.u32 %v2171, 7
        %v2173 = vsub.s32 %v2170, %v2172
        %v2174 = vrot.slane %v2167, %v2173
        %v2176 = vsub.f32 %v2140, %v2174
        %v2177 = vmul.f32 %v1016, %v2176
        %v2178 = vsub.f32 %v2036, %v2177
        %v2179 = vsub.f32 %v2178, %v2033
        %v2180 = vmul.f32 %v2179, 0.743691
        %v2181 = vadd.f32 %v2178, %v2180
        %v2183 = vlaneseq
        %v2184 = vshrl.u32 %v2183, 7
        %v2185 = vsub.s32 0, %v2184
        %v2186 = vrot.slane %v2181, %v2185
        %v2187 = vlaneseq
        %v2188 = vshrl.u32 %v2187, 7
        %v2189 = vsub.s32 1, %v2188
        %v2190 = vrot.slane %v2181, %v2189
        %2193 = vrot.lane.b32.xlu0 %v2186, 1
        %v2194 = vpop.permute.xlu0 %2193
        %2195 = vrot.lane.b32.xlu0 %v2190, 1
        %v2196 = vpop.permute.xlu0 %2195
        %v2197 = vsel %vm848, %v2194, %v2196
        %v2198 = vsel %vm848, %v2196, %v2194
        %v2201 = vcombine.low %v2198, %v2197
        %v2203 = vunpack.c.l.s4 1966171168
        %v2204 = vunpack.c.0.s8 %v2203
        %v2205 = vlaneseq
        %v2206 = vshrl.u32 %v2205, 7
        %v2207 = vsub.s32 %v2204, %v2206
        %v2208 = vrot.slane %v2201, %v2207
        %v2210 = vunpack.c.l.s4 1966171168
        %v2211 = vunpack.c.0.s8 %v2210
        %v2212 = vlaneseq
        %v2213 = vshrl.u32 %v2212, 7
        %v2214 = vsub.s32 %v2211, %v2213
        %v2215 = vrot.slane %v2208, %v2214
        %v2217 = vsub.f32 %v2181, %v2215
        %v2218 = vmul.f32 %v2217, %v887
        %v2219 = vsub.f32 %v2218, %v897
        %2220 = vrot.lane.b32.xlu0 %v2186, 16
        %v2221 = vpop.permute.xlu0 %2220
        %2222 = vrot.lane.b32.xlu0 %v2190, 16
        %v2223 = vpop.permute.xlu0 %2222
        %v2224 = vsel %vm904, %v2221, %v2223
        %v2225 = vsel %vm904, %v2223, %v2221
        %v2228 = vcombine.low %v2225, %v2224
        %v2230 = vunpack.c.l.s4 1966171168
        %v2231 = vunpack.c.0.s8 %v2230
        %v2232 = vlaneseq
        %v2233 = vshrl.u32 %v2232, 7
        %v2234 = vsub.s32 %v2231, %v2233
        %v2235 = vrot.slane %v2228, %v2234
        %v2237 = vunpack.c.l.s4 1966171168
        %v2238 = vunpack.c.0.s8 %v2237
        %v2239 = vlaneseq
        %v2240 = vshrl.u32 %v2239, 7
        %v2241 = vsub.s32 %v2238, %v2240
        %v2242 = vrot.slane %v2235, %v2241
        %v2244 = vsub.f32 %v2181, %v2242
        %v2245 = vmul.f32 %v2244, %v933
        %v2246 = vsub.f32 %v2245, %v936
        %v2247 = vmul.f32 %v2219, %v887
        %v2248 = vmul.f32 %v2246, %v933
        %v2250 = vlaneseq
        %v2251 = vshrl.u32 %v2250, 7
        %v2252 = vsub.s32 0, %v2251
        %v2253 = vrot.slane %v2247, %v2252
        %v2254 = vlaneseq
        %v2255 = vshrl.u32 %v2254, 7
        %v2256 = vsub.s32 1, %v2255
        %v2257 = vrot.slane %v2247, %v2256
        %2260 = vrot.lane.b32.xlu0 %v2253, 127
        %v2261 = vpop.permute.xlu0 %2260
        %2262 = vrot.lane.b32.xlu0 %v2257, 127
        %v2263 = vpop.permute.xlu0 %2262
        %v2264 = vsel %vm956, %v2261, %v2263
        %v2265 = vsel %vm956, %v2263, %v2261
        %v2268 = vcombine.low %v2264, %v2265
        %v2270 = vunpack.c.l.s4 1966171168
        %v2271 = vunpack.c.0.s8 %v2270
        %v2272 = vlaneseq
        %v2273 = vshrl.u32 %v2272, 7
        %v2274 = vsub.s32 %v2271, %v2273
        %v2275 = vrot.slane %v2268, %v2274
        %v2277 = vunpack.c.l.s4 1966171168
        %v2278 = vunpack.c.0.s8 %v2277
        %v2279 = vlaneseq
        %v2280 = vshrl.u32 %v2279, 7
        %v2281 = vsub.s32 %v2278, %v2280
        %v2282 = vrot.slane %v2275, %v2281
        %v2284 = vsub.f32 %v2247, %v2282
        %v2285 = vadd.f32 %v2284, %v2248
        %v2287 = vlaneseq
        %v2288 = vshrl.u32 %v2287, 7
        %v2289 = vsub.s32 0, %v2288
        %v2290 = vrot.slane %v2248, %v2289
        %v2291 = vlaneseq
        %v2292 = vshrl.u32 %v2291, 7
        %v2293 = vsub.s32 1, %v2292
        %v2294 = vrot.slane %v2248, %v2293
        %2297 = vrot.lane.b32.xlu0 %v2290, 112
        %v2298 = vpop.permute.xlu0 %2297
        %2299 = vrot.lane.b32.xlu0 %v2294, 112
        %v2300 = vpop.permute.xlu0 %2299
        %v2301 = vsel %vm994, %v2298, %v2300
        %v2302 = vsel %vm994, %v2300, %v2298
        %v2305 = vcombine.low %v2301, %v2302
        %v2307 = vunpack.c.l.s4 1966171168
        %v2308 = vunpack.c.0.s8 %v2307
        %v2309 = vlaneseq
        %v2310 = vshrl.u32 %v2309, 7
        %v2311 = vsub.s32 %v2308, %v2310
        %v2312 = vrot.slane %v2305, %v2311
        %v2314 = vunpack.c.l.s4 1966171168
        %v2315 = vunpack.c.0.s8 %v2314
        %v2316 = vlaneseq
        %v2317 = vshrl.u32 %v2316, 7
        %v2318 = vsub.s32 %v2315, %v2317
        %v2319 = vrot.slane %v2312, %v2318
        %v2321 = vsub.f32 %v2285, %v2319
        %v2322 = vmul.f32 %v1016, %v2321
        %v2323 = vsub.f32 %v2181, %v2322
        %v2325 = vlaneseq
        %v2326 = vshrl.u32 %v2325, 7
        %v2327 = vsub.s32 0, %v2326
        %v2328 = vrot.slane %v2323, %v2327
        %v2329 = vlaneseq
        %v2330 = vshrl.u32 %v2329, 7
        %v2331 = vsub.s32 1, %v2330
        %v2332 = vrot.slane %v2323, %v2331
        %2335 = vrot.lane.b32.xlu0 %v2328, 1
        %v2336 = vpop.permute.xlu0 %2335
        %2337 = vrot.lane.b32.xlu0 %v2332, 1
        %v2338 = vpop.permute.xlu0 %2337
        %v2339 = vsel %vm848, %v2336, %v2338
        %v2340 = vsel %vm848, %v2338, %v2336
        %v2343 = vcombine.low %v2340, %v2339
        %v2345 = vunpack.c.l.s4 1966171168
        %v2346 = vunpack.c.0.s8 %v2345
        %v2347 = vlaneseq
        %v2348 = vshrl.u32 %v2347, 7
        %v2349 = vsub.s32 %v2346, %v2348
        %v2350 = vrot.slane %v2343, %v2349
        %v2352 = vunpack.c.l.s4 1966171168
        %v2353 = vunpack.c.0.s8 %v2352
        %v2354 = vlaneseq
        %v2355 = vshrl.u32 %v2354, 7
        %v2356 = vsub.s32 %v2353, %v2355
        %v2357 = vrot.slane %v2350, %v2356
        %v2359 = vsub.f32 %v2323, %v2357
        %v2360 = vmul.f32 %v2359, %v887
        %v2361 = vsub.f32 %v2360, %v897
        %2362 = vrot.lane.b32.xlu0 %v2328, 16
        %v2363 = vpop.permute.xlu0 %2362
        %2364 = vrot.lane.b32.xlu0 %v2332, 16
        %v2365 = vpop.permute.xlu0 %2364
        %v2366 = vsel %vm904, %v2363, %v2365
        %v2367 = vsel %vm904, %v2365, %v2363
        %v2370 = vcombine.low %v2367, %v2366
        %v2372 = vunpack.c.l.s4 1966171168
        %v2373 = vunpack.c.0.s8 %v2372
        %v2374 = vlaneseq
        %v2375 = vshrl.u32 %v2374, 7
        %v2376 = vsub.s32 %v2373, %v2375
        %v2377 = vrot.slane %v2370, %v2376
        %v2379 = vunpack.c.l.s4 1966171168
        %v2380 = vunpack.c.0.s8 %v2379
        %v2381 = vlaneseq
        %v2382 = vshrl.u32 %v2381, 7
        %v2383 = vsub.s32 %v2380, %v2382
        %v2384 = vrot.slane %v2377, %v2383
        %v2386 = vsub.f32 %v2323, %v2384
        %v2387 = vmul.f32 %v2386, %v933
        %v2388 = vsub.f32 %v2387, %v936
        %v2389 = vmul.f32 %v2361, %v887
        %v2390 = vmul.f32 %v2388, %v933
        %v2392 = vlaneseq
        %v2393 = vshrl.u32 %v2392, 7
        %v2394 = vsub.s32 0, %v2393
        %v2395 = vrot.slane %v2389, %v2394
        %v2396 = vlaneseq
        %v2397 = vshrl.u32 %v2396, 7
        %v2398 = vsub.s32 1, %v2397
        %v2399 = vrot.slane %v2389, %v2398
        %2402 = vrot.lane.b32.xlu0 %v2395, 127
        %v2403 = vpop.permute.xlu0 %2402
        %2404 = vrot.lane.b32.xlu0 %v2399, 127
        %v2405 = vpop.permute.xlu0 %2404
        %v2406 = vsel %vm956, %v2403, %v2405
        %v2407 = vsel %vm956, %v2405, %v2403
        %v2410 = vcombine.low %v2406, %v2407
        %v2412 = vunpack.c.l.s4 1966171168
        %v2413 = vunpack.c.0.s8 %v2412
        %v2414 = vlaneseq
        %v2415 = vshrl.u32 %v2414, 7
        %v2416 = vsub.s32 %v2413, %v2415
        %v2417 = vrot.slane %v2410, %v2416
        %v2419 = vunpack.c.l.s4 1966171168
        %v2420 = vunpack.c.0.s8 %v2419
        %v2421 = vlaneseq
        %v2422 = vshrl.u32 %v2421, 7
        %v2423 = vsub.s32 %v2420, %v2422
        %v2424 = vrot.slane %v2417, %v2423
        %v2426 = vsub.f32 %v2389, %v2424
        %v2427 = vadd.f32 %v2426, %v2390
        %v2429 = vlaneseq
        %v2430 = vshrl.u32 %v2429, 7
        %v2431 = vsub.s32 0, %v2430
        %v2432 = vrot.slane %v2390, %v2431
        %v2433 = vlaneseq
        %v2434 = vshrl.u32 %v2433, 7
        %v2435 = vsub.s32 1, %v2434
        %v2436 = vrot.slane %v2390, %v2435
        %2439 = vrot.lane.b32.xlu0 %v2432, 112
        %v2440 = vpop.permute.xlu0 %2439
        %2441 = vrot.lane.b32.xlu0 %v2436, 112
        %v2442 = vpop.permute.xlu0 %2441
        %v2443 = vsel %vm994, %v2440, %v2442
        %v2444 = vsel %vm994, %v2442, %v2440
        %v2447 = vcombine.low %v2443, %v2444
        %v2449 = vunpack.c.l.s4 1966171168
        %v2450 = vunpack.c.0.s8 %v2449
        %v2451 = vlaneseq
        %v2452 = vshrl.u32 %v2451, 7
        %v2453 = vsub.s32 %v2450, %v2452
        %v2454 = vrot.slane %v2447, %v2453
        %v2456 = vunpack.c.l.s4 1966171168
        %v2457 = vunpack.c.0.s8 %v2456
        %v2458 = vlaneseq
        %v2459 = vshrl.u32 %v2458, 7
        %v2460 = vsub.s32 %v2457, %v2459
        %v2461 = vrot.slane %v2454, %v2460
        %v2463 = vsub.f32 %v2427, %v2461
        %v2465 = vlaneseq
        %v2466 = vshrl.u32 %v2465, 7
        %v2467 = vsub.s32 0, %v2466
        %v2468 = vrot.slane %v2463, %v2467
        %v2469 = vlaneseq
        %v2470 = vshrl.u32 %v2469, 7
        %v2471 = vsub.s32 1, %v2470
        %v2472 = vrot.slane %v2463, %v2471
        %vm2475 = vcmask 1040384
        %v2476 = vsel %vm2475, %v2328, %v2468
        %v2477 = vsel %vm2475, %v2332, %v2472
        %v2478 = vld [vmem:[%s735] sm:$0x7]
        %v2479 = vld [vmem:[%s739] sm:$0x3f]
        %2480 = vrot.lane.b32.xlu0 %v2476, 17
        %v2481 = vpop.permute.xlu0 %2480
        %2482 = vrot.lane.b32.xlu0 %v2477, 17
        %v2483 = vpop.permute.xlu0 %2482
        %vm2484 = vcmp.lt.s32.totalorder %v847, 17
        %v2485 = vsel %vm2484, %v2481, %v2483
        %v2486 = vsel %vm2484, %v2483, %v2481
        %v2487 = vlaneseq
        %v2488 = vshrl.u32 %v2487, 7
        %v2489 = vsub.s32 0, %v2488
        %v2490 = vrot.slane %v823, %v2489
        %v2491 = vlaneseq
        %v2492 = vshrl.u32 %v2491, 7
        %v2493 = vsub.s32 0, %v2492
        %v2494 = vrot.slane %v824, %v2493
        %v2495 = vmul.f32 %v2486, %v2490
        %v2496 = vmul.f32 %v2485, %v2494
        %v2497 = vpack.c.bf16 %v2495, %v2495
        %v2498 = vpack.c.bf16 %v2496, %v2496
        %2499 = vrot.lane.b32.xlu0 %v2476, 16
        %v2500 = vpop.permute.xlu0 %2499
        %2501 = vrot.lane.b32.xlu0 %v2477, 16
        %v2502 = vpop.permute.xlu0 %2501
        %v2503 = vsel %vm904, %v2500, %v2502
        %v2504 = vsel %vm904, %v2502, %v2500
        %v2505 = vlaneseq
        %v2506 = vshrl.u32 %v2505, 7
        %v2507 = vsub.s32 1, %v2506
        %v2508 = vrot.slane %v823, %v2507
        %v2509 = vlaneseq
        %v2510 = vshrl.u32 %v2509, 7
        %v2511 = vsub.s32 1, %v2510
        %v2512 = vrot.slane %v824, %v2511
        %v2513 = vmul.f32 %v2504, %v2508
        %v2514 = vmul.f32 %v2503, %v2512
        %v2515 = vpack.c.bf16 %v2513, %v2513
        %v2516 = vpack.c.bf16 %v2514, %v2514
        %2517 = vrot.lane.b32.xlu0 %v2476, 15
        %v2518 = vpop.permute.xlu0 %2517
        %2519 = vrot.lane.b32.xlu0 %v2477, 15
        %v2520 = vpop.permute.xlu0 %2519
        %vm2521 = vcmp.lt.s32.totalorder %v847, 15
        %v2522 = vsel %vm2521, %v2518, %v2520
        %v2523 = vsel %vm2521, %v2520, %v2518
        %v2524 = vlaneseq
        %v2525 = vshrl.u32 %v2524, 7
        %v2526 = vsub.s32 2, %v2525
        %v2527 = vrot.slane %v823, %v2526
        %v2528 = vlaneseq
        %v2529 = vshrl.u32 %v2528, 7
        %v2530 = vsub.s32 2, %v2529
        %v2531 = vrot.slane %v824, %v2530
        %v2532 = vmul.f32 %v2523, %v2527
        %v2533 = vmul.f32 %v2522, %v2531
        %v2534 = vpack.c.bf16 %v2532, %v2532
        %v2535 = vpack.c.bf16 %v2533, %v2533
        %2536 = vrot.lane.b32.xlu0 %v2476, 1
        %v2537 = vpop.permute.xlu0 %2536
        %2538 = vrot.lane.b32.xlu0 %v2477, 1
        %v2539 = vpop.permute.xlu0 %2538
        %v2540 = vsel %vm848, %v2537, %v2539
        %v2541 = vsel %vm848, %v2539, %v2537
        %v2542 = vlaneseq
        %v2543 = vshrl.u32 %v2542, 7
        %v2544 = vsub.s32 3, %v2543
        %v2545 = vrot.slane %v823, %v2544
        %v2546 = vlaneseq
        %v2547 = vshrl.u32 %v2546, 7
        %v2548 = vsub.s32 3, %v2547
        %v2549 = vrot.slane %v824, %v2548
        %v2550 = vmul.f32 %v2541, %v2545
        %v2551 = vmul.f32 %v2540, %v2549
        %v2552 = vpack.c.bf16 %v2550, %v2550
        %v2553 = vpack.c.bf16 %v2551, %v2551
        %v2554 = vpack.c.bf16 %v2476, %v2476
        %v2555 = vpack.c.bf16 %v2477, %v2477
        %2556 = vrot.lane.b32.xlu0 %v2476, 127
        %v2557 = vpop.permute.xlu0 %2556
        %2558 = vrot.lane.b32.xlu0 %v2477, 127
        %v2559 = vpop.permute.xlu0 %2558
        %v2560 = vsel %vm956, %v2557, %v2559
        %v2561 = vsel %vm956, %v2559, %v2557
        %v2562 = vlaneseq
        %v2563 = vshrl.u32 %v2562, 7
        %v2564 = vsub.s32 5, %v2563
        %v2565 = vrot.slane %v823, %v2564
        %v2566 = vlaneseq
        %v2567 = vshrl.u32 %v2566, 7
        %v2568 = vsub.s32 5, %v2567
        %v2569 = vrot.slane %v824, %v2568
        %v2570 = vmul.f32 %v2560, %v2565
        %v2571 = vmul.f32 %v2561, %v2569
        %v2572 = vpack.c.bf16 %v2570, %v2570
        %v2573 = vpack.c.bf16 %v2571, %v2571
        %2574 = vrot.lane.b32.xlu0 %v2476, 113
        %v2575 = vpop.permute.xlu0 %2574
        %2576 = vrot.lane.b32.xlu0 %v2477, 113
        %v2577 = vpop.permute.xlu0 %2576
        %vm2578 = vcmp.lt.s32.totalorder %v847, 113
        %v2579 = vsel %vm2578, %v2575, %v2577
        %v2580 = vsel %vm2578, %v2577, %v2575
        %v2581 = vlaneseq
        %v2582 = vshrl.u32 %v2581, 7
        %v2583 = vsub.s32 6, %v2582
        %v2584 = vrot.slane %v823, %v2583
        %v2585 = vlaneseq
        %v2586 = vshrl.u32 %v2585, 7
        %v2587 = vsub.s32 6, %v2586
        %v2588 = vrot.slane %v824, %v2587
        %v2589 = vmul.f32 %v2579, %v2584
        %v2590 = vmul.f32 %v2580, %v2588
        %v2591 = vpack.c.bf16 %v2589, %v2589
        %v2592 = vpack.c.bf16 %v2590, %v2590
        %2593 = vrot.lane.b32.xlu0 %v2476, 112
        %v2594 = vpop.permute.xlu0 %2593
        %2595 = vrot.lane.b32.xlu0 %v2477, 112
        %v2596 = vpop.permute.xlu0 %2595
        %v2597 = vsel %vm994, %v2594, %v2596
        %v2598 = vsel %vm994, %v2596, %v2594
        %v2599 = vlaneseq
        %v2600 = vshrl.u32 %v2599, 7
        %v2601 = vsub.s32 7, %v2600
        %v2602 = vrot.slane %v823, %v2601
        %v2603 = vlaneseq
        %v2604 = vshrl.u32 %v2603, 7
        %v2605 = vsub.s32 7, %v2604
        %v2606 = vrot.slane %v824, %v2605
        %v2607 = vmul.f32 %v2597, %v2602
        %v2608 = vmul.f32 %v2598, %v2606
        %v2609 = vpack.c.bf16 %v2607, %v2607
        %v2610 = vpack.c.bf16 %v2608, %v2608
        %2611 = vrot.lane.b32.xlu0 %v2476, 111
        %v2612 = vpop.permute.xlu0 %2611
        %2613 = vrot.lane.b32.xlu0 %v2477, 111
        %v2614 = vpop.permute.xlu0 %2613
        %vm2615 = vcmp.lt.s32.totalorder %v847, 111
        %v2616 = vsel %vm2615, %v2612, %v2614
        %v2617 = vsel %vm2615, %v2614, %v2612
        %v2618 = vlaneseq
        %v2619 = vshrl.u32 %v2618, 7
        %v2620 = vsub.s32 0, %v2619
        %v2621 = vrot.slane %v825, %v2620
        %v2622 = vlaneseq
        %v2623 = vshrl.u32 %v2622, 7
        %v2624 = vsub.s32 0, %v2623
        %v2625 = vrot.slane %v826, %v2624
        %v2626 = vmul.f32 %v2616, %v2621
        %v2627 = vmul.f32 %v2617, %v2625
        %v2628 = vpack.c.bf16 %v2626, %v2626
        %v2629 = vpack.c.bf16 %v2627, %v2627
        %v2632 = vrot.slane %v2515, 7
        %v2633 = vrot.slane %v2516, 7
        %v2636 = vrot.slane %v2534, 6
        %v2637 = vrot.slane %v2535, 6
        %v2640 = vrot.slane %v2552, 5
        %v2641 = vrot.slane %v2553, 5
        %v2644 = vrot.slane %v2554, 4
        %v2645 = vrot.slane %v2555, 4
        %v2648 = vrot.slane %v2572, 3
        %v2649 = vrot.slane %v2573, 3
        %v2652 = vrot.slane %v2591, 2
        %v2653 = vrot.slane %v2592, 2
        %v2656 = vrot.slane %v2609, 1
        %v2657 = vrot.slane %v2610, 1
        %v2660 = vsel %vm2475, %v2497, %v2632
        %v2663 = vsel %vm2475, %v2498, %v2633
        %vm2664 = vcmask 1041408
        %v2666 = vsel %vm2664, %v2660, %v2636
        %v2668 = vsel %vm2664, %v2663, %v2637
        %vm2669 = vcmask 1042432
        %v2671 = vsel %vm2669, %v2666, %v2640
        %v2673 = vsel %vm2669, %v2668, %v2641
        %vm2674 = vcmask 1043456
        %v2676 = vsel %vm2674, %v2671, %v2644
        %v2678 = vsel %vm2674, %v2673, %v2645
        %vm2679 = vcmask 1044480
        %v2681 = vsel %vm2679, %v2676, %v2648
        %v2683 = vsel %vm2679, %v2678, %v2649
        %vm2684 = vcmask 1045504
        %v2686 = vsel %vm2684, %v2681, %v2652
        %v2688 = vsel %vm2684, %v2683, %v2653
        %vm2689 = vcmask 1046528
        %v2691 = vsel %vm2689, %v2686, %v2656
        %v2694 = vsel %vm2689, %v2688, %v2657
        %2697 = vset.pattern.permute.xlu0 0
        %2698 = vperm.xlu0 %2697, %v2479
        %v2699 = vpop.permute.xlu0 %2698
        %vm2701 = vcmask 146432
        %v2703 = vsel %vm2701, %v2478, 0
        %v2706 = vsel %vm2475, %v2628, 0
        %v2709 = vsel %vm2475, %v2629, 0
        %2711 = vmatprep.subr.bf16.mxu0 0
        %2712 = vmatpush1.bf16.msra.mxu0 0
        %2713 = vmatprep.subr.bf16.mxu0 0
        %2714 = vmatpush1.bf16.msra.mxu0 0
        %2715 = vmatprep.subr.bf16.mxu0 0
        %2716 = vmatpush1.bf16.msra.mxu0 0
        %2717 = vmatprep.subr.bf16.mxu0 0
        %2718 = vmatpush1.bf16.msra.mxu0 0
        %2719 = vmatprep.subr.bf16.mxu0 0
        %2720 = vmatpush1.bf16.msra.mxu0 0
        %2721 = vmatprep.subr.bf16.mxu0 0
        %2722 = vmatpush1.bf16.msra.mxu0 0
        %2723 = vmatprep.subr.bf16.mxu0 %v2709
        %2724 = vmatpush1.bf16.msra.mxu0 %v2706
        %2725 = vmatprep.subr.bf16.mxu0 %v2694
        %2726 = vmatpush1.bf16.msra.mxu0 %v2691
        %2727 = vmatprep.subr.bf16.mxu0 0
        %2728 = vmatpush2.bf16.msra.mxu0 0
        %2729 = vmatprep.subr.bf16.mxu0 0
        %2730 = vmatpush2.bf16.msra.mxu0 0
        %2731 = vmatprep.subr.bf16.mxu0 0
        %2732 = vmatpush2.bf16.msra.mxu0 0
        %2733 = vmatprep.subr.bf16.mxu0 0
        %2734 = vmatpush2.bf16.msra.mxu0 0
        %2735 = vmatprep.subr.bf16.mxu0 0
        %2736 = vmatpush2.bf16.msra.mxu0 0
        %2737 = vmatprep.subr.bf16.mxu0 0
        %2738 = vmatpush2.bf16.msra.mxu0 0
        %2739 = vmatprep.subr.bf16.mxu0 0
        %2740 = vmatpush2.bf16.msra.mxu0 0
        %2741 = vmatprep.subr.bf16.mxu0 0
        %2742 = vmatpush2.bf16.msra.mxu0 0
        %2743 = vmatprep.mubr.bf16.mxu0 0
        %2744 = vmatmul.mubr.bf16.gmra.mxu0 %v2703
        %v2745 = vpop.f32.mrf.mxu0
        %v2746 = vadd.f32 %v2699, %v2745
        %v2747 = vpop.f32.mrf.mxu0
        %v2748 = vadd.f32 %v2699, %v2747
        %v2749 = vpop.f32.mrf.mxu0
        %v2750 = vpop.f32.mrf.mxu0
        %2751 = vdwg.mxu0
        %s2752 = smul.u32 %s34, 128
        %s2753 = sld [smem:[#allocation6 + %s2752]]
        %vm2754 = vcmp.gt.f32.partialorder %v2746, 0.0
        %vm2755 = vcmp.gt.f32.partialorder %v2748, 0.0
        %v2756 = vstv %s2753
        %v2757 = vmul.f32 %v2756, %v2746
        %v2758 = vmul.f32 %v2756, %v2748
        %v2759 = vsel %vm2754, %v2746, %v2757
        %v2760 = vsel %vm2755, %v2748, %v2758
        %v2761 = vld [vmem:[%s742] sm:$0x1]
        %v2762 = vld [vmem:[%s745] sm:$0x1]
        %2763 = vrot.lane.b32.xlu0 %v2759, 17
        %v2764 = vpop.permute.xlu0 %2763
        %2765 = vrot.lane.b32.xlu0 %v2760, 17
        %v2766 = vpop.permute.xlu0 %2765
        %v2767 = vsel %vm2484, %v2764, %v2766
        %v2768 = vsel %vm2484, %v2766, %v2764
        %v2769 = vmul.f32 %v2768, %v2490
        %v2770 = vmul.f32 %v2767, %v2494
        %v2771 = vpack.c.bf16 %v2769, %v2769
        %v2772 = vpack.c.bf16 %v2770, %v2770
        %2773 = vrot.lane.b32.xlu0 %v2759, 16
        %v2774 = vpop.permute.xlu0 %2773
        %2775 = vrot.lane.b32.xlu0 %v2760, 16
        %v2776 = vpop.permute.xlu0 %2775
        %v2777 = vsel %vm904, %v2774, %v2776
        %v2778 = vsel %vm904, %v2776, %v2774
        %v2779 = vmul.f32 %v2778, %v2508
        %v2780 = vmul.f32 %v2777, %v2512
        %v2781 = vpack.c.bf16 %v2779, %v2779
        %v2782 = vpack.c.bf16 %v2780, %v2780
        %2783 = vrot.lane.b32.xlu0 %v2759, 15
        %v2784 = vpop.permute.xlu0 %2783
        %2785 = vrot.lane.b32.xlu0 %v2760, 15
        %v2786 = vpop.permute.xlu0 %2785
        %v2787 = vsel %vm2521, %v2784, %v2786
        %v2788 = vsel %vm2521, %v2786, %v2784
        %v2789 = vmul.f32 %v2788, %v2527
        %v2790 = vmul.f32 %v2787, %v2531
        %v2791 = vpack.c.bf16 %v2789, %v2789
        %v2792 = vpack.c.bf16 %v2790, %v2790
        %2793 = vrot.lane.b32.xlu0 %v2759, 1
        %v2794 = vpop.permute.xlu0 %2793
        %2795 = vrot.lane.b32.xlu0 %v2760, 1
        %v2796 = vpop.permute.xlu0 %2795
        %v2797 = vsel %vm848, %v2794, %v2796
        %v2798 = vsel %vm848, %v2796, %v2794
        %v2799 = vmul.f32 %v2798, %v2545
        %v2800 = vmul.f32 %v2797, %v2549
        %v2801 = vpack.c.bf16 %v2799, %v2799
        %v2802 = vpack.c.bf16 %v2800, %v2800
        %v2803 = vpack.c.bf16 %v2759, %v2759
        %v2804 = vpack.c.bf16 %v2760, %v2760
        %2805 = vrot.lane.b32.xlu0 %v2759, 127
        %v2806 = vpop.permute.xlu0 %2805
        %2807 = vrot.lane.b32.xlu0 %v2760, 127
        %v2808 = vpop.permute.xlu0 %2807
        %v2809 = vsel %vm956, %v2806, %v2808
        %v2810 = vsel %vm956, %v2808, %v2806
        %v2811 = vmul.f32 %v2809, %v2565
        %v2812 = vmul.f32 %v2810, %v2569
        %v2813 = vpack.c.bf16 %v2811, %v2811
        %v2814 = vpack.c.bf16 %v2812, %v2812
        %2815 = vrot.lane.b32.xlu0 %v2759, 113
        %v2816 = vpop.permute.xlu0 %2815
        %2817 = vrot.lane.b32.xlu0 %v2760, 113
        %v2818 = vpop.permute.xlu0 %2817
        %v2819 = vsel %vm2578, %v2816, %v2818
        %v2820 = vsel %vm2578, %v2818, %v2816
        %v2821 = vmul.f32 %v2819, %v2584
        %v2822 = vmul.f32 %v2820, %v2588
        %v2823 = vpack.c.bf16 %v2821, %v2821
        %v2824 = vpack.c.bf16 %v2822, %v2822
        %2825 = vrot.lane.b32.xlu0 %v2759, 112
        %v2826 = vpop.permute.xlu0 %2825
        %2827 = vrot.lane.b32.xlu0 %v2760, 112
        %v2828 = vpop.permute.xlu0 %2827
        %v2829 = vsel %vm994, %v2826, %v2828
        %v2830 = vsel %vm994, %v2828, %v2826
        %v2831 = vmul.f32 %v2829, %v2602
        %v2832 = vmul.f32 %v2830, %v2606
        %v2833 = vpack.c.bf16 %v2831, %v2831
        %v2834 = vpack.c.bf16 %v2832, %v2832
        %2835 = vrot.lane.b32.xlu0 %v2759, 111
        %v2836 = vpop.permute.xlu0 %2835
        %2837 = vrot.lane.b32.xlu0 %v2760, 111
        %v2838 = vpop.permute.xlu0 %2837
        %v2839 = vsel %vm2615, %v2836, %v2838
        %v2840 = vsel %vm2615, %v2838, %v2836
        %v2841 = vmul.f32 %v2839, %v2621
        %v2842 = vmul.f32 %v2840, %v2625
        %v2843 = vpack.c.bf16 %v2841, %v2841
        %v2844 = vpack.c.bf16 %v2842, %v2842
        %v2847 = vrot.slane %v2781, 5
        %v2848 = vrot.slane %v2782, 5
        %v2851 = vrot.slane %v2791, 2
        %v2852 = vrot.slane %v2792, 2
        %v2855 = vrot.slane %v2801, 7
        %v2856 = vrot.slane %v2802, 7
        %v2859 = vrot.slane %v2803, 4
        %v2860 = vrot.slane %v2804, 4
        %v2863 = vrot.slane %v2813, 1
        %v2864 = vrot.slane %v2814, 1
        %v2867 = vrot.slane %v2823, 6
        %v2868 = vrot.slane %v2824, 6
        %v2871 = vrot.slane %v2833, 3
        %v2872 = vrot.slane %v2834, 3
        %v2875 = vsel %vm2669, %v2771, %v2847
        %v2878 = vsel %vm2669, %v2772, %v2848
        %v2880 = vsel %vm2684, %v2875, %v2851
        %v2883 = vsel %vm2684, %v2878, %v2852
        %v2886 = vsel %vm2475, %v2851, %v2855
        %v2888 = vsel %vm2475, %v2852, %v2856
        %v2890 = vsel %vm2674, %v2886, %v2859
        %v2892 = vsel %vm2674, %v2888, %v2860
        %v2894 = vsel %vm2689, %v2890, %v2863
        %v2897 = vsel %vm2689, %v2892, %v2864
        %v2900 = vsel %vm2664, %v2863, %v2867
        %v2902 = vsel %vm2664, %v2864, %v2868
        %v2904 = vsel %vm2679, %v2900, %v2871
        %v2907 = vsel %vm2679, %v2902, %v2872
        %2910 = vset.pattern.permute.xlu0 0
        %2911 = vperm.xlu0 %2910, %v2762
        %v2912 = vpop.permute.xlu0 %2911
        %v2914 = vlaneseq
        %v2915 = vshrl.u32 %v2914, 7
        %v2916 = vsub.s32 0, %v2915
        %v2917 = vrot.slane %v2912, %v2916
        %vm2918 = vcmask 441344
        %v2920 = vsel %vm2918, %v2761, 0
        %v2923 = vsel %vm2669, %v2843, 0
        %v2926 = vsel %vm2669, %v2844, 0
        %2928 = vmatprep.subr.bf16.mxu0 0
        %2929 = vmatpush1.bf16.msra.mxu0 0
        %2930 = vmatprep.subr.bf16.mxu0 0
        %2931 = vmatpush1.bf16.msra.mxu0 0
        %2932 = vmatprep.subr.bf16.mxu0 0
        %2933 = vmatpush1.bf16.msra.mxu0 0
        %2934 = vmatprep.subr.bf16.mxu0 0
        %2935 = vmatpush1.bf16.msra.mxu0 0
        %2936 = vmatprep.subr.bf16.mxu0 %v2926
        %2937 = vmatpush1.bf16.msra.mxu0 %v2923
        %2938 = vmatprep.subr.bf16.mxu0 %v2907
        %2939 = vmatpush1.bf16.msra.mxu0 %v2904
        %2940 = vmatprep.subr.bf16.mxu0 %v2897
        %2941 = vmatpush1.bf16.msra.mxu0 %v2894
        %2942 = vmatprep.subr.bf16.mxu0 %v2883
        %2943 = vmatpush1.bf16.msra.mxu0 %v2880
        %2944 = vmatprep.subr.bf16.mxu0 0
        %2945 = vmatpush2.bf16.msra.mxu0 0
        %2946 = vmatprep.subr.bf16.mxu0 0
        %2947 = vmatpush2.bf16.msra.mxu0 0
        %2948 = vmatprep.subr.bf16.mxu0 0
        %2949 = vmatpush2.bf16.msra.mxu0 0
        %2950 = vmatprep.subr.bf16.mxu0 0
        %2951 = vmatpush2.bf16.msra.mxu0 0
        %2952 = vmatprep.subr.bf16.mxu0 0
        %2953 = vmatpush2.bf16.msra.mxu0 0
        %2954 = vmatprep.subr.bf16.mxu0 0
        %2955 = vmatpush2.bf16.msra.mxu0 0
        %2956 = vmatprep.subr.bf16.mxu0 0
        %2957 = vmatpush2.bf16.msra.mxu0 0
        %2958 = vmatprep.subr.bf16.mxu0 0
        %2959 = vmatpush2.bf16.msra.mxu0 0
        %2960 = vmatprep.mubr.bf16.mxu0 0
        %2961 = vmatmul.mubr.bf16.gmra.mxu0 %v2920
        %v2962 = vpop.f32.mrf.mxu0
        %v2963 = vadd.f32 %v2917, %v2962
        %v2964 = vpop.f32.mrf.mxu0
        %v2965 = vadd.f32 %v2917, %v2964
        %v2966 = vpop.f32.mrf.mxu0
        %v2967 = vpop.f32.mrf.mxu0
        %2968 = vdwg.mxu0
        %v2969 = vstv %s800
        %v2970 = vmul.f32 %v2323, %v2969
        %s2971 = ssub.f32 1.0, %s800
        %v2972 = vstv %s2971
        %v2973 = vmul.f32 %v2972, %v2963
        %v2974 = vmul.f32 %v2972, %v2965
        %v2977 = vcombine.low %v2973, %v2974
        %v2979 = vunpack.c.l.s4 1966171168
        %v2980 = vunpack.c.0.s8 %v2979
        %v2981 = vlaneseq
        %v2982 = vshrl.u32 %v2981, 7
        %v2983 = vsub.s32 %v2980, %v2982
        %v2984 = vrot.slane %v2977, %v2983
        %v2986 = vunpack.c.l.s4 1966171168
        %v2987 = vunpack.c.0.s8 %v2986
        %v2988 = vlaneseq
        %v2989 = vshrl.u32 %v2988, 7
        %v2990 = vsub.s32 %v2987, %v2989
        %v2991 = vrot.slane %v2984, %v2990
        %v2993 = vadd.f32 %v2970, %v2991
        %v2995 = vlaneseq
        %v2996 = vshrl.u32 %v2995, 7
        %v2997 = vsub.s32 0, %v2996
        %v2998 = vrot.slane %v2993, %v2997
        %v2999 = vlaneseq
        %v3000 = vshrl.u32 %v2999, 7
        %v3001 = vsub.s32 1, %v3000
        %v3002 = vrot.slane %v2993, %v3001
        %3005 = vrot.lane.b32.xlu0 %v2998, 1
        %v3006 = vpop.permute.xlu0 %3005
        %3007 = vrot.lane.b32.xlu0 %v3002, 1
        %v3008 = vpop.permute.xlu0 %3007
        %v3009 = vsel %vm848, %v3006, %v3008
        %v3010 = vsel %vm848, %v3008, %v3006
        %v3013 = vcombine.low %v3010, %v3009
        %v3015 = vunpack.c.l.s4 1966171168
        %v3016 = vunpack.c.0.s8 %v3015
        %v3017 = vlaneseq
        %v3018 = vshrl.u32 %v3017, 7
        %v3019 = vsub.s32 %v3016, %v3018
        %v3020 = vrot.slane %v3013, %v3019
        %v3022 = vunpack.c.l.s4 1966171168
        %v3023 = vunpack.c.0.s8 %v3022
        %v3024 = vlaneseq
        %v3025 = vshrl.u32 %v3024, 7
        %v3026 = vsub.s32 %v3023, %v3025
        %v3027 = vrot.slane %v3020, %v3026
        %v3029 = vsub.f32 %v2993, %v3027
        %v3030 = vmul.f32 %v3029, %v887
        %v3033 = vunpack.c.l.s4 857870592
        %v3034 = vunpack.c.0.s8 %v3033
        %v3035 = vlaneseq
        %v3036 = vshrl.u32 %v3035, 7
        %v3037 = vsub.s32 %v3034, %v3036
        %v3038 = vrot.slane %v3030, %v3037
        %v3040 = vsub.f32 %v829, %v3038
        %3041 = vrot.lane.b32.xlu0 %v2998, 16
        %v3042 = vpop.permute.xlu0 %3041
        %3043 = vrot.lane.b32.xlu0 %v3002, 16
        %v3044 = vpop.permute.xlu0 %3043
        %v3045 = vsel %vm904, %v3042, %v3044
        %v3046 = vsel %vm904, %v3044, %v3042
        %v3049 = vcombine.low %v3046, %v3045
        %v3051 = vunpack.c.l.s4 1966171168
        %v3052 = vunpack.c.0.s8 %v3051
        %v3053 = vlaneseq
        %v3054 = vshrl.u32 %v3053, 7
        %v3055 = vsub.s32 %v3052, %v3054
        %v3056 = vrot.slane %v3049, %v3055
        %v3058 = vunpack.c.l.s4 1966171168
        %v3059 = vunpack.c.0.s8 %v3058
        %v3060 = vlaneseq
        %v3061 = vshrl.u32 %v3060, 7
        %v3062 = vsub.s32 %v3059, %v3061
        %v3063 = vrot.slane %v3056, %v3062
        %v3065 = vsub.f32 %v2993, %v3063
        %v3066 = vmul.f32 %v3065, %v933
        %v3069 = vunpack.c.l.s4 857870592
        %v3070 = vunpack.c.0.s8 %v3069
        %v3071 = vlaneseq
        %v3072 = vshrl.u32 %v3071, 7
        %v3073 = vsub.s32 %v3070, %v3072
        %v3074 = vrot.slane %v3066, %v3073
        %v3076 = vsub.f32 %v829, %v3074
        %v3078 = vlaneseq
        %v3079 = vshrl.u32 %v3078, 7
        %v3080 = vsub.s32 0, %v3079
        %v3081 = vrot.slane %v3040, %v3080
        %v3082 = vlaneseq
        %v3083 = vshrl.u32 %v3082, 7
        %v3084 = vsub.s32 2, %v3083
        %v3085 = vrot.slane %v3040, %v3084
        %v3089 = vlaneseq
        %v3090 = vshrl.u32 %v3089, 7
        %v3091 = vsub.s32 1, %v3090
        %v3092 = vrot.slane %v3076, %v3091
        %v3093 = vlaneseq
        %v3094 = vshrl.u32 %v3093, 7
        %v3095 = vsub.s32 3, %v3094
        %v3096 = vrot.slane %v3076, %v3095
        %v3099 = vsel %vm2475, %v3081, %v3092
        %v3100 = vsel %vm2475, %v3085, %v3096
        %v3101 = vld [vmem:[%s750] sm:$0xf]
        %v3102 = vld [vmem:[%s750 + $0x4] sm:$0xf]
        %v3103 = vld [vmem:[%s750 + $0x8] sm:$0xf]
        %v3104 = vld [vmem:[%s750 + $0xc] sm:$0xf]
        %v3105 = vld [vmem:[%s755] sm:$0xff]
        %v3106 = vld [vmem:[%s755 + $0x8] sm:$0xff]
        %v3107 = vld [vmem:[%s755 + $0x10] sm:$0xff]
        %v3108 = vld [vmem:[%s755 + $0x18] sm:$0xff]
        %3109 = vrot.lane.b32.xlu0 %v3099, 17
        %v3110 = vpop.permute.xlu0 %3109
        %3111 = vrot.lane.b32.xlu0 %v3100, 17
        %v3112 = vpop.permute.xlu0 %3111
        %v3113 = vsel %vm2484, %v3110, %v3112
        %v3114 = vsel %vm2484, %v3112, %v3110
        %v3115 = vmul.f32 %v3114, %v2490
        %v3116 = vmul.f32 %v3113, %v2494
        %v3117 = vpack.c.bf16 %v3115, %v3115
        %v3118 = vpack.c.bf16 %v3116, %v3116
        %3119 = vrot.lane.b32.xlu0 %v3099, 16
        %v3120 = vpop.permute.xlu0 %3119
        %3121 = vrot.lane.b32.xlu0 %v3100, 16
        %v3122 = vpop.permute.xlu0 %3121
        %v3123 = vsel %vm904, %v3120, %v3122
        %v3124 = vsel %vm904, %v3122, %v3120
        %v3125 = vmul.f32 %v3124, %v2508
        %v3126 = vmul.f32 %v3123, %v2512
        %v3127 = vpack.c.bf16 %v3125, %v3125
        %v3128 = vpack.c.bf16 %v3126, %v3126
        %3129 = vrot.lane.b32.xlu0 %v3099, 15
        %v3130 = vpop.permute.xlu0 %3129
        %3131 = vrot.lane.b32.xlu0 %v3100, 15
        %v3132 = vpop.permute.xlu0 %3131
        %v3133 = vsel %vm2521, %v3130, %v3132
        %v3134 = vsel %vm2521, %v3132, %v3130
        %v3135 = vmul.f32 %v3134, %v2527
        %v3136 = vmul.f32 %v3133, %v2531
        %v3137 = vpack.c.bf16 %v3135, %v3135
        %v3138 = vpack.c.bf16 %v3136, %v3136
        %3139 = vrot.lane.b32.xlu0 %v3099, 1
        %v3140 = vpop.permute.xlu0 %3139
        %3141 = vrot.lane.b32.xlu0 %v3100, 1
        %v3142 = vpop.permute.xlu0 %3141
        %v3143 = vsel %vm848, %v3140, %v3142
        %v3144 = vsel %vm848, %v3142, %v3140
        %v3145 = vmul.f32 %v3144, %v2545
        %v3146 = vmul.f32 %v3143, %v2549
        %v3147 = vpack.c.bf16 %v3145, %v3145
        %v3148 = vpack.c.bf16 %v3146, %v3146
        %v3149 = vpack.c.bf16 %v3099, %v3099
        %v3150 = vpack.c.bf16 %v3100, %v3100
        %3151 = vrot.lane.b32.xlu0 %v3099, 127
        %v3152 = vpop.permute.xlu0 %3151
        %3153 = vrot.lane.b32.xlu0 %v3100, 127
        %v3154 = vpop.permute.xlu0 %3153
        %v3155 = vsel %vm956, %v3152, %v3154
        %v3156 = vsel %vm956, %v3154, %v3152
        %v3157 = vmul.f32 %v3155, %v2565
        %v3158 = vmul.f32 %v3156, %v2569
        %v3159 = vpack.c.bf16 %v3157, %v3157
        %v3160 = vpack.c.bf16 %v3158, %v3158
        %3161 = vrot.lane.b32.xlu0 %v3099, 113
        %v3162 = vpop.permute.xlu0 %3161
        %3163 = vrot.lane.b32.xlu0 %v3100, 113
        %v3164 = vpop.permute.xlu0 %3163
        %v3165 = vsel %vm2578, %v3162, %v3164
        %v3166 = vsel %vm2578, %v3164, %v3162
        %v3167 = vmul.f32 %v3165, %v2584
        %v3168 = vmul.f32 %v3166, %v2588
        %v3169 = vpack.c.bf16 %v3167, %v3167
        %v3170 = vpack.c.bf16 %v3168, %v3168
        %3171 = vrot.lane.b32.xlu0 %v3099, 112
        %v3172 = vpop.permute.xlu0 %3171
        %3173 = vrot.lane.b32.xlu0 %v3100, 112
        %v3174 = vpop.permute.xlu0 %3173
        %v3175 = vsel %vm994, %v3172, %v3174
        %v3176 = vsel %vm994, %v3174, %v3172
        %v3177 = vmul.f32 %v3175, %v2602
        %v3178 = vmul.f32 %v3176, %v2606
        %v3179 = vpack.c.bf16 %v3177, %v3177
        %v3180 = vpack.c.bf16 %v3178, %v3178
        %3181 = vrot.lane.b32.xlu0 %v3099, 111
        %v3182 = vpop.permute.xlu0 %3181
        %3183 = vrot.lane.b32.xlu0 %v3100, 111
        %v3184 = vpop.permute.xlu0 %3183
        %v3185 = vsel %vm2615, %v3182, %v3184
        %v3186 = vsel %vm2615, %v3184, %v3182
        %v3187 = vmul.f32 %v3185, %v2621
        %v3188 = vmul.f32 %v3186, %v2625
        %v3189 = vpack.c.bf16 %v3187, %v3187
        %v3190 = vpack.c.bf16 %v3188, %v3188
        %v3193 = vrot.slane %v3127, 7
        %v3194 = vrot.slane %v3128, 7
        %v3197 = vrot.slane %v3137, 6
        %v3198 = vrot.slane %v3138, 6
        %v3201 = vrot.slane %v3147, 5
        %v3202 = vrot.slane %v3148, 5
        %v3205 = vrot.slane %v3149, 4
        %v3206 = vrot.slane %v3150, 4
        %v3209 = vrot.slane %v3159, 3
        %v3210 = vrot.slane %v3160, 3
        %v3213 = vrot.slane %v3169, 2
        %v3214 = vrot.slane %v3170, 2
        %v3217 = vrot.slane %v3179, 1
        %v3218 = vrot.slane %v3180, 1
        %v3221 = vsel %vm2475, %v3117, %v3193
        %v3224 = vsel %vm2475, %v3118, %v3194
        %v3226 = vsel %vm2664, %v3221, %v3197
        %v3228 = vsel %vm2664, %v3224, %v3198
        %v3230 = vsel %vm2669, %v3226, %v3201
        %v3232 = vsel %vm2669, %v3228, %v3202
        %v3234 = vsel %vm2674, %v3230, %v3205
        %v3236 = vsel %vm2674, %v3232, %v3206
        %v3238 = vsel %vm2679, %v3234, %v3209
        %v3240 = vsel %vm2679, %v3236, %v3210
        %v3242 = vsel %vm2684, %v3238, %v3213
        %v3244 = vsel %vm2684, %v3240, %v3214
        %v3246 = vsel %vm2689, %v3242, %v3217
        %v3249 = vsel %vm2689, %v3244, %v3218
        %3252 = vset.pattern.permute.xlu0 0
        %3253 = vperm.xlu0 %3252, %v3105
        %v3254 = vpop.permute.xlu0 %3253
        %3257 = vset.pattern.permute.xlu0 0
        %3258 = vperm.xlu0 %3257, %v3106
        %v3259 = vpop.permute.xlu0 %3258
        %3262 = vset.pattern.permute.xlu0 0
        %3263 = vperm.xlu0 %3262, %v3107
        %v3264 = vpop.permute.xlu0 %3263
        %3267 = vset.pattern.permute.xlu0 0
        %3268 = vperm.xlu0 %3267, %v3108
        %v3269 = vpop.permute.xlu0 %3268
        %v3275 = vunpack.c.l.b16 %v3101
        %v3276 = vunpack.c.l.b16 %v3102
        %v3277 = vunpack.c.l.b16 %v3103
        %v3278 = vunpack.c.l.b16 %v3104
        %v3279 = vpack.c.b16 %v3276, %v3275
        %v3280 = vpack.c.b16 %v3278, %v3277
        %v3282 = vsel %vm2701, %v3279, 0
        %v3285 = vsel %vm2701, %v3280, 0
        %v3288 = vsel %vm2475, %v3189, 0
        %v3291 = vsel %vm2475, %v3190, 0
        %3293 = vmatprep.subr.bf16.mxu0 0
        %3294 = vmatpush1.bf16.msra.mxu0 0
        %3295 = vmatprep.subr.bf16.mxu0 0
        %3296 = vmatpush1.bf16.msra.mxu0 0
        %3297 = vmatprep.subr.bf16.mxu0 0
        %3298 = vmatpush1.bf16.msra.mxu0 0
        %3299 = vmatprep.subr.bf16.mxu0 0
        %3300 = vmatpush1.bf16.msra.mxu0 0
        %3301 = vmatprep.subr.bf16.mxu0 0
        %3302 = vmatpush1.bf16.msra.mxu0 0
        %3303 = vmatprep.subr.bf16.mxu0 0
        %3304 = vmatpush1.bf16.msra.mxu0 0
        %3305 = vmatprep.subr.bf16.mxu0 %v3291
        %3306 = vmatpush1.bf16.msra.mxu0 %v3288
        %3307 = vmatprep.subr.bf16.mxu0 %v3249
        %3308 = vmatpush1.bf16.msra.mxu0 %v3246
        %3309 = vmatprep.subr.bf16.mxu0 0
        %3310 = vmatpush2.bf16.msra.mxu0 0
        %3311 = vmatprep.subr.bf16.mxu0 0
        %3312 = vmatpush2.bf16.msra.mxu0 0
        %3313 = vmatprep.subr.bf16.mxu0 0
        %3314 = vmatpush2.bf16.msra.mxu0 0
        %3315 = vmatprep.subr.bf16.mxu0 0
        %3316 = vmatpush2.bf16.msra.mxu0 0
        %3317 = vmatprep.subr.bf16.mxu0 0
        %3318 = vmatpush2.bf16.msra.mxu0 0
        %3319 = vmatprep.subr.bf16.mxu0 0
        %3320 = vmatpush2.bf16.msra.mxu0 0
        %3321 = vmatprep.subr.bf16.mxu0 0
        %3322 = vmatpush2.bf16.msra.mxu0 0
        %3323 = vmatprep.subr.bf16.mxu0 0
        %3324 = vmatpush2.bf16.msra.mxu0 0
        %3325 = vmatprep.mubr.bf16.mxu0 0
        %3326 = vmatmul.mubr.bf16.gmra.mxu0 %v3282
        %v3327 = vpop.f32.mrf.mxu0
        %v3328 = vadd.f32 %v3254, %v3327
        %v3329 = vpop.f32.mrf.mxu0
        %v3330 = vadd.f32 %v3254, %v3329
        %v3331 = vpop.f32.mrf.mxu0
        %v3332 = vadd.f32 %v3259, %v3331
        %v3333 = vpop.f32.mrf.mxu0
        %v3334 = vadd.f32 %v3259, %v3333
        %3335 = vmatprep.mubr.bf16.mxu0 0
        %3336 = vmatmul.mubr.bf16.gmra.mxu0 %v3285
        %v3337 = vpop.f32.mrf.mxu0
        %v3338 = vadd.f32 %v3264, %v3337
        %v3339 = vpop.f32.mrf.mxu0
        %v3340 = vadd.f32 %v3264, %v3339
        %v3341 = vpop.f32.mrf.mxu0
        %v3342 = vadd.f32 %v3269, %v3341
        %v3343 = vpop.f32.mrf.mxu0
        %v3344 = vadd.f32 %v3269, %v3343
        %3345 = vdwg.mxu0
        %s3346 = sadd.s32 %s2752, 1
        %s3347 = sld [smem:[#allocation6 + %s3346]]
        %vm3348 = vcmp.gt.f32.partialorder %v3328, 0.0
        %vm3349 = vcmp.gt.f32.partialorder %v3330, 0.0
        %vm3350 = vcmp.gt.f32.partialorder %v3332, 0.0
        %vm3351 = vcmp.gt.f32.partialorder %v3334, 0.0
        %vm3352 = vcmp.gt.f32.partialorder %v3338, 0.0
        %vm3353 = vcmp.gt.f32.partialorder %v3340, 0.0
        %vm3354 = vcmp.gt.f32.partialorder %v3342, 0.0
        %vm3355 = vcmp.gt.f32.partialorder %v3344, 0.0
        %v3356 = vstv %s3347
        %v3357 = vmul.f32 %v3356, %v3328
        %v3358 = vmul.f32 %v3356, %v3330
        %v3359 = vmul.f32 %v3356, %v3332
        %v3360 = vmul.f32 %v3356, %v3334
        %v3361 = vmul.f32 %v3356, %v3338
        %v3362 = vmul.f32 %v3356, %v3340
        %v3363 = vmul.f32 %v3356, %v3342
        %v3364 = vmul.f32 %v3356, %v3344
        %v3365 = vsel %vm3348, %v3328, %v3357
        %v3366 = vsel %vm3349, %v3330, %v3358
        %v3367 = vsel %vm3350, %v3332, %v3359
        %v3368 = vsel %vm3351, %v3334, %v3360
        %v3369 = vsel %vm3352, %v3338, %v3361
        %v3370 = vsel %vm3353, %v3340, %v3362
        %v3371 = vsel %vm3354, %v3342, %v3363
        %v3372 = vsel %vm3355, %v3344, %v3364
        %v3373 = vld [vmem:[%s760] sm:$0xff]
        %v3374 = vld [vmem:[%s760 + $0x8] sm:$0xf]
        %v3375 = vld [vmem:[%s760 + $0xc] sm:$0xff]
        %v3376 = vld [vmem:[%s760 + $0x14] sm:$0xf]
        %v3377 = vld [vmem:[%s760 + $0x18] sm:$0xff]
        %v3378 = vld [vmem:[%s760 + $0x20] sm:$0xf]
        %v3379 = vld [vmem:[%s760 + $0x24] sm:$0xff]
        %v3380 = vld [vmem:[%s760 + $0x2c] sm:$0xf]
        %v3381 = vld [vmem:[%s765] sm:$0xff]
        %v3382 = vld [vmem:[%s765 + $0x8] sm:$0xff]
        %v3383 = vld [vmem:[%s765 + $0x10] sm:$0xff]
        %v3384 = vld [vmem:[%s765 + $0x18] sm:$0xff]
        %3385 = vrot.lane.b32.xlu0 %v3365, 17
        %v3386 = vpop.permute.xlu0 %3385
        %3387 = vrot.lane.b32.xlu0 %v3367, 17
        %v3388 = vpop.permute.xlu0 %3387
        %3389 = vrot.lane.b32.xlu0 %v3369, 17
        %v3390 = vpop.permute.xlu0 %3389
        %3391 = vrot.lane.b32.xlu0 %v3371, 17
        %v3392 = vpop.permute.xlu0 %3391
        %3393 = vrot.lane.b32.xlu0 %v3366, 17
        %v3394 = vpop.permute.xlu0 %3393
        %3395 = vrot.lane.b32.xlu0 %v3368, 17
        %v3396 = vpop.permute.xlu0 %3395
        %3397 = vrot.lane.b32.xlu0 %v3370, 17
        %v3398 = vpop.permute.xlu0 %3397
        %3399 = vrot.lane.b32.xlu0 %v3372, 17
        %v3400 = vpop.permute.xlu0 %3399
        %v3401 = vsel %vm2484, %v3386, %v3394
        %v3402 = vsel %vm2484, %v3388, %v3396
        %v3403 = vsel %vm2484, %v3390, %v3398
        %v3404 = vsel %vm2484, %v3392, %v3400
        %v3405 = vsel %vm2484, %v3394, %v3386
        %v3406 = vsel %vm2484, %v3396, %v3388
        %v3407 = vsel %vm2484, %v3398, %v3390
        %v3408 = vsel %vm2484, %v3400, %v3392
        %v3409 = vmul.f32 %v3405, %v2490
        %v3410 = vmul.f32 %v3401, %v2494
        %v3411 = vmul.f32 %v3406, %v2490
        %v3412 = vmul.f32 %v3402, %v2494
        %v3413 = vmul.f32 %v3407, %v2490
        %v3414 = vmul.f32 %v3403, %v2494
        %v3415 = vmul.f32 %v3408, %v2490
        %v3416 = vmul.f32 %v3404, %v2494
        %v3417 = vpack.c.bf16 %v3411, %v3409
        %v3418 = vpack.c.bf16 %v3412, %v3410
        %v3419 = vpack.c.bf16 %v3415, %v3413
        %v3420 = vpack.c.bf16 %v3416, %v3414
        %3421 = vrot.lane.b32.xlu0 %v3365, 16
        %v3422 = vpop.permute.xlu0 %3421
        %3423 = vrot.lane.b32.xlu0 %v3367, 16
        %v3424 = vpop.permute.xlu0 %3423
        %3425 = vrot.lane.b32.xlu0 %v3369, 16
        %v3426 = vpop.permute.xlu0 %3425
        %3427 = vrot.lane.b32.xlu0 %v3371, 16
        %v3428 = vpop.permute.xlu0 %3427
        %3429 = vrot.lane.b32.xlu0 %v3366, 16
        %v3430 = vpop.permute.xlu0 %3429
        %3431 = vrot.lane.b32.xlu0 %v3368, 16
        %v3432 = vpop.permute.xlu0 %3431
        %3433 = vrot.lane.b32.xlu0 %v3370, 16
        %v3434 = vpop.permute.xlu0 %3433
        %3435 = vrot.lane.b32.xlu0 %v3372, 16
        %v3436 = vpop.permute.xlu0 %3435
        %v3437 = vsel %vm904, %v3422, %v3430
        %v3438 = vsel %vm904, %v3424, %v3432
        %v3439 = vsel %vm904, %v3426, %v3434
        %v3440 = vsel %vm904, %v3428, %v3436
        %v3441 = vsel %vm904, %v3430, %v3422
        %v3442 = vsel %vm904, %v3432, %v3424
        %v3443 = vsel %vm904, %v3434, %v3426
        %v3444 = vsel %vm904, %v3436, %v3428
        %v3445 = vmul.f32 %v3441, %v2508
        %v3446 = vmul.f32 %v3437, %v2512
        %v3447 = vmul.f32 %v3442, %v2508
        %v3448 = vmul.f32 %v3438, %v2512
        %v3449 = vmul.f32 %v3443, %v2508
        %v3450 = vmul.f32 %v3439, %v2512
        %v3451 = vmul.f32 %v3444, %v2508
        %v3452 = vmul.f32 %v3440, %v2512
        %v3453 = vpack.c.bf16 %v3447, %v3445
        %v3454 = vpack.c.bf16 %v3448, %v3446
        %v3455 = vpack.c.bf16 %v3451, %v3449
        %v3456 = vpack.c.bf16 %v3452, %v3450
        %3457 = vrot.lane.b32.xlu0 %v3365, 15
        %v3458 = vpop.permute.xlu0 %3457
        %3459 = vrot.lane.b32.xlu0 %v3367, 15
        %v3460 = vpop.permute.xlu0 %3459
        %3461 = vrot.lane.b32.xlu0 %v3369, 15
        %v3462 = vpop.permute.xlu0 %3461
        %3463 = vrot.lane.b32.xlu0 %v3371, 15
        %v3464 = vpop.permute.xlu0 %3463
        %3465 = vrot.lane.b32.xlu0 %v3366, 15
        %v3466 = vpop.permute.xlu0 %3465
        %3467 = vrot.lane.b32.xlu0 %v3368, 15
        %v3468 = vpop.permute.xlu0 %3467
        %3469 = vrot.lane.b32.xlu0 %v3370, 15
        %v3470 = vpop.permute.xlu0 %3469
        %3471 = vrot.lane.b32.xlu0 %v3372, 15
        %v3472 = vpop.permute.xlu0 %3471
        %v3473 = vsel %vm2521, %v3458, %v3466
        %v3474 = vsel %vm2521, %v3460, %v3468
        %v3475 = vsel %vm2521, %v3462, %v3470
        %v3476 = vsel %vm2521, %v3464, %v3472
        %v3477 = vsel %vm2521, %v3466, %v3458
        %v3478 = vsel %vm2521, %v3468, %v3460
        %v3479 = vsel %vm2521, %v3470, %v3462
        %v3480 = vsel %vm2521, %v3472, %v3464
        %v3481 = vmul.f32 %v3477, %v2527
        %v3482 = vmul.f32 %v3473, %v2531
        %v3483 = vmul.f32 %v3478, %v2527
        %v3484 = vmul.f32 %v3474, %v2531
        %v3485 = vmul.f32 %v3479, %v2527
        %v3486 = vmul.f32 %v3475, %v2531
        %v3487 = vmul.f32 %v3480, %v2527
        %v3488 = vmul.f32 %v3476, %v2531
        %v3489 = vpack.c.bf16 %v3483, %v3481
        %v3490 = vpack.c.bf16 %v3484, %v3482
        %v3491 = vpack.c.bf16 %v3487, %v3485
        %v3492 = vpack.c.bf16 %v3488, %v3486
        %3493 = vrot.lane.b32.xlu0 %v3365, 1
        %v3494 = vpop.permute.xlu0 %3493
        %3495 = vrot.lane.b32.xlu0 %v3367, 1
        %v3496 = vpop.permute.xlu0 %3495
        %3497 = vrot.lane.b32.xlu0 %v3369, 1
        %v3498 = vpop.permute.xlu0 %3497
        %3499 = vrot.lane.b32.xlu0 %v3371, 1
        %v3500 = vpop.permute.xlu0 %3499
        %3501 = vrot.lane.b32.xlu0 %v3366, 1
        %v3502 = vpop.permute.xlu0 %3501
        %3503 = vrot.lane.b32.xlu0 %v3368, 1
        %v3504 = vpop.permute.xlu0 %3503
        %3505 = vrot.lane.b32.xlu0 %v3370, 1
        %v3506 = vpop.permute.xlu0 %3505
        %3507 = vrot.lane.b32.xlu0 %v3372, 1
        %v3508 = vpop.permute.xlu0 %3507
        %v3509 = vsel %vm848, %v3494, %v3502
        %v3510 = vsel %vm848, %v3496, %v3504
        %v3511 = vsel %vm848, %v3498, %v3506
        %v3512 = vsel %vm848, %v3500, %v3508
        %v3513 = vsel %vm848, %v3502, %v3494
        %v3514 = vsel %vm848, %v3504, %v3496
        %v3515 = vsel %vm848, %v3506, %v3498
        %v3516 = vsel %vm848, %v3508, %v3500
        %v3517 = vmul.f32 %v3513, %v2545
        %v3518 = vmul.f32 %v3509, %v2549
        %v3519 = vmul.f32 %v3514, %v2545
        %v3520 = vmul.f32 %v3510, %v2549
        %v3521 = vmul.f32 %v3515, %v2545
        %v3522 = vmul.f32 %v3511, %v2549
        %v3523 = vmul.f32 %v3516, %v2545
        %v3524 = vmul.f32 %v3512, %v2549
        %v3525 = vpack.c.bf16 %v3519, %v3517
        %v3526 = vpack.c.bf16 %v3520, %v3518
        %v3527 = vpack.c.bf16 %v3523, %v3521
        %v3528 = vpack.c.bf16 %v3524, %v3522
        %v3529 = vpack.c.bf16 %v3367, %v3365
        %v3530 = vpack.c.bf16 %v3368, %v3366
        %v3531 = vpack.c.bf16 %v3371, %v3369
        %v3532 = vpack.c.bf16 %v3372, %v3370
        %3533 = vrot.lane.b32.xlu0 %v3365, 127
        %v3534 = vpop.permute.xlu0 %3533
        %3535 = vrot.lane.b32.xlu0 %v3367, 127
        %v3536 = vpop.permute.xlu0 %3535
        %3537 = vrot.lane.b32.xlu0 %v3369, 127
        %v3538 = vpop.permute.xlu0 %3537
        %3539 = vrot.lane.b32.xlu0 %v3371, 127
        %v3540 = vpop.permute.xlu0 %3539
        %3541 = vrot.lane.b32.xlu0 %v3366, 127
        %v3542 = vpop.permute.xlu0 %3541
        %3543 = vrot.lane.b32.xlu0 %v3368, 127
        %v3544 = vpop.permute.xlu0 %3543
        %3545 = vrot.lane.b32.xlu0 %v3370, 127
        %v3546 = vpop.permute.xlu0 %3545
        %3547 = vrot.lane.b32.xlu0 %v3372, 127
        %v3548 = vpop.permute.xlu0 %3547
        %v3549 = vsel %vm956, %v3534, %v3542
        %v3550 = vsel %vm956, %v3536, %v3544
        %v3551 = vsel %vm956, %v3538, %v3546
        %v3552 = vsel %vm956, %v3540, %v3548
        %v3553 = vsel %vm956, %v3542, %v3534
        %v3554 = vsel %vm956, %v3544, %v3536
        %v3555 = vsel %vm956, %v3546, %v3538
        %v3556 = vsel %vm956, %v3548, %v3540
        %v3557 = vmul.f32 %v3549, %v2565
        %v3558 = vmul.f32 %v3553, %v2569
        %v3559 = vmul.f32 %v3550, %v2565
        %v3560 = vmul.f32 %v3554, %v2569
        %v3561 = vmul.f32 %v3551, %v2565
        %v3562 = vmul.f32 %v3555, %v2569
        %v3563 = vmul.f32 %v3552, %v2565
        %v3564 = vmul.f32 %v3556, %v2569
        %v3565 = vpack.c.bf16 %v3559, %v3557
        %v3566 = vpack.c.bf16 %v3560, %v3558
        %v3567 = vpack.c.bf16 %v3563, %v3561
        %v3568 = vpack.c.bf16 %v3564, %v3562
        %3569 = vrot.lane.b32.xlu0 %v3365, 113
        %v3570 = vpop.permute.xlu0 %3569
        %3571 = vrot.lane.b32.xlu0 %v3367, 113
        %v3572 = vpop.permute.xlu0 %3571
        %3573 = vrot.lane.b32.xlu0 %v3369, 113
        %v3574 = vpop.permute.xlu0 %3573
        %3575 = vrot.lane.b32.xlu0 %v3371, 113
        %v3576 = vpop.permute.xlu0 %3575
        %3577 = vrot.lane.b32.xlu0 %v3366, 113
        %v3578 = vpop.permute.xlu0 %3577
        %3579 = vrot.lane.b32.xlu0 %v3368, 113
        %v3580 = vpop.permute.xlu0 %3579
        %3581 = vrot.lane.b32.xlu0 %v3370, 113
        %v3582 = vpop.permute.xlu0 %3581
        %3583 = vrot.lane.b32.xlu0 %v3372, 113
        %v3584 = vpop.permute.xlu0 %3583
        %v3585 = vsel %vm2578, %v3570, %v3578
        %v3586 = vsel %vm2578, %v3572, %v3580
        %v3587 = vsel %vm2578, %v3574, %v3582
        %v3588 = vsel %vm2578, %v3576, %v3584
        %v3589 = vsel %vm2578, %v3578, %v3570
        %v3590 = vsel %vm2578, %v3580, %v3572
        %v3591 = vsel %vm2578, %v3582, %v3574
        %v3592 = vsel %vm2578, %v3584, %v3576
        %v3593 = vmul.f32 %v3585, %v2584
        %v3594 = vmul.f32 %v3589, %v2588
        %v3595 = vmul.f32 %v3586, %v2584
        %v3596 = vmul.f32 %v3590, %v2588
        %v3597 = vmul.f32 %v3587, %v2584
        %v3598 = vmul.f32 %v3591, %v2588
        %v3599 = vmul.f32 %v3588, %v2584
        %v3600 = vmul.f32 %v3592, %v2588
        %v3601 = vpack.c.bf16 %v3595, %v3593
        %v3602 = vpack.c.bf16 %v3596, %v3594
        %v3603 = vpack.c.bf16 %v3599, %v3597
        %v3604 = vpack.c.bf16 %v3600, %v3598
        %3605 = vrot.lane.b32.xlu0 %v3365, 112
        %v3606 = vpop.permute.xlu0 %3605
        %3607 = vrot.lane.b32.xlu0 %v3367, 112
        %v3608 = vpop.permute.xlu0 %3607
        %3609 = vrot.lane.b32.xlu0 %v3369, 112
        %v3610 = vpop.permute.xlu0 %3609
        %3611 = vrot.lane.b32.xlu0 %v3371, 112
        %v3612 = vpop.permute.xlu0 %3611
        %3613 = vrot.lane.b32.xlu0 %v3366, 112
        %v3614 = vpop.permute.xlu0 %3613
        %3615 = vrot.lane.b32.xlu0 %v3368, 112
        %v3616 = vpop.permute.xlu0 %3615
        %3617 = vrot.lane.b32.xlu0 %v3370, 112
        %v3618 = vpop.permute.xlu0 %3617
        %3619 = vrot.lane.b32.xlu0 %v3372, 112
        %v3620 = vpop.permute.xlu0 %3619
        %v3621 = vsel %vm994, %v3606, %v3614
        %v3622 = vsel %vm994, %v3608, %v3616
        %v3623 = vsel %vm994, %v3610, %v3618
        %v3624 = vsel %vm994, %v3612, %v3620
        %v3625 = vsel %vm994, %v3614, %v3606
        %v3626 = vsel %vm994, %v3616, %v3608
        %v3627 = vsel %vm994, %v3618, %v3610
        %v3628 = vsel %vm994, %v3620, %v3612
        %v3629 = vmul.f32 %v3621, %v2602
        %v3630 = vmul.f32 %v3625, %v2606
        %v3631 = vmul.f32 %v3622, %v2602
        %v3632 = vmul.f32 %v3626, %v2606
        %v3633 = vmul.f32 %v3623, %v2602
        %v3634 = vmul.f32 %v3627, %v2606
        %v3635 = vmul.f32 %v3624, %v2602
        %v3636 = vmul.f32 %v3628, %v2606
        %v3637 = vpack.c.bf16 %v3631, %v3629
        %v3638 = vpack.c.bf16 %v3632, %v3630
        %v3639 = vpack.c.bf16 %v3635, %v3633
        %v3640 = vpack.c.bf16 %v3636, %v3634
        %3641 = vrot.lane.b32.xlu0 %v3365, 111
        %v3642 = vpop.permute.xlu0 %3641
        %3643 = vrot.lane.b32.xlu0 %v3367, 111
        %v3644 = vpop.permute.xlu0 %3643
        %3645 = vrot.lane.b32.xlu0 %v3369, 111
        %v3646 = vpop.permute.xlu0 %3645
        %3647 = vrot.lane.b32.xlu0 %v3371, 111
        %v3648 = vpop.permute.xlu0 %3647
        %3649 = vrot.lane.b32.xlu0 %v3366, 111
        %v3650 = vpop.permute.xlu0 %3649
        %3651 = vrot.lane.b32.xlu0 %v3368, 111
        %v3652 = vpop.permute.xlu0 %3651
        %3653 = vrot.lane.b32.xlu0 %v3370, 111
        %v3654 = vpop.permute.xlu0 %3653
        %3655 = vrot.lane.b32.xlu0 %v3372, 111
        %v3656 = vpop.permute.xlu0 %3655
        %v3657 = vsel %vm2615, %v3642, %v3650
        %v3658 = vsel %vm2615, %v3644, %v3652
        %v3659 = vsel %vm2615, %v3646, %v3654
        %v3660 = vsel %vm2615, %v3648, %v3656
        %v3661 = vsel %vm2615, %v3650, %v3642
        %v3662 = vsel %vm2615, %v3652, %v3644
        %v3663 = vsel %vm2615, %v3654, %v3646
        %v3664 = vsel %vm2615, %v3656, %v3648
        %v3665 = vmul.f32 %v3657, %v2621
        %v3666 = vmul.f32 %v3661, %v2625
        %v3667 = vmul.f32 %v3658, %v2621
        %v3668 = vmul.f32 %v3662, %v2625
        %v3669 = vmul.f32 %v3659, %v2621
        %v3670 = vmul.f32 %v3663, %v2625
        %v3671 = vmul.f32 %v3660, %v2621
        %v3672 = vmul.f32 %v3664, %v2625
        %v3673 = vpack.c.bf16 %v3667, %v3665
        %v3674 = vpack.c.bf16 %v3668, %v3666
        %v3675 = vpack.c.bf16 %v3671, %v3669
        %v3676 = vpack.c.bf16 %v3672, %v3670
        %3678 = vset.pattern.permute.xlu0 0
        %3679 = vperm.xlu0 %3678, %v3381
        %v3680 = vpop.permute.xlu0 %3679
        %3683 = vset.pattern.permute.xlu0 0
        %3684 = vperm.xlu0 %3683, %v3382
        %v3685 = vpop.permute.xlu0 %3684
        %3688 = vset.pattern.permute.xlu0 0
        %3689 = vperm.xlu0 %3688, %v3383
        %v3690 = vpop.permute.xlu0 %3689
        %3693 = vset.pattern.permute.xlu0 0
        %3694 = vperm.xlu0 %3693, %v3384
        %v3695 = vpop.permute.xlu0 %3694
        %v3705 = vunpack.c.l.b16 %v3373
        %v3706 = vunpack.c.h.b16 %v3373
        %v3707 = vunpack.c.l.b16 %v3374
        %v3708 = vunpack.c.l.b16 %v3375
        %v3709 = vunpack.c.h.b16 %v3375
        %v3710 = vunpack.c.l.b16 %v3376
        %v3711 = vunpack.c.l.b16 %v3377
        %v3712 = vunpack.c.h.b16 %v3377
        %v3713 = vunpack.c.l.b16 %v3378
        %v3714 = vunpack.c.l.b16 %v3379
        %v3715 = vunpack.c.h.b16 %v3379
        %v3716 = vunpack.c.l.b16 %v3380
        %v3717 = vpack.c.b16 %v3708, %v3705
        %v3718 = vpack.c.b16 %v3709, %v3706
        %v3719 = vpack.c.b16 %v3710, %v3707
        %v3720 = vpack.c.b16 %v3714, %v3711
        %v3721 = vpack.c.b16 %v3715, %v3712
        %v3722 = vpack.c.b16 %v3716, %v3713
        %vm3727 = vcmask 261120
        %v3729 = vsel %vm3727, %v3719, 0
        %v3732 = vsel %vm3727, %v3722, 0
        %3734 = vmatprep.subr.bf16.mxu0 %v3528
        %3735 = vmatpush1.bf16.msra.mxu0 %v3527
        %3736 = vmatprep.subr.bf16.mxu0 %v3526
        %3737 = vmatpush1.bf16.msra.mxu0 %v3525
        %3738 = vmatprep.subr.bf16.mxu0 %v3492
        %3739 = vmatpush1.bf16.msra.mxu0 %v3491
        %3740 = vmatprep.subr.bf16.mxu0 %v3490
        %3741 = vmatpush1.bf16.msra.mxu0 %v3489
        %3742 = vmatprep.subr.bf16.mxu0 %v3456
        %3743 = vmatpush1.bf16.msra.mxu0 %v3455
        %3744 = vmatprep.subr.bf16.mxu0 %v3454
        %3745 = vmatpush1.bf16.msra.mxu0 %v3453
        %3746 = vmatprep.subr.bf16.mxu0 %v3420
        %3747 = vmatpush1.bf16.msra.mxu0 %v3419
        %3748 = vmatprep.subr.bf16.mxu0 %v3418
        %3749 = vmatpush1.bf16.msra.mxu0 %v3417
        %3750 = vmatprep.subr.bf16.mxu0 %v3640
        %3751 = vmatpush2.bf16.msra.mxu0 %v3639
        %3752 = vmatprep.subr.bf16.mxu0 %v3638
        %3753 = vmatpush2.bf16.msra.mxu0 %v3637
        %3754 = vmatprep.subr.bf16.mxu0 %v3604
        %3755 = vmatpush2.bf16.msra.mxu0 %v3603
        %3756 = vmatprep.subr.bf16.mxu0 %v3602
        %3757 = vmatpush2.bf16.msra.mxu0 %v3601
        %3758 = vmatprep.subr.bf16.mxu0 %v3568
        %3759 = vmatpush2.bf16.msra.mxu0 %v3567
        %3760 = vmatprep.subr.bf16.mxu0 %v3566
        %3761 = vmatpush2.bf16.msra.mxu0 %v3565
        %3762 = vmatprep.subr.bf16.mxu0 %v3532
        %3763 = vmatpush2.bf16.msra.mxu0 %v3531
        %3764 = vmatprep.subr.bf16.mxu0 %v3530
        %3765 = vmatpush2.bf16.msra.mxu0 %v3529
        %3766 = vmatprep.mubr.bf16.mxu0 %v3718
        %3767 = vmatmul.mubr.bf16.gmra.mxu0 %v3717
        %v3768 = vpop.f32.mrf.mxu0
        %v3769 = vadd.f32 %v3680, %v3768
        %v3770 = vpop.f32.mrf.mxu0
        %v3771 = vadd.f32 %v3680, %v3770
        %v3772 = vpop.f32.mrf.mxu0
        %v3773 = vadd.f32 %v3685, %v3772
        %v3774 = vpop.f32.mrf.mxu0
        %v3775 = vadd.f32 %v3685, %v3774
        %3776 = vmatprep.mubr.bf16.mxu0 %v3721
        %3777 = vmatmul.mubr.bf16.gmra.mxu0 %v3720
        %v3778 = vpop.f32.mrf.mxu0
        %v3779 = vadd.f32 %v3690, %v3778
        %v3780 = vpop.f32.mrf.mxu0
        %v3781 = vadd.f32 %v3690, %v3780
        %v3782 = vpop.f32.mrf.mxu0
        %v3783 = vadd.f32 %v3695, %v3782
        %v3784 = vpop.f32.mrf.mxu0
        %v3785 = vadd.f32 %v3695, %v3784
        %3786 = vdwg.mxu0
        %3787 = vmatprep.subr.bf16.mxu0 0
        %3788 = vmatpush1.bf16.msra.mxu0 0
        %3789 = vmatprep.subr.bf16.mxu0 0
        %3790 = vmatpush1.bf16.msra.mxu0 0
        %3791 = vmatprep.subr.bf16.mxu0 0
        %3792 = vmatpush1.bf16.msra.mxu0 0
        %3793 = vmatprep.subr.bf16.mxu0 0
        %3794 = vmatpush1.bf16.msra.mxu0 0
        %3795 = vmatprep.subr.bf16.mxu0 0
        %3796 = vmatpush1.bf16.msra.mxu0 0
        %3797 = vmatprep.subr.bf16.mxu0 0
        %3798 = vmatpush1.bf16.msra.mxu0 0
        %3799 = vmatprep.subr.bf16.mxu0 %v3676
        %3800 = vmatpush1.bf16.msra.mxu0 %v3675
        %3801 = vmatprep.subr.bf16.mxu0 %v3674
        %3802 = vmatpush1.bf16.msra.mxu0 %v3673
        %3803 = vmatprep.subr.bf16.mxu0 0
        %3804 = vmatpush2.bf16.msra.mxu0 0
        %3805 = vmatprep.subr.bf16.mxu0 0
        %3806 = vmatpush2.bf16.msra.mxu0 0
        %3807 = vmatprep.subr.bf16.mxu0 0
        %3808 = vmatpush2.bf16.msra.mxu0 0
        %3809 = vmatprep.subr.bf16.mxu0 0
        %3810 = vmatpush2.bf16.msra.mxu0 0
        %3811 = vmatprep.subr.bf16.mxu0 0
        %3812 = vmatpush2.bf16.msra.mxu0 0
        %3813 = vmatprep.subr.bf16.mxu0 0
        %3814 = vmatpush2.bf16.msra.mxu0 0
        %3815 = vmatprep.subr.bf16.mxu0 0
        %3816 = vmatpush2.bf16.msra.mxu0 0
        %3817 = vmatprep.subr.bf16.mxu0 0
        %3818 = vmatpush2.bf16.msra.mxu0 0
        %3819 = vmatprep.mubr.bf16.mxu0 0
        %3820 = vmatmul.mubr.bf16.gmra.mxu0 %v3729
        %v3821 = vpop.f32.mrf.mxu0
        %v3822 = vadd.f32 %v3769, %v3821
        %v3823 = vpop.f32.mrf.mxu0
        %v3824 = vadd.f32 %v3771, %v3823
        %v3825 = vpop.f32.mrf.mxu0
        %v3826 = vadd.f32 %v3773, %v3825
        %v3827 = vpop.f32.mrf.mxu0
        %v3828 = vadd.f32 %v3775, %v3827
        %3829 = vmatprep.mubr.bf16.mxu0 0
        %3830 = vmatmul.mubr.bf16.gmra.mxu0 %v3732
        %v3831 = vpop.f32.mrf.mxu0
        %v3832 = vadd.f32 %v3779, %v3831
        %v3833 = vpop.f32.mrf.mxu0
        %v3834 = vadd.f32 %v3781, %v3833
        %v3835 = vpop.f32.mrf.mxu0
        %v3836 = vadd.f32 %v3783, %v3835
        %v3837 = vpop.f32.mrf.mxu0
        %v3838 = vadd.f32 %v3785, %v3837
        %3839 = vdwg.mxu0
        %s3840 = sadd.s32 %s2752, 2
        %s3841 = sld [smem:[#allocation6 + %s3840]]
        %vm3842 = vcmp.gt.f32.partialorder %v3822, 0.0
        %vm3843 = vcmp.gt.f32.partialorder %v3824, 0.0
        %vm3844 = vcmp.gt.f32.partialorder %v3826, 0.0
        %vm3845 = vcmp.gt.f32.partialorder %v3828, 0.0
        %vm3846 = vcmp.gt.f32.partialorder %v3832, 0.0
        %vm3847 = vcmp.gt.f32.partialorder %v3834, 0.0
        %vm3848 = vcmp.gt.f32.partialorder %v3836, 0.0
        %vm3849 = vcmp.gt.f32.partialorder %v3838, 0.0
        %v3850 = vstv %s3841
        %v3851 = vmul.f32 %v3850, %v3822
        %v3852 = vmul.f32 %v3850, %v3824
        %v3853 = vmul.f32 %v3850, %v3826
        %v3854 = vmul.f32 %v3850, %v3828
        %v3855 = vmul.f32 %v3850, %v3832
        %v3856 = vmul.f32 %v3850, %v3834
        %v3857 = vmul.f32 %v3850, %v3836
        %v3858 = vmul.f32 %v3850, %v3838
        %v3859 = vsel %vm3842, %v3822, %v3851
        %v3860 = vsel %vm3843, %v3824, %v3852
        %v3861 = vsel %vm3844, %v3826, %v3853
        %v3862 = vsel %vm3845, %v3828, %v3854
        %v3863 = vsel %vm3846, %v3832, %v3855
        %v3864 = vsel %vm3847, %v3834, %v3856
        %v3865 = vsel %vm3848, %v3836, %v3857
        %v3866 = vsel %vm3849, %v3838, %v3858
        %s3867 = scalar_lea.vmem %s760, 48
        %v3868 = vld [vmem:[%s3867] sm:$0xff]
        %v3869 = vld [vmem:[%s3867 + $0x8] sm:$0xf]
        %v3870 = vld [vmem:[%s3867 + $0xc] sm:$0xff]
        %v3871 = vld [vmem:[%s3867 + $0x14] sm:$0xf]
        %v3872 = vld [vmem:[%s3867 + $0x18] sm:$0xff]
        %v3873 = vld [vmem:[%s3867 + $0x20] sm:$0xf]
        %v3874 = vld [vmem:[%s3867 + $0x24] sm:$0xff]
        %v3875 = vld [vmem:[%s3867 + $0x2c] sm:$0xf]
        %s3876 = scalar_lea.vmem %s765, 32
        %v3877 = vld [vmem:[%s3876] sm:$0xff]
        %v3878 = vld [vmem:[%s3876 + $0x8] sm:$0xff]
        %v3879 = vld [vmem:[%s3876 + $0x10] sm:$0xff]
        %v3880 = vld [vmem:[%s3876 + $0x18] sm:$0xff]
        %3881 = vrot.lane.b32.xlu0 %v3859, 17
        %v3882 = vpop.permute.xlu0 %3881
        %3883 = vrot.lane.b32.xlu0 %v3861, 17
        %v3884 = vpop.permute.xlu0 %3883
        %3885 = vrot.lane.b32.xlu0 %v3863, 17
        %v3886 = vpop.permute.xlu0 %3885
        %3887 = vrot.lane.b32.xlu0 %v3865, 17
        %v3888 = vpop.permute.xlu0 %3887
        %3889 = vrot.lane.b32.xlu0 %v3860, 17
        %v3890 = vpop.permute.xlu0 %3889
        %3891 = vrot.lane.b32.xlu0 %v3862, 17
        %v3892 = vpop.permute.xlu0 %3891
        %3893 = vrot.lane.b32.xlu0 %v3864, 17
        %v3894 = vpop.permute.xlu0 %3893
        %3895 = vrot.lane.b32.xlu0 %v3866, 17
        %v3896 = vpop.permute.xlu0 %3895
        %v3897 = vsel %vm2484, %v3882, %v3890
        %v3898 = vsel %vm2484, %v3884, %v3892
        %v3899 = vsel %vm2484, %v3886, %v3894
        %v3900 = vsel %vm2484, %v3888, %v3896
        %v3901 = vsel %vm2484, %v3890, %v3882
        %v3902 = vsel %vm2484, %v3892, %v3884
        %v3903 = vsel %vm2484, %v3894, %v3886
        %v3904 = vsel %vm2484, %v3896, %v3888
        %v3905 = vmul.f32 %v3901, %v2490
        %v3906 = vmul.f32 %v3897, %v2494
        %v3907 = vmul.f32 %v3902, %v2490
        %v3908 = vmul.f32 %v3898, %v2494
        %v3909 = vmul.f32 %v3903, %v2490
        %v3910 = vmul.f32 %v3899, %v2494
        %v3911 = vmul.f32 %v3904, %v2490
        %v3912 = vmul.f32 %v3900, %v2494
        %v3913 = vpack.c.bf16 %v3907, %v3905
        %v3914 = vpack.c.bf16 %v3908, %v3906
        %v3915 = vpack.c.bf16 %v3911, %v3909
        %v3916 = vpack.c.bf16 %v3912, %v3910
        %3917 = vrot.lane.b32.xlu0 %v3859, 16
        %v3918 = vpop.permute.xlu0 %3917
        %3919 = vrot.lane.b32.xlu0 %v3861, 16
        %v3920 = vpop.permute.xlu0 %3919
        %3921 = vrot.lane.b32.xlu0 %v3863, 16
        %v3922 = vpop.permute.xlu0 %3921
        %3923 = vrot.lane.b32.xlu0 %v3865, 16
        %v3924 = vpop.permute.xlu0 %3923
        %3925 = vrot.lane.b32.xlu0 %v3860, 16
        %v3926 = vpop.permute.xlu0 %3925
        %3927 = vrot.lane.b32.xlu0 %v3862, 16
        %v3928 = vpop.permute.xlu0 %3927
        %3929 = vrot.lane.b32.xlu0 %v3864, 16
        %v3930 = vpop.permute.xlu0 %3929
        %3931 = vrot.lane.b32.xlu0 %v3866, 16
        %v3932 = vpop.permute.xlu0 %3931
        %v3933 = vsel %vm904, %v3918, %v3926
        %v3934 = vsel %vm904, %v3920, %v3928
        %v3935 = vsel %vm904, %v3922, %v3930
        %v3936 = vsel %vm904, %v3924, %v3932
        %v3937 = vsel %vm904, %v3926, %v3918
        %v3938 = vsel %vm904, %v3928, %v3920
        %v3939 = vsel %vm904, %v3930, %v3922
        %v3940 = vsel %vm904, %v3932, %v3924
        %v3941 = vmul.f32 %v3937, %v2508
        %v3942 = vmul.f32 %v3933, %v2512
        %v3943 = vmul.f32 %v3938, %v2508
        %v3944 = vmul.f32 %v3934, %v2512
        %v3945 = vmul.f32 %v3939, %v2508
        %v3946 = vmul.f32 %v3935, %v2512
        %v3947 = vmul.f32 %v3940, %v2508
        %v3948 = vmul.f32 %v3936, %v2512
        %v3949 = vpack.c.bf16 %v3943, %v3941
        %v3950 = vpack.c.bf16 %v3944, %v3942
        %v3951 = vpack.c.bf16 %v3947, %v3945
        %v3952 = vpack.c.bf16 %v3948, %v3946
        %3953 = vrot.lane.b32.xlu0 %v3859, 15
        %v3954 = vpop.permute.xlu0 %3953
        %3955 = vrot.lane.b32.xlu0 %v3861, 15
        %v3956 = vpop.permute.xlu0 %3955
        %3957 = vrot.lane.b32.xlu0 %v3863, 15
        %v3958 = vpop.permute.xlu0 %3957
        %3959 = vrot.lane.b32.xlu0 %v3865, 15
        %v3960 = vpop.permute.xlu0 %3959
        %3961 = vrot.lane.b32.xlu0 %v3860, 15
        %v3962 = vpop.permute.xlu0 %3961
        %3963 = vrot.lane.b32.xlu0 %v3862, 15
        %v3964 = vpop.permute.xlu0 %3963
        %3965 = vrot.lane.b32.xlu0 %v3864, 15
        %v3966 = vpop.permute.xlu0 %3965
        %3967 = vrot.lane.b32.xlu0 %v3866, 15
        %v3968 = vpop.permute.xlu0 %3967
        %v3969 = vsel %vm2521, %v3954, %v3962
        %v3970 = vsel %vm2521, %v3956, %v3964
        %v3971 = vsel %vm2521, %v3958, %v3966
        %v3972 = vsel %vm2521, %v3960, %v3968
        %v3973 = vsel %vm2521, %v3962, %v3954
        %v3974 = vsel %vm2521, %v3964, %v3956
        %v3975 = vsel %vm2521, %v3966, %v3958
        %v3976 = vsel %vm2521, %v3968, %v3960
        %v3977 = vmul.f32 %v3973, %v2527
        %v3978 = vmul.f32 %v3969, %v2531
        %v3979 = vmul.f32 %v3974, %v2527
        %v3980 = vmul.f32 %v3970, %v2531
        %v3981 = vmul.f32 %v3975, %v2527
        %v3982 = vmul.f32 %v3971, %v2531
        %v3983 = vmul.f32 %v3976, %v2527
        %v3984 = vmul.f32 %v3972, %v2531
        %v3985 = vpack.c.bf16 %v3979, %v3977
        %v3986 = vpack.c.bf16 %v3980, %v3978
        %v3987 = vpack.c.bf16 %v3983, %v3981
        %v3988 = vpack.c.bf16 %v3984, %v3982
        %3989 = vrot.lane.b32.xlu0 %v3859, 1
        %v3990 = vpop.permute.xlu0 %3989
        %3991 = vrot.lane.b32.xlu0 %v3861, 1
        %v3992 = vpop.permute.xlu0 %3991
        %3993 = vrot.lane.b32.xlu0 %v3863, 1
        %v3994 = vpop.permute.xlu0 %3993
        %3995 = vrot.lane.b32.xlu0 %v3865, 1
        %v3996 = vpop.permute.xlu0 %3995
        %3997 = vrot.lane.b32.xlu0 %v3860, 1
        %v3998 = vpop.permute.xlu0 %3997
        %3999 = vrot.lane.b32.xlu0 %v3862, 1
        %v4000 = vpop.permute.xlu0 %3999
        %4001 = vrot.lane.b32.xlu0 %v3864, 1
        %v4002 = vpop.permute.xlu0 %4001
        %4003 = vrot.lane.b32.xlu0 %v3866, 1
        %v4004 = vpop.permute.xlu0 %4003
        %v4005 = vsel %vm848, %v3990, %v3998
        %v4006 = vsel %vm848, %v3992, %v4000
        %v4007 = vsel %vm848, %v3994, %v4002
        %v4008 = vsel %vm848, %v3996, %v4004
        %v4009 = vsel %vm848, %v3998, %v3990
        %v4010 = vsel %vm848, %v4000, %v3992
        %v4011 = vsel %vm848, %v4002, %v3994
        %v4012 = vsel %vm848, %v4004, %v3996
        %v4013 = vmul.f32 %v4009, %v2545
        %v4014 = vmul.f32 %v4005, %v2549
        %v4015 = vmul.f32 %v4010, %v2545
        %v4016 = vmul.f32 %v4006, %v2549
        %v4017 = vmul.f32 %v4011, %v2545
        %v4018 = vmul.f32 %v4007, %v2549
        %v4019 = vmul.f32 %v4012, %v2545
        %v4020 = vmul.f32 %v4008, %v2549
        %v4021 = vpack.c.bf16 %v4015, %v4013
        %v4022 = vpack.c.bf16 %v4016, %v4014
        %v4023 = vpack.c.bf16 %v4019, %v4017
        %v4024 = vpack.c.bf16 %v4020, %v4018
        %v4025 = vpack.c.bf16 %v3861, %v3859
        %v4026 = vpack.c.bf16 %v3862, %v3860
        %v4027 = vpack.c.bf16 %v3865, %v3863
        %v4028 = vpack.c.bf16 %v3866, %v3864
        %4029 = vrot.lane.b32.xlu0 %v3859, 127
        %v4030 = vpop.permute.xlu0 %4029
        %4031 = vrot.lane.b32.xlu0 %v3861, 127
        %v4032 = vpop.permute.xlu0 %4031
        %4033 = vrot.lane.b32.xlu0 %v3863, 127
        %v4034 = vpop.permute.xlu0 %4033
        %4035 = vrot.lane.b32.xlu0 %v3865, 127
        %v4036 = vpop.permute.xlu0 %4035
        %4037 = vrot.lane.b32.xlu0 %v3860, 127
        %v4038 = vpop.permute.xlu0 %4037
        %4039 = vrot.lane.b32.xlu0 %v3862, 127
        %v4040 = vpop.permute.xlu0 %4039
        %4041 = vrot.lane.b32.xlu0 %v3864, 127
        %v4042 = vpop.permute.xlu0 %4041
        %4043 = vrot.lane.b32.xlu0 %v3866, 127
        %v4044 = vpop.permute.xlu0 %4043
        %v4045 = vsel %vm956, %v4030, %v4038
        %v4046 = vsel %vm956, %v4032, %v4040
        %v4047 = vsel %vm956, %v4034, %v4042
        %v4048 = vsel %vm956, %v4036, %v4044
        %v4049 = vsel %vm956, %v4038, %v4030
        %v4050 = vsel %vm956, %v4040, %v4032
        %v4051 = vsel %vm956, %v4042, %v4034
        %v4052 = vsel %vm956, %v4044, %v4036
        %v4053 = vmul.f32 %v4045, %v2565
        %v4054 = vmul.f32 %v4049, %v2569
        %v4055 = vmul.f32 %v4046, %v2565
        %v4056 = vmul.f32 %v4050, %v2569
        %v4057 = vmul.f32 %v4047, %v2565
        %v4058 = vmul.f32 %v4051, %v2569
        %v4059 = vmul.f32 %v4048, %v2565
        %v4060 = vmul.f32 %v4052, %v2569
        %v4061 = vpack.c.bf16 %v4055, %v4053
        %v4062 = vpack.c.bf16 %v4056, %v4054
        %v4063 = vpack.c.bf16 %v4059, %v4057
        %v4064 = vpack.c.bf16 %v4060, %v4058
        %4065 = vrot.lane.b32.xlu0 %v3859, 113
        %v4066 = vpop.permute.xlu0 %4065
        %4067 = vrot.lane.b32.xlu0 %v3861, 113
        %v4068 = vpop.permute.xlu0 %4067
        %4069 = vrot.lane.b32.xlu0 %v3863, 113
        %v4070 = vpop.permute.xlu0 %4069
        %4071 = vrot.lane.b32.xlu0 %v3865, 113
        %v4072 = vpop.permute.xlu0 %4071
        %4073 = vrot.lane.b32.xlu0 %v3860, 113
        %v4074 = vpop.permute.xlu0 %4073
        %4075 = vrot.lane.b32.xlu0 %v3862, 113
        %v4076 = vpop.permute.xlu0 %4075
        %4077 = vrot.lane.b32.xlu0 %v3864, 113
        %v4078 = vpop.permute.xlu0 %4077
        %4079 = vrot.lane.b32.xlu0 %v3866, 113
        %v4080 = vpop.permute.xlu0 %4079
        %v4081 = vsel %vm2578, %v4066, %v4074
        %v4082 = vsel %vm2578, %v4068, %v4076
        %v4083 = vsel %vm2578, %v4070, %v4078
        %v4084 = vsel %vm2578, %v4072, %v4080
        %v4085 = vsel %vm2578, %v4074, %v4066
        %v4086 = vsel %vm2578, %v4076, %v4068
        %v4087 = vsel %vm2578, %v4078, %v4070
        %v4088 = vsel %vm2578, %v4080, %v4072
        %v4089 = vmul.f32 %v4081, %v2584
        %v4090 = vmul.f32 %v4085, %v2588
        %v4091 = vmul.f32 %v4082, %v2584
        %v4092 = vmul.f32 %v4086, %v2588
        %v4093 = vmul.f32 %v4083, %v2584
        %v4094 = vmul.f32 %v4087, %v2588
        %v4095 = vmul.f32 %v4084, %v2584
        %v4096 = vmul.f32 %v4088, %v2588
        %v4097 = vpack.c.bf16 %v4091, %v4089
        %v4098 = vpack.c.bf16 %v4092, %v4090
        %v4099 = vpack.c.bf16 %v4095, %v4093
        %v4100 = vpack.c.bf16 %v4096, %v4094
        %4101 = vrot.lane.b32.xlu0 %v3859, 112
        %v4102 = vpop.permute.xlu0 %4101
        %4103 = vrot.lane.b32.xlu0 %v3861, 112
        %v4104 = vpop.permute.xlu0 %4103
        %4105 = vrot.lane.b32.xlu0 %v3863, 112
        %v4106 = vpop.permute.xlu0 %4105
        %4107 = vrot.lane.b32.xlu0 %v3865, 112
        %v4108 = vpop.permute.xlu0 %4107
        %4109 = vrot.lane.b32.xlu0 %v3860, 112
        %v4110 = vpop.permute.xlu0 %4109
        %4111 = vrot.lane.b32.xlu0 %v3862, 112
        %v4112 = vpop.permute.xlu0 %4111
        %4113 = vrot.lane.b32.xlu0 %v3864, 112
        %v4114 = vpop.permute.xlu0 %4113
        %4115 = vrot.lane.b32.xlu0 %v3866, 112
        %v4116 = vpop.permute.xlu0 %4115
        %v4117 = vsel %vm994, %v4102, %v4110
        %v4118 = vsel %vm994, %v4104, %v4112
        %v4119 = vsel %vm994, %v4106, %v4114
        %v4120 = vsel %vm994, %v4108, %v4116
        %v4121 = vsel %vm994, %v4110, %v4102
        %v4122 = vsel %vm994, %v4112, %v4104
        %v4123 = vsel %vm994, %v4114, %v4106
        %v4124 = vsel %vm994, %v4116, %v4108
        %v4125 = vmul.f32 %v4117, %v2602
        %v4126 = vmul.f32 %v4121, %v2606
        %v4127 = vmul.f32 %v4118, %v2602
        %v4128 = vmul.f32 %v4122, %v2606
        %v4129 = vmul.f32 %v4119, %v2602
        %v4130 = vmul.f32 %v4123, %v2606
        %v4131 = vmul.f32 %v4120, %v2602
        %v4132 = vmul.f32 %v4124, %v2606
        %v4133 = vpack.c.bf16 %v4127, %v4125
        %v4134 = vpack.c.bf16 %v4128, %v4126
        %v4135 = vpack.c.bf16 %v4131, %v4129
        %v4136 = vpack.c.bf16 %v4132, %v4130
        %4137 = vrot.lane.b32.xlu0 %v3859, 111
        %v4138 = vpop.permute.xlu0 %4137
        %4139 = vrot.lane.b32.xlu0 %v3861, 111
        %v4140 = vpop.permute.xlu0 %4139
        %4141 = vrot.lane.b32.xlu0 %v3863, 111
        %v4142 = vpop.permute.xlu0 %4141
        %4143 = vrot.lane.b32.xlu0 %v3865, 111
        %v4144 = vpop.permute.xlu0 %4143
        %4145 = vrot.lane.b32.xlu0 %v3860, 111
        %v4146 = vpop.permute.xlu0 %4145
        %4147 = vrot.lane.b32.xlu0 %v3862, 111
        %v4148 = vpop.permute.xlu0 %4147
        %4149 = vrot.lane.b32.xlu0 %v3864, 111
        %v4150 = vpop.permute.xlu0 %4149
        %4151 = vrot.lane.b32.xlu0 %v3866, 111
        %v4152 = vpop.permute.xlu0 %4151
        %v4153 = vsel %vm2615, %v4138, %v4146
        %v4154 = vsel %vm2615, %v4140, %v4148
        %v4155 = vsel %vm2615, %v4142, %v4150
        %v4156 = vsel %vm2615, %v4144, %v4152
        %v4157 = vsel %vm2615, %v4146, %v4138
        %v4158 = vsel %vm2615, %v4148, %v4140
        %v4159 = vsel %vm2615, %v4150, %v4142
        %v4160 = vsel %vm2615, %v4152, %v4144
        %v4161 = vmul.f32 %v4153, %v2621
        %v4162 = vmul.f32 %v4157, %v2625
        %v4163 = vmul.f32 %v4154, %v2621
        %v4164 = vmul.f32 %v4158, %v2625
        %v4165 = vmul.f32 %v4155, %v2621
        %v4166 = vmul.f32 %v4159, %v2625
        %v4167 = vmul.f32 %v4156, %v2621
        %v4168 = vmul.f32 %v4160, %v2625
        %v4169 = vpack.c.bf16 %v4163, %v4161
        %v4170 = vpack.c.bf16 %v4164, %v4162
        %v4171 = vpack.c.bf16 %v4167, %v4165
        %v4172 = vpack.c.bf16 %v4168, %v4166
        %4174 = vset.pattern.permute.xlu0 0
        %4175 = vperm.xlu0 %4174, %v3877
        %v4176 = vpop.permute.xlu0 %4175
        %4179 = vset.pattern.permute.xlu0 0
        %4180 = vperm.xlu0 %4179, %v3878
        %v4181 = vpop.permute.xlu0 %4180
        %4184 = vset.pattern.permute.xlu0 0
        %4185 = vperm.xlu0 %4184, %v3879
        %v4186 = vpop.permute.xlu0 %4185
        %4189 = vset.pattern.permute.xlu0 0
        %4190 = vperm.xlu0 %4189, %v3880
        %v4191 = vpop.permute.xlu0 %4190
        %v4201 = vunpack.c.l.b16 %v3868
        %v4202 = vunpack.c.h.b16 %v3868
        %v4203 = vunpack.c.l.b16 %v3869
        %v4204 = vunpack.c.l.b16 %v3870
        %v4205 = vunpack.c.h.b16 %v3870
        %v4206 = vunpack.c.l.b16 %v3871
        %v4207 = vunpack.c.l.b16 %v3872
        %v4208 = vunpack.c.h.b16 %v3872
        %v4209 = vunpack.c.l.b16 %v3873
        %v4210 = vunpack.c.l.b16 %v3874
        %v4211 = vunpack.c.h.b16 %v3874
        %v4212 = vunpack.c.l.b16 %v3875
        %v4213 = vpack.c.b16 %v4204, %v4201
        %v4214 = vpack.c.b16 %v4205, %v4202
        %v4215 = vpack.c.b16 %v4206, %v4203
        %v4216 = vpack.c.b16 %v4210, %v4207
        %v4217 = vpack.c.b16 %v4211, %v4208
        %v4218 = vpack.c.b16 %v4212, %v4209
        %v4224 = vsel %vm3727, %v4215, 0
        %v4227 = vsel %vm3727, %v4218, 0
        %4229 = vmatprep.subr.bf16.mxu0 %v4024
        %4230 = vmatpush1.bf16.msra.mxu0 %v4023
        %4231 = vmatprep.subr.bf16.mxu0 %v4022
        %4232 = vmatpush1.bf16.msra.mxu0 %v4021
        %4233 = vmatprep.subr.bf16.mxu0 %v3988
        %4234 = vmatpush1.bf16.msra.mxu0 %v3987
        %4235 = vmatprep.subr.bf16.mxu0 %v3986
        %4236 = vmatpush1.bf16.msra.mxu0 %v3985
        %4237 = vmatprep.subr.bf16.mxu0 %v3952
        %4238 = vmatpush1.bf16.msra.mxu0 %v3951
        %4239 = vmatprep.subr.bf16.mxu0 %v3950
        %4240 = vmatpush1.bf16.msra.mxu0 %v3949
        %4241 = vmatprep.subr.bf16.mxu0 %v3916
        %4242 = vmatpush1.bf16.msra.mxu0 %v3915
        %4243 = vmatprep.subr.bf16.mxu0 %v3914
        %4244 = vmatpush1.bf16.msra.mxu0 %v3913
        %4245 = vmatprep.subr.bf16.mxu0 %v4136
        %4246 = vmatpush2.bf16.msra.mxu0 %v4135
        %4247 = vmatprep.subr.bf16.mxu0 %v4134
        %4248 = vmatpush2.bf16.msra.mxu0 %v4133
        %4249 = vmatprep.subr.bf16.mxu0 %v4100
        %4250 = vmatpush2.bf16.msra.mxu0 %v4099
        %4251 = vmatprep.subr.bf16.mxu0 %v4098
        %4252 = vmatpush2.bf16.msra.mxu0 %v4097
        %4253 = vmatprep.subr.bf16.mxu0 %v4064
        %4254 = vmatpush2.bf16.msra.mxu0 %v4063
        %4255 = vmatprep.subr.bf16.mxu0 %v4062
        %4256 = vmatpush2.bf16.msra.mxu0 %v4061
        %4257 = vmatprep.subr.bf16.mxu0 %v4028
        %4258 = vmatpush2.bf16.msra.mxu0 %v4027
        %4259 = vmatprep.subr.bf16.mxu0 %v4026
        %4260 = vmatpush2.bf16.msra.mxu0 %v4025
        %4261 = vmatprep.mubr.bf16.mxu0 %v4214
        %4262 = vmatmul.mubr.bf16.gmra.mxu0 %v4213
        %v4263 = vpop.f32.mrf.mxu0
        %v4264 = vadd.f32 %v4176, %v4263
        %v4265 = vpop.f32.mrf.mxu0
        %v4266 = vadd.f32 %v4176, %v4265
        %v4267 = vpop.f32.mrf.mxu0
        %v4268 = vadd.f32 %v4181, %v4267
        %v4269 = vpop.f32.mrf.mxu0
        %v4270 = vadd.f32 %v4181, %v4269
        %4271 = vmatprep.mubr.bf16.mxu0 %v4217
        %4272 = vmatmul.mubr.bf16.gmra.mxu0 %v4216
        %v4273 = vpop.f32.mrf.mxu0
        %v4274 = vadd.f32 %v4186, %v4273
        %v4275 = vpop.f32.mrf.mxu0
        %v4276 = vadd.f32 %v4186, %v4275
        %v4277 = vpop.f32.mrf.mxu0
        %v4278 = vadd.f32 %v4191, %v4277
        %v4279 = vpop.f32.mrf.mxu0
        %v4280 = vadd.f32 %v4191, %v4279
        %4281 = vdwg.mxu0
        %4282 = vmatprep.subr.bf16.mxu0 0
        %4283 = vmatpush1.bf16.msra.mxu0 0
        %4284 = vmatprep.subr.bf16.mxu0 0
        %4285 = vmatpush1.bf16.msra.mxu0 0
        %4286 = vmatprep.subr.bf16.mxu0 0
        %4287 = vmatpush1.bf16.msra.mxu0 0
        %4288 = vmatprep.subr.bf16.mxu0 0
        %4289 = vmatpush1.bf16.msra.mxu0 0
        %4290 = vmatprep.subr.bf16.mxu0 0
        %4291 = vmatpush1.bf16.msra.mxu0 0
        %4292 = vmatprep.subr.bf16.mxu0 0
        %4293 = vmatpush1.bf16.msra.mxu0 0
        %4294 = vmatprep.subr.bf16.mxu0 %v4172
        %4295 = vmatpush1.bf16.msra.mxu0 %v4171
        %4296 = vmatprep.subr.bf16.mxu0 %v4170
        %4297 = vmatpush1.bf16.msra.mxu0 %v4169
        %4298 = vmatprep.subr.bf16.mxu0 0
        %4299 = vmatpush2.bf16.msra.mxu0 0
        %4300 = vmatprep.subr.bf16.mxu0 0
        %4301 = vmatpush2.bf16.msra.mxu0 0
        %4302 = vmatprep.subr.bf16.mxu0 0
        %4303 = vmatpush2.bf16.msra.mxu0 0
        %4304 = vmatprep.subr.bf16.mxu0 0
        %4305 = vmatpush2.bf16.msra.mxu0 0
        %4306 = vmatprep.subr.bf16.mxu0 0
        %4307 = vmatpush2.bf16.msra.mxu0 0
        %4308 = vmatprep.subr.bf16.mxu0 0
        %4309 = vmatpush2.bf16.msra.mxu0 0
        %4310 = vmatprep.subr.bf16.mxu0 0
        %4311 = vmatpush2.bf16.msra.mxu0 0
        %4312 = vmatprep.subr.bf16.mxu0 0
        %4313 = vmatpush2.bf16.msra.mxu0 0
        %4314 = vmatprep.mubr.bf16.mxu0 0
        %4315 = vmatmul.mubr.bf16.gmra.mxu0 %v4224
        %v4316 = vpop.f32.mrf.mxu0
        %v4317 = vadd.f32 %v4264, %v4316
        %v4318 = vpop.f32.mrf.mxu0
        %v4319 = vadd.f32 %v4266, %v4318
        %v4320 = vpop.f32.mrf.mxu0
        %v4321 = vadd.f32 %v4268, %v4320
        %v4322 = vpop.f32.mrf.mxu0
        %v4323 = vadd.f32 %v4270, %v4322
        %4324 = vmatprep.mubr.bf16.mxu0 0
        %4325 = vmatmul.mubr.bf16.gmra.mxu0 %v4227
        %v4326 = vpop.f32.mrf.mxu0
        %v4327 = vadd.f32 %v4274, %v4326
        %v4328 = vpop.f32.mrf.mxu0
        %v4329 = vadd.f32 %v4276, %v4328
        %v4330 = vpop.f32.mrf.mxu0
        %v4331 = vadd.f32 %v4278, %v4330
        %v4332 = vpop.f32.mrf.mxu0
        %v4333 = vadd.f32 %v4280, %v4332
        %4334 = vdwg.mxu0
        %s4335 = sadd.s32 %s2752, 3
        %s4336 = sld [smem:[#allocation6 + %s4335]]
        %vm4337 = vcmp.gt.f32.partialorder %v4317, 0.0
        %vm4338 = vcmp.gt.f32.partialorder %v4319, 0.0
        %vm4339 = vcmp.gt.f32.partialorder %v4321, 0.0
        %vm4340 = vcmp.gt.f32.partialorder %v4323, 0.0
        %vm4341 = vcmp.gt.f32.partialorder %v4327, 0.0
        %vm4342 = vcmp.gt.f32.partialorder %v4329, 0.0
        %vm4343 = vcmp.gt.f32.partialorder %v4331, 0.0
        %vm4344 = vcmp.gt.f32.partialorder %v4333, 0.0
        %v4345 = vstv %s4336
        %v4346 = vmul.f32 %v4345, %v4317
        %v4347 = vmul.f32 %v4345, %v4319
        %v4348 = vmul.f32 %v4345, %v4321
        %v4349 = vmul.f32 %v4345, %v4323
        %v4350 = vmul.f32 %v4345, %v4327
        %v4351 = vmul.f32 %v4345, %v4329
        %v4352 = vmul.f32 %v4345, %v4331
        %v4353 = vmul.f32 %v4345, %v4333
        %v4354 = vsel %vm4337, %v4317, %v4346
        %v4355 = vsel %vm4338, %v4319, %v4347
        %v4356 = vsel %vm4339, %v4321, %v4348
        %v4357 = vsel %vm4340, %v4323, %v4349
        %v4358 = vsel %vm4341, %v4327, %v4350
        %v4359 = vsel %vm4342, %v4329, %v4351
        %v4360 = vsel %vm4343, %v4331, %v4352
        %v4361 = vsel %vm4344, %v4333, %v4353
        %s4362 = scalar_lea.vmem %s760, 96
        %v4363 = vld [vmem:[%s4362] sm:$0xff]
        %v4364 = vld [vmem:[%s4362 + $0x8] sm:$0xf]
        %v4365 = vld [vmem:[%s4362 + $0xc] sm:$0xff]
        %v4366 = vld [vmem:[%s4362 + $0x14] sm:$0xf]
        %v4367 = vld [vmem:[%s4362 + $0x18] sm:$0xff]
        %v4368 = vld [vmem:[%s4362 + $0x20] sm:$0xf]
        %v4369 = vld [vmem:[%s4362 + $0x24] sm:$0xff]
        %v4370 = vld [vmem:[%s4362 + $0x2c] sm:$0xf]
        %s4371 = scalar_lea.vmem %s765, 64
        %v4372 = vld [vmem:[%s4371] sm:$0xff]
        %v4373 = vld [vmem:[%s4371 + $0x8] sm:$0xff]
        %v4374 = vld [vmem:[%s4371 + $0x10] sm:$0xff]
        %v4375 = vld [vmem:[%s4371 + $0x18] sm:$0xff]
        %4376 = vrot.lane.b32.xlu0 %v4354, 17
        %v4377 = vpop.permute.xlu0 %4376
        %4378 = vrot.lane.b32.xlu0 %v4356, 17
        %v4379 = vpop.permute.xlu0 %4378
        %4380 = vrot.lane.b32.xlu0 %v4358, 17
        %v4381 = vpop.permute.xlu0 %4380
        %4382 = vrot.lane.b32.xlu0 %v4360, 17
        %v4383 = vpop.permute.xlu0 %4382
        %4384 = vrot.lane.b32.xlu0 %v4355, 17
        %v4385 = vpop.permute.xlu0 %4384
        %4386 = vrot.lane.b32.xlu0 %v4357, 17
        %v4387 = vpop.permute.xlu0 %4386
        %4388 = vrot.lane.b32.xlu0 %v4359, 17
        %v4389 = vpop.permute.xlu0 %4388
        %4390 = vrot.lane.b32.xlu0 %v4361, 17
        %v4391 = vpop.permute.xlu0 %4390
        %v4392 = vsel %vm2484, %v4377, %v4385
        %v4393 = vsel %vm2484, %v4379, %v4387
        %v4394 = vsel %vm2484, %v4381, %v4389
        %v4395 = vsel %vm2484, %v4383, %v4391
        %v4396 = vsel %vm2484, %v4385, %v4377
        %v4397 = vsel %vm2484, %v4387, %v4379
        %v4398 = vsel %vm2484, %v4389, %v4381
        %v4399 = vsel %vm2484, %v4391, %v4383
        %v4400 = vmul.f32 %v4396, %v2490
        %v4401 = vmul.f32 %v4392, %v2494
        %v4402 = vmul.f32 %v4397, %v2490
        %v4403 = vmul.f32 %v4393, %v2494
        %v4404 = vmul.f32 %v4398, %v2490
        %v4405 = vmul.f32 %v4394, %v2494
        %v4406 = vmul.f32 %v4399, %v2490
        %v4407 = vmul.f32 %v4395, %v2494
        %v4408 = vpack.c.bf16 %v4402, %v4400
        %v4409 = vpack.c.bf16 %v4403, %v4401
        %v4410 = vpack.c.bf16 %v4406, %v4404
        %v4411 = vpack.c.bf16 %v4407, %v4405
        %4412 = vrot.lane.b32.xlu0 %v4354, 16
        %v4413 = vpop.permute.xlu0 %4412
        %4414 = vrot.lane.b32.xlu0 %v4356, 16
        %v4415 = vpop.permute.xlu0 %4414
        %4416 = vrot.lane.b32.xlu0 %v4358, 16
        %v4417 = vpop.permute.xlu0 %4416
        %4418 = vrot.lane.b32.xlu0 %v4360, 16
        %v4419 = vpop.permute.xlu0 %4418
        %4420 = vrot.lane.b32.xlu0 %v4355, 16
        %v4421 = vpop.permute.xlu0 %4420
        %4422 = vrot.lane.b32.xlu0 %v4357, 16
        %v4423 = vpop.permute.xlu0 %4422
        %4424 = vrot.lane.b32.xlu0 %v4359, 16
        %v4425 = vpop.permute.xlu0 %4424
        %4426 = vrot.lane.b32.xlu0 %v4361, 16
        %v4427 = vpop.permute.xlu0 %4426
        %v4428 = vsel %vm904, %v4413, %v4421
        %v4429 = vsel %vm904, %v4415, %v4423
        %v4430 = vsel %vm904, %v4417, %v4425
        %v4431 = vsel %vm904, %v4419, %v4427
        %v4432 = vsel %vm904, %v4421, %v4413
        %v4433 = vsel %vm904, %v4423, %v4415
        %v4434 = vsel %vm904, %v4425, %v4417
        %v4435 = vsel %vm904, %v4427, %v4419
        %v4436 = vmul.f32 %v4432, %v2508
        %v4437 = vmul.f32 %v4428, %v2512
        %v4438 = vmul.f32 %v4433, %v2508
        %v4439 = vmul.f32 %v4429, %v2512
        %v4440 = vmul.f32 %v4434, %v2508
        %v4441 = vmul.f32 %v4430, %v2512
        %v4442 = vmul.f32 %v4435, %v2508
        %v4443 = vmul.f32 %v4431, %v2512
        %v4444 = vpack.c.bf16 %v4438, %v4436
        %v4445 = vpack.c.bf16 %v4439, %v4437
        %v4446 = vpack.c.bf16 %v4442, %v4440
        %v4447 = vpack.c.bf16 %v4443, %v4441
        %4448 = vrot.lane.b32.xlu0 %v4354, 15
        %v4449 = vpop.permute.xlu0 %4448
        %4450 = vrot.lane.b32.xlu0 %v4356, 15
        %v4451 = vpop.permute.xlu0 %4450
        %4452 = vrot.lane.b32.xlu0 %v4358, 15
        %v4453 = vpop.permute.xlu0 %4452
        %4454 = vrot.lane.b32.xlu0 %v4360, 15
        %v4455 = vpop.permute.xlu0 %4454
        %4456 = vrot.lane.b32.xlu0 %v4355, 15
        %v4457 = vpop.permute.xlu0 %4456
        %4458 = vrot.lane.b32.xlu0 %v4357, 15
        %v4459 = vpop.permute.xlu0 %4458
        %4460 = vrot.lane.b32.xlu0 %v4359, 15
        %v4461 = vpop.permute.xlu0 %4460
        %4462 = vrot.lane.b32.xlu0 %v4361, 15
        %v4463 = vpop.permute.xlu0 %4462
        %v4464 = vsel %vm2521, %v4449, %v4457
        %v4465 = vsel %vm2521, %v4451, %v4459
        %v4466 = vsel %vm2521, %v4453, %v4461
        %v4467 = vsel %vm2521, %v4455, %v4463
        %v4468 = vsel %vm2521, %v4457, %v4449
        %v4469 = vsel %vm2521, %v4459, %v4451
        %v4470 = vsel %vm2521, %v4461, %v4453
        %v4471 = vsel %vm2521, %v4463, %v4455
        %v4472 = vmul.f32 %v4468, %v2527
        %v4473 = vmul.f32 %v4464, %v2531
        %v4474 = vmul.f32 %v4469, %v2527
        %v4475 = vmul.f32 %v4465, %v2531
        %v4476 = vmul.f32 %v4470, %v2527
        %v4477 = vmul.f32 %v4466, %v2531
        %v4478 = vmul.f32 %v4471, %v2527
        %v4479 = vmul.f32 %v4467, %v2531
        %v4480 = vpack.c.bf16 %v4474, %v4472
        %v4481 = vpack.c.bf16 %v4475, %v4473
        %v4482 = vpack.c.bf16 %v4478, %v4476
        %v4483 = vpack.c.bf16 %v4479, %v4477
        %4484 = vrot.lane.b32.xlu0 %v4354, 1
        %v4485 = vpop.permute.xlu0 %4484
        %4486 = vrot.lane.b32.xlu0 %v4356, 1
        %v4487 = vpop.permute.xlu0 %4486
        %4488 = vrot.lane.b32.xlu0 %v4358, 1
        %v4489 = vpop.permute.xlu0 %4488
        %4490 = vrot.lane.b32.xlu0 %v4360, 1
        %v4491 = vpop.permute.xlu0 %4490
        %4492 = vrot.lane.b32.xlu0 %v4355, 1
        %v4493 = vpop.permute.xlu0 %4492
        %4494 = vrot.lane.b32.xlu0 %v4357, 1
        %v4495 = vpop.permute.xlu0 %4494
        %4496 = vrot.lane.b32.xlu0 %v4359, 1
        %v4497 = vpop.permute.xlu0 %4496
        %4498 = vrot.lane.b32.xlu0 %v4361, 1
        %v4499 = vpop.permute.xlu0 %4498
        %v4500 = vsel %vm848, %v4485, %v4493
        %v4501 = vsel %vm848, %v4487, %v4495
        %v4502 = vsel %vm848, %v4489, %v4497
        %v4503 = vsel %vm848, %v4491, %v4499
        %v4504 = vsel %vm848, %v4493, %v4485
        %v4505 = vsel %vm848, %v4495, %v4487
        %v4506 = vsel %vm848, %v4497, %v4489
        %v4507 = vsel %vm848, %v4499, %v4491
        %v4508 = vmul.f32 %v4504, %v2545
        %v4509 = vmul.f32 %v4500, %v2549
        %v4510 = vmul.f32 %v4505, %v2545
        %v4511 = vmul.f32 %v4501, %v2549
        %v4512 = vmul.f32 %v4506, %v2545
        %v4513 = vmul.f32 %v4502, %v2549
        %v4514 = vmul.f32 %v4507, %v2545
        %v4515 = vmul.f32 %v4503, %v2549
        %v4516 = vpack.c.bf16 %v4510, %v4508
        %v4517 = vpack.c.bf16 %v4511, %v4509
        %v4518 = vpack.c.bf16 %v4514, %v4512
        %v4519 = vpack.c.bf16 %v4515, %v4513
        %v4520 = vpack.c.bf16 %v4356, %v4354
        %v4521 = vpack.c.bf16 %v4357, %v4355
        %v4522 = vpack.c.bf16 %v4360, %v4358
        %v4523 = vpack.c.bf16 %v4361, %v4359
        %4524 = vrot.lane.b32.xlu0 %v4354, 127
        %v4525 = vpop.permute.xlu0 %4524
        %4526 = vrot.lane.b32.xlu0 %v4356, 127
        %v4527 = vpop.permute.xlu0 %4526
        %4528 = vrot.lane.b32.xlu0 %v4358, 127
        %v4529 = vpop.permute.xlu0 %4528
        %4530 = vrot.lane.b32.xlu0 %v4360, 127
        %v4531 = vpop.permute.xlu0 %4530
        %4532 = vrot.lane.b32.xlu0 %v4355, 127
        %v4533 = vpop.permute.xlu0 %4532
        %4534 = vrot.lane.b32.xlu0 %v4357, 127
        %v4535 = vpop.permute.xlu0 %4534
        %4536 = vrot.lane.b32.xlu0 %v4359, 127
        %v4537 = vpop.permute.xlu0 %4536
        %4538 = vrot.lane.b32.xlu0 %v4361, 127
        %v4539 = vpop.permute.xlu0 %4538
        %v4540 = vsel %vm956, %v4525, %v4533
        %v4541 = vsel %vm956, %v4527, %v4535
        %v4542 = vsel %vm956, %v4529, %v4537
        %v4543 = vsel %vm956, %v4531, %v4539
        %v4544 = vsel %vm956, %v4533, %v4525
        %v4545 = vsel %vm956, %v4535, %v4527
        %v4546 = vsel %vm956, %v4537, %v4529
        %v4547 = vsel %vm956, %v4539, %v4531
        %v4548 = vmul.f32 %v4540, %v2565
        %v4549 = vmul.f32 %v4544, %v2569
        %v4550 = vmul.f32 %v4541, %v2565
        %v4551 = vmul.f32 %v4545, %v2569
        %v4552 = vmul.f32 %v4542, %v2565
        %v4553 = vmul.f32 %v4546, %v2569
        %v4554 = vmul.f32 %v4543, %v2565
        %v4555 = vmul.f32 %v4547, %v2569
        %v4556 = vpack.c.bf16 %v4550, %v4548
        %v4557 = vpack.c.bf16 %v4551, %v4549
        %v4558 = vpack.c.bf16 %v4554, %v4552
        %v4559 = vpack.c.bf16 %v4555, %v4553
        %4560 = vrot.lane.b32.xlu0 %v4354, 113
        %v4561 = vpop.permute.xlu0 %4560
        %4562 = vrot.lane.b32.xlu0 %v4356, 113
        %v4563 = vpop.permute.xlu0 %4562
        %4564 = vrot.lane.b32.xlu0 %v4358, 113
        %v4565 = vpop.permute.xlu0 %4564
        %4566 = vrot.lane.b32.xlu0 %v4360, 113
        %v4567 = vpop.permute.xlu0 %4566
        %4568 = vrot.lane.b32.xlu0 %v4355, 113
        %v4569 = vpop.permute.xlu0 %4568
        %4570 = vrot.lane.b32.xlu0 %v4357, 113
        %v4571 = vpop.permute.xlu0 %4570
        %4572 = vrot.lane.b32.xlu0 %v4359, 113
        %v4573 = vpop.permute.xlu0 %4572
        %4574 = vrot.lane.b32.xlu0 %v4361, 113
        %v4575 = vpop.permute.xlu0 %4574
        %v4576 = vsel %vm2578, %v4561, %v4569
        %v4577 = vsel %vm2578, %v4563, %v4571
        %v4578 = vsel %vm2578, %v4565, %v4573
        %v4579 = vsel %vm2578, %v4567, %v4575
        %v4580 = vsel %vm2578, %v4569, %v4561
        %v4581 = vsel %vm2578, %v4571, %v4563
        %v4582 = vsel %vm2578, %v4573, %v4565
        %v4583 = vsel %vm2578, %v4575, %v4567
        %v4584 = vmul.f32 %v4576, %v2584
        %v4585 = vmul.f32 %v4580, %v2588
        %v4586 = vmul.f32 %v4577, %v2584
        %v4587 = vmul.f32 %v4581, %v2588
        %v4588 = vmul.f32 %v4578, %v2584
        %v4589 = vmul.f32 %v4582, %v2588
        %v4590 = vmul.f32 %v4579, %v2584
        %v4591 = vmul.f32 %v4583, %v2588
        %v4592 = vpack.c.bf16 %v4586, %v4584
        %v4593 = vpack.c.bf16 %v4587, %v4585
        %v4594 = vpack.c.bf16 %v4590, %v4588
        %v4595 = vpack.c.bf16 %v4591, %v4589
        %4596 = vrot.lane.b32.xlu0 %v4354, 112
        %v4597 = vpop.permute.xlu0 %4596
        %4598 = vrot.lane.b32.xlu0 %v4356, 112
        %v4599 = vpop.permute.xlu0 %4598
        %4600 = vrot.lane.b32.xlu0 %v4358, 112
        %v4601 = vpop.permute.xlu0 %4600
        %4602 = vrot.lane.b32.xlu0 %v4360, 112
        %v4603 = vpop.permute.xlu0 %4602
        %4604 = vrot.lane.b32.xlu0 %v4355, 112
        %v4605 = vpop.permute.xlu0 %4604
        %4606 = vrot.lane.b32.xlu0 %v4357, 112
        %v4607 = vpop.permute.xlu0 %4606
        %4608 = vrot.lane.b32.xlu0 %v4359, 112
        %v4609 = vpop.permute.xlu0 %4608
        %4610 = vrot.lane.b32.xlu0 %v4361, 112
        %v4611 = vpop.permute.xlu0 %4610
        %v4612 = vsel %vm994, %v4597, %v4605
        %v4613 = vsel %vm994, %v4599, %v4607
        %v4614 = vsel %vm994, %v4601, %v4609
        %v4615 = vsel %vm994, %v4603, %v4611
        %v4616 = vsel %vm994, %v4605, %v4597
        %v4617 = vsel %vm994, %v4607, %v4599
        %v4618 = vsel %vm994, %v4609, %v4601
        %v4619 = vsel %vm994, %v4611, %v4603
        %v4620 = vmul.f32 %v4612, %v2602
        %v4621 = vmul.f32 %v4616, %v2606
        %v4622 = vmul.f32 %v4613, %v2602
        %v4623 = vmul.f32 %v4617, %v2606
        %v4624 = vmul.f32 %v4614, %v2602
        %v4625 = vmul.f32 %v4618, %v2606
        %v4626 = vmul.f32 %v4615, %v2602
        %v4627 = vmul.f32 %v4619, %v2606
        %v4628 = vpack.c.bf16 %v4622, %v4620
        %v4629 = vpack.c.bf16 %v4623, %v4621
        %v4630 = vpack.c.bf16 %v4626, %v4624
        %v4631 = vpack.c.bf16 %v4627, %v4625
        %4632 = vrot.lane.b32.xlu0 %v4354, 111
        %v4633 = vpop.permute.xlu0 %4632
        %4634 = vrot.lane.b32.xlu0 %v4356, 111
        %v4635 = vpop.permute.xlu0 %4634
        %4636 = vrot.lane.b32.xlu0 %v4358, 111
        %v4637 = vpop.permute.xlu0 %4636
        %4638 = vrot.lane.b32.xlu0 %v4360, 111
        %v4639 = vpop.permute.xlu0 %4638
        %4640 = vrot.lane.b32.xlu0 %v4355, 111
        %v4641 = vpop.permute.xlu0 %4640
        %4642 = vrot.lane.b32.xlu0 %v4357, 111
        %v4643 = vpop.permute.xlu0 %4642
        %4644 = vrot.lane.b32.xlu0 %v4359, 111
        %v4645 = vpop.permute.xlu0 %4644
        %4646 = vrot.lane.b32.xlu0 %v4361, 111
        %v4647 = vpop.permute.xlu0 %4646
        %v4648 = vsel %vm2615, %v4633, %v4641
        %v4649 = vsel %vm2615, %v4635, %v4643
        %v4650 = vsel %vm2615, %v4637, %v4645
        %v4651 = vsel %vm2615, %v4639, %v4647
        %v4652 = vsel %vm2615, %v4641, %v4633
        %v4653 = vsel %vm2615, %v4643, %v4635
        %v4654 = vsel %vm2615, %v4645, %v4637
        %v4655 = vsel %vm2615, %v4647, %v4639
        %v4656 = vmul.f32 %v4648, %v2621
        %v4657 = vmul.f32 %v4652, %v2625
        %v4658 = vmul.f32 %v4649, %v2621
        %v4659 = vmul.f32 %v4653, %v2625
        %v4660 = vmul.f32 %v4650, %v2621
        %v4661 = vmul.f32 %v4654, %v2625
        %v4662 = vmul.f32 %v4651, %v2621
        %v4663 = vmul.f32 %v4655, %v2625
        %v4664 = vpack.c.bf16 %v4658, %v4656
        %v4665 = vpack.c.bf16 %v4659, %v4657
        %v4666 = vpack.c.bf16 %v4662, %v4660
        %v4667 = vpack.c.bf16 %v4663, %v4661
        %4669 = vset.pattern.permute.xlu0 0
        %4670 = vperm.xlu0 %4669, %v4372
        %v4671 = vpop.permute.xlu0 %4670
        %4674 = vset.pattern.permute.xlu0 0
        %4675 = vperm.xlu0 %4674, %v4373
        %v4676 = vpop.permute.xlu0 %4675
        %4679 = vset.pattern.permute.xlu0 0
        %4680 = vperm.xlu0 %4679, %v4374
        %v4681 = vpop.permute.xlu0 %4680
        %4684 = vset.pattern.permute.xlu0 0
        %4685 = vperm.xlu0 %4684, %v4375
        %v4686 = vpop.permute.xlu0 %4685
        %v4696 = vunpack.c.l.b16 %v4363
        %v4697 = vunpack.c.h.b16 %v4363
        %v4698 = vunpack.c.l.b16 %v4364
        %v4699 = vunpack.c.l.b16 %v4365
        %v4700 = vunpack.c.h.b16 %v4365
        %v4701 = vunpack.c.l.b16 %v4366
        %v4702 = vunpack.c.l.b16 %v4367
        %v4703 = vunpack.c.h.b16 %v4367
        %v4704 = vunpack.c.l.b16 %v4368
        %v4705 = vunpack.c.l.b16 %v4369
        %v4706 = vunpack.c.h.b16 %v4369
        %v4707 = vunpack.c.l.b16 %v4370
        %v4708 = vpack.c.b16 %v4699, %v4696
        %v4709 = vpack.c.b16 %v4700, %v4697
        %v4710 = vpack.c.b16 %v4701, %v4698
        %v4711 = vpack.c.b16 %v4705, %v4702
        %v4712 = vpack.c.b16 %v4706, %v4703
        %v4713 = vpack.c.b16 %v4707, %v4704
        %v4719 = vsel %vm3727, %v4710, 0
        %v4722 = vsel %vm3727, %v4713, 0
        %4724 = vmatprep.subr.bf16.mxu0 %v4519
        %4725 = vmatpush1.bf16.msra.mxu0 %v4518
        %4726 = vmatprep.subr.bf16.mxu0 %v4517
        %4727 = vmatpush1.bf16.msra.mxu0 %v4516
        %4728 = vmatprep.subr.bf16.mxu0 %v4483
        %4729 = vmatpush1.bf16.msra.mxu0 %v4482
        %4730 = vmatprep.subr.bf16.mxu0 %v4481
        %4731 = vmatpush1.bf16.msra.mxu0 %v4480
        %4732 = vmatprep.subr.bf16.mxu0 %v4447
        %4733 = vmatpush1.bf16.msra.mxu0 %v4446
        %4734 = vmatprep.subr.bf16.mxu0 %v4445
        %4735 = vmatpush1.bf16.msra.mxu0 %v4444
        %4736 = vmatprep.subr.bf16.mxu0 %v4411
        %4737 = vmatpush1.bf16.msra.mxu0 %v4410
        %4738 = vmatprep.subr.bf16.mxu0 %v4409
        %4739 = vmatpush1.bf16.msra.mxu0 %v4408
        %4740 = vmatprep.subr.bf16.mxu0 %v4631
        %4741 = vmatpush2.bf16.msra.mxu0 %v4630
        %4742 = vmatprep.subr.bf16.mxu0 %v4629
        %4743 = vmatpush2.bf16.msra.mxu0 %v4628
        %4744 = vmatprep.subr.bf16.mxu0 %v4595
        %4745 = vmatpush2.bf16.msra.mxu0 %v4594
        %4746 = vmatprep.subr.bf16.mxu0 %v4593
        %4747 = vmatpush2.bf16.msra.mxu0 %v4592
        %4748 = vmatprep.subr.bf16.mxu0 %v4559
        %4749 = vmatpush2.bf16.msra.mxu0 %v4558
        %4750 = vmatprep.subr.bf16.mxu0 %v4557
        %4751 = vmatpush2.bf16.msra.mxu0 %v4556
        %4752 = vmatprep.subr.bf16.mxu0 %v4523
        %4753 = vmatpush2.bf16.msra.mxu0 %v4522
        %4754 = vmatprep.subr.bf16.mxu0 %v4521
        %4755 = vmatpush2.bf16.msra.mxu0 %v4520
        %4756 = vmatprep.mubr.bf16.mxu0 %v4709
        %4757 = vmatmul.mubr.bf16.gmra.mxu0 %v4708
        %v4758 = vpop.f32.mrf.mxu0
        %v4759 = vadd.f32 %v4671, %v4758
        %v4760 = vpop.f32.mrf.mxu0
        %v4761 = vadd.f32 %v4671, %v4760
        %v4762 = vpop.f32.mrf.mxu0
        %v4763 = vadd.f32 %v4676, %v4762
        %v4764 = vpop.f32.mrf.mxu0
        %v4765 = vadd.f32 %v4676, %v4764
        %4766 = vmatprep.mubr.bf16.mxu0 %v4712
        %4767 = vmatmul.mubr.bf16.gmra.mxu0 %v4711
        %v4768 = vpop.f32.mrf.mxu0
        %v4769 = vadd.f32 %v4681, %v4768
        %v4770 = vpop.f32.mrf.mxu0
        %v4771 = vadd.f32 %v4681, %v4770
        %v4772 = vpop.f32.mrf.mxu0
        %v4773 = vadd.f32 %v4686, %v4772
        %v4774 = vpop.f32.mrf.mxu0
        %v4775 = vadd.f32 %v4686, %v4774
        %4776 = vdwg.mxu0
        %4777 = vmatprep.subr.bf16.mxu0 0
        %4778 = vmatpush1.bf16.msra.mxu0 0
        %4779 = vmatprep.subr.bf16.mxu0 0
        %4780 = vmatpush1.bf16.msra.mxu0 0
        %4781 = vmatprep.subr.bf16.mxu0 0
        %4782 = vmatpush1.bf16.msra.mxu0 0
        %4783 = vmatprep.subr.bf16.mxu0 0
        %4784 = vmatpush1.bf16.msra.mxu0 0
        %4785 = vmatprep.subr.bf16.mxu0 0
        %4786 = vmatpush1.bf16.msra.mxu0 0
        %4787 = vmatprep.subr.bf16.mxu0 0
        %4788 = vmatpush1.bf16.msra.mxu0 0
        %4789 = vmatprep.subr.bf16.mxu0 %v4667
        %4790 = vmatpush1.bf16.msra.mxu0 %v4666
        %4791 = vmatprep.subr.bf16.mxu0 %v4665
        %4792 = vmatpush1.bf16.msra.mxu0 %v4664
        %4793 = vmatprep.subr.bf16.mxu0 0
        %4794 = vmatpush2.bf16.msra.mxu0 0
        %4795 = vmatprep.subr.bf16.mxu0 0
        %4796 = vmatpush2.bf16.msra.mxu0 0
        %4797 = vmatprep.subr.bf16.mxu0 0
        %4798 = vmatpush2.bf16.msra.mxu0 0
        %4799 = vmatprep.subr.bf16.mxu0 0
        %4800 = vmatpush2.bf16.msra.mxu0 0
        %4801 = vmatprep.subr.bf16.mxu0 0
        %4802 = vmatpush2.bf16.msra.mxu0 0
        %4803 = vmatprep.subr.bf16.mxu0 0
        %4804 = vmatpush2.bf16.msra.mxu0 0
        %4805 = vmatprep.subr.bf16.mxu0 0
        %4806 = vmatpush2.bf16.msra.mxu0 0
        %4807 = vmatprep.subr.bf16.mxu0 0
        %4808 = vmatpush2.bf16.msra.mxu0 0
        %4809 = vmatprep.mubr.bf16.mxu0 0
        %4810 = vmatmul.mubr.bf16.gmra.mxu0 %v4719
        %v4811 = vpop.f32.mrf.mxu0
        %v4812 = vadd.f32 %v4759, %v4811
        %v4813 = vpop.f32.mrf.mxu0
        %v4814 = vadd.f32 %v4761, %v4813
        %v4815 = vpop.f32.mrf.mxu0
        %v4816 = vadd.f32 %v4763, %v4815
        %v4817 = vpop.f32.mrf.mxu0
        %v4818 = vadd.f32 %v4765, %v4817
        %4819 = vmatprep.mubr.bf16.mxu0 0
        %4820 = vmatmul.mubr.bf16.gmra.mxu0 %v4722
        %v4821 = vpop.f32.mrf.mxu0
        %v4822 = vadd.f32 %v4769, %v4821
        %v4823 = vpop.f32.mrf.mxu0
        %v4824 = vadd.f32 %v4771, %v4823
        %v4825 = vpop.f32.mrf.mxu0
        %v4826 = vadd.f32 %v4773, %v4825
        %v4827 = vpop.f32.mrf.mxu0
        %v4828 = vadd.f32 %v4775, %v4827
        %4829 = vdwg.mxu0
        %s4830 = sadd.s32 %s2752, 4
        %s4831 = sld [smem:[#allocation6 + %s4830]]
        %vm4832 = vcmp.gt.f32.partialorder %v4812, 0.0
        %vm4833 = vcmp.gt.f32.partialorder %v4814, 0.0
        %vm4834 = vcmp.gt.f32.partialorder %v4816, 0.0
        %vm4835 = vcmp.gt.f32.partialorder %v4818, 0.0
        %vm4836 = vcmp.gt.f32.partialorder %v4822, 0.0
        %vm4837 = vcmp.gt.f32.partialorder %v4824, 0.0
        %vm4838 = vcmp.gt.f32.partialorder %v4826, 0.0
        %vm4839 = vcmp.gt.f32.partialorder %v4828, 0.0
        %v4840 = vstv %s4831
        %v4841 = vmul.f32 %v4840, %v4812
        %v4842 = vmul.f32 %v4840, %v4814
        %v4843 = vmul.f32 %v4840, %v4816
        %v4844 = vmul.f32 %v4840, %v4818
        %v4845 = vmul.f32 %v4840, %v4822
        %v4846 = vmul.f32 %v4840, %v4824
        %v4847 = vmul.f32 %v4840, %v4826
        %v4848 = vmul.f32 %v4840, %v4828
        %v4849 = vsel %vm4832, %v4812, %v4841
        %v4850 = vsel %vm4833, %v4814, %v4842
        %v4851 = vsel %vm4834, %v4816, %v4843
        %v4852 = vsel %vm4835, %v4818, %v4844
        %v4853 = vsel %vm4836, %v4822, %v4845
        %v4854 = vsel %vm4837, %v4824, %v4846
        %v4855 = vsel %vm4838, %v4826, %v4847
        %v4856 = vsel %vm4839, %v4828, %v4848
        %s4857 = scalar_lea.vmem %s760, 144
        %v4858 = vld [vmem:[%s4857] sm:$0xff]
        %v4859 = vld [vmem:[%s4857 + $0x8] sm:$0xf]
        %v4860 = vld [vmem:[%s4857 + $0xc] sm:$0xff]
        %v4861 = vld [vmem:[%s4857 + $0x14] sm:$0xf]
        %v4862 = vld [vmem:[%s4857 + $0x18] sm:$0xff]
        %v4863 = vld [vmem:[%s4857 + $0x20] sm:$0xf]
        %v4864 = vld [vmem:[%s4857 + $0x24] sm:$0xff]
        %v4865 = vld [vmem:[%s4857 + $0x2c] sm:$0xf]
        %s4866 = scalar_lea.vmem %s765, 96
        %v4867 = vld [vmem:[%s4866] sm:$0xff]
        %v4868 = vld [vmem:[%s4866 + $0x8] sm:$0xff]
        %v4869 = vld [vmem:[%s4866 + $0x10] sm:$0xff]
        %v4870 = vld [vmem:[%s4866 + $0x18] sm:$0xff]
        %4871 = vrot.lane.b32.xlu0 %v4849, 17
        %v4872 = vpop.permute.xlu0 %4871
        %4873 = vrot.lane.b32.xlu0 %v4851, 17
        %v4874 = vpop.permute.xlu0 %4873
        %4875 = vrot.lane.b32.xlu0 %v4853, 17
        %v4876 = vpop.permute.xlu0 %4875
        %4877 = vrot.lane.b32.xlu0 %v4855, 17
        %v4878 = vpop.permute.xlu0 %4877
        %4879 = vrot.lane.b32.xlu0 %v4850, 17
        %v4880 = vpop.permute.xlu0 %4879
        %4881 = vrot.lane.b32.xlu0 %v4852, 17
        %v4882 = vpop.permute.xlu0 %4881
        %4883 = vrot.lane.b32.xlu0 %v4854, 17
        %v4884 = vpop.permute.xlu0 %4883
        %4885 = vrot.lane.b32.xlu0 %v4856, 17
        %v4886 = vpop.permute.xlu0 %4885
        %v4887 = vsel %vm2484, %v4872, %v4880
        %v4888 = vsel %vm2484, %v4874, %v4882
        %v4889 = vsel %vm2484, %v4876, %v4884
        %v4890 = vsel %vm2484, %v4878, %v4886
        %v4891 = vsel %vm2484, %v4880, %v4872
        %v4892 = vsel %vm2484, %v4882, %v4874
        %v4893 = vsel %vm2484, %v4884, %v4876
        %v4894 = vsel %vm2484, %v4886, %v4878
        %v4895 = vmul.f32 %v4891, %v2490
        %v4896 = vmul.f32 %v4887, %v2494
        %v4897 = vmul.f32 %v4892, %v2490
        %v4898 = vmul.f32 %v4888, %v2494
        %v4899 = vmul.f32 %v4893, %v2490
        %v4900 = vmul.f32 %v4889, %v2494
        %v4901 = vmul.f32 %v4894, %v2490
        %v4902 = vmul.f32 %v4890, %v2494
        %v4903 = vpack.c.bf16 %v4897, %v4895
        %v4904 = vpack.c.bf16 %v4898, %v4896
        %v4905 = vpack.c.bf16 %v4901, %v4899
        %v4906 = vpack.c.bf16 %v4902, %v4900
        %4907 = vrot.lane.b32.xlu0 %v4849, 16
        %v4908 = vpop.permute.xlu0 %4907
        %4909 = vrot.lane.b32.xlu0 %v4851, 16
        %v4910 = vpop.permute.xlu0 %4909
        %4911 = vrot.lane.b32.xlu0 %v4853, 16
        %v4912 = vpop.permute.xlu0 %4911
        %4913 = vrot.lane.b32.xlu0 %v4855, 16
        %v4914 = vpop.permute.xlu0 %4913
        %4915 = vrot.lane.b32.xlu0 %v4850, 16
        %v4916 = vpop.permute.xlu0 %4915
        %4917 = vrot.lane.b32.xlu0 %v4852, 16
        %v4918 = vpop.permute.xlu0 %4917
        %4919 = vrot.lane.b32.xlu0 %v4854, 16
        %v4920 = vpop.permute.xlu0 %4919
        %4921 = vrot.lane.b32.xlu0 %v4856, 16
        %v4922 = vpop.permute.xlu0 %4921
        %v4923 = vsel %vm904, %v4908, %v4916
        %v4924 = vsel %vm904, %v4910, %v4918
        %v4925 = vsel %vm904, %v4912, %v4920
        %v4926 = vsel %vm904, %v4914, %v4922
        %v4927 = vsel %vm904, %v4916, %v4908
        %v4928 = vsel %vm904, %v4918, %v4910
        %v4929 = vsel %vm904, %v4920, %v4912
        %v4930 = vsel %vm904, %v4922, %v4914
        %v4931 = vmul.f32 %v4927, %v2508
        %v4932 = vmul.f32 %v4923, %v2512
        %v4933 = vmul.f32 %v4928, %v2508
        %v4934 = vmul.f32 %v4924, %v2512
        %v4935 = vmul.f32 %v4929, %v2508
        %v4936 = vmul.f32 %v4925, %v2512
        %v4937 = vmul.f32 %v4930, %v2508
        %v4938 = vmul.f32 %v4926, %v2512
        %v4939 = vpack.c.bf16 %v4933, %v4931
        %v4940 = vpack.c.bf16 %v4934, %v4932
        %v4941 = vpack.c.bf16 %v4937, %v4935
        %v4942 = vpack.c.bf16 %v4938, %v4936
        %4943 = vrot.lane.b32.xlu0 %v4849, 15
        %v4944 = vpop.permute.xlu0 %4943
        %4945 = vrot.lane.b32.xlu0 %v4851, 15
        %v4946 = vpop.permute.xlu0 %4945
        %4947 = vrot.lane.b32.xlu0 %v4853, 15
        %v4948 = vpop.permute.xlu0 %4947
        %4949 = vrot.lane.b32.xlu0 %v4855, 15
        %v4950 = vpop.permute.xlu0 %4949
        %4951 = vrot.lane.b32.xlu0 %v4850, 15
        %v4952 = vpop.permute.xlu0 %4951
        %4953 = vrot.lane.b32.xlu0 %v4852, 15
        %v4954 = vpop.permute.xlu0 %4953
        %4955 = vrot.lane.b32.xlu0 %v4854, 15
        %v4956 = vpop.permute.xlu0 %4955
        %4957 = vrot.lane.b32.xlu0 %v4856, 15
        %v4958 = vpop.permute.xlu0 %4957
        %v4959 = vsel %vm2521, %v4944, %v4952
        %v4960 = vsel %vm2521, %v4946, %v4954
        %v4961 = vsel %vm2521, %v4948, %v4956
        %v4962 = vsel %vm2521, %v4950, %v4958
        %v4963 = vsel %vm2521, %v4952, %v4944
        %v4964 = vsel %vm2521, %v4954, %v4946
        %v4965 = vsel %vm2521, %v4956, %v4948
        %v4966 = vsel %vm2521, %v4958, %v4950
        %v4967 = vmul.f32 %v4963, %v2527
        %v4968 = vmul.f32 %v4959, %v2531
        %v4969 = vmul.f32 %v4964, %v2527
        %v4970 = vmul.f32 %v4960, %v2531
        %v4971 = vmul.f32 %v4965, %v2527
        %v4972 = vmul.f32 %v4961, %v2531
        %v4973 = vmul.f32 %v4966, %v2527
        %v4974 = vmul.f32 %v4962, %v2531
        %v4975 = vpack.c.bf16 %v4969, %v4967
        %v4976 = vpack.c.bf16 %v4970, %v4968
        %v4977 = vpack.c.bf16 %v4973, %v4971
        %v4978 = vpack.c.bf16 %v4974, %v4972
        %4979 = vrot.lane.b32.xlu0 %v4849, 1
        %v4980 = vpop.permute.xlu0 %4979
        %4981 = vrot.lane.b32.xlu0 %v4851, 1
        %v4982 = vpop.permute.xlu0 %4981
        %4983 = vrot.lane.b32.xlu0 %v4853, 1
        %v4984 = vpop.permute.xlu0 %4983
        %4985 = vrot.lane.b32.xlu0 %v4855, 1
        %v4986 = vpop.permute.xlu0 %4985
        %4987 = vrot.lane.b32.xlu0 %v4850, 1
        %v4988 = vpop.permute.xlu0 %4987
        %4989 = vrot.lane.b32.xlu0 %v4852, 1
        %v4990 = vpop.permute.xlu0 %4989
        %4991 = vrot.lane.b32.xlu0 %v4854, 1
        %v4992 = vpop.permute.xlu0 %4991
        %4993 = vrot.lane.b32.xlu0 %v4856, 1
        %v4994 = vpop.permute.xlu0 %4993
        %v4995 = vsel %vm848, %v4980, %v4988
        %v4996 = vsel %vm848, %v4982, %v4990
        %v4997 = vsel %vm848, %v4984, %v4992
        %v4998 = vsel %vm848, %v4986, %v4994
        %v4999 = vsel %vm848, %v4988, %v4980
        %v5000 = vsel %vm848, %v4990, %v4982
        %v5001 = vsel %vm848, %v4992, %v4984
        %v5002 = vsel %vm848, %v4994, %v4986
        %v5003 = vmul.f32 %v4999, %v2545
        %v5004 = vmul.f32 %v4995, %v2549
        %v5005 = vmul.f32 %v5000, %v2545
        %v5006 = vmul.f32 %v4996, %v2549
        %v5007 = vmul.f32 %v5001, %v2545
        %v5008 = vmul.f32 %v4997, %v2549
        %v5009 = vmul.f32 %v5002, %v2545
        %v5010 = vmul.f32 %v4998, %v2549
        %v5011 = vpack.c.bf16 %v5005, %v5003
        %v5012 = vpack.c.bf16 %v5006, %v5004
        %v5013 = vpack.c.bf16 %v5009, %v5007
        %v5014 = vpack.c.bf16 %v5010, %v5008
        %v5015 = vpack.c.bf16 %v4851, %v4849
        %v5016 = vpack.c.bf16 %v4852, %v4850
        %v5017 = vpack.c.bf16 %v4855, %v4853
        %v5018 = vpack.c.bf16 %v4856, %v4854
        %5019 = vrot.lane.b32.xlu0 %v4849, 127
        %v5020 = vpop.permute.xlu0 %5019
        %5021 = vrot.lane.b32.xlu0 %v4851, 127
        %v5022 = vpop.permute.xlu0 %5021
        %5023 = vrot.lane.b32.xlu0 %v4853, 127
        %v5024 = vpop.permute.xlu0 %5023
        %5025 = vrot.lane.b32.xlu0 %v4855, 127
        %v5026 = vpop.permute.xlu0 %5025
        %5027 = vrot.lane.b32.xlu0 %v4850, 127
        %v5028 = vpop.permute.xlu0 %5027
        %5029 = vrot.lane.b32.xlu0 %v4852, 127
        %v5030 = vpop.permute.xlu0 %5029
        %5031 = vrot.lane.b32.xlu0 %v4854, 127
        %v5032 = vpop.permute.xlu0 %5031
        %5033 = vrot.lane.b32.xlu0 %v4856, 127
        %v5034 = vpop.permute.xlu0 %5033
        %v5035 = vsel %vm956, %v5020, %v5028
        %v5036 = vsel %vm956, %v5022, %v5030
        %v5037 = vsel %vm956, %v5024, %v5032
        %v5038 = vsel %vm956, %v5026, %v5034
        %v5039 = vsel %vm956, %v5028, %v5020
        %v5040 = vsel %vm956, %v5030, %v5022
        %v5041 = vsel %vm956, %v5032, %v5024
        %v5042 = vsel %vm956, %v5034, %v5026
        %v5043 = vmul.f32 %v5035, %v2565
        %v5044 = vmul.f32 %v5039, %v2569
        %v5045 = vmul.f32 %v5036, %v2565
        %v5046 = vmul.f32 %v5040, %v2569
        %v5047 = vmul.f32 %v5037, %v2565
        %v5048 = vmul.f32 %v5041, %v2569
        %v5049 = vmul.f32 %v5038, %v2565
        %v5050 = vmul.f32 %v5042, %v2569
        %v5051 = vpack.c.bf16 %v5045, %v5043
        %v5052 = vpack.c.bf16 %v5046, %v5044
        %v5053 = vpack.c.bf16 %v5049, %v5047
        %v5054 = vpack.c.bf16 %v5050, %v5048
        %5055 = vrot.lane.b32.xlu0 %v4849, 113
        %v5056 = vpop.permute.xlu0 %5055
        %5057 = vrot.lane.b32.xlu0 %v4851, 113
        %v5058 = vpop.permute.xlu0 %5057
        %5059 = vrot.lane.b32.xlu0 %v4853, 113
        %v5060 = vpop.permute.xlu0 %5059
        %5061 = vrot.lane.b32.xlu0 %v4855, 113
        %v5062 = vpop.permute.xlu0 %5061
        %5063 = vrot.lane.b32.xlu0 %v4850, 113
        %v5064 = vpop.permute.xlu0 %5063
        %5065 = vrot.lane.b32.xlu0 %v4852, 113
        %v5066 = vpop.permute.xlu0 %5065
        %5067 = vrot.lane.b32.xlu0 %v4854, 113
        %v5068 = vpop.permute.xlu0 %5067
        %5069 = vrot.lane.b32.xlu0 %v4856, 113
        %v5070 = vpop.permute.xlu0 %5069
        %v5071 = vsel %vm2578, %v5056, %v5064
        %v5072 = vsel %vm2578, %v5058, %v5066
        %v5073 = vsel %vm2578, %v5060, %v5068
        %v5074 = vsel %vm2578, %v5062, %v5070
        %v5075 = vsel %vm2578, %v5064, %v5056
        %v5076 = vsel %vm2578, %v5066, %v5058
        %v5077 = vsel %vm2578, %v5068, %v5060
        %v5078 = vsel %vm2578, %v5070, %v5062
        %v5079 = vmul.f32 %v5071, %v2584
        %v5080 = vmul.f32 %v5075, %v2588
        %v5081 = vmul.f32 %v5072, %v2584
        %v5082 = vmul.f32 %v5076, %v2588
        %v5083 = vmul.f32 %v5073, %v2584
        %v5084 = vmul.f32 %v5077, %v2588
        %v5085 = vmul.f32 %v5074, %v2584
        %v5086 = vmul.f32 %v5078, %v2588
        %v5087 = vpack.c.bf16 %v5081, %v5079
        %v5088 = vpack.c.bf16 %v5082, %v5080
        %v5089 = vpack.c.bf16 %v5085, %v5083
        %v5090 = vpack.c.bf16 %v5086, %v5084
        %5091 = vrot.lane.b32.xlu0 %v4849, 112
        %v5092 = vpop.permute.xlu0 %5091
        %5093 = vrot.lane.b32.xlu0 %v4851, 112
        %v5094 = vpop.permute.xlu0 %5093
        %5095 = vrot.lane.b32.xlu0 %v4853, 112
        %v5096 = vpop.permute.xlu0 %5095
        %5097 = vrot.lane.b32.xlu0 %v4855, 112
        %v5098 = vpop.permute.xlu0 %5097
        %5099 = vrot.lane.b32.xlu0 %v4850, 112
        %v5100 = vpop.permute.xlu0 %5099
        %5101 = vrot.lane.b32.xlu0 %v4852, 112
        %v5102 = vpop.permute.xlu0 %5101
        %5103 = vrot.lane.b32.xlu0 %v4854, 112
        %v5104 = vpop.permute.xlu0 %5103
        %5105 = vrot.lane.b32.xlu0 %v4856, 112
        %v5106 = vpop.permute.xlu0 %5105
        %v5107 = vsel %vm994, %v5092, %v5100
        %v5108 = vsel %vm994, %v5094, %v5102
        %v5109 = vsel %vm994, %v5096, %v5104
        %v5110 = vsel %vm994, %v5098, %v5106
        %v5111 = vsel %vm994, %v5100, %v5092
        %v5112 = vsel %vm994, %v5102, %v5094
        %v5113 = vsel %vm994, %v5104, %v5096
        %v5114 = vsel %vm994, %v5106, %v5098
        %v5115 = vmul.f32 %v5107, %v2602
        %v5116 = vmul.f32 %v5111, %v2606
        %v5117 = vmul.f32 %v5108, %v2602
        %v5118 = vmul.f32 %v5112, %v2606
        %v5119 = vmul.f32 %v5109, %v2602
        %v5120 = vmul.f32 %v5113, %v2606
        %v5121 = vmul.f32 %v5110, %v2602
        %v5122 = vmul.f32 %v5114, %v2606
        %v5123 = vpack.c.bf16 %v5117, %v5115
        %v5124 = vpack.c.bf16 %v5118, %v5116
        %v5125 = vpack.c.bf16 %v5121, %v5119
        %v5126 = vpack.c.bf16 %v5122, %v5120
        %5127 = vrot.lane.b32.xlu0 %v4849, 111
        %v5128 = vpop.permute.xlu0 %5127
        %5129 = vrot.lane.b32.xlu0 %v4851, 111
        %v5130 = vpop.permute.xlu0 %5129
        %5131 = vrot.lane.b32.xlu0 %v4853, 111
        %v5132 = vpop.permute.xlu0 %5131
        %5133 = vrot.lane.b32.xlu0 %v4855, 111
        %v5134 = vpop.permute.xlu0 %5133
        %5135 = vrot.lane.b32.xlu0 %v4850, 111
        %v5136 = vpop.permute.xlu0 %5135
        %5137 = vrot.lane.b32.xlu0 %v4852, 111
        %v5138 = vpop.permute.xlu0 %5137
        %5139 = vrot.lane.b32.xlu0 %v4854, 111
        %v5140 = vpop.permute.xlu0 %5139
        %5141 = vrot.lane.b32.xlu0 %v4856, 111
        %v5142 = vpop.permute.xlu0 %5141
        %v5143 = vsel %vm2615, %v5128, %v5136
        %v5144 = vsel %vm2615, %v5130, %v5138
        %v5145 = vsel %vm2615, %v5132, %v5140
        %v5146 = vsel %vm2615, %v5134, %v5142
        %v5147 = vsel %vm2615, %v5136, %v5128
        %v5148 = vsel %vm2615, %v5138, %v5130
        %v5149 = vsel %vm2615, %v5140, %v5132
        %v5150 = vsel %vm2615, %v5142, %v5134
        %v5151 = vmul.f32 %v5143, %v2621
        %v5152 = vmul.f32 %v5147, %v2625
        %v5153 = vmul.f32 %v5144, %v2621
        %v5154 = vmul.f32 %v5148, %v2625
        %v5155 = vmul.f32 %v5145, %v2621
        %v5156 = vmul.f32 %v5149, %v2625
        %v5157 = vmul.f32 %v5146, %v2621
        %v5158 = vmul.f32 %v5150, %v2625
        %v5159 = vpack.c.bf16 %v5153, %v5151
        %v5160 = vpack.c.bf16 %v5154, %v5152
        %v5161 = vpack.c.bf16 %v5157, %v5155
        %v5162 = vpack.c.bf16 %v5158, %v5156
        %5164 = vset.pattern.permute.xlu0 0
        %5165 = vperm.xlu0 %5164, %v4867
        %v5166 = vpop.permute.xlu0 %5165
        %5169 = vset.pattern.permute.xlu0 0
        %5170 = vperm.xlu0 %5169, %v4868
        %v5171 = vpop.permute.xlu0 %5170
        %5174 = vset.pattern.permute.xlu0 0
        %5175 = vperm.xlu0 %5174, %v4869
        %v5176 = vpop.permute.xlu0 %5175
        %5179 = vset.pattern.permute.xlu0 0
        %5180 = vperm.xlu0 %5179, %v4870
        %v5181 = vpop.permute.xlu0 %5180
        %v5191 = vunpack.c.l.b16 %v4858
        %v5192 = vunpack.c.h.b16 %v4858
        %v5193 = vunpack.c.l.b16 %v4859
        %v5194 = vunpack.c.l.b16 %v4860
        %v5195 = vunpack.c.h.b16 %v4860
        %v5196 = vunpack.c.l.b16 %v4861
        %v5197 = vunpack.c.l.b16 %v4862
        %v5198 = vunpack.c.h.b16 %v4862
        %v5199 = vunpack.c.l.b16 %v4863
        %v5200 = vunpack.c.l.b16 %v4864
        %v5201 = vunpack.c.h.b16 %v4864
        %v5202 = vunpack.c.l.b16 %v4865
        %v5203 = vpack.c.b16 %v5194, %v5191
        %v5204 = vpack.c.b16 %v5195, %v5192
        %v5205 = vpack.c.b16 %v5196, %v5193
        %v5206 = vpack.c.b16 %v5200, %v5197
        %v5207 = vpack.c.b16 %v5201, %v5198
        %v5208 = vpack.c.b16 %v5202, %v5199
        %v5214 = vsel %vm3727, %v5205, 0
        %v5217 = vsel %vm3727, %v5208, 0
        %5219 = vmatprep.subr.bf16.mxu0 %v5014
        %5220 = vmatpush1.bf16.msra.mxu0 %v5013
        %5221 = vmatprep.subr.bf16.mxu0 %v5012
        %5222 = vmatpush1.bf16.msra.mxu0 %v5011
        %5223 = vmatprep.subr.bf16.mxu0 %v4978
        %5224 = vmatpush1.bf16.msra.mxu0 %v4977
        %5225 = vmatprep.subr.bf16.mxu0 %v4976
        %5226 = vmatpush1.bf16.msra.mxu0 %v4975
        %5227 = vmatprep.subr.bf16.mxu0 %v4942
        %5228 = vmatpush1.bf16.msra.mxu0 %v4941
        %5229 = vmatprep.subr.bf16.mxu0 %v4940
        %5230 = vmatpush1.bf16.msra.mxu0 %v4939
        %5231 = vmatprep.subr.bf16.mxu0 %v4906
        %5232 = vmatpush1.bf16.msra.mxu0 %v4905
        %5233 = vmatprep.subr.bf16.mxu0 %v4904
        %5234 = vmatpush1.bf16.msra.mxu0 %v4903
        %5235 = vmatprep.subr.bf16.mxu0 %v5126
        %5236 = vmatpush2.bf16.msra.mxu0 %v5125
        %5237 = vmatprep.subr.bf16.mxu0 %v5124
        %5238 = vmatpush2.bf16.msra.mxu0 %v5123
        %5239 = vmatprep.subr.bf16.mxu0 %v5090
        %5240 = vmatpush2.bf16.msra.mxu0 %v5089
        %5241 = vmatprep.subr.bf16.mxu0 %v5088
        %5242 = vmatpush2.bf16.msra.mxu0 %v5087
        %5243 = vmatprep.subr.bf16.mxu0 %v5054
        %5244 = vmatpush2.bf16.msra.mxu0 %v5053
        %5245 = vmatprep.subr.bf16.mxu0 %v5052
        %5246 = vmatpush2.bf16.msra.mxu0 %v5051
        %5247 = vmatprep.subr.bf16.mxu0 %v5018
        %5248 = vmatpush2.bf16.msra.mxu0 %v5017
        %5249 = vmatprep.subr.bf16.mxu0 %v5016
        %5250 = vmatpush2.bf16.msra.mxu0 %v5015
        %5251 = vmatprep.mubr.bf16.mxu0 %v5204
        %5252 = vmatmul.mubr.bf16.gmra.mxu0 %v5203
        %v5253 = vpop.f32.mrf.mxu0
        %v5254 = vadd.f32 %v5166, %v5253
        %v5255 = vpop.f32.mrf.mxu0
        %v5256 = vadd.f32 %v5166, %v5255
        %v5257 = vpop.f32.mrf.mxu0
        %v5258 = vadd.f32 %v5171, %v5257
        %v5259 = vpop.f32.mrf.mxu0
        %v5260 = vadd.f32 %v5171, %v5259
        %5261 = vmatprep.mubr.bf16.mxu0 %v5207
        %5262 = vmatmul.mubr.bf16.gmra.mxu0 %v5206
        %v5263 = vpop.f32.mrf.mxu0
        %v5264 = vadd.f32 %v5176, %v5263
        %v5265 = vpop.f32.mrf.mxu0
        %v5266 = vadd.f32 %v5176, %v5265
        %v5267 = vpop.f32.mrf.mxu0
        %v5268 = vadd.f32 %v5181, %v5267
        %v5269 = vpop.f32.mrf.mxu0
        %v5270 = vadd.f32 %v5181, %v5269
        %5271 = vdwg.mxu0
        %5272 = vmatprep.subr.bf16.mxu0 0
        %5273 = vmatpush1.bf16.msra.mxu0 0
        %5274 = vmatprep.subr.bf16.mxu0 0
        %5275 = vmatpush1.bf16.msra.mxu0 0
        %5276 = vmatprep.subr.bf16.mxu0 0
        %5277 = vmatpush1.bf16.msra.mxu0 0
        %5278 = vmatprep.subr.bf16.mxu0 0
        %5279 = vmatpush1.bf16.msra.mxu0 0
        %5280 = vmatprep.subr.bf16.mxu0 0
        %5281 = vmatpush1.bf16.msra.mxu0 0
        %5282 = vmatprep.subr.bf16.mxu0 0
        %5283 = vmatpush1.bf16.msra.mxu0 0
        %5284 = vmatprep.subr.bf16.mxu0 %v5162
        %5285 = vmatpush1.bf16.msra.mxu0 %v5161
        %5286 = vmatprep.subr.bf16.mxu0 %v5160
        %5287 = vmatpush1.bf16.msra.mxu0 %v5159
        %5288 = vmatprep.subr.bf16.mxu0 0
        %5289 = vmatpush2.bf16.msra.mxu0 0
        %5290 = vmatprep.subr.bf16.mxu0 0
        %5291 = vmatpush2.bf16.msra.mxu0 0
        %5292 = vmatprep.subr.bf16.mxu0 0
        %5293 = vmatpush2.bf16.msra.mxu0 0
        %5294 = vmatprep.subr.bf16.mxu0 0
        %5295 = vmatpush2.bf16.msra.mxu0 0
        %5296 = vmatprep.subr.bf16.mxu0 0
        %5297 = vmatpush2.bf16.msra.mxu0 0
        %5298 = vmatprep.subr.bf16.mxu0 0
        %5299 = vmatpush2.bf16.msra.mxu0 0
        %5300 = vmatprep.subr.bf16.mxu0 0
        %5301 = vmatpush2.bf16.msra.mxu0 0
        %5302 = vmatprep.subr.bf16.mxu0 0
        %5303 = vmatpush2.bf16.msra.mxu0 0
        %5304 = vmatprep.mubr.bf16.mxu0 0
        %5305 = vmatmul.mubr.bf16.gmra.mxu0 %v5214
        %v5306 = vpop.f32.mrf.mxu0
        %v5307 = vadd.f32 %v5254, %v5306
        %v5308 = vpop.f32.mrf.mxu0
        %v5309 = vadd.f32 %v5256, %v5308
        %v5310 = vpop.f32.mrf.mxu0
        %v5311 = vadd.f32 %v5258, %v5310
        %v5312 = vpop.f32.mrf.mxu0
        %v5313 = vadd.f32 %v5260, %v5312
        %5314 = vmatprep.mubr.bf16.mxu0 0
        %5315 = vmatmul.mubr.bf16.gmra.mxu0 %v5217
        %v5316 = vpop.f32.mrf.mxu0
        %v5317 = vadd.f32 %v5264, %v5316
        %v5318 = vpop.f32.mrf.mxu0
        %v5319 = vadd.f32 %v5266, %v5318
        %v5320 = vpop.f32.mrf.mxu0
        %v5321 = vadd.f32 %v5268, %v5320
        %v5322 = vpop.f32.mrf.mxu0
        %v5323 = vadd.f32 %v5270, %v5322
        %5324 = vdwg.mxu0
        %s5325 = sadd.s32 %s2752, 5
        %s5326 = sld [smem:[#allocation6 + %s5325]]
        %vm5327 = vcmp.gt.f32.partialorder %v5307, 0.0
        %vm5328 = vcmp.gt.f32.partialorder %v5309, 0.0
        %vm5329 = vcmp.gt.f32.partialorder %v5311, 0.0
        %vm5330 = vcmp.gt.f32.partialorder %v5313, 0.0
        %vm5331 = vcmp.gt.f32.partialorder %v5317, 0.0
        %vm5332 = vcmp.gt.f32.partialorder %v5319, 0.0
        %vm5333 = vcmp.gt.f32.partialorder %v5321, 0.0
        %vm5334 = vcmp.gt.f32.partialorder %v5323, 0.0
        %v5335 = vstv %s5326
        %v5336 = vmul.f32 %v5335, %v5307
        %v5337 = vmul.f32 %v5335, %v5309
        %v5338 = vmul.f32 %v5335, %v5311
        %v5339 = vmul.f32 %v5335, %v5313
        %v5340 = vmul.f32 %v5335, %v5317
        %v5341 = vmul.f32 %v5335, %v5319
        %v5342 = vmul.f32 %v5335, %v5321
        %v5343 = vmul.f32 %v5335, %v5323
        %v5344 = vsel %vm5327, %v5307, %v5336
        %v5345 = vsel %vm5328, %v5309, %v5337
        %v5346 = vsel %vm5329, %v5311, %v5338
        %v5347 = vsel %vm5330, %v5313, %v5339
        %v5348 = vsel %vm5331, %v5317, %v5340
        %v5349 = vsel %vm5332, %v5319, %v5341
        %v5350 = vsel %vm5333, %v5321, %v5342
        %v5351 = vsel %vm5334, %v5323, %v5343
        %v5352 = vld [vmem:[%s769] sm:$0x7]
        %v5353 = vld [vmem:[%s773] sm:$0x3]
        %5354 = vrot.lane.b32.xlu0 %v5344, 17
        %v5355 = vpop.permute.xlu0 %5354
        %5356 = vrot.lane.b32.xlu0 %v5346, 17
        %v5357 = vpop.permute.xlu0 %5356
        %5358 = vrot.lane.b32.xlu0 %v5348, 17
        %v5359 = vpop.permute.xlu0 %5358
        %5360 = vrot.lane.b32.xlu0 %v5350, 17
        %v5361 = vpop.permute.xlu0 %5360
        %5362 = vrot.lane.b32.xlu0 %v5345, 17
        %v5363 = vpop.permute.xlu0 %5362
        %5364 = vrot.lane.b32.xlu0 %v5347, 17
        %v5365 = vpop.permute.xlu0 %5364
        %5366 = vrot.lane.b32.xlu0 %v5349, 17
        %v5367 = vpop.permute.xlu0 %5366
        %5368 = vrot.lane.b32.xlu0 %v5351, 17
        %v5369 = vpop.permute.xlu0 %5368
        %v5370 = vsel %vm2484, %v5355, %v5363
        %v5371 = vsel %vm2484, %v5357, %v5365
        %v5372 = vsel %vm2484, %v5359, %v5367
        %v5373 = vsel %vm2484, %v5361, %v5369
        %v5374 = vsel %vm2484, %v5363, %v5355
        %v5375 = vsel %vm2484, %v5365, %v5357
        %v5376 = vsel %vm2484, %v5367, %v5359
        %v5377 = vsel %vm2484, %v5369, %v5361
        %v5378 = vmul.f32 %v5374, %v2490
        %v5379 = vmul.f32 %v5370, %v2494
        %v5380 = vmul.f32 %v5375, %v2490
        %v5381 = vmul.f32 %v5371, %v2494
        %v5382 = vmul.f32 %v5376, %v2490
        %v5383 = vmul.f32 %v5372, %v2494
        %v5384 = vmul.f32 %v5377, %v2490
        %v5385 = vmul.f32 %v5373, %v2494
        %v5386 = vpack.c.bf16 %v5380, %v5378
        %v5387 = vpack.c.bf16 %v5381, %v5379
        %v5388 = vpack.c.bf16 %v5384, %v5382
        %v5389 = vpack.c.bf16 %v5385, %v5383
        %5390 = vrot.lane.b32.xlu0 %v5344, 16
        %v5391 = vpop.permute.xlu0 %5390
        %5392 = vrot.lane.b32.xlu0 %v5346, 16
        %v5393 = vpop.permute.xlu0 %5392
        %5394 = vrot.lane.b32.xlu0 %v5348, 16
        %v5395 = vpop.permute.xlu0 %5394
        %5396 = vrot.lane.b32.xlu0 %v5350, 16
        %v5397 = vpop.permute.xlu0 %5396
        %5398 = vrot.lane.b32.xlu0 %v5345, 16
        %v5399 = vpop.permute.xlu0 %5398
        %5400 = vrot.lane.b32.xlu0 %v5347, 16
        %v5401 = vpop.permute.xlu0 %5400
        %5402 = vrot.lane.b32.xlu0 %v5349, 16
        %v5403 = vpop.permute.xlu0 %5402
        %5404 = vrot.lane.b32.xlu0 %v5351, 16
        %v5405 = vpop.permute.xlu0 %5404
        %v5406 = vsel %vm904, %v5391, %v5399
        %v5407 = vsel %vm904, %v5393, %v5401
        %v5408 = vsel %vm904, %v5395, %v5403
        %v5409 = vsel %vm904, %v5397, %v5405
        %v5410 = vsel %vm904, %v5399, %v5391
        %v5411 = vsel %vm904, %v5401, %v5393
        %v5412 = vsel %vm904, %v5403, %v5395
        %v5413 = vsel %vm904, %v5405, %v5397
        %v5414 = vmul.f32 %v5410, %v2508
        %v5415 = vmul.f32 %v5406, %v2512
        %v5416 = vmul.f32 %v5411, %v2508
        %v5417 = vmul.f32 %v5407, %v2512
        %v5418 = vmul.f32 %v5412, %v2508
        %v5419 = vmul.f32 %v5408, %v2512
        %v5420 = vmul.f32 %v5413, %v2508
        %v5421 = vmul.f32 %v5409, %v2512
        %v5422 = vpack.c.bf16 %v5416, %v5414
        %v5423 = vpack.c.bf16 %v5417, %v5415
        %v5424 = vpack.c.bf16 %v5420, %v5418
        %v5425 = vpack.c.bf16 %v5421, %v5419
        %5426 = vrot.lane.b32.xlu0 %v5344, 15
        %v5427 = vpop.permute.xlu0 %5426
        %5428 = vrot.lane.b32.xlu0 %v5346, 15
        %v5429 = vpop.permute.xlu0 %5428
        %5430 = vrot.lane.b32.xlu0 %v5348, 15
        %v5431 = vpop.permute.xlu0 %5430
        %5432 = vrot.lane.b32.xlu0 %v5350, 15
        %v5433 = vpop.permute.xlu0 %5432
        %5434 = vrot.lane.b32.xlu0 %v5345, 15
        %v5435 = vpop.permute.xlu0 %5434
        %5436 = vrot.lane.b32.xlu0 %v5347, 15
        %v5437 = vpop.permute.xlu0 %5436
        %5438 = vrot.lane.b32.xlu0 %v5349, 15
        %v5439 = vpop.permute.xlu0 %5438
        %5440 = vrot.lane.b32.xlu0 %v5351, 15
        %v5441 = vpop.permute.xlu0 %5440
        %v5442 = vsel %vm2521, %v5427, %v5435
        %v5443 = vsel %vm2521, %v5429, %v5437
        %v5444 = vsel %vm2521, %v5431, %v5439
        %v5445 = vsel %vm2521, %v5433, %v5441
        %v5446 = vsel %vm2521, %v5435, %v5427
        %v5447 = vsel %vm2521, %v5437, %v5429
        %v5448 = vsel %vm2521, %v5439, %v5431
        %v5449 = vsel %vm2521, %v5441, %v5433
        %v5450 = vmul.f32 %v5446, %v2527
        %v5451 = vmul.f32 %v5442, %v2531
        %v5452 = vmul.f32 %v5447, %v2527
        %v5453 = vmul.f32 %v5443, %v2531
        %v5454 = vmul.f32 %v5448, %v2527
        %v5455 = vmul.f32 %v5444, %v2531
        %v5456 = vmul.f32 %v5449, %v2527
        %v5457 = vmul.f32 %v5445, %v2531
        %v5458 = vpack.c.bf16 %v5452, %v5450
        %v5459 = vpack.c.bf16 %v5453, %v5451
        %v5460 = vpack.c.bf16 %v5456, %v5454
        %v5461 = vpack.c.bf16 %v5457, %v5455
        %5462 = vrot.lane.b32.xlu0 %v5344, 1
        %v5463 = vpop.permute.xlu0 %5462
        %5464 = vrot.lane.b32.xlu0 %v5346, 1
        %v5465 = vpop.permute.xlu0 %5464
        %5466 = vrot.lane.b32.xlu0 %v5348, 1
        %v5467 = vpop.permute.xlu0 %5466
        %5468 = vrot.lane.b32.xlu0 %v5350, 1
        %v5469 = vpop.permute.xlu0 %5468
        %5470 = vrot.lane.b32.xlu0 %v5345, 1
        %v5471 = vpop.permute.xlu0 %5470
        %5472 = vrot.lane.b32.xlu0 %v5347, 1
        %v5473 = vpop.permute.xlu0 %5472
        %5474 = vrot.lane.b32.xlu0 %v5349, 1
        %v5475 = vpop.permute.xlu0 %5474
        %5476 = vrot.lane.b32.xlu0 %v5351, 1
        %v5477 = vpop.permute.xlu0 %5476
        %v5478 = vsel %vm848, %v5463, %v5471
        %v5479 = vsel %vm848, %v5465, %v5473
        %v5480 = vsel %vm848, %v5467, %v5475
        %v5481 = vsel %vm848, %v5469, %v5477
        %v5482 = vsel %vm848, %v5471, %v5463
        %v5483 = vsel %vm848, %v5473, %v5465
        %v5484 = vsel %vm848, %v5475, %v5467
        %v5485 = vsel %vm848, %v5477, %v5469
        %v5486 = vmul.f32 %v5482, %v2545
        %v5487 = vmul.f32 %v5478, %v2549
        %v5488 = vmul.f32 %v5483, %v2545
        %v5489 = vmul.f32 %v5479, %v2549
        %v5490 = vmul.f32 %v5484, %v2545
        %v5491 = vmul.f32 %v5480, %v2549
        %v5492 = vmul.f32 %v5485, %v2545
        %v5493 = vmul.f32 %v5481, %v2549
        %v5494 = vpack.c.bf16 %v5488, %v5486
        %v5495 = vpack.c.bf16 %v5489, %v5487
        %v5496 = vpack.c.bf16 %v5492, %v5490
        %v5497 = vpack.c.bf16 %v5493, %v5491
        %v5498 = vpack.c.bf16 %v5346, %v5344
        %v5499 = vpack.c.bf16 %v5347, %v5345
        %v5500 = vpack.c.bf16 %v5350, %v5348
        %v5501 = vpack.c.bf16 %v5351, %v5349
        %5502 = vrot.lane.b32.xlu0 %v5344, 127
        %v5503 = vpop.permute.xlu0 %5502
        %5504 = vrot.lane.b32.xlu0 %v5346, 127
        %v5505 = vpop.permute.xlu0 %5504
        %5506 = vrot.lane.b32.xlu0 %v5348, 127
        %v5507 = vpop.permute.xlu0 %5506
        %5508 = vrot.lane.b32.xlu0 %v5350, 127
        %v5509 = vpop.permute.xlu0 %5508
        %5510 = vrot.lane.b32.xlu0 %v5345, 127
        %v5511 = vpop.permute.xlu0 %5510
        %5512 = vrot.lane.b32.xlu0 %v5347, 127
        %v5513 = vpop.permute.xlu0 %5512
        %5514 = vrot.lane.b32.xlu0 %v5349, 127
        %v5515 = vpop.permute.xlu0 %5514
        %5516 = vrot.lane.b32.xlu0 %v5351, 127
        %v5517 = vpop.permute.xlu0 %5516
        %v5518 = vsel %vm956, %v5503, %v5511
        %v5519 = vsel %vm956, %v5505, %v5513
        %v5520 = vsel %vm956, %v5507, %v5515
        %v5521 = vsel %vm956, %v5509, %v5517
        %v5522 = vsel %vm956, %v5511, %v5503
        %v5523 = vsel %vm956, %v5513, %v5505
        %v5524 = vsel %vm956, %v5515, %v5507
        %v5525 = vsel %vm956, %v5517, %v5509
        %v5526 = vmul.f32 %v5518, %v2565
        %v5527 = vmul.f32 %v5522, %v2569
        %v5528 = vmul.f32 %v5519, %v2565
        %v5529 = vmul.f32 %v5523, %v2569
        %v5530 = vmul.f32 %v5520, %v2565
        %v5531 = vmul.f32 %v5524, %v2569
        %v5532 = vmul.f32 %v5521, %v2565
        %v5533 = vmul.f32 %v5525, %v2569
        %v5534 = vpack.c.bf16 %v5528, %v5526
        %v5535 = vpack.c.bf16 %v5529, %v5527
        %v5536 = vpack.c.bf16 %v5532, %v5530
        %v5537 = vpack.c.bf16 %v5533, %v5531
        %5538 = vrot.lane.b32.xlu0 %v5344, 113
        %v5539 = vpop.permute.xlu0 %5538
        %5540 = vrot.lane.b32.xlu0 %v5346, 113
        %v5541 = vpop.permute.xlu0 %5540
        %5542 = vrot.lane.b32.xlu0 %v5348, 113
        %v5543 = vpop.permute.xlu0 %5542
        %5544 = vrot.lane.b32.xlu0 %v5350, 113
        %v5545 = vpop.permute.xlu0 %5544
        %5546 = vrot.lane.b32.xlu0 %v5345, 113
        %v5547 = vpop.permute.xlu0 %5546
        %5548 = vrot.lane.b32.xlu0 %v5347, 113
        %v5549 = vpop.permute.xlu0 %5548
        %5550 = vrot.lane.b32.xlu0 %v5349, 113
        %v5551 = vpop.permute.xlu0 %5550
        %5552 = vrot.lane.b32.xlu0 %v5351, 113
        %v5553 = vpop.permute.xlu0 %5552
        %v5554 = vsel %vm2578, %v5539, %v5547
        %v5555 = vsel %vm2578, %v5541, %v5549
        %v5556 = vsel %vm2578, %v5543, %v5551
        %v5557 = vsel %vm2578, %v5545, %v5553
        %v5558 = vsel %vm2578, %v5547, %v5539
        %v5559 = vsel %vm2578, %v5549, %v5541
        %v5560 = vsel %vm2578, %v5551, %v5543
        %v5561 = vsel %vm2578, %v5553, %v5545
        %v5562 = vmul.f32 %v5554, %v2584
        %v5563 = vmul.f32 %v5558, %v2588
        %v5564 = vmul.f32 %v5555, %v2584
        %v5565 = vmul.f32 %v5559, %v2588
        %v5566 = vmul.f32 %v5556, %v2584
        %v5567 = vmul.f32 %v5560, %v2588
        %v5568 = vmul.f32 %v5557, %v2584
        %v5569 = vmul.f32 %v5561, %v2588
        %v5570 = vpack.c.bf16 %v5564, %v5562
        %v5571 = vpack.c.bf16 %v5565, %v5563
        %v5572 = vpack.c.bf16 %v5568, %v5566
        %v5573 = vpack.c.bf16 %v5569, %v5567
        %5574 = vrot.lane.b32.xlu0 %v5344, 112
        %v5575 = vpop.permute.xlu0 %5574
        %5576 = vrot.lane.b32.xlu0 %v5346, 112
        %v5577 = vpop.permute.xlu0 %5576
        %5578 = vrot.lane.b32.xlu0 %v5348, 112
        %v5579 = vpop.permute.xlu0 %5578
        %5580 = vrot.lane.b32.xlu0 %v5350, 112
        %v5581 = vpop.permute.xlu0 %5580
        %5582 = vrot.lane.b32.xlu0 %v5345, 112
        %v5583 = vpop.permute.xlu0 %5582
        %5584 = vrot.lane.b32.xlu0 %v5347, 112
        %v5585 = vpop.permute.xlu0 %5584
        %5586 = vrot.lane.b32.xlu0 %v5349, 112
        %v5587 = vpop.permute.xlu0 %5586
        %5588 = vrot.lane.b32.xlu0 %v5351, 112
        %v5589 = vpop.permute.xlu0 %5588
        %v5590 = vsel %vm994, %v5575, %v5583
        %v5591 = vsel %vm994, %v5577, %v5585
        %v5592 = vsel %vm994, %v5579, %v5587
        %v5593 = vsel %vm994, %v5581, %v5589
        %v5594 = vsel %vm994, %v5583, %v5575
        %v5595 = vsel %vm994, %v5585, %v5577
        %v5596 = vsel %vm994, %v5587, %v5579
        %v5597 = vsel %vm994, %v5589, %v5581
        %v5598 = vmul.f32 %v5590, %v2602
        %v5599 = vmul.f32 %v5594, %v2606
        %v5600 = vmul.f32 %v5591, %v2602
        %v5601 = vmul.f32 %v5595, %v2606
        %v5602 = vmul.f32 %v5592, %v2602
        %v5603 = vmul.f32 %v5596, %v2606
        %v5604 = vmul.f32 %v5593, %v2602
        %v5605 = vmul.f32 %v5597, %v2606
        %v5606 = vpack.c.bf16 %v5600, %v5598
        %v5607 = vpack.c.bf16 %v5601, %v5599
        %v5608 = vpack.c.bf16 %v5604, %v5602
        %v5609 = vpack.c.bf16 %v5605, %v5603
        %5610 = vrot.lane.b32.xlu0 %v5344, 111
        %v5611 = vpop.permute.xlu0 %5610
        %5612 = vrot.lane.b32.xlu0 %v5346, 111
        %v5613 = vpop.permute.xlu0 %5612
        %5614 = vrot.lane.b32.xlu0 %v5348, 111
        %v5615 = vpop.permute.xlu0 %5614
        %5616 = vrot.lane.b32.xlu0 %v5350, 111
        %v5617 = vpop.permute.xlu0 %5616
        %5618 = vrot.lane.b32.xlu0 %v5345, 111
        %v5619 = vpop.permute.xlu0 %5618
        %5620 = vrot.lane.b32.xlu0 %v5347, 111
        %v5621 = vpop.permute.xlu0 %5620
        %5622 = vrot.lane.b32.xlu0 %v5349, 111
        %v5623 = vpop.permute.xlu0 %5622
        %5624 = vrot.lane.b32.xlu0 %v5351, 111
        %v5625 = vpop.permute.xlu0 %5624
        %v5626 = vsel %vm2615, %v5611, %v5619
        %v5627 = vsel %vm2615, %v5613, %v5621
        %v5628 = vsel %vm2615, %v5615, %v5623
        %v5629 = vsel %vm2615, %v5617, %v5625
        %v5630 = vsel %vm2615, %v5619, %v5611
        %v5631 = vsel %vm2615, %v5621, %v5613
        %v5632 = vsel %vm2615, %v5623, %v5615
        %v5633 = vsel %vm2615, %v5625, %v5617
        %v5634 = vmul.f32 %v5626, %v2621
        %v5635 = vmul.f32 %v5630, %v2625
        %v5636 = vmul.f32 %v5627, %v2621
        %v5637 = vmul.f32 %v5631, %v2625
        %v5638 = vmul.f32 %v5628, %v2621
        %v5639 = vmul.f32 %v5632, %v2625
        %v5640 = vmul.f32 %v5629, %v2621
        %v5641 = vmul.f32 %v5633, %v2625
        %v5642 = vpack.c.bf16 %v5636, %v5634
        %v5643 = vpack.c.bf16 %v5637, %v5635
        %v5644 = vpack.c.bf16 %v5640, %v5638
        %v5645 = vpack.c.bf16 %v5641, %v5639
        %5647 = vset.pattern.permute.xlu0 0
        %5648 = vperm.xlu0 %5647, %v5353
        %v5649 = vpop.permute.xlu0 %5648
        %v5653 = vunpack.c.l.s4 1966171168
        %v5654 = vunpack.c.0.s8 %v5653
        %v5655 = vlaneseq
        %v5656 = vshrl.u32 %v5655, 7
        %v5657 = vsub.s32 %v5654, %v5656
        %v5658 = vrot.slane %v5352, %v5657
        %v5659 = vcombine.high %v5658, %v5658
        %v5661 = vunpack.c.l.s4 1966171168
        %v5662 = vunpack.c.0.s8 %v5661
        %v5663 = vlaneseq
        %v5664 = vshrl.u32 %v5663, 7
        %v5665 = vsub.s32 %v5662, %v5664
        %v5666 = vrot.slane %v5658, %v5665
        %v5668 = vunpack.c.l.s4 1966171168
        %v5669 = vunpack.c.0.s8 %v5668
        %v5670 = vlaneseq
        %v5671 = vshrl.u32 %v5670, 7
        %v5672 = vsub.s32 %v5669, %v5671
        %v5673 = vrot.slane %v5659, %v5672
        %v5674 = vcombine.high %v5666, %v5666
        %v5678 = vsel %vm3727, %v5674, 0
        %5680 = vmatprep.subr.bf16.mxu0 %v5497
        %5681 = vmatpush1.bf16.msra.mxu0 %v5496
        %5682 = vmatprep.subr.bf16.mxu0 %v5495
        %5683 = vmatpush1.bf16.msra.mxu0 %v5494
        %5684 = vmatprep.subr.bf16.mxu0 %v5461
        %5685 = vmatpush1.bf16.msra.mxu0 %v5460
        %5686 = vmatprep.subr.bf16.mxu0 %v5459
        %5687 = vmatpush1.bf16.msra.mxu0 %v5458
        %5688 = vmatprep.subr.bf16.mxu0 %v5425
        %5689 = vmatpush1.bf16.msra.mxu0 %v5424
        %5690 = vmatprep.subr.bf16.mxu0 %v5423
        %5691 = vmatpush1.bf16.msra.mxu0 %v5422
        %5692 = vmatprep.subr.bf16.mxu0 %v5389
        %5693 = vmatpush1.bf16.msra.mxu0 %v5388
        %5694 = vmatprep.subr.bf16.mxu0 %v5387
        %5695 = vmatpush1.bf16.msra.mxu0 %v5386
        %5696 = vmatprep.subr.bf16.mxu0 %v5609
        %5697 = vmatpush2.bf16.msra.mxu0 %v5608
        %5698 = vmatprep.subr.bf16.mxu0 %v5607
        %5699 = vmatpush2.bf16.msra.mxu0 %v5606
        %5700 = vmatprep.subr.bf16.mxu0 %v5573
        %5701 = vmatpush2.bf16.msra.mxu0 %v5572
        %5702 = vmatprep.subr.bf16.mxu0 %v5571
        %5703 = vmatpush2.bf16.msra.mxu0 %v5570
        %5704 = vmatprep.subr.bf16.mxu0 %v5537
        %5705 = vmatpush2.bf16.msra.mxu0 %v5536
        %5706 = vmatprep.subr.bf16.mxu0 %v5535
        %5707 = vmatpush2.bf16.msra.mxu0 %v5534
        %5708 = vmatprep.subr.bf16.mxu0 %v5501
        %5709 = vmatpush2.bf16.msra.mxu0 %v5500
        %5710 = vmatprep.subr.bf16.mxu0 %v5499
        %5711 = vmatpush2.bf16.msra.mxu0 %v5498
        %5712 = vmatprep.mubr.bf16.mxu0 %v5673
        %5713 = vmatmul.mubr.bf16.gmra.mxu0 %v5666
        %v5714 = vpop.f32.mrf.mxu0
        %v5715 = vadd.f32 %v5649, %v5714
        %v5716 = vpop.f32.mrf.mxu0
        %v5717 = vadd.f32 %v5649, %v5716
        %v5718 = vpop.f32.mrf.mxu0
        %v5719 = vpop.f32.mrf.mxu0
        %5720 = vdwg.mxu0
        %5721 = vmatprep.subr.bf16.mxu0 0
        %5722 = vmatpush1.bf16.msra.mxu0 0
        %5723 = vmatprep.subr.bf16.mxu0 0
        %5724 = vmatpush1.bf16.msra.mxu0 0
        %5725 = vmatprep.subr.bf16.mxu0 0
        %5726 = vmatpush1.bf16.msra.mxu0 0
        %5727 = vmatprep.subr.bf16.mxu0 0
        %5728 = vmatpush1.bf16.msra.mxu0 0
        %5729 = vmatprep.subr.bf16.mxu0 0
        %5730 = vmatpush1.bf16.msra.mxu0 0
        %5731 = vmatprep.subr.bf16.mxu0 0
        %5732 = vmatpush1.bf16.msra.mxu0 0
        %5733 = vmatprep.subr.bf16.mxu0 %v5645
        %5734 = vmatpush1.bf16.msra.mxu0 %v5644
        %5735 = vmatprep.subr.bf16.mxu0 %v5643
        %5736 = vmatpush1.bf16.msra.mxu0 %v5642
        %5737 = vmatprep.subr.bf16.mxu0 0
        %5738 = vmatpush2.bf16.msra.mxu0 0
        %5739 = vmatprep.subr.bf16.mxu0 0
        %5740 = vmatpush2.bf16.msra.mxu0 0
        %5741 = vmatprep.subr.bf16.mxu0 0
        %5742 = vmatpush2.bf16.msra.mxu0 0
        %5743 = vmatprep.subr.bf16.mxu0 0
        %5744 = vmatpush2.bf16.msra.mxu0 0
        %5745 = vmatprep.subr.bf16.mxu0 0
        %5746 = vmatpush2.bf16.msra.mxu0 0
        %5747 = vmatprep.subr.bf16.mxu0 0
        %5748 = vmatpush2.bf16.msra.mxu0 0
        %5749 = vmatprep.subr.bf16.mxu0 0
        %5750 = vmatpush2.bf16.msra.mxu0 0
        %5751 = vmatprep.subr.bf16.mxu0 0
        %5752 = vmatpush2.bf16.msra.mxu0 0
        %5753 = vmatprep.mubr.bf16.mxu0 0
        %5754 = vmatmul.mubr.bf16.gmra.mxu0 %v5678
        %v5755 = vpop.f32.mrf.mxu0
        %v5756 = vadd.f32 %v5715, %v5755
        %v5757 = vpop.f32.mrf.mxu0
        %v5758 = vadd.f32 %v5717, %v5757
        %v5759 = vpop.f32.mrf.mxu0
        %v5760 = vpop.f32.mrf.mxu0
        %5761 = vdwg.mxu0
        %v5762 = vstv %s810
        %vm5763 = vcmp.gt.f32.partialorder %v5756, %v5762
        %vm5764 = vcmp.gt.f32.partialorder %v5758, %v5762
        %v5765 = vsub.f32 %v5756, %v5762
        %v5766 = vsub.f32 %v5758, %v5762
        %s5767 = ssub.f32 0.0, %s810
        %v5768 = vstv %s5767
        %vm5769 = vcmp.lt.f32.partialorder %v5756, %v5768
        %vm5770 = vcmp.lt.f32.partialorder %v5758, %v5768
        %v5771 = vadd.f32 %v5756, %v5762
        %v5772 = vadd.f32 %v5758, %v5762
        %v5773 = vsel %vm5769, %v5771, 0.0
        %v5774 = vsel %vm5770, %v5772, 0.0
        %v5775 = vsel %vm5763, %v5765, %v5773
        %v5776 = vsel %vm5764, %v5766, %v5774
        %v5777 = vlaneseq
        %vm5778 = vcmp.ge.s32.totalorder %v5777, 0
        %vm5779 = vcmp.lt.s32.totalorder %v5777, 256
        %vm5780 = vmand %vm5778, %vm5779
        %5781 = vst.msk [vmem:[#allocation2] sm:$0x3] %vm5780, %v2993
        %v5784 = vcombine.low %v5775, %v5776
        %v5786 = vunpack.c.l.s4 1983009808
        %v5787 = vunpack.c.0.s8 %v5786
        %v5788 = vlaneseq
        %v5789 = vshrl.u32 %v5788, 7
        %v5790 = vsub.s32 %v5787, %v5789
        %v5791 = vrot.slane %v5784, %v5790
        %5793 = vst [vmem:[#allocation3] sm:$0xf] %v5791
        %5794 = vst.msk [vmem:[%s781] sm:$0x3] %vm5780, %v2993
        %p5795 = scmp.lt.s32.totalorder %s33, 1
        %s5796 = scalar_select %p5795, %s33, 1
        %p5797 = scmp.lt.s32.totalorder %s34, 1
        %s5798 = scalar_select %p5797, %s34, 1
        %s5799 = smul.addr %s5798, 2
        %s5800 = smul.addr %s5796, 4
        %s5801 = sadd.s32 %s5799, %s5800
        %s5802 = scalar_lea.vmem %s16, %s5801
        // Predicated region
        $region97: #{network_forward.3} parent=83 // pred_check
          %p5803 = pneg %p462
        $region98: #{network_forward.3} parent=83 // pred_check_branch
          %5805 = sbr.rel (%p5803) target = $region100
        $region99: #{network_forward.3} parent=83 // pred_region
          _
        $region100: #{network_forward.3} parent=83 // pred_fallthru
          _
      $region84: #{network_forward.3} parent=5 // pred_fallthru
        _
      %p5806 = scmp.le.s32.totalorder 2, %s24
      // Predicated region
      $region101: #{network_forward.3} parent=5 // pred_check
        %p5807 = pneg %p5806
      $region102: #{network_forward.3} parent=5 // pred_check_branch
        %5809 = sbr.rel (%p5807) target = $region104
      $region103: #{network_forward.3} parent=5 // pred_region
        %s5810 = ssub.s32 %s24, 2
        // Predicated region
        $region105: #{network_forward.3} parent=103 // pred_check
          %p5811 = pneg %p468
        $region106: #{network_forward.3} parent=103 // pred_check_branch
          %5813 = sbr.rel (%p5811) target = $region108
        $region107: #{network_forward.3} parent=103 // pred_region
          %p5814 = scmp.lt.s32.totalorder %s35, 1
          %s5815 = scalar_select %p5814, %s35, 1
          %p5816 = scmp.lt.s32.totalorder %s36, 1
          %s5817 = scalar_select %p5816, %s36, 1
          %s5818 = smul.addr %s5817, 2
          %s5819 = smul.addr %s5815, 4
          %s5820 = sadd.s32 %s5818, %s5819
          %s5821 = scalar_lea.vmem %s16, %s5820
        $region108: #{network_forward.3} parent=103 // pred_fallthru
          _
      $region104: #{network_forward.3} parent=5 // pred_fallthru
        _
    $region6: #{network_forward.3} parent=1 // loop_footer
      %s28 = sadd.s32 1, %s24
    $region7: #{network_forward.3} parent=1 // loop_footer_branch
      %23 = sbr.rel target = $region3
    $region8: #{network_forward.3} parent=1 // loop_exit
      _
    %5822 = vsyncpa [#allocation5], 1
    %s5823 = scalar_lea.sflag [#allocation5], 1
    %5824 = vsyncpa %s5823, 1
    %5825 = vsyncpa [#allocation7], 1

</llo_original>
